<compile_context>
chip_gen: v7x
topology: tpu7x:2x2x1
jax: 0.10.0
libtpu: 0.0.40
codegen_flags: <defaults>
</compile_context>

<pallas_src>
import jax
import jax.numpy as jnp
from jax.experimental import pallas as pl
from jax.experimental.pallas import tpu as pltpu

EPS = 1e-5


def _fused_kernel(x_ref, s_ref, w_ref, gamma_ref, beta_ref, o_ref):
    # channel-wise scale in bf16; s is (Cin, 1) -> lane broadcast (free)
    xs = x_ref[...] * s_ref[...]                                  # (Cin, HW) bf16

    # 1x1 conv == matmul on the MXU: (Cout, Cin) @ (Cin, HW) -> (Cout, HW), f32 acc
    y = jnp.dot(w_ref[...], xs, preferred_element_type=jnp.float32)

    # BatchNorm2d (training mode): per-output-channel stats over the HW lanes (XLU reduce)
    inv_hw = 1.0 / y.shape[1]
    mean = jnp.sum(y, axis=1, keepdims=True) * inv_hw             # (Cout, 1)
    diff = y - mean
    var = jnp.sum(diff * diff, axis=1, keepdims=True) * inv_hw    # biased variance
    scale = jax.lax.rsqrt(var + EPS) * gamma_ref[...]             # (Cout, 1)
    o_ref[...] = (diff * scale + beta_ref[...]).astype(o_ref.dtype)


def prepare_conv_weight(w):
    """One-time weight prep (hoisted out of the per-call path):
       (Cout, Cin, 1, 1) f32 -> (Cout, Cin) bf16.  Pure reshape + cast, no transpose."""
    cout, cin = w.shape[0], w.shape[1]
    return w.reshape(cout, cin).astype(jnp.bfloat16)


@jax.jit
def fused_mul_conv1x1_bn(x, s, w2, gamma, beta):
    """x: (1, Cin, H, W); s: (1, Cin, 1, 1); w2: prepared (Cout, Cin) bf16;
       gamma, beta: (Cout,).  Returns (1, Cout, H, W) float32."""
    n, cin, h, wd = x.shape
    cout = w2.shape[0]
    assert n == 1, "kernel is specialized for N == 1 (see TODO at top of file)"
    hw = h * wd

    # --- pure reshapes / casts only (no transposes, no big materializations) ---
    x2 = x.reshape(cin, hw).astype(jnp.bfloat16)    # (Cin, HW)  bf16
    s2 = s.reshape(cin, 1).astype(jnp.bfloat16)     # (Cin, 1)   bf16
    g2 = gamma.reshape(cout, 1).astype(jnp.float32)
    b2 = beta.reshape(cout, 1).astype(jnp.float32)

    cost = pl.CostEstimate(
        flops=2 * hw * cin * cout,
        transcendentals=0,
        bytes_accessed=(x2.size * 2 + s2.size * 2 + w2.size * 2
                        + g2.size * 4 + b2.size * 4 + cout * hw * 4))

    out2 = pl.pallas_call(
        _fused_kernel,
        out_shape=jax.ShapeDtypeStruct((cout, hw), jnp.float32),
        grid=(1,),
        in_specs=[
            pl.BlockSpec((cin, hw), lambda i: (0, 0)),     # X
            pl.BlockSpec((cin, 1), lambda i: (0, 0)),      # scale column
            pl.BlockSpec((cout, cin), lambda i: (0, 0)),   # W (bf16, pre-prepared)
            pl.BlockSpec((cout, 1), lambda i: (0, 0)),     # gamma
            pl.BlockSpec((cout, 1), lambda i: (0, 0)),     # beta
        ],
        out_specs=pl.BlockSpec((cout, hw), lambda i: (0, 0)),
        compiler_params=pltpu.CompilerParams(
            dimension_semantics=("arbitrary",)),
        cost_estimate=cost,
    )(x2, s2, w2, g2, b2)

    # (Cout, HW) -> (1, Cout, H, W): pure reshape
    return out2.reshape(n, cout, h, wd)


def reference(x, s, w, gamma, beta):
    """Pure-JAX f32 reference of the PyTorch forward (training-mode BN, biased var)."""
    xs = x * s
    y = jnp.einsum("nchw,oc->nohw", xs, w.reshape(w.shape[0], w.shape[1]))
    mean = jnp.mean(y, axis=(0, 2, 3), keepdims=True)
    var = jnp.mean((y - mean) ** 2, axis=(0, 2, 3), keepdims=True)
    return ((y - mean) / jnp.sqrt(var + EPS) * gamma.reshape(1, -1, 1, 1)
            + beta.reshape(1, -1, 1, 1))


if __name__ == "__main__":
    key = jax.random.PRNGKey(0)
    k1, k2, k3 = jax.random.split(key, 3)

    N, CIN, COUT, H, W = 1, 2304, 384, 7, 7

    x700 = jax.random.normal(k1, (N, CIN, H, W), dtype=jnp.float32)
    x705 = jax.random.normal(k2, (N, CIN, 1, 1), dtype=jnp.float32)

    # Conv2d(2304, 384, 1, bias=False) weight; deterministic init
    conv_w = jax.random.normal(k3, (COUT, CIN, 1, 1), dtype=jnp.float32) * 0.02
    # BatchNorm2d default affine init: gamma=1, beta=0
    gamma = jnp.ones((COUT,), dtype=jnp.float32)
    beta = jnp.zeros((COUT,), dtype=jnp.float32)

    # Weight prep hoisted out of the per-call path (done once).
    w2 = jax.block_until_ready(prepare_conv_weight(conv_w))

    out = fused_mul_conv1x1_bn(x700, x705, w2, gamma, beta)
    out = jax.block_until_ready(out)

    ref = reference(x700, x705, conv_w, gamma, beta)
    assert out.shape == (N, COUT, H, W)
    # x, s, w all bf16 into the MXU (f32 accumulation) over K=2304 vs pure-f32 reference
    assert jnp.allclose(out, ref, atol=3e-2, rtol=3e-2)

    print("KERNEL_OK")
</pallas_src>

<mosaic_0001>
module attributes {stable_mosaic.version = 11 : i64} {
  func.func @_fused_kernel(%arg0: i32, %arg1: memref<2304x49xbf16, #tpu.memory_space<vmem>>, %arg2: memref<2304x1xbf16, #tpu.memory_space<vmem>>, %arg3: memref<384x2304xbf16, #tpu.memory_space<vmem>>, %arg4: memref<384x1xf32, #tpu.memory_space<vmem>>, %arg5: memref<384x1xf32, #tpu.memory_space<vmem>>, %arg6: memref<384x49xf32, #tpu.memory_space<vmem>>) attributes {dimension_semantics = [#tpu.dimension_semantics<arbitrary>], iteration_bounds = array<i64: 1>, scalar_prefetch = 0 : i64, scratch_operands = 0 : i64, tpu.core_type = #tpu.core_type<tc>, window_params = [{pipeline_mode = #tpu.pipeline_mode<synchronous>, transform_indices = @transform_0, window_bounds = array<i64: 2304, 49>}, {pipeline_mode = #tpu.pipeline_mode<synchronous>, transform_indices = @transform_1, window_bounds = array<i64: 2304, 1>}, {pipeline_mode = #tpu.pipeline_mode<synchronous>, transform_indices = @transform_2, window_bounds = array<i64: 384, 2304>}, {pipeline_mode = #tpu.pipeline_mode<synchronous>, transform_indices = @transform_3, window_bounds = array<i64: 384, 1>}, {pipeline_mode = #tpu.pipeline_mode<synchronous>, transform_indices = @transform_4, window_bounds = array<i64: 384, 1>}, {pipeline_mode = #tpu.pipeline_mode<synchronous>, transform_indices = @transform_5, window_bounds = array<i64: 384, 49>}]} {
    %c0 = arith.constant 0 : index
    %c0_0 = arith.constant 0 : index
    %0 = vector.load %arg1[%c0, %c0_0] : memref<2304x49xbf16, #tpu.memory_space<vmem>>, vector<2304x49xbf16>
    %c0_1 = arith.constant 0 : index
    %c0_2 = arith.constant 0 : index
    %1 = vector.load %arg2[%c0_1, %c0_2] : memref<2304x1xbf16, #tpu.memory_space<vmem>>, vector<2304x1xbf16>
    %2 = vector.broadcast %1 : vector<2304x1xbf16> to vector<2304x49xbf16>
    %3 = arith.mulf %0, %2 : vector<2304x49xbf16>
    %c0_3 = arith.constant 0 : index
    %c0_4 = arith.constant 0 : index
    %4 = vector.load %arg3[%c0_3, %c0_4] : memref<384x2304xbf16, #tpu.memory_space<vmem>>, vector<384x2304xbf16>
    %cst = arith.constant dense<0.000000e+00> : vector<384x49xf32>
    %5 = tpu.matmul %4, %3, %cst {dimension_numbers = #tpu.dot_dimension_numbers<[1], [0], [0], [1], [0, 0, 1, 1], [], []>} : vector<384x2304xbf16>, vector<2304x49xbf16>, vector<384x49xf32> -> vector<384x49xf32>
    %cst_5 = arith.constant dense<0.000000e+00> : vector<384xf32>
    %6 = vector.multi_reduction <add>, %5, %cst_5 [1] : vector<384x49xf32> to vector<384xf32>
    %7 = vector.shape_cast %6 : vector<384xf32> to vector<384x1xf32>
    %cst_6 = arith.constant 0.0204081628 : f32
    %8 = vector.broadcast %cst_6 : f32 to vector<384x1xf32>
    %9 = arith.mulf %7, %8 : vector<384x1xf32>
    %10 = vector.broadcast %9 : vector<384x1xf32> to vector<384x49xf32>
    %11 = arith.subf %5, %10 : vector<384x49xf32>
    %12 = arith.mulf %11, %11 : vector<384x49xf32>
    %cst_7 = arith.constant dense<0.000000e+00> : vector<384xf32>
    %13 = vector.multi_reduction <add>, %12, %cst_7 [1] : vector<384x49xf32> to vector<384xf32>
    %14 = vector.shape_cast %13 : vector<384xf32> to vector<384x1xf32>
    %cst_8 = arith.constant 0.0204081628 : f32
    %15 = vector.broadcast %cst_8 : f32 to vector<384x1xf32>
    %16 = arith.mulf %14, %15 : vector<384x1xf32>
    %cst_9 = arith.constant 9.99999974E-6 : f32
    %17 = vector.broadcast %cst_9 : f32 to vector<384x1xf32>
    %18 = arith.addf %16, %17 : vector<384x1xf32>
    %19 = math.rsqrt %18 : vector<384x1xf32>
    %c0_10 = arith.constant 0 : index
    %c0_11 = arith.constant 0 : index
    %20 = vector.load %arg4[%c0_10, %c0_11] : memref<384x1xf32, #tpu.memory_space<vmem>>, vector<384x1xf32>
    %21 = arith.mulf %19, %20 : vector<384x1xf32>
    %22 = vector.broadcast %21 : vector<384x1xf32> to vector<384x49xf32>
    %23 = arith.mulf %11, %22 : vector<384x49xf32>
    %c0_12 = arith.constant 0 : index
    %c0_13 = arith.constant 0 : index
    %24 = vector.load %arg5[%c0_12, %c0_13] : memref<384x1xf32, #tpu.memory_space<vmem>>, vector<384x1xf32>
    %25 = vector.broadcast %24 : vector<384x1xf32> to vector<384x49xf32>
    %26 = arith.addf %23, %25 : vector<384x49xf32>
    %c0_14 = arith.constant 0 : index
    %c0_15 = arith.constant 0 : index
    %27 = vector.load %arg6[%c0_14, %c0_15] : memref<384x49xf32, #tpu.memory_space<vmem>>, vector<384x49xf32>
    tpu.vector_store %arg6[%c0_14, %c0_15], %26 {strides = array<i32>} : memref<384x49xf32, #tpu.memory_space<vmem>>, vector<384x49xf32>,
    return
  }
  func.func @transform_0(%arg0: i32) -> (i32, i32) {
    %c0_i32 = arith.constant 0 : i32
    %c0_i32_0 = arith.constant 0 : i32
    %c0_i32_1 = arith.constant 0 : i32
    return %c0_i32, %c0_i32_0 : i32, i32
  }
  func.func @transform_1(%arg0: i32) -> (i32, i32) {
    %c0_i32 = arith.constant 0 : i32
    %c0_i32_0 = arith.constant 0 : i32
    %c0_i32_1 = arith.constant 0 : i32
    return %c0_i32, %c0_i32_0 : i32, i32
  }
  func.func @transform_2(%arg0: i32) -> (i32, i32) {
    %c0_i32 = arith.constant 0 : i32
    %c0_i32_0 = arith.constant 0 : i32
    %c0_i32_1 = arith.constant 0 : i32
    return %c0_i32, %c0_i32_0 : i32, i32
  }
  func.func @transform_3(%arg0: i32) -> (i32, i32) {
    %c0_i32 = arith.constant 0 : i32
    %c0_i32_0 = arith.constant 0 : i32
    %c0_i32_1 = arith.constant 0 : i32
    return %c0_i32, %c0_i32_0 : i32, i32
  }
  func.func @transform_4(%arg0: i32) -> (i32, i32) {
    %c0_i32 = arith.constant 0 : i32
    %c0_i32_0 = arith.constant 0 : i32
    %c0_i32_1 = arith.constant 0 : i32
    return %c0_i32, %c0_i32_0 : i32, i32
  }
  func.func @transform_5(%arg0: i32) -> (i32, i32) {
    %c0_i32 = arith.constant 0 : i32
    %c0_i32_0 = arith.constant 0 : i32
    %c0_i32_1 = arith.constant 0 : i32
    return %c0_i32, %c0_i32_0 : i32, i32
  }
}

</mosaic_0001>

<llo_original>
// kernel: fused_mul_conv1x1_bn.1
$region0: #{fused_mul_conv1x1_bn.1}
  #allocation0 [shape = 'u32[]', space=smem, size = 0x4, offset = 0x4, fixed_abs, tag = 'smem constant byte address 0x4 - core index']
  #allocation1 [shape = 'u32[144,128]{1,0:T(1,128)}', space=vmem, size = 0x12000, scoped, tag = 'internal scratch']
  %s0 = inlined_call_operand.vmem [shape: bf16[2304,49], index: 0, kind: input, shape index: {}]
  %s1 = inlined_call_operand.vmem [shape: bf16[2304,1], index: 1, kind: input, shape index: {}]
  %s2 = inlined_call_operand.vmem [shape: bf16[384,2304], index: 2, kind: input, shape index: {}]
  %s3 = inlined_call_operand.vmem [shape: f32[384,1], index: 3, kind: input, shape index: {}]
  %s4 = inlined_call_operand.vmem [shape: f32[384,1], index: 4, kind: input, shape index: {}]
  %s5 = inlined_call_operand.vmem [shape: f32[384,49], index: 5, kind: output, shape index: {}]
  %s6 = sld [smem:[#allocation0]]
  $region30: #{fused_mul_conv1x1_bn.1} parent=0
    _
  %s8 = ssub.s32 1, %s6
  %s9 = scalar_select 0, %s8, %s6
  // Predicated region
  $region2: #{fused_mul_conv1x1_bn.1} parent=0 // pred_check
    _
  $region3: #{fused_mul_conv1x1_bn.1} parent=0 // pred_check_branch
    %11 = sbr.rel (0) target = $region5
  $region4: #{fused_mul_conv1x1_bn.1} parent=0 // pred_region
    _
  $region5: #{fused_mul_conv1x1_bn.1} parent=0 // pred_fallthru
    _
  // Predicated region
  $region6: #{fused_mul_conv1x1_bn.1} parent=0 // pred_check
    _
  $region7: #{fused_mul_conv1x1_bn.1} parent=0 // pred_check_branch
    %13 = sbr.rel (0) target = $region9
  $region8: #{fused_mul_conv1x1_bn.1} parent=0 // pred_region
    _
  $region9: #{fused_mul_conv1x1_bn.1} parent=0 // pred_fallthru
    _
  // Predicated region
  $region10: #{fused_mul_conv1x1_bn.1} parent=0 // pred_check
    _
  $region11: #{fused_mul_conv1x1_bn.1} parent=0 // pred_check_branch
    %15 = sbr.rel (0) target = $region13
  $region12: #{fused_mul_conv1x1_bn.1} parent=0 // pred_region
    _
  $region13: #{fused_mul_conv1x1_bn.1} parent=0 // pred_fallthru
    _
  // Predicated region
  $region14: #{fused_mul_conv1x1_bn.1} parent=0 // pred_check
    _
  $region15: #{fused_mul_conv1x1_bn.1} parent=0 // pred_check_branch
    %17 = sbr.rel (0) target = $region17
  $region16: #{fused_mul_conv1x1_bn.1} parent=0 // pred_region
    _
  $region17: #{fused_mul_conv1x1_bn.1} parent=0 // pred_fallthru
    _
  // Predicated region
  $region18: #{fused_mul_conv1x1_bn.1} parent=0 // pred_check
    _
  $region19: #{fused_mul_conv1x1_bn.1} parent=0 // pred_check_branch
    %19 = sbr.rel (0) target = $region21
  $region20: #{fused_mul_conv1x1_bn.1} parent=0 // pred_region
    _
  $region21: #{fused_mul_conv1x1_bn.1} parent=0 // pred_fallthru
    _
  %v21 = vld [vmem:[%s0] sm:$0xf]
  %v22 = vld [vmem:[%s0 + $0x4] sm:$0xf]
  %v23 = vld [vmem:[%s0 + $0x8] sm:$0xf]
  %v24 = vld [vmem:[%s0 + $0xc] sm:$0xf]
  %v25 = vld [vmem:[%s0 + $0x10] sm:$0xf]
  %v26 = vld [vmem:[%s0 + $0x14] sm:$0xf]
  %v27 = vld [vmem:[%s0 + $0x18] sm:$0xf]
  %v28 = vld [vmem:[%s0 + $0x1c] sm:$0xf]
  %v29 = vld [vmem:[%s0 + $0x20] sm:$0xf]
  %v30 = vld [vmem:[%s0 + $0x24] sm:$0xf]
  %v31 = vld [vmem:[%s0 + $0x28] sm:$0xf]
  %v32 = vld [vmem:[%s0 + $0x2c] sm:$0xf]
  %v33 = vld [vmem:[%s0 + $0x30] sm:$0xf]
  %v34 = vld [vmem:[%s0 + $0x34] sm:$0xf]
  %v35 = vld [vmem:[%s0 + $0x38] sm:$0xf]
  %v36 = vld [vmem:[%s0 + $0x3c] sm:$0xf]
  %v37 = vld [vmem:[%s0 + $0x40] sm:$0xf]
  %v38 = vld [vmem:[%s0 + $0x44] sm:$0xf]
  %v39 = vld [vmem:[%s0 + $0x48] sm:$0xf]
  %v40 = vld [vmem:[%s0 + $0x4c] sm:$0xf]
  %v41 = vld [vmem:[%s0 + $0x50] sm:$0xf]
  %v42 = vld [vmem:[%s0 + $0x54] sm:$0xf]
  %v43 = vld [vmem:[%s0 + $0x58] sm:$0xf]
  %v44 = vld [vmem:[%s0 + $0x5c] sm:$0xf]
  %v45 = vld [vmem:[%s0 + $0x60] sm:$0xf]
  %v46 = vld [vmem:[%s0 + $0x64] sm:$0xf]
  %v47 = vld [vmem:[%s0 + $0x68] sm:$0xf]
  %v48 = vld [vmem:[%s0 + $0x6c] sm:$0xf]
  %v49 = vld [vmem:[%s0 + $0x70] sm:$0xf]
  %v50 = vld [vmem:[%s0 + $0x74] sm:$0xf]
  %v51 = vld [vmem:[%s0 + $0x78] sm:$0xf]
  %v52 = vld [vmem:[%s0 + $0x7c] sm:$0xf]
  %v53 = vld [vmem:[%s0 + $0x80] sm:$0xf]
  %v54 = vld [vmem:[%s0 + $0x84] sm:$0xf]
  %v55 = vld [vmem:[%s0 + $0x88] sm:$0xf]
  %v56 = vld [vmem:[%s0 + $0x8c] sm:$0xf]
  %v57 = vld [vmem:[%s0 + $0x90] sm:$0xf]
  %v58 = vld [vmem:[%s0 + $0x94] sm:$0xf]
  %v59 = vld [vmem:[%s0 + $0x98] sm:$0xf]
  %v60 = vld [vmem:[%s0 + $0x9c] sm:$0xf]
  %v61 = vld [vmem:[%s0 + $0xa0] sm:$0xf]
  %v62 = vld [vmem:[%s0 + $0xa4] sm:$0xf]
  %v63 = vld [vmem:[%s0 + $0xa8] sm:$0xf]
  %v64 = vld [vmem:[%s0 + $0xac] sm:$0xf]
  %v65 = vld [vmem:[%s0 + $0xb0] sm:$0xf]
  %v66 = vld [vmem:[%s0 + $0xb4] sm:$0xf]
  %v67 = vld [vmem:[%s0 + $0xb8] sm:$0xf]
  %v68 = vld [vmem:[%s0 + $0xbc] sm:$0xf]
  %v69 = vld [vmem:[%s0 + $0xc0] sm:$0xf]
  %v70 = vld [vmem:[%s0 + $0xc4] sm:$0xf]
  %v71 = vld [vmem:[%s0 + $0xc8] sm:$0xf]
  %v72 = vld [vmem:[%s0 + $0xcc] sm:$0xf]
  %v73 = vld [vmem:[%s0 + $0xd0] sm:$0xf]
  %v74 = vld [vmem:[%s0 + $0xd4] sm:$0xf]
  %v75 = vld [vmem:[%s0 + $0xd8] sm:$0xf]
  %v76 = vld [vmem:[%s0 + $0xdc] sm:$0xf]
  %v77 = vld [vmem:[%s0 + $0xe0] sm:$0xf]
  %v78 = vld [vmem:[%s0 + $0xe4] sm:$0xf]
  %v79 = vld [vmem:[%s0 + $0xe8] sm:$0xf]
  %v80 = vld [vmem:[%s0 + $0xec] sm:$0xf]
  %v81 = vld [vmem:[%s0 + $0xf0] sm:$0xf]
  %v82 = vld [vmem:[%s0 + $0xf4] sm:$0xf]
  %v83 = vld [vmem:[%s0 + $0xf8] sm:$0xf]
  %v84 = vld [vmem:[%s0 + $0xfc] sm:$0xf]
  %v85 = vld [vmem:[%s0 + $0x100] sm:$0xf]
  %v86 = vld [vmem:[%s0 + $0x104] sm:$0xf]
  %v87 = vld [vmem:[%s0 + $0x108] sm:$0xf]
  %v88 = vld [vmem:[%s0 + $0x10c] sm:$0xf]
  %v89 = vld [vmem:[%s0 + $0x110] sm:$0xf]
  %v90 = vld [vmem:[%s0 + $0x114] sm:$0xf]
  %v91 = vld [vmem:[%s0 + $0x118] sm:$0xf]
  %v92 = vld [vmem:[%s0 + $0x11c] sm:$0xf]
  %v93 = vld [vmem:[%s0 + $0x120] sm:$0xf]
  %v94 = vld [vmem:[%s0 + $0x124] sm:$0xf]
  %v95 = vld [vmem:[%s0 + $0x128] sm:$0xf]
  %v96 = vld [vmem:[%s0 + $0x12c] sm:$0xf]
  %v97 = vld [vmem:[%s0 + $0x130] sm:$0xf]
  %v98 = vld [vmem:[%s0 + $0x134] sm:$0xf]
  %v99 = vld [vmem:[%s0 + $0x138] sm:$0xf]
  %v100 = vld [vmem:[%s0 + $0x13c] sm:$0xf]
  %v101 = vld [vmem:[%s0 + $0x140] sm:$0xf]
  %v102 = vld [vmem:[%s0 + $0x144] sm:$0xf]
  %v103 = vld [vmem:[%s0 + $0x148] sm:$0xf]
  %v104 = vld [vmem:[%s0 + $0x14c] sm:$0xf]
  %v105 = vld [vmem:[%s0 + $0x150] sm:$0xf]
  %v106 = vld [vmem:[%s0 + $0x154] sm:$0xf]
  %v107 = vld [vmem:[%s0 + $0x158] sm:$0xf]
  %v108 = vld [vmem:[%s0 + $0x15c] sm:$0xf]
  %v109 = vld [vmem:[%s0 + $0x160] sm:$0xf]
  %v110 = vld [vmem:[%s0 + $0x164] sm:$0xf]
  %v111 = vld [vmem:[%s0 + $0x168] sm:$0xf]
  %v112 = vld [vmem:[%s0 + $0x16c] sm:$0xf]
  %v113 = vld [vmem:[%s0 + $0x170] sm:$0xf]
  %v114 = vld [vmem:[%s0 + $0x174] sm:$0xf]
  %v115 = vld [vmem:[%s0 + $0x178] sm:$0xf]
  %v116 = vld [vmem:[%s0 + $0x17c] sm:$0xf]
  %v117 = vld [vmem:[%s0 + $0x180] sm:$0xf]
  %v118 = vld [vmem:[%s0 + $0x184] sm:$0xf]
  %v119 = vld [vmem:[%s0 + $0x188] sm:$0xf]
  %v120 = vld [vmem:[%s0 + $0x18c] sm:$0xf]
  %v121 = vld [vmem:[%s0 + $0x190] sm:$0xf]
  %v122 = vld [vmem:[%s0 + $0x194] sm:$0xf]
  %v123 = vld [vmem:[%s0 + $0x198] sm:$0xf]
  %v124 = vld [vmem:[%s0 + $0x19c] sm:$0xf]
  %v125 = vld [vmem:[%s0 + $0x1a0] sm:$0xf]
  %v126 = vld [vmem:[%s0 + $0x1a4] sm:$0xf]
  %v127 = vld [vmem:[%s0 + $0x1a8] sm:$0xf]
  %v128 = vld [vmem:[%s0 + $0x1ac] sm:$0xf]
  %v129 = vld [vmem:[%s0 + $0x1b0] sm:$0xf]
  %v130 = vld [vmem:[%s0 + $0x1b4] sm:$0xf]
  %v131 = vld [vmem:[%s0 + $0x1b8] sm:$0xf]
  %v132 = vld [vmem:[%s0 + $0x1bc] sm:$0xf]
  %v133 = vld [vmem:[%s0 + $0x1c0] sm:$0xf]
  %v134 = vld [vmem:[%s0 + $0x1c4] sm:$0xf]
  %v135 = vld [vmem:[%s0 + $0x1c8] sm:$0xf]
  %v136 = vld [vmem:[%s0 + $0x1cc] sm:$0xf]
  %v137 = vld [vmem:[%s0 + $0x1d0] sm:$0xf]
  %v138 = vld [vmem:[%s0 + $0x1d4] sm:$0xf]
  %v139 = vld [vmem:[%s0 + $0x1d8] sm:$0xf]
  %v140 = vld [vmem:[%s0 + $0x1dc] sm:$0xf]
  %v141 = vld [vmem:[%s0 + $0x1e0] sm:$0xf]
  %v142 = vld [vmem:[%s0 + $0x1e4] sm:$0xf]
  %v143 = vld [vmem:[%s0 + $0x1e8] sm:$0xf]
  %v144 = vld [vmem:[%s0 + $0x1ec] sm:$0xf]
  %v145 = vld [vmem:[%s0 + $0x1f0] sm:$0xf]
  %v146 = vld [vmem:[%s0 + $0x1f4] sm:$0xf]
  %v147 = vld [vmem:[%s0 + $0x1f8] sm:$0xf]
  %v148 = vld [vmem:[%s0 + $0x1fc] sm:$0xf]
  %v149 = vld [vmem:[%s0 + $0x200] sm:$0xf]
  %v150 = vld [vmem:[%s0 + $0x204] sm:$0xf]
  %v151 = vld [vmem:[%s0 + $0x208] sm:$0xf]
  %v152 = vld [vmem:[%s0 + $0x20c] sm:$0xf]
  %v153 = vld [vmem:[%s0 + $0x210] sm:$0xf]
  %v154 = vld [vmem:[%s0 + $0x214] sm:$0xf]
  %v155 = vld [vmem:[%s0 + $0x218] sm:$0xf]
  %v156 = vld [vmem:[%s0 + $0x21c] sm:$0xf]
  %v157 = vld [vmem:[%s0 + $0x220] sm:$0xf]
  %v158 = vld [vmem:[%s0 + $0x224] sm:$0xf]
  %v159 = vld [vmem:[%s0 + $0x228] sm:$0xf]
  %v160 = vld [vmem:[%s0 + $0x22c] sm:$0xf]
  %v161 = vld [vmem:[%s0 + $0x230] sm:$0xf]
  %v162 = vld [vmem:[%s0 + $0x234] sm:$0xf]
  %v163 = vld [vmem:[%s0 + $0x238] sm:$0xf]
  %v164 = vld [vmem:[%s0 + $0x23c] sm:$0xf]
  %v165 = vld [vmem:[%s0 + $0x240] sm:$0xf]
  %v166 = vld [vmem:[%s0 + $0x244] sm:$0xf]
  %v167 = vld [vmem:[%s0 + $0x248] sm:$0xf]
  %v168 = vld [vmem:[%s0 + $0x24c] sm:$0xf]
  %v169 = vld [vmem:[%s0 + $0x250] sm:$0xf]
  %v170 = vld [vmem:[%s0 + $0x254] sm:$0xf]
  %v171 = vld [vmem:[%s0 + $0x258] sm:$0xf]
  %v172 = vld [vmem:[%s0 + $0x25c] sm:$0xf]
  %v173 = vld [vmem:[%s0 + $0x260] sm:$0xf]
  %v174 = vld [vmem:[%s0 + $0x264] sm:$0xf]
  %v175 = vld [vmem:[%s0 + $0x268] sm:$0xf]
  %v176 = vld [vmem:[%s0 + $0x26c] sm:$0xf]
  %v177 = vld [vmem:[%s0 + $0x270] sm:$0xf]
  %v178 = vld [vmem:[%s0 + $0x274] sm:$0xf]
  %v179 = vld [vmem:[%s0 + $0x278] sm:$0xf]
  %v180 = vld [vmem:[%s0 + $0x27c] sm:$0xf]
  %v181 = vld [vmem:[%s0 + $0x280] sm:$0xf]
  %v182 = vld [vmem:[%s0 + $0x284] sm:$0xf]
  %v183 = vld [vmem:[%s0 + $0x288] sm:$0xf]
  %v184 = vld [vmem:[%s0 + $0x28c] sm:$0xf]
  %v185 = vld [vmem:[%s0 + $0x290] sm:$0xf]
  %v186 = vld [vmem:[%s0 + $0x294] sm:$0xf]
  %v187 = vld [vmem:[%s0 + $0x298] sm:$0xf]
  %v188 = vld [vmem:[%s0 + $0x29c] sm:$0xf]
  %v189 = vld [vmem:[%s0 + $0x2a0] sm:$0xf]
  %v190 = vld [vmem:[%s0 + $0x2a4] sm:$0xf]
  %v191 = vld [vmem:[%s0 + $0x2a8] sm:$0xf]
  %v192 = vld [vmem:[%s0 + $0x2ac] sm:$0xf]
  %v193 = vld [vmem:[%s0 + $0x2b0] sm:$0xf]
  %v194 = vld [vmem:[%s0 + $0x2b4] sm:$0xf]
  %v195 = vld [vmem:[%s0 + $0x2b8] sm:$0xf]
  %v196 = vld [vmem:[%s0 + $0x2bc] sm:$0xf]
  %v197 = vld [vmem:[%s0 + $0x2c0] sm:$0xf]
  %v198 = vld [vmem:[%s0 + $0x2c4] sm:$0xf]
  %v199 = vld [vmem:[%s0 + $0x2c8] sm:$0xf]
  %v200 = vld [vmem:[%s0 + $0x2cc] sm:$0xf]
  %v201 = vld [vmem:[%s0 + $0x2d0] sm:$0xf]
  %v202 = vld [vmem:[%s0 + $0x2d4] sm:$0xf]
  %v203 = vld [vmem:[%s0 + $0x2d8] sm:$0xf]
  %v204 = vld [vmem:[%s0 + $0x2dc] sm:$0xf]
  %v205 = vld [vmem:[%s0 + $0x2e0] sm:$0xf]
  %v206 = vld [vmem:[%s0 + $0x2e4] sm:$0xf]
  %v207 = vld [vmem:[%s0 + $0x2e8] sm:$0xf]
  %v208 = vld [vmem:[%s0 + $0x2ec] sm:$0xf]
  %v209 = vld [vmem:[%s0 + $0x2f0] sm:$0xf]
  %v210 = vld [vmem:[%s0 + $0x2f4] sm:$0xf]
  %v211 = vld [vmem:[%s0 + $0x2f8] sm:$0xf]
  %v212 = vld [vmem:[%s0 + $0x2fc] sm:$0xf]
  %v213 = vld [vmem:[%s0 + $0x300] sm:$0xf]
  %v214 = vld [vmem:[%s0 + $0x304] sm:$0xf]
  %v215 = vld [vmem:[%s0 + $0x308] sm:$0xf]
  %v216 = vld [vmem:[%s0 + $0x30c] sm:$0xf]
  %v217 = vld [vmem:[%s0 + $0x310] sm:$0xf]
  %v218 = vld [vmem:[%s0 + $0x314] sm:$0xf]
  %v219 = vld [vmem:[%s0 + $0x318] sm:$0xf]
  %v220 = vld [vmem:[%s0 + $0x31c] sm:$0xf]
  %v221 = vld [vmem:[%s0 + $0x320] sm:$0xf]
  %v222 = vld [vmem:[%s0 + $0x324] sm:$0xf]
  %v223 = vld [vmem:[%s0 + $0x328] sm:$0xf]
  %v224 = vld [vmem:[%s0 + $0x32c] sm:$0xf]
  %v225 = vld [vmem:[%s0 + $0x330] sm:$0xf]
  %v226 = vld [vmem:[%s0 + $0x334] sm:$0xf]
  %v227 = vld [vmem:[%s0 + $0x338] sm:$0xf]
  %v228 = vld [vmem:[%s0 + $0x33c] sm:$0xf]
  %v229 = vld [vmem:[%s0 + $0x340] sm:$0xf]
  %v230 = vld [vmem:[%s0 + $0x344] sm:$0xf]
  %v231 = vld [vmem:[%s0 + $0x348] sm:$0xf]
  %v232 = vld [vmem:[%s0 + $0x34c] sm:$0xf]
  %v233 = vld [vmem:[%s0 + $0x350] sm:$0xf]
  %v234 = vld [vmem:[%s0 + $0x354] sm:$0xf]
  %v235 = vld [vmem:[%s0 + $0x358] sm:$0xf]
  %v236 = vld [vmem:[%s0 + $0x35c] sm:$0xf]
  %v237 = vld [vmem:[%s0 + $0x360] sm:$0xf]
  %v238 = vld [vmem:[%s0 + $0x364] sm:$0xf]
  %v239 = vld [vmem:[%s0 + $0x368] sm:$0xf]
  %v240 = vld [vmem:[%s0 + $0x36c] sm:$0xf]
  %v241 = vld [vmem:[%s0 + $0x370] sm:$0xf]
  %v242 = vld [vmem:[%s0 + $0x374] sm:$0xf]
  %v243 = vld [vmem:[%s0 + $0x378] sm:$0xf]
  %v244 = vld [vmem:[%s0 + $0x37c] sm:$0xf]
  %v245 = vld [vmem:[%s0 + $0x380] sm:$0xf]
  %v246 = vld [vmem:[%s0 + $0x384] sm:$0xf]
  %v247 = vld [vmem:[%s0 + $0x388] sm:$0xf]
  %v248 = vld [vmem:[%s0 + $0x38c] sm:$0xf]
  %v249 = vld [vmem:[%s0 + $0x390] sm:$0xf]
  %v250 = vld [vmem:[%s0 + $0x394] sm:$0xf]
  %v251 = vld [vmem:[%s0 + $0x398] sm:$0xf]
  %v252 = vld [vmem:[%s0 + $0x39c] sm:$0xf]
  %v253 = vld [vmem:[%s0 + $0x3a0] sm:$0xf]
  %v254 = vld [vmem:[%s0 + $0x3a4] sm:$0xf]
  %v255 = vld [vmem:[%s0 + $0x3a8] sm:$0xf]
  %v256 = vld [vmem:[%s0 + $0x3ac] sm:$0xf]
  %v257 = vld [vmem:[%s0 + $0x3b0] sm:$0xf]
  %v258 = vld [vmem:[%s0 + $0x3b4] sm:$0xf]
  %v259 = vld [vmem:[%s0 + $0x3b8] sm:$0xf]
  %v260 = vld [vmem:[%s0 + $0x3bc] sm:$0xf]
  %v261 = vld [vmem:[%s0 + $0x3c0] sm:$0xf]
  %v262 = vld [vmem:[%s0 + $0x3c4] sm:$0xf]
  %v263 = vld [vmem:[%s0 + $0x3c8] sm:$0xf]
  %v264 = vld [vmem:[%s0 + $0x3cc] sm:$0xf]
  %v265 = vld [vmem:[%s0 + $0x3d0] sm:$0xf]
  %v266 = vld [vmem:[%s0 + $0x3d4] sm:$0xf]
  %v267 = vld [vmem:[%s0 + $0x3d8] sm:$0xf]
  %v268 = vld [vmem:[%s0 + $0x3dc] sm:$0xf]
  %v269 = vld [vmem:[%s0 + $0x3e0] sm:$0xf]
  %v270 = vld [vmem:[%s0 + $0x3e4] sm:$0xf]
  %v271 = vld [vmem:[%s0 + $0x3e8] sm:$0xf]
  %v272 = vld [vmem:[%s0 + $0x3ec] sm:$0xf]
  %v273 = vld [vmem:[%s0 + $0x3f0] sm:$0xf]
  %v274 = vld [vmem:[%s0 + $0x3f4] sm:$0xf]
  %v275 = vld [vmem:[%s0 + $0x3f8] sm:$0xf]
  %v276 = vld [vmem:[%s0 + $0x3fc] sm:$0xf]
  %v277 = vld [vmem:[%s0 + $0x400] sm:$0xf]
  %v278 = vld [vmem:[%s0 + $0x404] sm:$0xf]
  %v279 = vld [vmem:[%s0 + $0x408] sm:$0xf]
  %v280 = vld [vmem:[%s0 + $0x40c] sm:$0xf]
  %v281 = vld [vmem:[%s0 + $0x410] sm:$0xf]
  %v282 = vld [vmem:[%s0 + $0x414] sm:$0xf]
  %v283 = vld [vmem:[%s0 + $0x418] sm:$0xf]
  %v284 = vld [vmem:[%s0 + $0x41c] sm:$0xf]
  %v285 = vld [vmem:[%s0 + $0x420] sm:$0xf]
  %v286 = vld [vmem:[%s0 + $0x424] sm:$0xf]
  %v287 = vld [vmem:[%s0 + $0x428] sm:$0xf]
  %v288 = vld [vmem:[%s0 + $0x42c] sm:$0xf]
  %v289 = vld [vmem:[%s0 + $0x430] sm:$0xf]
  %v290 = vld [vmem:[%s0 + $0x434] sm:$0xf]
  %v291 = vld [vmem:[%s0 + $0x438] sm:$0xf]
  %v292 = vld [vmem:[%s0 + $0x43c] sm:$0xf]
  %v293 = vld [vmem:[%s0 + $0x440] sm:$0xf]
  %v294 = vld [vmem:[%s0 + $0x444] sm:$0xf]
  %v295 = vld [vmem:[%s0 + $0x448] sm:$0xf]
  %v296 = vld [vmem:[%s0 + $0x44c] sm:$0xf]
  %v297 = vld [vmem:[%s0 + $0x450] sm:$0xf]
  %v298 = vld [vmem:[%s0 + $0x454] sm:$0xf]
  %v299 = vld [vmem:[%s0 + $0x458] sm:$0xf]
  %v300 = vld [vmem:[%s0 + $0x45c] sm:$0xf]
  %v301 = vld [vmem:[%s0 + $0x460] sm:$0xf]
  %v302 = vld [vmem:[%s0 + $0x464] sm:$0xf]
  %v303 = vld [vmem:[%s0 + $0x468] sm:$0xf]
  %v304 = vld [vmem:[%s0 + $0x46c] sm:$0xf]
  %v305 = vld [vmem:[%s0 + $0x470] sm:$0xf]
  %v306 = vld [vmem:[%s0 + $0x474] sm:$0xf]
  %v307 = vld [vmem:[%s0 + $0x478] sm:$0xf]
  %v308 = vld [vmem:[%s0 + $0x47c] sm:$0xf]
  %v309 = vld [vmem:[%s1] sm:$0xf]
  %v310 = vld [vmem:[%s1 + $0x4] sm:$0xf]
  %v311 = vld [vmem:[%s1 + $0x8] sm:$0xf]
  %v312 = vld [vmem:[%s1 + $0xc] sm:$0xf]
  %v313 = vld [vmem:[%s1 + $0x10] sm:$0xf]
  %v314 = vld [vmem:[%s1 + $0x14] sm:$0xf]
  %v315 = vld [vmem:[%s1 + $0x18] sm:$0xf]
  %v316 = vld [vmem:[%s1 + $0x1c] sm:$0xf]
  %v317 = vld [vmem:[%s1 + $0x20] sm:$0xf]
  %v318 = vld [vmem:[%s1 + $0x24] sm:$0xf]
  %v319 = vld [vmem:[%s1 + $0x28] sm:$0xf]
  %v320 = vld [vmem:[%s1 + $0x2c] sm:$0xf]
  %v321 = vld [vmem:[%s1 + $0x30] sm:$0xf]
  %v322 = vld [vmem:[%s1 + $0x34] sm:$0xf]
  %v323 = vld [vmem:[%s1 + $0x38] sm:$0xf]
  %v324 = vld [vmem:[%s1 + $0x3c] sm:$0xf]
  %v325 = vld [vmem:[%s1 + $0x40] sm:$0xf]
  %v326 = vld [vmem:[%s1 + $0x44] sm:$0xf]
  %v327 = vld [vmem:[%s1 + $0x48] sm:$0xf]
  %v328 = vld [vmem:[%s1 + $0x4c] sm:$0xf]
  %v329 = vld [vmem:[%s1 + $0x50] sm:$0xf]
  %v330 = vld [vmem:[%s1 + $0x54] sm:$0xf]
  %v331 = vld [vmem:[%s1 + $0x58] sm:$0xf]
  %v332 = vld [vmem:[%s1 + $0x5c] sm:$0xf]
  %v333 = vld [vmem:[%s1 + $0x60] sm:$0xf]
  %v334 = vld [vmem:[%s1 + $0x64] sm:$0xf]
  %v335 = vld [vmem:[%s1 + $0x68] sm:$0xf]
  %v336 = vld [vmem:[%s1 + $0x6c] sm:$0xf]
  %v337 = vld [vmem:[%s1 + $0x70] sm:$0xf]
  %v338 = vld [vmem:[%s1 + $0x74] sm:$0xf]
  %v339 = vld [vmem:[%s1 + $0x78] sm:$0xf]
  %v340 = vld [vmem:[%s1 + $0x7c] sm:$0xf]
  %v341 = vld [vmem:[%s1 + $0x80] sm:$0xf]
  %v342 = vld [vmem:[%s1 + $0x84] sm:$0xf]
  %v343 = vld [vmem:[%s1 + $0x88] sm:$0xf]
  %v344 = vld [vmem:[%s1 + $0x8c] sm:$0xf]
  %v345 = vld [vmem:[%s1 + $0x90] sm:$0xf]
  %v346 = vld [vmem:[%s1 + $0x94] sm:$0xf]
  %v347 = vld [vmem:[%s1 + $0x98] sm:$0xf]
  %v348 = vld [vmem:[%s1 + $0x9c] sm:$0xf]
  %v349 = vld [vmem:[%s1 + $0xa0] sm:$0xf]
  %v350 = vld [vmem:[%s1 + $0xa4] sm:$0xf]
  %v351 = vld [vmem:[%s1 + $0xa8] sm:$0xf]
  %v352 = vld [vmem:[%s1 + $0xac] sm:$0xf]
  %v353 = vld [vmem:[%s1 + $0xb0] sm:$0xf]
  %v354 = vld [vmem:[%s1 + $0xb4] sm:$0xf]
  %v355 = vld [vmem:[%s1 + $0xb8] sm:$0xf]
  %v356 = vld [vmem:[%s1 + $0xbc] sm:$0xf]
  %v357 = vld [vmem:[%s1 + $0xc0] sm:$0xf]
  %v358 = vld [vmem:[%s1 + $0xc4] sm:$0xf]
  %v359 = vld [vmem:[%s1 + $0xc8] sm:$0xf]
  %v360 = vld [vmem:[%s1 + $0xcc] sm:$0xf]
  %v361 = vld [vmem:[%s1 + $0xd0] sm:$0xf]
  %v362 = vld [vmem:[%s1 + $0xd4] sm:$0xf]
  %v363 = vld [vmem:[%s1 + $0xd8] sm:$0xf]
  %v364 = vld [vmem:[%s1 + $0xdc] sm:$0xf]
  %v365 = vld [vmem:[%s1 + $0xe0] sm:$0xf]
  %v366 = vld [vmem:[%s1 + $0xe4] sm:$0xf]
  %v367 = vld [vmem:[%s1 + $0xe8] sm:$0xf]
  %v368 = vld [vmem:[%s1 + $0xec] sm:$0xf]
  %v369 = vld [vmem:[%s1 + $0xf0] sm:$0xf]
  %v370 = vld [vmem:[%s1 + $0xf4] sm:$0xf]
  %v371 = vld [vmem:[%s1 + $0xf8] sm:$0xf]
  %v372 = vld [vmem:[%s1 + $0xfc] sm:$0xf]
  %v373 = vld [vmem:[%s1 + $0x100] sm:$0xf]
  %v374 = vld [vmem:[%s1 + $0x104] sm:$0xf]
  %v375 = vld [vmem:[%s1 + $0x108] sm:$0xf]
  %v376 = vld [vmem:[%s1 + $0x10c] sm:$0xf]
  %v377 = vld [vmem:[%s1 + $0x110] sm:$0xf]
  %v378 = vld [vmem:[%s1 + $0x114] sm:$0xf]
  %v379 = vld [vmem:[%s1 + $0x118] sm:$0xf]
  %v380 = vld [vmem:[%s1 + $0x11c] sm:$0xf]
  %v381 = vld [vmem:[%s1 + $0x120] sm:$0xf]
  %v382 = vld [vmem:[%s1 + $0x124] sm:$0xf]
  %v383 = vld [vmem:[%s1 + $0x128] sm:$0xf]
  %v384 = vld [vmem:[%s1 + $0x12c] sm:$0xf]
  %v385 = vld [vmem:[%s1 + $0x130] sm:$0xf]
  %v386 = vld [vmem:[%s1 + $0x134] sm:$0xf]
  %v387 = vld [vmem:[%s1 + $0x138] sm:$0xf]
  %v388 = vld [vmem:[%s1 + $0x13c] sm:$0xf]
  %v389 = vld [vmem:[%s1 + $0x140] sm:$0xf]
  %v390 = vld [vmem:[%s1 + $0x144] sm:$0xf]
  %v391 = vld [vmem:[%s1 + $0x148] sm:$0xf]
  %v392 = vld [vmem:[%s1 + $0x14c] sm:$0xf]
  %v393 = vld [vmem:[%s1 + $0x150] sm:$0xf]
  %v394 = vld [vmem:[%s1 + $0x154] sm:$0xf]
  %v395 = vld [vmem:[%s1 + $0x158] sm:$0xf]
  %v396 = vld [vmem:[%s1 + $0x15c] sm:$0xf]
  %v397 = vld [vmem:[%s1 + $0x160] sm:$0xf]
  %v398 = vld [vmem:[%s1 + $0x164] sm:$0xf]
  %v399 = vld [vmem:[%s1 + $0x168] sm:$0xf]
  %v400 = vld [vmem:[%s1 + $0x16c] sm:$0xf]
  %v401 = vld [vmem:[%s1 + $0x170] sm:$0xf]
  %v402 = vld [vmem:[%s1 + $0x174] sm:$0xf]
  %v403 = vld [vmem:[%s1 + $0x178] sm:$0xf]
  %v404 = vld [vmem:[%s1 + $0x17c] sm:$0xf]
  %v405 = vld [vmem:[%s1 + $0x180] sm:$0xf]
  %v406 = vld [vmem:[%s1 + $0x184] sm:$0xf]
  %v407 = vld [vmem:[%s1 + $0x188] sm:$0xf]
  %v408 = vld [vmem:[%s1 + $0x18c] sm:$0xf]
  %v409 = vld [vmem:[%s1 + $0x190] sm:$0xf]
  %v410 = vld [vmem:[%s1 + $0x194] sm:$0xf]
  %v411 = vld [vmem:[%s1 + $0x198] sm:$0xf]
  %v412 = vld [vmem:[%s1 + $0x19c] sm:$0xf]
  %v413 = vld [vmem:[%s1 + $0x1a0] sm:$0xf]
  %v414 = vld [vmem:[%s1 + $0x1a4] sm:$0xf]
  %v415 = vld [vmem:[%s1 + $0x1a8] sm:$0xf]
  %v416 = vld [vmem:[%s1 + $0x1ac] sm:$0xf]
  %v417 = vld [vmem:[%s1 + $0x1b0] sm:$0xf]
  %v418 = vld [vmem:[%s1 + $0x1b4] sm:$0xf]
  %v419 = vld [vmem:[%s1 + $0x1b8] sm:$0xf]
  %v420 = vld [vmem:[%s1 + $0x1bc] sm:$0xf]
  %v421 = vld [vmem:[%s1 + $0x1c0] sm:$0xf]
  %v422 = vld [vmem:[%s1 + $0x1c4] sm:$0xf]
  %v423 = vld [vmem:[%s1 + $0x1c8] sm:$0xf]
  %v424 = vld [vmem:[%s1 + $0x1cc] sm:$0xf]
  %v425 = vld [vmem:[%s1 + $0x1d0] sm:$0xf]
  %v426 = vld [vmem:[%s1 + $0x1d4] sm:$0xf]
  %v427 = vld [vmem:[%s1 + $0x1d8] sm:$0xf]
  %v428 = vld [vmem:[%s1 + $0x1dc] sm:$0xf]
  %v429 = vld [vmem:[%s1 + $0x1e0] sm:$0xf]
  %v430 = vld [vmem:[%s1 + $0x1e4] sm:$0xf]
  %v431 = vld [vmem:[%s1 + $0x1e8] sm:$0xf]
  %v432 = vld [vmem:[%s1 + $0x1ec] sm:$0xf]
  %v433 = vld [vmem:[%s1 + $0x1f0] sm:$0xf]
  %v434 = vld [vmem:[%s1 + $0x1f4] sm:$0xf]
  %v435 = vld [vmem:[%s1 + $0x1f8] sm:$0xf]
  %v436 = vld [vmem:[%s1 + $0x1fc] sm:$0xf]
  %v437 = vld [vmem:[%s1 + $0x200] sm:$0xf]
  %v438 = vld [vmem:[%s1 + $0x204] sm:$0xf]
  %v439 = vld [vmem:[%s1 + $0x208] sm:$0xf]
  %v440 = vld [vmem:[%s1 + $0x20c] sm:$0xf]
  %v441 = vld [vmem:[%s1 + $0x210] sm:$0xf]
  %v442 = vld [vmem:[%s1 + $0x214] sm:$0xf]
  %v443 = vld [vmem:[%s1 + $0x218] sm:$0xf]
  %v444 = vld [vmem:[%s1 + $0x21c] sm:$0xf]
  %v445 = vld [vmem:[%s1 + $0x220] sm:$0xf]
  %v446 = vld [vmem:[%s1 + $0x224] sm:$0xf]
  %v447 = vld [vmem:[%s1 + $0x228] sm:$0xf]
  %v448 = vld [vmem:[%s1 + $0x22c] sm:$0xf]
  %v449 = vld [vmem:[%s1 + $0x230] sm:$0xf]
  %v450 = vld [vmem:[%s1 + $0x234] sm:$0xf]
  %v451 = vld [vmem:[%s1 + $0x238] sm:$0xf]
  %v452 = vld [vmem:[%s1 + $0x23c] sm:$0xf]
  %v453 = vld [vmem:[%s1 + $0x240] sm:$0xf]
  %v454 = vld [vmem:[%s1 + $0x244] sm:$0xf]
  %v455 = vld [vmem:[%s1 + $0x248] sm:$0xf]
  %v456 = vld [vmem:[%s1 + $0x24c] sm:$0xf]
  %v457 = vld [vmem:[%s1 + $0x250] sm:$0xf]
  %v458 = vld [vmem:[%s1 + $0x254] sm:$0xf]
  %v459 = vld [vmem:[%s1 + $0x258] sm:$0xf]
  %v460 = vld [vmem:[%s1 + $0x25c] sm:$0xf]
  %v461 = vld [vmem:[%s1 + $0x260] sm:$0xf]
  %v462 = vld [vmem:[%s1 + $0x264] sm:$0xf]
  %v463 = vld [vmem:[%s1 + $0x268] sm:$0xf]
  %v464 = vld [vmem:[%s1 + $0x26c] sm:$0xf]
  %v465 = vld [vmem:[%s1 + $0x270] sm:$0xf]
  %v466 = vld [vmem:[%s1 + $0x274] sm:$0xf]
  %v467 = vld [vmem:[%s1 + $0x278] sm:$0xf]
  %v468 = vld [vmem:[%s1 + $0x27c] sm:$0xf]
  %v469 = vld [vmem:[%s1 + $0x280] sm:$0xf]
  %v470 = vld [vmem:[%s1 + $0x284] sm:$0xf]
  %v471 = vld [vmem:[%s1 + $0x288] sm:$0xf]
  %v472 = vld [vmem:[%s1 + $0x28c] sm:$0xf]
  %v473 = vld [vmem:[%s1 + $0x290] sm:$0xf]
  %v474 = vld [vmem:[%s1 + $0x294] sm:$0xf]
  %v475 = vld [vmem:[%s1 + $0x298] sm:$0xf]
  %v476 = vld [vmem:[%s1 + $0x29c] sm:$0xf]
  %v477 = vld [vmem:[%s1 + $0x2a0] sm:$0xf]
  %v478 = vld [vmem:[%s1 + $0x2a4] sm:$0xf]
  %v479 = vld [vmem:[%s1 + $0x2a8] sm:$0xf]
  %v480 = vld [vmem:[%s1 + $0x2ac] sm:$0xf]
  %v481 = vld [vmem:[%s1 + $0x2b0] sm:$0xf]
  %v482 = vld [vmem:[%s1 + $0x2b4] sm:$0xf]
  %v483 = vld [vmem:[%s1 + $0x2b8] sm:$0xf]
  %v484 = vld [vmem:[%s1 + $0x2bc] sm:$0xf]
  %v485 = vld [vmem:[%s1 + $0x2c0] sm:$0xf]
  %v486 = vld [vmem:[%s1 + $0x2c4] sm:$0xf]
  %v487 = vld [vmem:[%s1 + $0x2c8] sm:$0xf]
  %v488 = vld [vmem:[%s1 + $0x2cc] sm:$0xf]
  %v489 = vld [vmem:[%s1 + $0x2d0] sm:$0xf]
  %v490 = vld [vmem:[%s1 + $0x2d4] sm:$0xf]
  %v491 = vld [vmem:[%s1 + $0x2d8] sm:$0xf]
  %v492 = vld [vmem:[%s1 + $0x2dc] sm:$0xf]
  %v493 = vld [vmem:[%s1 + $0x2e0] sm:$0xf]
  %v494 = vld [vmem:[%s1 + $0x2e4] sm:$0xf]
  %v495 = vld [vmem:[%s1 + $0x2e8] sm:$0xf]
  %v496 = vld [vmem:[%s1 + $0x2ec] sm:$0xf]
  %v497 = vld [vmem:[%s1 + $0x2f0] sm:$0xf]
  %v498 = vld [vmem:[%s1 + $0x2f4] sm:$0xf]
  %v499 = vld [vmem:[%s1 + $0x2f8] sm:$0xf]
  %v500 = vld [vmem:[%s1 + $0x2fc] sm:$0xf]
  %v501 = vld [vmem:[%s1 + $0x300] sm:$0xf]
  %v502 = vld [vmem:[%s1 + $0x304] sm:$0xf]
  %v503 = vld [vmem:[%s1 + $0x308] sm:$0xf]
  %v504 = vld [vmem:[%s1 + $0x30c] sm:$0xf]
  %v505 = vld [vmem:[%s1 + $0x310] sm:$0xf]
  %v506 = vld [vmem:[%s1 + $0x314] sm:$0xf]
  %v507 = vld [vmem:[%s1 + $0x318] sm:$0xf]
  %v508 = vld [vmem:[%s1 + $0x31c] sm:$0xf]
  %v509 = vld [vmem:[%s1 + $0x320] sm:$0xf]
  %v510 = vld [vmem:[%s1 + $0x324] sm:$0xf]
  %v511 = vld [vmem:[%s1 + $0x328] sm:$0xf]
  %v512 = vld [vmem:[%s1 + $0x32c] sm:$0xf]
  %v513 = vld [vmem:[%s1 + $0x330] sm:$0xf]
  %v514 = vld [vmem:[%s1 + $0x334] sm:$0xf]
  %v515 = vld [vmem:[%s1 + $0x338] sm:$0xf]
  %v516 = vld [vmem:[%s1 + $0x33c] sm:$0xf]
  %v517 = vld [vmem:[%s1 + $0x340] sm:$0xf]
  %v518 = vld [vmem:[%s1 + $0x344] sm:$0xf]
  %v519 = vld [vmem:[%s1 + $0x348] sm:$0xf]
  %v520 = vld [vmem:[%s1 + $0x34c] sm:$0xf]
  %v521 = vld [vmem:[%s1 + $0x350] sm:$0xf]
  %v522 = vld [vmem:[%s1 + $0x354] sm:$0xf]
  %v523 = vld [vmem:[%s1 + $0x358] sm:$0xf]
  %v524 = vld [vmem:[%s1 + $0x35c] sm:$0xf]
  %v525 = vld [vmem:[%s1 + $0x360] sm:$0xf]
  %v526 = vld [vmem:[%s1 + $0x364] sm:$0xf]
  %v527 = vld [vmem:[%s1 + $0x368] sm:$0xf]
  %v528 = vld [vmem:[%s1 + $0x36c] sm:$0xf]
  %v529 = vld [vmem:[%s1 + $0x370] sm:$0xf]
  %v530 = vld [vmem:[%s1 + $0x374] sm:$0xf]
  %v531 = vld [vmem:[%s1 + $0x378] sm:$0xf]
  %v532 = vld [vmem:[%s1 + $0x37c] sm:$0xf]
  %v533 = vld [vmem:[%s1 + $0x380] sm:$0xf]
  %v534 = vld [vmem:[%s1 + $0x384] sm:$0xf]
  %v535 = vld [vmem:[%s1 + $0x388] sm:$0xf]
  %v536 = vld [vmem:[%s1 + $0x38c] sm:$0xf]
  %v537 = vld [vmem:[%s1 + $0x390] sm:$0xf]
  %v538 = vld [vmem:[%s1 + $0x394] sm:$0xf]
  %v539 = vld [vmem:[%s1 + $0x398] sm:$0xf]
  %v540 = vld [vmem:[%s1 + $0x39c] sm:$0xf]
  %v541 = vld [vmem:[%s1 + $0x3a0] sm:$0xf]
  %v542 = vld [vmem:[%s1 + $0x3a4] sm:$0xf]
  %v543 = vld [vmem:[%s1 + $0x3a8] sm:$0xf]
  %v544 = vld [vmem:[%s1 + $0x3ac] sm:$0xf]
  %v545 = vld [vmem:[%s1 + $0x3b0] sm:$0xf]
  %v546 = vld [vmem:[%s1 + $0x3b4] sm:$0xf]
  %v547 = vld [vmem:[%s1 + $0x3b8] sm:$0xf]
  %v548 = vld [vmem:[%s1 + $0x3bc] sm:$0xf]
  %v549 = vld [vmem:[%s1 + $0x3c0] sm:$0xf]
  %v550 = vld [vmem:[%s1 + $0x3c4] sm:$0xf]
  %v551 = vld [vmem:[%s1 + $0x3c8] sm:$0xf]
  %v552 = vld [vmem:[%s1 + $0x3cc] sm:$0xf]
  %v553 = vld [vmem:[%s1 + $0x3d0] sm:$0xf]
  %v554 = vld [vmem:[%s1 + $0x3d4] sm:$0xf]
  %v555 = vld [vmem:[%s1 + $0x3d8] sm:$0xf]
  %v556 = vld [vmem:[%s1 + $0x3dc] sm:$0xf]
  %v557 = vld [vmem:[%s1 + $0x3e0] sm:$0xf]
  %v558 = vld [vmem:[%s1 + $0x3e4] sm:$0xf]
  %v559 = vld [vmem:[%s1 + $0x3e8] sm:$0xf]
  %v560 = vld [vmem:[%s1 + $0x3ec] sm:$0xf]
  %v561 = vld [vmem:[%s1 + $0x3f0] sm:$0xf]
  %v562 = vld [vmem:[%s1 + $0x3f4] sm:$0xf]
  %v563 = vld [vmem:[%s1 + $0x3f8] sm:$0xf]
  %v564 = vld [vmem:[%s1 + $0x3fc] sm:$0xf]
  %v565 = vld [vmem:[%s1 + $0x400] sm:$0xf]
  %v566 = vld [vmem:[%s1 + $0x404] sm:$0xf]
  %v567 = vld [vmem:[%s1 + $0x408] sm:$0xf]
  %v568 = vld [vmem:[%s1 + $0x40c] sm:$0xf]
  %v569 = vld [vmem:[%s1 + $0x410] sm:$0xf]
  %v570 = vld [vmem:[%s1 + $0x414] sm:$0xf]
  %v571 = vld [vmem:[%s1 + $0x418] sm:$0xf]
  %v572 = vld [vmem:[%s1 + $0x41c] sm:$0xf]
  %v573 = vld [vmem:[%s1 + $0x420] sm:$0xf]
  %v574 = vld [vmem:[%s1 + $0x424] sm:$0xf]
  %v575 = vld [vmem:[%s1 + $0x428] sm:$0xf]
  %v576 = vld [vmem:[%s1 + $0x42c] sm:$0xf]
  %v577 = vld [vmem:[%s1 + $0x430] sm:$0xf]
  %v578 = vld [vmem:[%s1 + $0x434] sm:$0xf]
  %v579 = vld [vmem:[%s1 + $0x438] sm:$0xf]
  %v580 = vld [vmem:[%s1 + $0x43c] sm:$0xf]
  %v581 = vld [vmem:[%s1 + $0x440] sm:$0xf]
  %v582 = vld [vmem:[%s1 + $0x444] sm:$0xf]
  %v583 = vld [vmem:[%s1 + $0x448] sm:$0xf]
  %v584 = vld [vmem:[%s1 + $0x44c] sm:$0xf]
  %v585 = vld [vmem:[%s1 + $0x450] sm:$0xf]
  %v586 = vld [vmem:[%s1 + $0x454] sm:$0xf]
  %v587 = vld [vmem:[%s1 + $0x458] sm:$0xf]
  %v588 = vld [vmem:[%s1 + $0x45c] sm:$0xf]
  %v589 = vld [vmem:[%s1 + $0x460] sm:$0xf]
  %v590 = vld [vmem:[%s1 + $0x464] sm:$0xf]
  %v591 = vld [vmem:[%s1 + $0x468] sm:$0xf]
  %v592 = vld [vmem:[%s1 + $0x46c] sm:$0xf]
  %v593 = vld [vmem:[%s1 + $0x470] sm:$0xf]
  %v594 = vld [vmem:[%s1 + $0x474] sm:$0xf]
  %v595 = vld [vmem:[%s1 + $0x478] sm:$0xf]
  %v596 = vld [vmem:[%s1 + $0x47c] sm:$0xf]
  %598 = vset.pattern.permute.xlu0 0
  %599 = vperm.xlu0 %598, %v309
  %v600 = vpop.permute.xlu0 %599
  %v603 = vunpack.c.l.s4 839922192
  %v604 = vunpack.c.0.s8 %v603
  %v605 = vlaneseq
  %v606 = vshrl.u32 %v605, 7
  %v607 = vsub.s32 %v604, %v606
  %v608 = vrot.slane %v600, %v607
  %610 = vset.pattern.permute.xlu0 0
  %611 = vperm.xlu0 %610, %v310
  %v612 = vpop.permute.xlu0 %611
  %v615 = vunpack.c.l.s4 839922192
  %v616 = vunpack.c.0.s8 %v615
  %v617 = vlaneseq
  %v618 = vshrl.u32 %v617, 7
  %v619 = vsub.s32 %v616, %v618
  %v620 = vrot.slane %v612, %v619
  %622 = vset.pattern.permute.xlu0 0
  %623 = vperm.xlu0 %622, %v311
  %v624 = vpop.permute.xlu0 %623
  %v627 = vunpack.c.l.s4 839922192
  %v628 = vunpack.c.0.s8 %v627
  %v629 = vlaneseq
  %v630 = vshrl.u32 %v629, 7
  %v631 = vsub.s32 %v628, %v630
  %v632 = vrot.slane %v624, %v631
  %634 = vset.pattern.permute.xlu0 0
  %635 = vperm.xlu0 %634, %v312
  %v636 = vpop.permute.xlu0 %635
  %v639 = vunpack.c.l.s4 839922192
  %v640 = vunpack.c.0.s8 %v639
  %v641 = vlaneseq
  %v642 = vshrl.u32 %v641, 7
  %v643 = vsub.s32 %v640, %v642
  %v644 = vrot.slane %v636, %v643
  %646 = vset.pattern.permute.xlu0 0
  %647 = vperm.xlu0 %646, %v313
  %v648 = vpop.permute.xlu0 %647
  %v651 = vunpack.c.l.s4 839922192
  %v652 = vunpack.c.0.s8 %v651
  %v653 = vlaneseq
  %v654 = vshrl.u32 %v653, 7
  %v655 = vsub.s32 %v652, %v654
  %v656 = vrot.slane %v648, %v655
  %658 = vset.pattern.permute.xlu0 0
  %659 = vperm.xlu0 %658, %v314
  %v660 = vpop.permute.xlu0 %659
  %v663 = vunpack.c.l.s4 839922192
  %v664 = vunpack.c.0.s8 %v663
  %v665 = vlaneseq
  %v666 = vshrl.u32 %v665, 7
  %v667 = vsub.s32 %v664, %v666
  %v668 = vrot.slane %v660, %v667
  %670 = vset.pattern.permute.xlu0 0
  %671 = vperm.xlu0 %670, %v315
  %v672 = vpop.permute.xlu0 %671
  %v675 = vunpack.c.l.s4 839922192
  %v676 = vunpack.c.0.s8 %v675
  %v677 = vlaneseq
  %v678 = vshrl.u32 %v677, 7
  %v679 = vsub.s32 %v676, %v678
  %v680 = vrot.slane %v672, %v679
  %682 = vset.pattern.permute.xlu0 0
  %683 = vperm.xlu0 %682, %v316
  %v684 = vpop.permute.xlu0 %683
  %v687 = vunpack.c.l.s4 839922192
  %v688 = vunpack.c.0.s8 %v687
  %v689 = vlaneseq
  %v690 = vshrl.u32 %v689, 7
  %v691 = vsub.s32 %v688, %v690
  %v692 = vrot.slane %v684, %v691
  %694 = vset.pattern.permute.xlu0 0
  %695 = vperm.xlu0 %694, %v317
  %v696 = vpop.permute.xlu0 %695
  %v699 = vunpack.c.l.s4 839922192
  %v700 = vunpack.c.0.s8 %v699
  %v701 = vlaneseq
  %v702 = vshrl.u32 %v701, 7
  %v703 = vsub.s32 %v700, %v702
  %v704 = vrot.slane %v696, %v703
  %706 = vset.pattern.permute.xlu0 0
  %707 = vperm.xlu0 %706, %v318
  %v708 = vpop.permute.xlu0 %707
  %v711 = vunpack.c.l.s4 839922192
  %v712 = vunpack.c.0.s8 %v711
  %v713 = vlaneseq
  %v714 = vshrl.u32 %v713, 7
  %v715 = vsub.s32 %v712, %v714
  %v716 = vrot.slane %v708, %v715
  %718 = vset.pattern.permute.xlu0 0
  %719 = vperm.xlu0 %718, %v319
  %v720 = vpop.permute.xlu0 %719
  %v723 = vunpack.c.l.s4 839922192
  %v724 = vunpack.c.0.s8 %v723
  %v725 = vlaneseq
  %v726 = vshrl.u32 %v725, 7
  %v727 = vsub.s32 %v724, %v726
  %v728 = vrot.slane %v720, %v727
  %730 = vset.pattern.permute.xlu0 0
  %731 = vperm.xlu0 %730, %v320
  %v732 = vpop.permute.xlu0 %731
  %v735 = vunpack.c.l.s4 839922192
  %v736 = vunpack.c.0.s8 %v735
  %v737 = vlaneseq
  %v738 = vshrl.u32 %v737, 7
  %v739 = vsub.s32 %v736, %v738
  %v740 = vrot.slane %v732, %v739
  %742 = vset.pattern.permute.xlu0 0
  %743 = vperm.xlu0 %742, %v321
  %v744 = vpop.permute.xlu0 %743
  %v747 = vunpack.c.l.s4 839922192
  %v748 = vunpack.c.0.s8 %v747
  %v749 = vlaneseq
  %v750 = vshrl.u32 %v749, 7
  %v751 = vsub.s32 %v748, %v750
  %v752 = vrot.slane %v744, %v751
  %754 = vset.pattern.permute.xlu0 0
  %755 = vperm.xlu0 %754, %v322
  %v756 = vpop.permute.xlu0 %755
  %v759 = vunpack.c.l.s4 839922192
  %v760 = vunpack.c.0.s8 %v759
  %v761 = vlaneseq
  %v762 = vshrl.u32 %v761, 7
  %v763 = vsub.s32 %v760, %v762
  %v764 = vrot.slane %v756, %v763
  %766 = vset.pattern.permute.xlu0 0
  %767 = vperm.xlu0 %766, %v323
  %v768 = vpop.permute.xlu0 %767
  %v771 = vunpack.c.l.s4 839922192
  %v772 = vunpack.c.0.s8 %v771
  %v773 = vlaneseq
  %v774 = vshrl.u32 %v773, 7
  %v775 = vsub.s32 %v772, %v774
  %v776 = vrot.slane %v768, %v775
  %778 = vset.pattern.permute.xlu0 0
  %779 = vperm.xlu0 %778, %v324
  %v780 = vpop.permute.xlu0 %779
  %v783 = vunpack.c.l.s4 839922192
  %v784 = vunpack.c.0.s8 %v783
  %v785 = vlaneseq
  %v786 = vshrl.u32 %v785, 7
  %v787 = vsub.s32 %v784, %v786
  %v788 = vrot.slane %v780, %v787
  %790 = vset.pattern.permute.xlu0 0
  %791 = vperm.xlu0 %790, %v325
  %v792 = vpop.permute.xlu0 %791
  %v795 = vunpack.c.l.s4 839922192
  %v796 = vunpack.c.0.s8 %v795
  %v797 = vlaneseq
  %v798 = vshrl.u32 %v797, 7
  %v799 = vsub.s32 %v796, %v798
  %v800 = vrot.slane %v792, %v799
  %802 = vset.pattern.permute.xlu0 0
  %803 = vperm.xlu0 %802, %v326
  %v804 = vpop.permute.xlu0 %803
  %v807 = vunpack.c.l.s4 839922192
  %v808 = vunpack.c.0.s8 %v807
  %v809 = vlaneseq
  %v810 = vshrl.u32 %v809, 7
  %v811 = vsub.s32 %v808, %v810
  %v812 = vrot.slane %v804, %v811
  %814 = vset.pattern.permute.xlu0 0
  %815 = vperm.xlu0 %814, %v327
  %v816 = vpop.permute.xlu0 %815
  %v819 = vunpack.c.l.s4 839922192
  %v820 = vunpack.c.0.s8 %v819
  %v821 = vlaneseq
  %v822 = vshrl.u32 %v821, 7
  %v823 = vsub.s32 %v820, %v822
  %v824 = vrot.slane %v816, %v823
  %826 = vset.pattern.permute.xlu0 0
  %827 = vperm.xlu0 %826, %v328
  %v828 = vpop.permute.xlu0 %827
  %v831 = vunpack.c.l.s4 839922192
  %v832 = vunpack.c.0.s8 %v831
  %v833 = vlaneseq
  %v834 = vshrl.u32 %v833, 7
  %v835 = vsub.s32 %v832, %v834
  %v836 = vrot.slane %v828, %v835
  %838 = vset.pattern.permute.xlu0 0
  %839 = vperm.xlu0 %838, %v329
  %v840 = vpop.permute.xlu0 %839
  %v843 = vunpack.c.l.s4 839922192
  %v844 = vunpack.c.0.s8 %v843
  %v845 = vlaneseq
  %v846 = vshrl.u32 %v845, 7
  %v847 = vsub.s32 %v844, %v846
  %v848 = vrot.slane %v840, %v847
  %850 = vset.pattern.permute.xlu0 0
  %851 = vperm.xlu0 %850, %v330
  %v852 = vpop.permute.xlu0 %851
  %v855 = vunpack.c.l.s4 839922192
  %v856 = vunpack.c.0.s8 %v855
  %v857 = vlaneseq
  %v858 = vshrl.u32 %v857, 7
  %v859 = vsub.s32 %v856, %v858
  %v860 = vrot.slane %v852, %v859
  %862 = vset.pattern.permute.xlu0 0
  %863 = vperm.xlu0 %862, %v331
  %v864 = vpop.permute.xlu0 %863
  %v867 = vunpack.c.l.s4 839922192
  %v868 = vunpack.c.0.s8 %v867
  %v869 = vlaneseq
  %v870 = vshrl.u32 %v869, 7
  %v871 = vsub.s32 %v868, %v870
  %v872 = vrot.slane %v864, %v871
  %874 = vset.pattern.permute.xlu0 0
  %875 = vperm.xlu0 %874, %v332
  %v876 = vpop.permute.xlu0 %875
  %v879 = vunpack.c.l.s4 839922192
  %v880 = vunpack.c.0.s8 %v879
  %v881 = vlaneseq
  %v882 = vshrl.u32 %v881, 7
  %v883 = vsub.s32 %v880, %v882
  %v884 = vrot.slane %v876, %v883
  %886 = vset.pattern.permute.xlu0 0
  %887 = vperm.xlu0 %886, %v333
  %v888 = vpop.permute.xlu0 %887
  %v891 = vunpack.c.l.s4 839922192
  %v892 = vunpack.c.0.s8 %v891
  %v893 = vlaneseq
  %v894 = vshrl.u32 %v893, 7
  %v895 = vsub.s32 %v892, %v894
  %v896 = vrot.slane %v888, %v895
  %898 = vset.pattern.permute.xlu0 0
  %899 = vperm.xlu0 %898, %v334
  %v900 = vpop.permute.xlu0 %899
  %v903 = vunpack.c.l.s4 839922192
  %v904 = vunpack.c.0.s8 %v903
  %v905 = vlaneseq
  %v906 = vshrl.u32 %v905, 7
  %v907 = vsub.s32 %v904, %v906
  %v908 = vrot.slane %v900, %v907
  %910 = vset.pattern.permute.xlu0 0
  %911 = vperm.xlu0 %910, %v335
  %v912 = vpop.permute.xlu0 %911
  %v915 = vunpack.c.l.s4 839922192
  %v916 = vunpack.c.0.s8 %v915
  %v917 = vlaneseq
  %v918 = vshrl.u32 %v917, 7
  %v919 = vsub.s32 %v916, %v918
  %v920 = vrot.slane %v912, %v919
  %922 = vset.pattern.permute.xlu0 0
  %923 = vperm.xlu0 %922, %v336
  %v924 = vpop.permute.xlu0 %923
  %v927 = vunpack.c.l.s4 839922192
  %v928 = vunpack.c.0.s8 %v927
  %v929 = vlaneseq
  %v930 = vshrl.u32 %v929, 7
  %v931 = vsub.s32 %v928, %v930
  %v932 = vrot.slane %v924, %v931
  %934 = vset.pattern.permute.xlu0 0
  %935 = vperm.xlu0 %934, %v337
  %v936 = vpop.permute.xlu0 %935
  %v939 = vunpack.c.l.s4 839922192
  %v940 = vunpack.c.0.s8 %v939
  %v941 = vlaneseq
  %v942 = vshrl.u32 %v941, 7
  %v943 = vsub.s32 %v940, %v942
  %v944 = vrot.slane %v936, %v943
  %946 = vset.pattern.permute.xlu0 0
  %947 = vperm.xlu0 %946, %v338
  %v948 = vpop.permute.xlu0 %947
  %v951 = vunpack.c.l.s4 839922192
  %v952 = vunpack.c.0.s8 %v951
  %v953 = vlaneseq
  %v954 = vshrl.u32 %v953, 7
  %v955 = vsub.s32 %v952, %v954
  %v956 = vrot.slane %v948, %v955
  %958 = vset.pattern.permute.xlu0 0
  %959 = vperm.xlu0 %958, %v339
  %v960 = vpop.permute.xlu0 %959
  %v963 = vunpack.c.l.s4 839922192
  %v964 = vunpack.c.0.s8 %v963
  %v965 = vlaneseq
  %v966 = vshrl.u32 %v965, 7
  %v967 = vsub.s32 %v964, %v966
  %v968 = vrot.slane %v960, %v967
  %970 = vset.pattern.permute.xlu0 0
  %971 = vperm.xlu0 %970, %v340
  %v972 = vpop.permute.xlu0 %971
  %v975 = vunpack.c.l.s4 839922192
  %v976 = vunpack.c.0.s8 %v975
  %v977 = vlaneseq
  %v978 = vshrl.u32 %v977, 7
  %v979 = vsub.s32 %v976, %v978
  %v980 = vrot.slane %v972, %v979
  %982 = vset.pattern.permute.xlu0 0
  %983 = vperm.xlu0 %982, %v341
  %v984 = vpop.permute.xlu0 %983
  %v987 = vunpack.c.l.s4 839922192
  %v988 = vunpack.c.0.s8 %v987
  %v989 = vlaneseq
  %v990 = vshrl.u32 %v989, 7
  %v991 = vsub.s32 %v988, %v990
  %v992 = vrot.slane %v984, %v991
  %994 = vset.pattern.permute.xlu0 0
  %995 = vperm.xlu0 %994, %v342
  %v996 = vpop.permute.xlu0 %995
  %v999 = vunpack.c.l.s4 839922192
  %v1000 = vunpack.c.0.s8 %v999
  %v1001 = vlaneseq
  %v1002 = vshrl.u32 %v1001, 7
  %v1003 = vsub.s32 %v1000, %v1002
  %v1004 = vrot.slane %v996, %v1003
  %1006 = vset.pattern.permute.xlu0 0
  %1007 = vperm.xlu0 %1006, %v343
  %v1008 = vpop.permute.xlu0 %1007
  %v1011 = vunpack.c.l.s4 839922192
  %v1012 = vunpack.c.0.s8 %v1011
  %v1013 = vlaneseq
  %v1014 = vshrl.u32 %v1013, 7
  %v1015 = vsub.s32 %v1012, %v1014
  %v1016 = vrot.slane %v1008, %v1015
  %1018 = vset.pattern.permute.xlu0 0
  %1019 = vperm.xlu0 %1018, %v344
  %v1020 = vpop.permute.xlu0 %1019
  %v1023 = vunpack.c.l.s4 839922192
  %v1024 = vunpack.c.0.s8 %v1023
  %v1025 = vlaneseq
  %v1026 = vshrl.u32 %v1025, 7
  %v1027 = vsub.s32 %v1024, %v1026
  %v1028 = vrot.slane %v1020, %v1027
  %1030 = vset.pattern.permute.xlu0 0
  %1031 = vperm.xlu0 %1030, %v345
  %v1032 = vpop.permute.xlu0 %1031
  %v1035 = vunpack.c.l.s4 839922192
  %v1036 = vunpack.c.0.s8 %v1035
  %v1037 = vlaneseq
  %v1038 = vshrl.u32 %v1037, 7
  %v1039 = vsub.s32 %v1036, %v1038
  %v1040 = vrot.slane %v1032, %v1039
  %1042 = vset.pattern.permute.xlu0 0
  %1043 = vperm.xlu0 %1042, %v346
  %v1044 = vpop.permute.xlu0 %1043
  %v1047 = vunpack.c.l.s4 839922192
  %v1048 = vunpack.c.0.s8 %v1047
  %v1049 = vlaneseq
  %v1050 = vshrl.u32 %v1049, 7
  %v1051 = vsub.s32 %v1048, %v1050
  %v1052 = vrot.slane %v1044, %v1051
  %1054 = vset.pattern.permute.xlu0 0
  %1055 = vperm.xlu0 %1054, %v347
  %v1056 = vpop.permute.xlu0 %1055
  %v1059 = vunpack.c.l.s4 839922192
  %v1060 = vunpack.c.0.s8 %v1059
  %v1061 = vlaneseq
  %v1062 = vshrl.u32 %v1061, 7
  %v1063 = vsub.s32 %v1060, %v1062
  %v1064 = vrot.slane %v1056, %v1063
  %1066 = vset.pattern.permute.xlu0 0
  %1067 = vperm.xlu0 %1066, %v348
  %v1068 = vpop.permute.xlu0 %1067
  %v1071 = vunpack.c.l.s4 839922192
  %v1072 = vunpack.c.0.s8 %v1071
  %v1073 = vlaneseq
  %v1074 = vshrl.u32 %v1073, 7
  %v1075 = vsub.s32 %v1072, %v1074
  %v1076 = vrot.slane %v1068, %v1075
  %1078 = vset.pattern.permute.xlu0 0
  %1079 = vperm.xlu0 %1078, %v349
  %v1080 = vpop.permute.xlu0 %1079
  %v1083 = vunpack.c.l.s4 839922192
  %v1084 = vunpack.c.0.s8 %v1083
  %v1085 = vlaneseq
  %v1086 = vshrl.u32 %v1085, 7
  %v1087 = vsub.s32 %v1084, %v1086
  %v1088 = vrot.slane %v1080, %v1087
  %1090 = vset.pattern.permute.xlu0 0
  %1091 = vperm.xlu0 %1090, %v350
  %v1092 = vpop.permute.xlu0 %1091
  %v1095 = vunpack.c.l.s4 839922192
  %v1096 = vunpack.c.0.s8 %v1095
  %v1097 = vlaneseq
  %v1098 = vshrl.u32 %v1097, 7
  %v1099 = vsub.s32 %v1096, %v1098
  %v1100 = vrot.slane %v1092, %v1099
  %1102 = vset.pattern.permute.xlu0 0
  %1103 = vperm.xlu0 %1102, %v351
  %v1104 = vpop.permute.xlu0 %1103
  %v1107 = vunpack.c.l.s4 839922192
  %v1108 = vunpack.c.0.s8 %v1107
  %v1109 = vlaneseq
  %v1110 = vshrl.u32 %v1109, 7
  %v1111 = vsub.s32 %v1108, %v1110
  %v1112 = vrot.slane %v1104, %v1111
  %1114 = vset.pattern.permute.xlu0 0
  %1115 = vperm.xlu0 %1114, %v352
  %v1116 = vpop.permute.xlu0 %1115
  %v1119 = vunpack.c.l.s4 839922192
  %v1120 = vunpack.c.0.s8 %v1119
  %v1121 = vlaneseq
  %v1122 = vshrl.u32 %v1121, 7
  %v1123 = vsub.s32 %v1120, %v1122
  %v1124 = vrot.slane %v1116, %v1123
  %1126 = vset.pattern.permute.xlu0 0
  %1127 = vperm.xlu0 %1126, %v353
  %v1128 = vpop.permute.xlu0 %1127
  %v1131 = vunpack.c.l.s4 839922192
  %v1132 = vunpack.c.0.s8 %v1131
  %v1133 = vlaneseq
  %v1134 = vshrl.u32 %v1133, 7
  %v1135 = vsub.s32 %v1132, %v1134
  %v1136 = vrot.slane %v1128, %v1135
  %1138 = vset.pattern.permute.xlu0 0
  %1139 = vperm.xlu0 %1138, %v354
  %v1140 = vpop.permute.xlu0 %1139
  %v1143 = vunpack.c.l.s4 839922192
  %v1144 = vunpack.c.0.s8 %v1143
  %v1145 = vlaneseq
  %v1146 = vshrl.u32 %v1145, 7
  %v1147 = vsub.s32 %v1144, %v1146
  %v1148 = vrot.slane %v1140, %v1147
  %1150 = vset.pattern.permute.xlu0 0
  %1151 = vperm.xlu0 %1150, %v355
  %v1152 = vpop.permute.xlu0 %1151
  %v1155 = vunpack.c.l.s4 839922192
  %v1156 = vunpack.c.0.s8 %v1155
  %v1157 = vlaneseq
  %v1158 = vshrl.u32 %v1157, 7
  %v1159 = vsub.s32 %v1156, %v1158
  %v1160 = vrot.slane %v1152, %v1159
  %1162 = vset.pattern.permute.xlu0 0
  %1163 = vperm.xlu0 %1162, %v356
  %v1164 = vpop.permute.xlu0 %1163
  %v1167 = vunpack.c.l.s4 839922192
  %v1168 = vunpack.c.0.s8 %v1167
  %v1169 = vlaneseq
  %v1170 = vshrl.u32 %v1169, 7
  %v1171 = vsub.s32 %v1168, %v1170
  %v1172 = vrot.slane %v1164, %v1171
  %1174 = vset.pattern.permute.xlu0 0
  %1175 = vperm.xlu0 %1174, %v357
  %v1176 = vpop.permute.xlu0 %1175
  %v1179 = vunpack.c.l.s4 839922192
  %v1180 = vunpack.c.0.s8 %v1179
  %v1181 = vlaneseq
  %v1182 = vshrl.u32 %v1181, 7
  %v1183 = vsub.s32 %v1180, %v1182
  %v1184 = vrot.slane %v1176, %v1183
  %1186 = vset.pattern.permute.xlu0 0
  %1187 = vperm.xlu0 %1186, %v358
  %v1188 = vpop.permute.xlu0 %1187
  %v1191 = vunpack.c.l.s4 839922192
  %v1192 = vunpack.c.0.s8 %v1191
  %v1193 = vlaneseq
  %v1194 = vshrl.u32 %v1193, 7
  %v1195 = vsub.s32 %v1192, %v1194
  %v1196 = vrot.slane %v1188, %v1195
  %1198 = vset.pattern.permute.xlu0 0
  %1199 = vperm.xlu0 %1198, %v359
  %v1200 = vpop.permute.xlu0 %1199
  %v1203 = vunpack.c.l.s4 839922192
  %v1204 = vunpack.c.0.s8 %v1203
  %v1205 = vlaneseq
  %v1206 = vshrl.u32 %v1205, 7
  %v1207 = vsub.s32 %v1204, %v1206
  %v1208 = vrot.slane %v1200, %v1207
  %1210 = vset.pattern.permute.xlu0 0
  %1211 = vperm.xlu0 %1210, %v360
  %v1212 = vpop.permute.xlu0 %1211
  %v1215 = vunpack.c.l.s4 839922192
  %v1216 = vunpack.c.0.s8 %v1215
  %v1217 = vlaneseq
  %v1218 = vshrl.u32 %v1217, 7
  %v1219 = vsub.s32 %v1216, %v1218
  %v1220 = vrot.slane %v1212, %v1219
  %1222 = vset.pattern.permute.xlu0 0
  %1223 = vperm.xlu0 %1222, %v361
  %v1224 = vpop.permute.xlu0 %1223
  %v1227 = vunpack.c.l.s4 839922192
  %v1228 = vunpack.c.0.s8 %v1227
  %v1229 = vlaneseq
  %v1230 = vshrl.u32 %v1229, 7
  %v1231 = vsub.s32 %v1228, %v1230
  %v1232 = vrot.slane %v1224, %v1231
  %1234 = vset.pattern.permute.xlu0 0
  %1235 = vperm.xlu0 %1234, %v362
  %v1236 = vpop.permute.xlu0 %1235
  %v1239 = vunpack.c.l.s4 839922192
  %v1240 = vunpack.c.0.s8 %v1239
  %v1241 = vlaneseq
  %v1242 = vshrl.u32 %v1241, 7
  %v1243 = vsub.s32 %v1240, %v1242
  %v1244 = vrot.slane %v1236, %v1243
  %1246 = vset.pattern.permute.xlu0 0
  %1247 = vperm.xlu0 %1246, %v363
  %v1248 = vpop.permute.xlu0 %1247
  %v1251 = vunpack.c.l.s4 839922192
  %v1252 = vunpack.c.0.s8 %v1251
  %v1253 = vlaneseq
  %v1254 = vshrl.u32 %v1253, 7
  %v1255 = vsub.s32 %v1252, %v1254
  %v1256 = vrot.slane %v1248, %v1255
  %1258 = vset.pattern.permute.xlu0 0
  %1259 = vperm.xlu0 %1258, %v364
  %v1260 = vpop.permute.xlu0 %1259
  %v1263 = vunpack.c.l.s4 839922192
  %v1264 = vunpack.c.0.s8 %v1263
  %v1265 = vlaneseq
  %v1266 = vshrl.u32 %v1265, 7
  %v1267 = vsub.s32 %v1264, %v1266
  %v1268 = vrot.slane %v1260, %v1267
  %1270 = vset.pattern.permute.xlu0 0
  %1271 = vperm.xlu0 %1270, %v365
  %v1272 = vpop.permute.xlu0 %1271
  %v1275 = vunpack.c.l.s4 839922192
  %v1276 = vunpack.c.0.s8 %v1275
  %v1277 = vlaneseq
  %v1278 = vshrl.u32 %v1277, 7
  %v1279 = vsub.s32 %v1276, %v1278
  %v1280 = vrot.slane %v1272, %v1279
  %1282 = vset.pattern.permute.xlu0 0
  %1283 = vperm.xlu0 %1282, %v366
  %v1284 = vpop.permute.xlu0 %1283
  %v1287 = vunpack.c.l.s4 839922192
  %v1288 = vunpack.c.0.s8 %v1287
  %v1289 = vlaneseq
  %v1290 = vshrl.u32 %v1289, 7
  %v1291 = vsub.s32 %v1288, %v1290
  %v1292 = vrot.slane %v1284, %v1291
  %1294 = vset.pattern.permute.xlu0 0
  %1295 = vperm.xlu0 %1294, %v367
  %v1296 = vpop.permute.xlu0 %1295
  %v1299 = vunpack.c.l.s4 839922192
  %v1300 = vunpack.c.0.s8 %v1299
  %v1301 = vlaneseq
  %v1302 = vshrl.u32 %v1301, 7
  %v1303 = vsub.s32 %v1300, %v1302
  %v1304 = vrot.slane %v1296, %v1303
  %1306 = vset.pattern.permute.xlu0 0
  %1307 = vperm.xlu0 %1306, %v368
  %v1308 = vpop.permute.xlu0 %1307
  %v1311 = vunpack.c.l.s4 839922192
  %v1312 = vunpack.c.0.s8 %v1311
  %v1313 = vlaneseq
  %v1314 = vshrl.u32 %v1313, 7
  %v1315 = vsub.s32 %v1312, %v1314
  %v1316 = vrot.slane %v1308, %v1315
  %1318 = vset.pattern.permute.xlu0 0
  %1319 = vperm.xlu0 %1318, %v369
  %v1320 = vpop.permute.xlu0 %1319
  %v1323 = vunpack.c.l.s4 839922192
  %v1324 = vunpack.c.0.s8 %v1323
  %v1325 = vlaneseq
  %v1326 = vshrl.u32 %v1325, 7
  %v1327 = vsub.s32 %v1324, %v1326
  %v1328 = vrot.slane %v1320, %v1327
  %1330 = vset.pattern.permute.xlu0 0
  %1331 = vperm.xlu0 %1330, %v370
  %v1332 = vpop.permute.xlu0 %1331
  %v1335 = vunpack.c.l.s4 839922192
  %v1336 = vunpack.c.0.s8 %v1335
  %v1337 = vlaneseq
  %v1338 = vshrl.u32 %v1337, 7
  %v1339 = vsub.s32 %v1336, %v1338
  %v1340 = vrot.slane %v1332, %v1339
  %1342 = vset.pattern.permute.xlu0 0
  %1343 = vperm.xlu0 %1342, %v371
  %v1344 = vpop.permute.xlu0 %1343
  %v1347 = vunpack.c.l.s4 839922192
  %v1348 = vunpack.c.0.s8 %v1347
  %v1349 = vlaneseq
  %v1350 = vshrl.u32 %v1349, 7
  %v1351 = vsub.s32 %v1348, %v1350
  %v1352 = vrot.slane %v1344, %v1351
  %1354 = vset.pattern.permute.xlu0 0
  %1355 = vperm.xlu0 %1354, %v372
  %v1356 = vpop.permute.xlu0 %1355
  %v1359 = vunpack.c.l.s4 839922192
  %v1360 = vunpack.c.0.s8 %v1359
  %v1361 = vlaneseq
  %v1362 = vshrl.u32 %v1361, 7
  %v1363 = vsub.s32 %v1360, %v1362
  %v1364 = vrot.slane %v1356, %v1363
  %1366 = vset.pattern.permute.xlu0 0
  %1367 = vperm.xlu0 %1366, %v373
  %v1368 = vpop.permute.xlu0 %1367
  %v1371 = vunpack.c.l.s4 839922192
  %v1372 = vunpack.c.0.s8 %v1371
  %v1373 = vlaneseq
  %v1374 = vshrl.u32 %v1373, 7
  %v1375 = vsub.s32 %v1372, %v1374
  %v1376 = vrot.slane %v1368, %v1375
  %1378 = vset.pattern.permute.xlu0 0
  %1379 = vperm.xlu0 %1378, %v374
  %v1380 = vpop.permute.xlu0 %1379
  %v1383 = vunpack.c.l.s4 839922192
  %v1384 = vunpack.c.0.s8 %v1383
  %v1385 = vlaneseq
  %v1386 = vshrl.u32 %v1385, 7
  %v1387 = vsub.s32 %v1384, %v1386
  %v1388 = vrot.slane %v1380, %v1387
  %1390 = vset.pattern.permute.xlu0 0
  %1391 = vperm.xlu0 %1390, %v375
  %v1392 = vpop.permute.xlu0 %1391
  %v1395 = vunpack.c.l.s4 839922192
  %v1396 = vunpack.c.0.s8 %v1395
  %v1397 = vlaneseq
  %v1398 = vshrl.u32 %v1397, 7
  %v1399 = vsub.s32 %v1396, %v1398
  %v1400 = vrot.slane %v1392, %v1399
  %1402 = vset.pattern.permute.xlu0 0
  %1403 = vperm.xlu0 %1402, %v376
  %v1404 = vpop.permute.xlu0 %1403
  %v1407 = vunpack.c.l.s4 839922192
  %v1408 = vunpack.c.0.s8 %v1407
  %v1409 = vlaneseq
  %v1410 = vshrl.u32 %v1409, 7
  %v1411 = vsub.s32 %v1408, %v1410
  %v1412 = vrot.slane %v1404, %v1411
  %1414 = vset.pattern.permute.xlu0 0
  %1415 = vperm.xlu0 %1414, %v377
  %v1416 = vpop.permute.xlu0 %1415
  %v1419 = vunpack.c.l.s4 839922192
  %v1420 = vunpack.c.0.s8 %v1419
  %v1421 = vlaneseq
  %v1422 = vshrl.u32 %v1421, 7
  %v1423 = vsub.s32 %v1420, %v1422
  %v1424 = vrot.slane %v1416, %v1423
  %1426 = vset.pattern.permute.xlu0 0
  %1427 = vperm.xlu0 %1426, %v378
  %v1428 = vpop.permute.xlu0 %1427
  %v1431 = vunpack.c.l.s4 839922192
  %v1432 = vunpack.c.0.s8 %v1431
  %v1433 = vlaneseq
  %v1434 = vshrl.u32 %v1433, 7
  %v1435 = vsub.s32 %v1432, %v1434
  %v1436 = vrot.slane %v1428, %v1435
  %1438 = vset.pattern.permute.xlu0 0
  %1439 = vperm.xlu0 %1438, %v379
  %v1440 = vpop.permute.xlu0 %1439
  %v1443 = vunpack.c.l.s4 839922192
  %v1444 = vunpack.c.0.s8 %v1443
  %v1445 = vlaneseq
  %v1446 = vshrl.u32 %v1445, 7
  %v1447 = vsub.s32 %v1444, %v1446
  %v1448 = vrot.slane %v1440, %v1447
  %1450 = vset.pattern.permute.xlu0 0
  %1451 = vperm.xlu0 %1450, %v380
  %v1452 = vpop.permute.xlu0 %1451
  %v1455 = vunpack.c.l.s4 839922192
  %v1456 = vunpack.c.0.s8 %v1455
  %v1457 = vlaneseq
  %v1458 = vshrl.u32 %v1457, 7
  %v1459 = vsub.s32 %v1456, %v1458
  %v1460 = vrot.slane %v1452, %v1459
  %1462 = vset.pattern.permute.xlu0 0
  %1463 = vperm.xlu0 %1462, %v381
  %v1464 = vpop.permute.xlu0 %1463
  %v1467 = vunpack.c.l.s4 839922192
  %v1468 = vunpack.c.0.s8 %v1467
  %v1469 = vlaneseq
  %v1470 = vshrl.u32 %v1469, 7
  %v1471 = vsub.s32 %v1468, %v1470
  %v1472 = vrot.slane %v1464, %v1471
  %1474 = vset.pattern.permute.xlu0 0
  %1475 = vperm.xlu0 %1474, %v382
  %v1476 = vpop.permute.xlu0 %1475
  %v1479 = vunpack.c.l.s4 839922192
  %v1480 = vunpack.c.0.s8 %v1479
  %v1481 = vlaneseq
  %v1482 = vshrl.u32 %v1481, 7
  %v1483 = vsub.s32 %v1480, %v1482
  %v1484 = vrot.slane %v1476, %v1483
  %1486 = vset.pattern.permute.xlu0 0
  %1487 = vperm.xlu0 %1486, %v383
  %v1488 = vpop.permute.xlu0 %1487
  %v1491 = vunpack.c.l.s4 839922192
  %v1492 = vunpack.c.0.s8 %v1491
  %v1493 = vlaneseq
  %v1494 = vshrl.u32 %v1493, 7
  %v1495 = vsub.s32 %v1492, %v1494
  %v1496 = vrot.slane %v1488, %v1495
  %1498 = vset.pattern.permute.xlu0 0
  %1499 = vperm.xlu0 %1498, %v384
  %v1500 = vpop.permute.xlu0 %1499
  %v1503 = vunpack.c.l.s4 839922192
  %v1504 = vunpack.c.0.s8 %v1503
  %v1505 = vlaneseq
  %v1506 = vshrl.u32 %v1505, 7
  %v1507 = vsub.s32 %v1504, %v1506
  %v1508 = vrot.slane %v1500, %v1507
  %1510 = vset.pattern.permute.xlu0 0
  %1511 = vperm.xlu0 %1510, %v385
  %v1512 = vpop.permute.xlu0 %1511
  %v1515 = vunpack.c.l.s4 839922192
  %v1516 = vunpack.c.0.s8 %v1515
  %v1517 = vlaneseq
  %v1518 = vshrl.u32 %v1517, 7
  %v1519 = vsub.s32 %v1516, %v1518
  %v1520 = vrot.slane %v1512, %v1519
  %1522 = vset.pattern.permute.xlu0 0
  %1523 = vperm.xlu0 %1522, %v386
  %v1524 = vpop.permute.xlu0 %1523
  %v1527 = vunpack.c.l.s4 839922192
  %v1528 = vunpack.c.0.s8 %v1527
  %v1529 = vlaneseq
  %v1530 = vshrl.u32 %v1529, 7
  %v1531 = vsub.s32 %v1528, %v1530
  %v1532 = vrot.slane %v1524, %v1531
  %1534 = vset.pattern.permute.xlu0 0
  %1535 = vperm.xlu0 %1534, %v387
  %v1536 = vpop.permute.xlu0 %1535
  %v1539 = vunpack.c.l.s4 839922192
  %v1540 = vunpack.c.0.s8 %v1539
  %v1541 = vlaneseq
  %v1542 = vshrl.u32 %v1541, 7
  %v1543 = vsub.s32 %v1540, %v1542
  %v1544 = vrot.slane %v1536, %v1543
  %1546 = vset.pattern.permute.xlu0 0
  %1547 = vperm.xlu0 %1546, %v388
  %v1548 = vpop.permute.xlu0 %1547
  %v1551 = vunpack.c.l.s4 839922192
  %v1552 = vunpack.c.0.s8 %v1551
  %v1553 = vlaneseq
  %v1554 = vshrl.u32 %v1553, 7
  %v1555 = vsub.s32 %v1552, %v1554
  %v1556 = vrot.slane %v1548, %v1555
  %1558 = vset.pattern.permute.xlu0 0
  %1559 = vperm.xlu0 %1558, %v389
  %v1560 = vpop.permute.xlu0 %1559
  %v1563 = vunpack.c.l.s4 839922192
  %v1564 = vunpack.c.0.s8 %v1563
  %v1565 = vlaneseq
  %v1566 = vshrl.u32 %v1565, 7
  %v1567 = vsub.s32 %v1564, %v1566
  %v1568 = vrot.slane %v1560, %v1567
  %1570 = vset.pattern.permute.xlu0 0
  %1571 = vperm.xlu0 %1570, %v390
  %v1572 = vpop.permute.xlu0 %1571
  %v1575 = vunpack.c.l.s4 839922192
  %v1576 = vunpack.c.0.s8 %v1575
  %v1577 = vlaneseq
  %v1578 = vshrl.u32 %v1577, 7
  %v1579 = vsub.s32 %v1576, %v1578
  %v1580 = vrot.slane %v1572, %v1579
  %1582 = vset.pattern.permute.xlu0 0
  %1583 = vperm.xlu0 %1582, %v391
  %v1584 = vpop.permute.xlu0 %1583
  %v1587 = vunpack.c.l.s4 839922192
  %v1588 = vunpack.c.0.s8 %v1587
  %v1589 = vlaneseq
  %v1590 = vshrl.u32 %v1589, 7
  %v1591 = vsub.s32 %v1588, %v1590
  %v1592 = vrot.slane %v1584, %v1591
  %1594 = vset.pattern.permute.xlu0 0
  %1595 = vperm.xlu0 %1594, %v392
  %v1596 = vpop.permute.xlu0 %1595
  %v1599 = vunpack.c.l.s4 839922192
  %v1600 = vunpack.c.0.s8 %v1599
  %v1601 = vlaneseq
  %v1602 = vshrl.u32 %v1601, 7
  %v1603 = vsub.s32 %v1600, %v1602
  %v1604 = vrot.slane %v1596, %v1603
  %1606 = vset.pattern.permute.xlu0 0
  %1607 = vperm.xlu0 %1606, %v393
  %v1608 = vpop.permute.xlu0 %1607
  %v1611 = vunpack.c.l.s4 839922192
  %v1612 = vunpack.c.0.s8 %v1611
  %v1613 = vlaneseq
  %v1614 = vshrl.u32 %v1613, 7
  %v1615 = vsub.s32 %v1612, %v1614
  %v1616 = vrot.slane %v1608, %v1615
  %1618 = vset.pattern.permute.xlu0 0
  %1619 = vperm.xlu0 %1618, %v394
  %v1620 = vpop.permute.xlu0 %1619
  %v1623 = vunpack.c.l.s4 839922192
  %v1624 = vunpack.c.0.s8 %v1623
  %v1625 = vlaneseq
  %v1626 = vshrl.u32 %v1625, 7
  %v1627 = vsub.s32 %v1624, %v1626
  %v1628 = vrot.slane %v1620, %v1627
  %1630 = vset.pattern.permute.xlu0 0
  %1631 = vperm.xlu0 %1630, %v395
  %v1632 = vpop.permute.xlu0 %1631
  %v1635 = vunpack.c.l.s4 839922192
  %v1636 = vunpack.c.0.s8 %v1635
  %v1637 = vlaneseq
  %v1638 = vshrl.u32 %v1637, 7
  %v1639 = vsub.s32 %v1636, %v1638
  %v1640 = vrot.slane %v1632, %v1639
  %1642 = vset.pattern.permute.xlu0 0
  %1643 = vperm.xlu0 %1642, %v396
  %v1644 = vpop.permute.xlu0 %1643
  %v1647 = vunpack.c.l.s4 839922192
  %v1648 = vunpack.c.0.s8 %v1647
  %v1649 = vlaneseq
  %v1650 = vshrl.u32 %v1649, 7
  %v1651 = vsub.s32 %v1648, %v1650
  %v1652 = vrot.slane %v1644, %v1651
  %1654 = vset.pattern.permute.xlu0 0
  %1655 = vperm.xlu0 %1654, %v397
  %v1656 = vpop.permute.xlu0 %1655
  %v1659 = vunpack.c.l.s4 839922192
  %v1660 = vunpack.c.0.s8 %v1659
  %v1661 = vlaneseq
  %v1662 = vshrl.u32 %v1661, 7
  %v1663 = vsub.s32 %v1660, %v1662
  %v1664 = vrot.slane %v1656, %v1663
  %1666 = vset.pattern.permute.xlu0 0
  %1667 = vperm.xlu0 %1666, %v398
  %v1668 = vpop.permute.xlu0 %1667
  %v1671 = vunpack.c.l.s4 839922192
  %v1672 = vunpack.c.0.s8 %v1671
  %v1673 = vlaneseq
  %v1674 = vshrl.u32 %v1673, 7
  %v1675 = vsub.s32 %v1672, %v1674
  %v1676 = vrot.slane %v1668, %v1675
  %1678 = vset.pattern.permute.xlu0 0
  %1679 = vperm.xlu0 %1678, %v399
  %v1680 = vpop.permute.xlu0 %1679
  %v1683 = vunpack.c.l.s4 839922192
  %v1684 = vunpack.c.0.s8 %v1683
  %v1685 = vlaneseq
  %v1686 = vshrl.u32 %v1685, 7
  %v1687 = vsub.s32 %v1684, %v1686
  %v1688 = vrot.slane %v1680, %v1687
  %1690 = vset.pattern.permute.xlu0 0
  %1691 = vperm.xlu0 %1690, %v400
  %v1692 = vpop.permute.xlu0 %1691
  %v1695 = vunpack.c.l.s4 839922192
  %v1696 = vunpack.c.0.s8 %v1695
  %v1697 = vlaneseq
  %v1698 = vshrl.u32 %v1697, 7
  %v1699 = vsub.s32 %v1696, %v1698
  %v1700 = vrot.slane %v1692, %v1699
  %1702 = vset.pattern.permute.xlu0 0
  %1703 = vperm.xlu0 %1702, %v401
  %v1704 = vpop.permute.xlu0 %1703
  %v1707 = vunpack.c.l.s4 839922192
  %v1708 = vunpack.c.0.s8 %v1707
  %v1709 = vlaneseq
  %v1710 = vshrl.u32 %v1709, 7
  %v1711 = vsub.s32 %v1708, %v1710
  %v1712 = vrot.slane %v1704, %v1711
  %1714 = vset.pattern.permute.xlu0 0
  %1715 = vperm.xlu0 %1714, %v402
  %v1716 = vpop.permute.xlu0 %1715
  %v1719 = vunpack.c.l.s4 839922192
  %v1720 = vunpack.c.0.s8 %v1719
  %v1721 = vlaneseq
  %v1722 = vshrl.u32 %v1721, 7
  %v1723 = vsub.s32 %v1720, %v1722
  %v1724 = vrot.slane %v1716, %v1723
  %1726 = vset.pattern.permute.xlu0 0
  %1727 = vperm.xlu0 %1726, %v403
  %v1728 = vpop.permute.xlu0 %1727
  %v1731 = vunpack.c.l.s4 839922192
  %v1732 = vunpack.c.0.s8 %v1731
  %v1733 = vlaneseq
  %v1734 = vshrl.u32 %v1733, 7
  %v1735 = vsub.s32 %v1732, %v1734
  %v1736 = vrot.slane %v1728, %v1735
  %1738 = vset.pattern.permute.xlu0 0
  %1739 = vperm.xlu0 %1738, %v404
  %v1740 = vpop.permute.xlu0 %1739
  %v1743 = vunpack.c.l.s4 839922192
  %v1744 = vunpack.c.0.s8 %v1743
  %v1745 = vlaneseq
  %v1746 = vshrl.u32 %v1745, 7
  %v1747 = vsub.s32 %v1744, %v1746
  %v1748 = vrot.slane %v1740, %v1747
  %1750 = vset.pattern.permute.xlu0 0
  %1751 = vperm.xlu0 %1750, %v405
  %v1752 = vpop.permute.xlu0 %1751
  %v1755 = vunpack.c.l.s4 839922192
  %v1756 = vunpack.c.0.s8 %v1755
  %v1757 = vlaneseq
  %v1758 = vshrl.u32 %v1757, 7
  %v1759 = vsub.s32 %v1756, %v1758
  %v1760 = vrot.slane %v1752, %v1759
  %1762 = vset.pattern.permute.xlu0 0
  %1763 = vperm.xlu0 %1762, %v406
  %v1764 = vpop.permute.xlu0 %1763
  %v1767 = vunpack.c.l.s4 839922192
  %v1768 = vunpack.c.0.s8 %v1767
  %v1769 = vlaneseq
  %v1770 = vshrl.u32 %v1769, 7
  %v1771 = vsub.s32 %v1768, %v1770
  %v1772 = vrot.slane %v1764, %v1771
  %1774 = vset.pattern.permute.xlu0 0
  %1775 = vperm.xlu0 %1774, %v407
  %v1776 = vpop.permute.xlu0 %1775
  %v1779 = vunpack.c.l.s4 839922192
  %v1780 = vunpack.c.0.s8 %v1779
  %v1781 = vlaneseq
  %v1782 = vshrl.u32 %v1781, 7
  %v1783 = vsub.s32 %v1780, %v1782
  %v1784 = vrot.slane %v1776, %v1783
  %1786 = vset.pattern.permute.xlu0 0
  %1787 = vperm.xlu0 %1786, %v408
  %v1788 = vpop.permute.xlu0 %1787
  %v1791 = vunpack.c.l.s4 839922192
  %v1792 = vunpack.c.0.s8 %v1791
  %v1793 = vlaneseq
  %v1794 = vshrl.u32 %v1793, 7
  %v1795 = vsub.s32 %v1792, %v1794
  %v1796 = vrot.slane %v1788, %v1795
  %1798 = vset.pattern.permute.xlu0 0
  %1799 = vperm.xlu0 %1798, %v409
  %v1800 = vpop.permute.xlu0 %1799
  %v1803 = vunpack.c.l.s4 839922192
  %v1804 = vunpack.c.0.s8 %v1803
  %v1805 = vlaneseq
  %v1806 = vshrl.u32 %v1805, 7
  %v1807 = vsub.s32 %v1804, %v1806
  %v1808 = vrot.slane %v1800, %v1807
  %1810 = vset.pattern.permute.xlu0 0
  %1811 = vperm.xlu0 %1810, %v410
  %v1812 = vpop.permute.xlu0 %1811
  %v1815 = vunpack.c.l.s4 839922192
  %v1816 = vunpack.c.0.s8 %v1815
  %v1817 = vlaneseq
  %v1818 = vshrl.u32 %v1817, 7
  %v1819 = vsub.s32 %v1816, %v1818
  %v1820 = vrot.slane %v1812, %v1819
  %1822 = vset.pattern.permute.xlu0 0
  %1823 = vperm.xlu0 %1822, %v411
  %v1824 = vpop.permute.xlu0 %1823
  %v1827 = vunpack.c.l.s4 839922192
  %v1828 = vunpack.c.0.s8 %v1827
  %v1829 = vlaneseq
  %v1830 = vshrl.u32 %v1829, 7
  %v1831 = vsub.s32 %v1828, %v1830
  %v1832 = vrot.slane %v1824, %v1831
  %1834 = vset.pattern.permute.xlu0 0
  %1835 = vperm.xlu0 %1834, %v412
  %v1836 = vpop.permute.xlu0 %1835
  %v1839 = vunpack.c.l.s4 839922192
  %v1840 = vunpack.c.0.s8 %v1839
  %v1841 = vlaneseq
  %v1842 = vshrl.u32 %v1841, 7
  %v1843 = vsub.s32 %v1840, %v1842
  %v1844 = vrot.slane %v1836, %v1843
  %1846 = vset.pattern.permute.xlu0 0
  %1847 = vperm.xlu0 %1846, %v413
  %v1848 = vpop.permute.xlu0 %1847
  %v1851 = vunpack.c.l.s4 839922192
  %v1852 = vunpack.c.0.s8 %v1851
  %v1853 = vlaneseq
  %v1854 = vshrl.u32 %v1853, 7
  %v1855 = vsub.s32 %v1852, %v1854
  %v1856 = vrot.slane %v1848, %v1855
  %1858 = vset.pattern.permute.xlu0 0
  %1859 = vperm.xlu0 %1858, %v414
  %v1860 = vpop.permute.xlu0 %1859
  %v1863 = vunpack.c.l.s4 839922192
  %v1864 = vunpack.c.0.s8 %v1863
  %v1865 = vlaneseq
  %v1866 = vshrl.u32 %v1865, 7
  %v1867 = vsub.s32 %v1864, %v1866
  %v1868 = vrot.slane %v1860, %v1867
  %1870 = vset.pattern.permute.xlu0 0
  %1871 = vperm.xlu0 %1870, %v415
  %v1872 = vpop.permute.xlu0 %1871
  %v1875 = vunpack.c.l.s4 839922192
  %v1876 = vunpack.c.0.s8 %v1875
  %v1877 = vlaneseq
  %v1878 = vshrl.u32 %v1877, 7
  %v1879 = vsub.s32 %v1876, %v1878
  %v1880 = vrot.slane %v1872, %v1879
  %1882 = vset.pattern.permute.xlu0 0
  %1883 = vperm.xlu0 %1882, %v416
  %v1884 = vpop.permute.xlu0 %1883
  %v1887 = vunpack.c.l.s4 839922192
  %v1888 = vunpack.c.0.s8 %v1887
  %v1889 = vlaneseq
  %v1890 = vshrl.u32 %v1889, 7
  %v1891 = vsub.s32 %v1888, %v1890
  %v1892 = vrot.slane %v1884, %v1891
  %1894 = vset.pattern.permute.xlu0 0
  %1895 = vperm.xlu0 %1894, %v417
  %v1896 = vpop.permute.xlu0 %1895
  %v1899 = vunpack.c.l.s4 839922192
  %v1900 = vunpack.c.0.s8 %v1899
  %v1901 = vlaneseq
  %v1902 = vshrl.u32 %v1901, 7
  %v1903 = vsub.s32 %v1900, %v1902
  %v1904 = vrot.slane %v1896, %v1903
  %1906 = vset.pattern.permute.xlu0 0
  %1907 = vperm.xlu0 %1906, %v418
  %v1908 = vpop.permute.xlu0 %1907
  %v1911 = vunpack.c.l.s4 839922192
  %v1912 = vunpack.c.0.s8 %v1911
  %v1913 = vlaneseq
  %v1914 = vshrl.u32 %v1913, 7
  %v1915 = vsub.s32 %v1912, %v1914
  %v1916 = vrot.slane %v1908, %v1915
  %1918 = vset.pattern.permute.xlu0 0
  %1919 = vperm.xlu0 %1918, %v419
  %v1920 = vpop.permute.xlu0 %1919
  %v1923 = vunpack.c.l.s4 839922192
  %v1924 = vunpack.c.0.s8 %v1923
  %v1925 = vlaneseq
  %v1926 = vshrl.u32 %v1925, 7
  %v1927 = vsub.s32 %v1924, %v1926
  %v1928 = vrot.slane %v1920, %v1927
  %1930 = vset.pattern.permute.xlu0 0
  %1931 = vperm.xlu0 %1930, %v420
  %v1932 = vpop.permute.xlu0 %1931
  %v1935 = vunpack.c.l.s4 839922192
  %v1936 = vunpack.c.0.s8 %v1935
  %v1937 = vlaneseq
  %v1938 = vshrl.u32 %v1937, 7
  %v1939 = vsub.s32 %v1936, %v1938
  %v1940 = vrot.slane %v1932, %v1939
  %1942 = vset.pattern.permute.xlu0 0
  %1943 = vperm.xlu0 %1942, %v421
  %v1944 = vpop.permute.xlu0 %1943
  %v1947 = vunpack.c.l.s4 839922192
  %v1948 = vunpack.c.0.s8 %v1947
  %v1949 = vlaneseq
  %v1950 = vshrl.u32 %v1949, 7
  %v1951 = vsub.s32 %v1948, %v1950
  %v1952 = vrot.slane %v1944, %v1951
  %1954 = vset.pattern.permute.xlu0 0
  %1955 = vperm.xlu0 %1954, %v422
  %v1956 = vpop.permute.xlu0 %1955
  %v1959 = vunpack.c.l.s4 839922192
  %v1960 = vunpack.c.0.s8 %v1959
  %v1961 = vlaneseq
  %v1962 = vshrl.u32 %v1961, 7
  %v1963 = vsub.s32 %v1960, %v1962
  %v1964 = vrot.slane %v1956, %v1963
  %1966 = vset.pattern.permute.xlu0 0
  %1967 = vperm.xlu0 %1966, %v423
  %v1968 = vpop.permute.xlu0 %1967
  %v1971 = vunpack.c.l.s4 839922192
  %v1972 = vunpack.c.0.s8 %v1971
  %v1973 = vlaneseq
  %v1974 = vshrl.u32 %v1973, 7
  %v1975 = vsub.s32 %v1972, %v1974
  %v1976 = vrot.slane %v1968, %v1975
  %1978 = vset.pattern.permute.xlu0 0
  %1979 = vperm.xlu0 %1978, %v424
  %v1980 = vpop.permute.xlu0 %1979
  %v1983 = vunpack.c.l.s4 839922192
  %v1984 = vunpack.c.0.s8 %v1983
  %v1985 = vlaneseq
  %v1986 = vshrl.u32 %v1985, 7
  %v1987 = vsub.s32 %v1984, %v1986
  %v1988 = vrot.slane %v1980, %v1987
  %1990 = vset.pattern.permute.xlu0 0
  %1991 = vperm.xlu0 %1990, %v425
  %v1992 = vpop.permute.xlu0 %1991
  %v1995 = vunpack.c.l.s4 839922192
  %v1996 = vunpack.c.0.s8 %v1995
  %v1997 = vlaneseq
  %v1998 = vshrl.u32 %v1997, 7
  %v1999 = vsub.s32 %v1996, %v1998
  %v2000 = vrot.slane %v1992, %v1999
  %2002 = vset.pattern.permute.xlu0 0
  %2003 = vperm.xlu0 %2002, %v426
  %v2004 = vpop.permute.xlu0 %2003
  %v2007 = vunpack.c.l.s4 839922192
  %v2008 = vunpack.c.0.s8 %v2007
  %v2009 = vlaneseq
  %v2010 = vshrl.u32 %v2009, 7
  %v2011 = vsub.s32 %v2008, %v2010
  %v2012 = vrot.slane %v2004, %v2011
  %2014 = vset.pattern.permute.xlu0 0
  %2015 = vperm.xlu0 %2014, %v427
  %v2016 = vpop.permute.xlu0 %2015
  %v2019 = vunpack.c.l.s4 839922192
  %v2020 = vunpack.c.0.s8 %v2019
  %v2021 = vlaneseq
  %v2022 = vshrl.u32 %v2021, 7
  %v2023 = vsub.s32 %v2020, %v2022
  %v2024 = vrot.slane %v2016, %v2023
  %2026 = vset.pattern.permute.xlu0 0
  %2027 = vperm.xlu0 %2026, %v428
  %v2028 = vpop.permute.xlu0 %2027
  %v2031 = vunpack.c.l.s4 839922192
  %v2032 = vunpack.c.0.s8 %v2031
  %v2033 = vlaneseq
  %v2034 = vshrl.u32 %v2033, 7
  %v2035 = vsub.s32 %v2032, %v2034
  %v2036 = vrot.slane %v2028, %v2035
  %2038 = vset.pattern.permute.xlu0 0
  %2039 = vperm.xlu0 %2038, %v429
  %v2040 = vpop.permute.xlu0 %2039
  %v2043 = vunpack.c.l.s4 839922192
  %v2044 = vunpack.c.0.s8 %v2043
  %v2045 = vlaneseq
  %v2046 = vshrl.u32 %v2045, 7
  %v2047 = vsub.s32 %v2044, %v2046
  %v2048 = vrot.slane %v2040, %v2047
  %2050 = vset.pattern.permute.xlu0 0
  %2051 = vperm.xlu0 %2050, %v430
  %v2052 = vpop.permute.xlu0 %2051
  %v2055 = vunpack.c.l.s4 839922192
  %v2056 = vunpack.c.0.s8 %v2055
  %v2057 = vlaneseq
  %v2058 = vshrl.u32 %v2057, 7
  %v2059 = vsub.s32 %v2056, %v2058
  %v2060 = vrot.slane %v2052, %v2059
  %2062 = vset.pattern.permute.xlu0 0
  %2063 = vperm.xlu0 %2062, %v431
  %v2064 = vpop.permute.xlu0 %2063
  %v2067 = vunpack.c.l.s4 839922192
  %v2068 = vunpack.c.0.s8 %v2067
  %v2069 = vlaneseq
  %v2070 = vshrl.u32 %v2069, 7
  %v2071 = vsub.s32 %v2068, %v2070
  %v2072 = vrot.slane %v2064, %v2071
  %2074 = vset.pattern.permute.xlu0 0
  %2075 = vperm.xlu0 %2074, %v432
  %v2076 = vpop.permute.xlu0 %2075
  %v2079 = vunpack.c.l.s4 839922192
  %v2080 = vunpack.c.0.s8 %v2079
  %v2081 = vlaneseq
  %v2082 = vshrl.u32 %v2081, 7
  %v2083 = vsub.s32 %v2080, %v2082
  %v2084 = vrot.slane %v2076, %v2083
  %2086 = vset.pattern.permute.xlu0 0
  %2087 = vperm.xlu0 %2086, %v433
  %v2088 = vpop.permute.xlu0 %2087
  %v2091 = vunpack.c.l.s4 839922192
  %v2092 = vunpack.c.0.s8 %v2091
  %v2093 = vlaneseq
  %v2094 = vshrl.u32 %v2093, 7
  %v2095 = vsub.s32 %v2092, %v2094
  %v2096 = vrot.slane %v2088, %v2095
  %2098 = vset.pattern.permute.xlu0 0
  %2099 = vperm.xlu0 %2098, %v434
  %v2100 = vpop.permute.xlu0 %2099
  %v2103 = vunpack.c.l.s4 839922192
  %v2104 = vunpack.c.0.s8 %v2103
  %v2105 = vlaneseq
  %v2106 = vshrl.u32 %v2105, 7
  %v2107 = vsub.s32 %v2104, %v2106
  %v2108 = vrot.slane %v2100, %v2107
  %2110 = vset.pattern.permute.xlu0 0
  %2111 = vperm.xlu0 %2110, %v435
  %v2112 = vpop.permute.xlu0 %2111
  %v2115 = vunpack.c.l.s4 839922192
  %v2116 = vunpack.c.0.s8 %v2115
  %v2117 = vlaneseq
  %v2118 = vshrl.u32 %v2117, 7
  %v2119 = vsub.s32 %v2116, %v2118
  %v2120 = vrot.slane %v2112, %v2119
  %2122 = vset.pattern.permute.xlu0 0
  %2123 = vperm.xlu0 %2122, %v436
  %v2124 = vpop.permute.xlu0 %2123
  %v2127 = vunpack.c.l.s4 839922192
  %v2128 = vunpack.c.0.s8 %v2127
  %v2129 = vlaneseq
  %v2130 = vshrl.u32 %v2129, 7
  %v2131 = vsub.s32 %v2128, %v2130
  %v2132 = vrot.slane %v2124, %v2131
  %2134 = vset.pattern.permute.xlu0 0
  %2135 = vperm.xlu0 %2134, %v437
  %v2136 = vpop.permute.xlu0 %2135
  %v2139 = vunpack.c.l.s4 839922192
  %v2140 = vunpack.c.0.s8 %v2139
  %v2141 = vlaneseq
  %v2142 = vshrl.u32 %v2141, 7
  %v2143 = vsub.s32 %v2140, %v2142
  %v2144 = vrot.slane %v2136, %v2143
  %2146 = vset.pattern.permute.xlu0 0
  %2147 = vperm.xlu0 %2146, %v438
  %v2148 = vpop.permute.xlu0 %2147
  %v2151 = vunpack.c.l.s4 839922192
  %v2152 = vunpack.c.0.s8 %v2151
  %v2153 = vlaneseq
  %v2154 = vshrl.u32 %v2153, 7
  %v2155 = vsub.s32 %v2152, %v2154
  %v2156 = vrot.slane %v2148, %v2155
  %2158 = vset.pattern.permute.xlu0 0
  %2159 = vperm.xlu0 %2158, %v439
  %v2160 = vpop.permute.xlu0 %2159
  %v2163 = vunpack.c.l.s4 839922192
  %v2164 = vunpack.c.0.s8 %v2163
  %v2165 = vlaneseq
  %v2166 = vshrl.u32 %v2165, 7
  %v2167 = vsub.s32 %v2164, %v2166
  %v2168 = vrot.slane %v2160, %v2167
  %2170 = vset.pattern.permute.xlu0 0
  %2171 = vperm.xlu0 %2170, %v440
  %v2172 = vpop.permute.xlu0 %2171
  %v2175 = vunpack.c.l.s4 839922192
  %v2176 = vunpack.c.0.s8 %v2175
  %v2177 = vlaneseq
  %v2178 = vshrl.u32 %v2177, 7
  %v2179 = vsub.s32 %v2176, %v2178
  %v2180 = vrot.slane %v2172, %v2179
  %2182 = vset.pattern.permute.xlu0 0
  %2183 = vperm.xlu0 %2182, %v441
  %v2184 = vpop.permute.xlu0 %2183
  %v2187 = vunpack.c.l.s4 839922192
  %v2188 = vunpack.c.0.s8 %v2187
  %v2189 = vlaneseq
  %v2190 = vshrl.u32 %v2189, 7
  %v2191 = vsub.s32 %v2188, %v2190
  %v2192 = vrot.slane %v2184, %v2191
  %2194 = vset.pattern.permute.xlu0 0
  %2195 = vperm.xlu0 %2194, %v442
  %v2196 = vpop.permute.xlu0 %2195
  %v2199 = vunpack.c.l.s4 839922192
  %v2200 = vunpack.c.0.s8 %v2199
  %v2201 = vlaneseq
  %v2202 = vshrl.u32 %v2201, 7
  %v2203 = vsub.s32 %v2200, %v2202
  %v2204 = vrot.slane %v2196, %v2203
  %2206 = vset.pattern.permute.xlu0 0
  %2207 = vperm.xlu0 %2206, %v443
  %v2208 = vpop.permute.xlu0 %2207
  %v2211 = vunpack.c.l.s4 839922192
  %v2212 = vunpack.c.0.s8 %v2211
  %v2213 = vlaneseq
  %v2214 = vshrl.u32 %v2213, 7
  %v2215 = vsub.s32 %v2212, %v2214
  %v2216 = vrot.slane %v2208, %v2215
  %2218 = vset.pattern.permute.xlu0 0
  %2219 = vperm.xlu0 %2218, %v444
  %v2220 = vpop.permute.xlu0 %2219
  %v2223 = vunpack.c.l.s4 839922192
  %v2224 = vunpack.c.0.s8 %v2223
  %v2225 = vlaneseq
  %v2226 = vshrl.u32 %v2225, 7
  %v2227 = vsub.s32 %v2224, %v2226
  %v2228 = vrot.slane %v2220, %v2227
  %2230 = vset.pattern.permute.xlu0 0
  %2231 = vperm.xlu0 %2230, %v445
  %v2232 = vpop.permute.xlu0 %2231
  %v2235 = vunpack.c.l.s4 839922192
  %v2236 = vunpack.c.0.s8 %v2235
  %v2237 = vlaneseq
  %v2238 = vshrl.u32 %v2237, 7
  %v2239 = vsub.s32 %v2236, %v2238
  %v2240 = vrot.slane %v2232, %v2239
  %2242 = vset.pattern.permute.xlu0 0
  %2243 = vperm.xlu0 %2242, %v446
  %v2244 = vpop.permute.xlu0 %2243
  %v2247 = vunpack.c.l.s4 839922192
  %v2248 = vunpack.c.0.s8 %v2247
  %v2249 = vlaneseq
  %v2250 = vshrl.u32 %v2249, 7
  %v2251 = vsub.s32 %v2248, %v2250
  %v2252 = vrot.slane %v2244, %v2251
  %2254 = vset.pattern.permute.xlu0 0
  %2255 = vperm.xlu0 %2254, %v447
  %v2256 = vpop.permute.xlu0 %2255
  %v2259 = vunpack.c.l.s4 839922192
  %v2260 = vunpack.c.0.s8 %v2259
  %v2261 = vlaneseq
  %v2262 = vshrl.u32 %v2261, 7
  %v2263 = vsub.s32 %v2260, %v2262
  %v2264 = vrot.slane %v2256, %v2263
  %2266 = vset.pattern.permute.xlu0 0
  %2267 = vperm.xlu0 %2266, %v448
  %v2268 = vpop.permute.xlu0 %2267
  %v2271 = vunpack.c.l.s4 839922192
  %v2272 = vunpack.c.0.s8 %v2271
  %v2273 = vlaneseq
  %v2274 = vshrl.u32 %v2273, 7
  %v2275 = vsub.s32 %v2272, %v2274
  %v2276 = vrot.slane %v2268, %v2275
  %2278 = vset.pattern.permute.xlu0 0
  %2279 = vperm.xlu0 %2278, %v449
  %v2280 = vpop.permute.xlu0 %2279
  %v2283 = vunpack.c.l.s4 839922192
  %v2284 = vunpack.c.0.s8 %v2283
  %v2285 = vlaneseq
  %v2286 = vshrl.u32 %v2285, 7
  %v2287 = vsub.s32 %v2284, %v2286
  %v2288 = vrot.slane %v2280, %v2287
  %2290 = vset.pattern.permute.xlu0 0
  %2291 = vperm.xlu0 %2290, %v450
  %v2292 = vpop.permute.xlu0 %2291
  %v2295 = vunpack.c.l.s4 839922192
  %v2296 = vunpack.c.0.s8 %v2295
  %v2297 = vlaneseq
  %v2298 = vshrl.u32 %v2297, 7
  %v2299 = vsub.s32 %v2296, %v2298
  %v2300 = vrot.slane %v2292, %v2299
  %2302 = vset.pattern.permute.xlu0 0
  %2303 = vperm.xlu0 %2302, %v451
  %v2304 = vpop.permute.xlu0 %2303
  %v2307 = vunpack.c.l.s4 839922192
  %v2308 = vunpack.c.0.s8 %v2307
  %v2309 = vlaneseq
  %v2310 = vshrl.u32 %v2309, 7
  %v2311 = vsub.s32 %v2308, %v2310
  %v2312 = vrot.slane %v2304, %v2311
  %2314 = vset.pattern.permute.xlu0 0
  %2315 = vperm.xlu0 %2314, %v452
  %v2316 = vpop.permute.xlu0 %2315
  %v2319 = vunpack.c.l.s4 839922192
  %v2320 = vunpack.c.0.s8 %v2319
  %v2321 = vlaneseq
  %v2322 = vshrl.u32 %v2321, 7
  %v2323 = vsub.s32 %v2320, %v2322
  %v2324 = vrot.slane %v2316, %v2323
  %2326 = vset.pattern.permute.xlu0 0
  %2327 = vperm.xlu0 %2326, %v453
  %v2328 = vpop.permute.xlu0 %2327
  %v2331 = vunpack.c.l.s4 839922192
  %v2332 = vunpack.c.0.s8 %v2331
  %v2333 = vlaneseq
  %v2334 = vshrl.u32 %v2333, 7
  %v2335 = vsub.s32 %v2332, %v2334
  %v2336 = vrot.slane %v2328, %v2335
  %2338 = vset.pattern.permute.xlu0 0
  %2339 = vperm.xlu0 %2338, %v454
  %v2340 = vpop.permute.xlu0 %2339
  %v2343 = vunpack.c.l.s4 839922192
  %v2344 = vunpack.c.0.s8 %v2343
  %v2345 = vlaneseq
  %v2346 = vshrl.u32 %v2345, 7
  %v2347 = vsub.s32 %v2344, %v2346
  %v2348 = vrot.slane %v2340, %v2347
  %2350 = vset.pattern.permute.xlu0 0
  %2351 = vperm.xlu0 %2350, %v455
  %v2352 = vpop.permute.xlu0 %2351
  %v2355 = vunpack.c.l.s4 839922192
  %v2356 = vunpack.c.0.s8 %v2355
  %v2357 = vlaneseq
  %v2358 = vshrl.u32 %v2357, 7
  %v2359 = vsub.s32 %v2356, %v2358
  %v2360 = vrot.slane %v2352, %v2359
  %2362 = vset.pattern.permute.xlu0 0
  %2363 = vperm.xlu0 %2362, %v456
  %v2364 = vpop.permute.xlu0 %2363
  %v2367 = vunpack.c.l.s4 839922192
  %v2368 = vunpack.c.0.s8 %v2367
  %v2369 = vlaneseq
  %v2370 = vshrl.u32 %v2369, 7
  %v2371 = vsub.s32 %v2368, %v2370
  %v2372 = vrot.slane %v2364, %v2371
  %2374 = vset.pattern.permute.xlu0 0
  %2375 = vperm.xlu0 %2374, %v457
  %v2376 = vpop.permute.xlu0 %2375
  %v2379 = vunpack.c.l.s4 839922192
  %v2380 = vunpack.c.0.s8 %v2379
  %v2381 = vlaneseq
  %v2382 = vshrl.u32 %v2381, 7
  %v2383 = vsub.s32 %v2380, %v2382
  %v2384 = vrot.slane %v2376, %v2383
  %2386 = vset.pattern.permute.xlu0 0
  %2387 = vperm.xlu0 %2386, %v458
  %v2388 = vpop.permute.xlu0 %2387
  %v2391 = vunpack.c.l.s4 839922192
  %v2392 = vunpack.c.0.s8 %v2391
  %v2393 = vlaneseq
  %v2394 = vshrl.u32 %v2393, 7
  %v2395 = vsub.s32 %v2392, %v2394
  %v2396 = vrot.slane %v2388, %v2395
  %2398 = vset.pattern.permute.xlu0 0
  %2399 = vperm.xlu0 %2398, %v459
  %v2400 = vpop.permute.xlu0 %2399
  %v2403 = vunpack.c.l.s4 839922192
  %v2404 = vunpack.c.0.s8 %v2403
  %v2405 = vlaneseq
  %v2406 = vshrl.u32 %v2405, 7
  %v2407 = vsub.s32 %v2404, %v2406
  %v2408 = vrot.slane %v2400, %v2407
  %2410 = vset.pattern.permute.xlu0 0
  %2411 = vperm.xlu0 %2410, %v460
  %v2412 = vpop.permute.xlu0 %2411
  %v2415 = vunpack.c.l.s4 839922192
  %v2416 = vunpack.c.0.s8 %v2415
  %v2417 = vlaneseq
  %v2418 = vshrl.u32 %v2417, 7
  %v2419 = vsub.s32 %v2416, %v2418
  %v2420 = vrot.slane %v2412, %v2419
  %2422 = vset.pattern.permute.xlu0 0
  %2423 = vperm.xlu0 %2422, %v461
  %v2424 = vpop.permute.xlu0 %2423
  %v2427 = vunpack.c.l.s4 839922192
  %v2428 = vunpack.c.0.s8 %v2427
  %v2429 = vlaneseq
  %v2430 = vshrl.u32 %v2429, 7
  %v2431 = vsub.s32 %v2428, %v2430
  %v2432 = vrot.slane %v2424, %v2431
  %2434 = vset.pattern.permute.xlu0 0
  %2435 = vperm.xlu0 %2434, %v462
  %v2436 = vpop.permute.xlu0 %2435
  %v2439 = vunpack.c.l.s4 839922192
  %v2440 = vunpack.c.0.s8 %v2439
  %v2441 = vlaneseq
  %v2442 = vshrl.u32 %v2441, 7
  %v2443 = vsub.s32 %v2440, %v2442
  %v2444 = vrot.slane %v2436, %v2443
  %2446 = vset.pattern.permute.xlu0 0
  %2447 = vperm.xlu0 %2446, %v463
  %v2448 = vpop.permute.xlu0 %2447
  %v2451 = vunpack.c.l.s4 839922192
  %v2452 = vunpack.c.0.s8 %v2451
  %v2453 = vlaneseq
  %v2454 = vshrl.u32 %v2453, 7
  %v2455 = vsub.s32 %v2452, %v2454
  %v2456 = vrot.slane %v2448, %v2455
  %2458 = vset.pattern.permute.xlu0 0
  %2459 = vperm.xlu0 %2458, %v464
  %v2460 = vpop.permute.xlu0 %2459
  %v2463 = vunpack.c.l.s4 839922192
  %v2464 = vunpack.c.0.s8 %v2463
  %v2465 = vlaneseq
  %v2466 = vshrl.u32 %v2465, 7
  %v2467 = vsub.s32 %v2464, %v2466
  %v2468 = vrot.slane %v2460, %v2467
  %2470 = vset.pattern.permute.xlu0 0
  %2471 = vperm.xlu0 %2470, %v465
  %v2472 = vpop.permute.xlu0 %2471
  %v2475 = vunpack.c.l.s4 839922192
  %v2476 = vunpack.c.0.s8 %v2475
  %v2477 = vlaneseq
  %v2478 = vshrl.u32 %v2477, 7
  %v2479 = vsub.s32 %v2476, %v2478
  %v2480 = vrot.slane %v2472, %v2479
  %2482 = vset.pattern.permute.xlu0 0
  %2483 = vperm.xlu0 %2482, %v466
  %v2484 = vpop.permute.xlu0 %2483
  %v2487 = vunpack.c.l.s4 839922192
  %v2488 = vunpack.c.0.s8 %v2487
  %v2489 = vlaneseq
  %v2490 = vshrl.u32 %v2489, 7
  %v2491 = vsub.s32 %v2488, %v2490
  %v2492 = vrot.slane %v2484, %v2491
  %2494 = vset.pattern.permute.xlu0 0
  %2495 = vperm.xlu0 %2494, %v467
  %v2496 = vpop.permute.xlu0 %2495
  %v2499 = vunpack.c.l.s4 839922192
  %v2500 = vunpack.c.0.s8 %v2499
  %v2501 = vlaneseq
  %v2502 = vshrl.u32 %v2501, 7
  %v2503 = vsub.s32 %v2500, %v2502
  %v2504 = vrot.slane %v2496, %v2503
  %2506 = vset.pattern.permute.xlu0 0
  %2507 = vperm.xlu0 %2506, %v468
  %v2508 = vpop.permute.xlu0 %2507
  %v2511 = vunpack.c.l.s4 839922192
  %v2512 = vunpack.c.0.s8 %v2511
  %v2513 = vlaneseq
  %v2514 = vshrl.u32 %v2513, 7
  %v2515 = vsub.s32 %v2512, %v2514
  %v2516 = vrot.slane %v2508, %v2515
  %2518 = vset.pattern.permute.xlu0 0
  %2519 = vperm.xlu0 %2518, %v469
  %v2520 = vpop.permute.xlu0 %2519
  %v2523 = vunpack.c.l.s4 839922192
  %v2524 = vunpack.c.0.s8 %v2523
  %v2525 = vlaneseq
  %v2526 = vshrl.u32 %v2525, 7
  %v2527 = vsub.s32 %v2524, %v2526
  %v2528 = vrot.slane %v2520, %v2527
  %2530 = vset.pattern.permute.xlu0 0
  %2531 = vperm.xlu0 %2530, %v470
  %v2532 = vpop.permute.xlu0 %2531
  %v2535 = vunpack.c.l.s4 839922192
  %v2536 = vunpack.c.0.s8 %v2535
  %v2537 = vlaneseq
  %v2538 = vshrl.u32 %v2537, 7
  %v2539 = vsub.s32 %v2536, %v2538
  %v2540 = vrot.slane %v2532, %v2539
  %2542 = vset.pattern.permute.xlu0 0
  %2543 = vperm.xlu0 %2542, %v471
  %v2544 = vpop.permute.xlu0 %2543
  %v2547 = vunpack.c.l.s4 839922192
  %v2548 = vunpack.c.0.s8 %v2547
  %v2549 = vlaneseq
  %v2550 = vshrl.u32 %v2549, 7
  %v2551 = vsub.s32 %v2548, %v2550
  %v2552 = vrot.slane %v2544, %v2551
  %2554 = vset.pattern.permute.xlu0 0
  %2555 = vperm.xlu0 %2554, %v472
  %v2556 = vpop.permute.xlu0 %2555
  %v2559 = vunpack.c.l.s4 839922192
  %v2560 = vunpack.c.0.s8 %v2559
  %v2561 = vlaneseq
  %v2562 = vshrl.u32 %v2561, 7
  %v2563 = vsub.s32 %v2560, %v2562
  %v2564 = vrot.slane %v2556, %v2563
  %2566 = vset.pattern.permute.xlu0 0
  %2567 = vperm.xlu0 %2566, %v473
  %v2568 = vpop.permute.xlu0 %2567
  %v2571 = vunpack.c.l.s4 839922192
  %v2572 = vunpack.c.0.s8 %v2571
  %v2573 = vlaneseq
  %v2574 = vshrl.u32 %v2573, 7
  %v2575 = vsub.s32 %v2572, %v2574
  %v2576 = vrot.slane %v2568, %v2575
  %2578 = vset.pattern.permute.xlu0 0
  %2579 = vperm.xlu0 %2578, %v474
  %v2580 = vpop.permute.xlu0 %2579
  %v2583 = vunpack.c.l.s4 839922192
  %v2584 = vunpack.c.0.s8 %v2583
  %v2585 = vlaneseq
  %v2586 = vshrl.u32 %v2585, 7
  %v2587 = vsub.s32 %v2584, %v2586
  %v2588 = vrot.slane %v2580, %v2587
  %2590 = vset.pattern.permute.xlu0 0
  %2591 = vperm.xlu0 %2590, %v475
  %v2592 = vpop.permute.xlu0 %2591
  %v2595 = vunpack.c.l.s4 839922192
  %v2596 = vunpack.c.0.s8 %v2595
  %v2597 = vlaneseq
  %v2598 = vshrl.u32 %v2597, 7
  %v2599 = vsub.s32 %v2596, %v2598
  %v2600 = vrot.slane %v2592, %v2599
  %2602 = vset.pattern.permute.xlu0 0
  %2603 = vperm.xlu0 %2602, %v476
  %v2604 = vpop.permute.xlu0 %2603
  %v2607 = vunpack.c.l.s4 839922192
  %v2608 = vunpack.c.0.s8 %v2607
  %v2609 = vlaneseq
  %v2610 = vshrl.u32 %v2609, 7
  %v2611 = vsub.s32 %v2608, %v2610
  %v2612 = vrot.slane %v2604, %v2611
  %2614 = vset.pattern.permute.xlu0 0
  %2615 = vperm.xlu0 %2614, %v477
  %v2616 = vpop.permute.xlu0 %2615
  %v2619 = vunpack.c.l.s4 839922192
  %v2620 = vunpack.c.0.s8 %v2619
  %v2621 = vlaneseq
  %v2622 = vshrl.u32 %v2621, 7
  %v2623 = vsub.s32 %v2620, %v2622
  %v2624 = vrot.slane %v2616, %v2623
  %2626 = vset.pattern.permute.xlu0 0
  %2627 = vperm.xlu0 %2626, %v478
  %v2628 = vpop.permute.xlu0 %2627
  %v2631 = vunpack.c.l.s4 839922192
  %v2632 = vunpack.c.0.s8 %v2631
  %v2633 = vlaneseq
  %v2634 = vshrl.u32 %v2633, 7
  %v2635 = vsub.s32 %v2632, %v2634
  %v2636 = vrot.slane %v2628, %v2635
  %2638 = vset.pattern.permute.xlu0 0
  %2639 = vperm.xlu0 %2638, %v479
  %v2640 = vpop.permute.xlu0 %2639
  %v2643 = vunpack.c.l.s4 839922192
  %v2644 = vunpack.c.0.s8 %v2643
  %v2645 = vlaneseq
  %v2646 = vshrl.u32 %v2645, 7
  %v2647 = vsub.s32 %v2644, %v2646
  %v2648 = vrot.slane %v2640, %v2647
  %2650 = vset.pattern.permute.xlu0 0
  %2651 = vperm.xlu0 %2650, %v480
  %v2652 = vpop.permute.xlu0 %2651
  %v2655 = vunpack.c.l.s4 839922192
  %v2656 = vunpack.c.0.s8 %v2655
  %v2657 = vlaneseq
  %v2658 = vshrl.u32 %v2657, 7
  %v2659 = vsub.s32 %v2656, %v2658
  %v2660 = vrot.slane %v2652, %v2659
  %2662 = vset.pattern.permute.xlu0 0
  %2663 = vperm.xlu0 %2662, %v481
  %v2664 = vpop.permute.xlu0 %2663
  %v2667 = vunpack.c.l.s4 839922192
  %v2668 = vunpack.c.0.s8 %v2667
  %v2669 = vlaneseq
  %v2670 = vshrl.u32 %v2669, 7
  %v2671 = vsub.s32 %v2668, %v2670
  %v2672 = vrot.slane %v2664, %v2671
  %2674 = vset.pattern.permute.xlu0 0
  %2675 = vperm.xlu0 %2674, %v482
  %v2676 = vpop.permute.xlu0 %2675
  %v2679 = vunpack.c.l.s4 839922192
  %v2680 = vunpack.c.0.s8 %v2679
  %v2681 = vlaneseq
  %v2682 = vshrl.u32 %v2681, 7
  %v2683 = vsub.s32 %v2680, %v2682
  %v2684 = vrot.slane %v2676, %v2683
  %2686 = vset.pattern.permute.xlu0 0
  %2687 = vperm.xlu0 %2686, %v483
  %v2688 = vpop.permute.xlu0 %2687
  %v2691 = vunpack.c.l.s4 839922192
  %v2692 = vunpack.c.0.s8 %v2691
  %v2693 = vlaneseq
  %v2694 = vshrl.u32 %v2693, 7
  %v2695 = vsub.s32 %v2692, %v2694
  %v2696 = vrot.slane %v2688, %v2695
  %2698 = vset.pattern.permute.xlu0 0
  %2699 = vperm.xlu0 %2698, %v484
  %v2700 = vpop.permute.xlu0 %2699
  %v2703 = vunpack.c.l.s4 839922192
  %v2704 = vunpack.c.0.s8 %v2703
  %v2705 = vlaneseq
  %v2706 = vshrl.u32 %v2705, 7
  %v2707 = vsub.s32 %v2704, %v2706
  %v2708 = vrot.slane %v2700, %v2707
  %2710 = vset.pattern.permute.xlu0 0
  %2711 = vperm.xlu0 %2710, %v485
  %v2712 = vpop.permute.xlu0 %2711
  %v2715 = vunpack.c.l.s4 839922192
  %v2716 = vunpack.c.0.s8 %v2715
  %v2717 = vlaneseq
  %v2718 = vshrl.u32 %v2717, 7
  %v2719 = vsub.s32 %v2716, %v2718
  %v2720 = vrot.slane %v2712, %v2719
  %2722 = vset.pattern.permute.xlu0 0
  %2723 = vperm.xlu0 %2722, %v486
  %v2724 = vpop.permute.xlu0 %2723
  %v2727 = vunpack.c.l.s4 839922192
  %v2728 = vunpack.c.0.s8 %v2727
  %v2729 = vlaneseq
  %v2730 = vshrl.u32 %v2729, 7
  %v2731 = vsub.s32 %v2728, %v2730
  %v2732 = vrot.slane %v2724, %v2731
  %2734 = vset.pattern.permute.xlu0 0
  %2735 = vperm.xlu0 %2734, %v487
  %v2736 = vpop.permute.xlu0 %2735
  %v2739 = vunpack.c.l.s4 839922192
  %v2740 = vunpack.c.0.s8 %v2739
  %v2741 = vlaneseq
  %v2742 = vshrl.u32 %v2741, 7
  %v2743 = vsub.s32 %v2740, %v2742
  %v2744 = vrot.slane %v2736, %v2743
  %2746 = vset.pattern.permute.xlu0 0
  %2747 = vperm.xlu0 %2746, %v488
  %v2748 = vpop.permute.xlu0 %2747
  %v2751 = vunpack.c.l.s4 839922192
  %v2752 = vunpack.c.0.s8 %v2751
  %v2753 = vlaneseq
  %v2754 = vshrl.u32 %v2753, 7
  %v2755 = vsub.s32 %v2752, %v2754
  %v2756 = vrot.slane %v2748, %v2755
  %2758 = vset.pattern.permute.xlu0 0
  %2759 = vperm.xlu0 %2758, %v489
  %v2760 = vpop.permute.xlu0 %2759
  %v2763 = vunpack.c.l.s4 839922192
  %v2764 = vunpack.c.0.s8 %v2763
  %v2765 = vlaneseq
  %v2766 = vshrl.u32 %v2765, 7
  %v2767 = vsub.s32 %v2764, %v2766
  %v2768 = vrot.slane %v2760, %v2767
  %2770 = vset.pattern.permute.xlu0 0
  %2771 = vperm.xlu0 %2770, %v490
  %v2772 = vpop.permute.xlu0 %2771
  %v2775 = vunpack.c.l.s4 839922192
  %v2776 = vunpack.c.0.s8 %v2775
  %v2777 = vlaneseq
  %v2778 = vshrl.u32 %v2777, 7
  %v2779 = vsub.s32 %v2776, %v2778
  %v2780 = vrot.slane %v2772, %v2779
  %2782 = vset.pattern.permute.xlu0 0
  %2783 = vperm.xlu0 %2782, %v491
  %v2784 = vpop.permute.xlu0 %2783
  %v2787 = vunpack.c.l.s4 839922192
  %v2788 = vunpack.c.0.s8 %v2787
  %v2789 = vlaneseq
  %v2790 = vshrl.u32 %v2789, 7
  %v2791 = vsub.s32 %v2788, %v2790
  %v2792 = vrot.slane %v2784, %v2791
  %2794 = vset.pattern.permute.xlu0 0
  %2795 = vperm.xlu0 %2794, %v492
  %v2796 = vpop.permute.xlu0 %2795
  %v2799 = vunpack.c.l.s4 839922192
  %v2800 = vunpack.c.0.s8 %v2799
  %v2801 = vlaneseq
  %v2802 = vshrl.u32 %v2801, 7
  %v2803 = vsub.s32 %v2800, %v2802
  %v2804 = vrot.slane %v2796, %v2803
  %2806 = vset.pattern.permute.xlu0 0
  %2807 = vperm.xlu0 %2806, %v493
  %v2808 = vpop.permute.xlu0 %2807
  %v2811 = vunpack.c.l.s4 839922192
  %v2812 = vunpack.c.0.s8 %v2811
  %v2813 = vlaneseq
  %v2814 = vshrl.u32 %v2813, 7
  %v2815 = vsub.s32 %v2812, %v2814
  %v2816 = vrot.slane %v2808, %v2815
  %2818 = vset.pattern.permute.xlu0 0
  %2819 = vperm.xlu0 %2818, %v494
  %v2820 = vpop.permute.xlu0 %2819
  %v2823 = vunpack.c.l.s4 839922192
  %v2824 = vunpack.c.0.s8 %v2823
  %v2825 = vlaneseq
  %v2826 = vshrl.u32 %v2825, 7
  %v2827 = vsub.s32 %v2824, %v2826
  %v2828 = vrot.slane %v2820, %v2827
  %2830 = vset.pattern.permute.xlu0 0
  %2831 = vperm.xlu0 %2830, %v495
  %v2832 = vpop.permute.xlu0 %2831
  %v2835 = vunpack.c.l.s4 839922192
  %v2836 = vunpack.c.0.s8 %v2835
  %v2837 = vlaneseq
  %v2838 = vshrl.u32 %v2837, 7
  %v2839 = vsub.s32 %v2836, %v2838
  %v2840 = vrot.slane %v2832, %v2839
  %2842 = vset.pattern.permute.xlu0 0
  %2843 = vperm.xlu0 %2842, %v496
  %v2844 = vpop.permute.xlu0 %2843
  %v2847 = vunpack.c.l.s4 839922192
  %v2848 = vunpack.c.0.s8 %v2847
  %v2849 = vlaneseq
  %v2850 = vshrl.u32 %v2849, 7
  %v2851 = vsub.s32 %v2848, %v2850
  %v2852 = vrot.slane %v2844, %v2851
  %2854 = vset.pattern.permute.xlu0 0
  %2855 = vperm.xlu0 %2854, %v497
  %v2856 = vpop.permute.xlu0 %2855
  %v2859 = vunpack.c.l.s4 839922192
  %v2860 = vunpack.c.0.s8 %v2859
  %v2861 = vlaneseq
  %v2862 = vshrl.u32 %v2861, 7
  %v2863 = vsub.s32 %v2860, %v2862
  %v2864 = vrot.slane %v2856, %v2863
  %2866 = vset.pattern.permute.xlu0 0
  %2867 = vperm.xlu0 %2866, %v498
  %v2868 = vpop.permute.xlu0 %2867
  %v2871 = vunpack.c.l.s4 839922192
  %v2872 = vunpack.c.0.s8 %v2871
  %v2873 = vlaneseq
  %v2874 = vshrl.u32 %v2873, 7
  %v2875 = vsub.s32 %v2872, %v2874
  %v2876 = vrot.slane %v2868, %v2875
  %2878 = vset.pattern.permute.xlu0 0
  %2879 = vperm.xlu0 %2878, %v499
  %v2880 = vpop.permute.xlu0 %2879
  %v2883 = vunpack.c.l.s4 839922192
  %v2884 = vunpack.c.0.s8 %v2883
  %v2885 = vlaneseq
  %v2886 = vshrl.u32 %v2885, 7
  %v2887 = vsub.s32 %v2884, %v2886
  %v2888 = vrot.slane %v2880, %v2887
  %2890 = vset.pattern.permute.xlu0 0
  %2891 = vperm.xlu0 %2890, %v500
  %v2892 = vpop.permute.xlu0 %2891
  %v2895 = vunpack.c.l.s4 839922192
  %v2896 = vunpack.c.0.s8 %v2895
  %v2897 = vlaneseq
  %v2898 = vshrl.u32 %v2897, 7
  %v2899 = vsub.s32 %v2896, %v2898
  %v2900 = vrot.slane %v2892, %v2899
  %2902 = vset.pattern.permute.xlu0 0
  %2903 = vperm.xlu0 %2902, %v501
  %v2904 = vpop.permute.xlu0 %2903
  %v2907 = vunpack.c.l.s4 839922192
  %v2908 = vunpack.c.0.s8 %v2907
  %v2909 = vlaneseq
  %v2910 = vshrl.u32 %v2909, 7
  %v2911 = vsub.s32 %v2908, %v2910
  %v2912 = vrot.slane %v2904, %v2911
  %2914 = vset.pattern.permute.xlu0 0
  %2915 = vperm.xlu0 %2914, %v502
  %v2916 = vpop.permute.xlu0 %2915
  %v2919 = vunpack.c.l.s4 839922192
  %v2920 = vunpack.c.0.s8 %v2919
  %v2921 = vlaneseq
  %v2922 = vshrl.u32 %v2921, 7
  %v2923 = vsub.s32 %v2920, %v2922
  %v2924 = vrot.slane %v2916, %v2923
  %2926 = vset.pattern.permute.xlu0 0
  %2927 = vperm.xlu0 %2926, %v503
  %v2928 = vpop.permute.xlu0 %2927
  %v2931 = vunpack.c.l.s4 839922192
  %v2932 = vunpack.c.0.s8 %v2931
  %v2933 = vlaneseq
  %v2934 = vshrl.u32 %v2933, 7
  %v2935 = vsub.s32 %v2932, %v2934
  %v2936 = vrot.slane %v2928, %v2935
  %2938 = vset.pattern.permute.xlu0 0
  %2939 = vperm.xlu0 %2938, %v504
  %v2940 = vpop.permute.xlu0 %2939
  %v2943 = vunpack.c.l.s4 839922192
  %v2944 = vunpack.c.0.s8 %v2943
  %v2945 = vlaneseq
  %v2946 = vshrl.u32 %v2945, 7
  %v2947 = vsub.s32 %v2944, %v2946
  %v2948 = vrot.slane %v2940, %v2947
  %2950 = vset.pattern.permute.xlu0 0
  %2951 = vperm.xlu0 %2950, %v505
  %v2952 = vpop.permute.xlu0 %2951
  %v2955 = vunpack.c.l.s4 839922192
  %v2956 = vunpack.c.0.s8 %v2955
  %v2957 = vlaneseq
  %v2958 = vshrl.u32 %v2957, 7
  %v2959 = vsub.s32 %v2956, %v2958
  %v2960 = vrot.slane %v2952, %v2959
  %2962 = vset.pattern.permute.xlu0 0
  %2963 = vperm.xlu0 %2962, %v506
  %v2964 = vpop.permute.xlu0 %2963
  %v2967 = vunpack.c.l.s4 839922192
  %v2968 = vunpack.c.0.s8 %v2967
  %v2969 = vlaneseq
  %v2970 = vshrl.u32 %v2969, 7
  %v2971 = vsub.s32 %v2968, %v2970
  %v2972 = vrot.slane %v2964, %v2971
  %2974 = vset.pattern.permute.xlu0 0
  %2975 = vperm.xlu0 %2974, %v507
  %v2976 = vpop.permute.xlu0 %2975
  %v2979 = vunpack.c.l.s4 839922192
  %v2980 = vunpack.c.0.s8 %v2979
  %v2981 = vlaneseq
  %v2982 = vshrl.u32 %v2981, 7
  %v2983 = vsub.s32 %v2980, %v2982
  %v2984 = vrot.slane %v2976, %v2983
  %2986 = vset.pattern.permute.xlu0 0
  %2987 = vperm.xlu0 %2986, %v508
  %v2988 = vpop.permute.xlu0 %2987
  %v2991 = vunpack.c.l.s4 839922192
  %v2992 = vunpack.c.0.s8 %v2991
  %v2993 = vlaneseq
  %v2994 = vshrl.u32 %v2993, 7
  %v2995 = vsub.s32 %v2992, %v2994
  %v2996 = vrot.slane %v2988, %v2995
  %2998 = vset.pattern.permute.xlu0 0
  %2999 = vperm.xlu0 %2998, %v509
  %v3000 = vpop.permute.xlu0 %2999
  %v3003 = vunpack.c.l.s4 839922192
  %v3004 = vunpack.c.0.s8 %v3003
  %v3005 = vlaneseq
  %v3006 = vshrl.u32 %v3005, 7
  %v3007 = vsub.s32 %v3004, %v3006
  %v3008 = vrot.slane %v3000, %v3007
  %3010 = vset.pattern.permute.xlu0 0
  %3011 = vperm.xlu0 %3010, %v510
  %v3012 = vpop.permute.xlu0 %3011
  %v3015 = vunpack.c.l.s4 839922192
  %v3016 = vunpack.c.0.s8 %v3015
  %v3017 = vlaneseq
  %v3018 = vshrl.u32 %v3017, 7
  %v3019 = vsub.s32 %v3016, %v3018
  %v3020 = vrot.slane %v3012, %v3019
  %3022 = vset.pattern.permute.xlu0 0
  %3023 = vperm.xlu0 %3022, %v511
  %v3024 = vpop.permute.xlu0 %3023
  %v3027 = vunpack.c.l.s4 839922192
  %v3028 = vunpack.c.0.s8 %v3027
  %v3029 = vlaneseq
  %v3030 = vshrl.u32 %v3029, 7
  %v3031 = vsub.s32 %v3028, %v3030
  %v3032 = vrot.slane %v3024, %v3031
  %3034 = vset.pattern.permute.xlu0 0
  %3035 = vperm.xlu0 %3034, %v512
  %v3036 = vpop.permute.xlu0 %3035
  %v3039 = vunpack.c.l.s4 839922192
  %v3040 = vunpack.c.0.s8 %v3039
  %v3041 = vlaneseq
  %v3042 = vshrl.u32 %v3041, 7
  %v3043 = vsub.s32 %v3040, %v3042
  %v3044 = vrot.slane %v3036, %v3043
  %3046 = vset.pattern.permute.xlu0 0
  %3047 = vperm.xlu0 %3046, %v513
  %v3048 = vpop.permute.xlu0 %3047
  %v3051 = vunpack.c.l.s4 839922192
  %v3052 = vunpack.c.0.s8 %v3051
  %v3053 = vlaneseq
  %v3054 = vshrl.u32 %v3053, 7
  %v3055 = vsub.s32 %v3052, %v3054
  %v3056 = vrot.slane %v3048, %v3055
  %3058 = vset.pattern.permute.xlu0 0
  %3059 = vperm.xlu0 %3058, %v514
  %v3060 = vpop.permute.xlu0 %3059
  %v3063 = vunpack.c.l.s4 839922192
  %v3064 = vunpack.c.0.s8 %v3063
  %v3065 = vlaneseq
  %v3066 = vshrl.u32 %v3065, 7
  %v3067 = vsub.s32 %v3064, %v3066
  %v3068 = vrot.slane %v3060, %v3067
  %3070 = vset.pattern.permute.xlu0 0
  %3071 = vperm.xlu0 %3070, %v515
  %v3072 = vpop.permute.xlu0 %3071
  %v3075 = vunpack.c.l.s4 839922192
  %v3076 = vunpack.c.0.s8 %v3075
  %v3077 = vlaneseq
  %v3078 = vshrl.u32 %v3077, 7
  %v3079 = vsub.s32 %v3076, %v3078
  %v3080 = vrot.slane %v3072, %v3079
  %3082 = vset.pattern.permute.xlu0 0
  %3083 = vperm.xlu0 %3082, %v516
  %v3084 = vpop.permute.xlu0 %3083
  %v3087 = vunpack.c.l.s4 839922192
  %v3088 = vunpack.c.0.s8 %v3087
  %v3089 = vlaneseq
  %v3090 = vshrl.u32 %v3089, 7
  %v3091 = vsub.s32 %v3088, %v3090
  %v3092 = vrot.slane %v3084, %v3091
  %3094 = vset.pattern.permute.xlu0 0
  %3095 = vperm.xlu0 %3094, %v517
  %v3096 = vpop.permute.xlu0 %3095
  %v3099 = vunpack.c.l.s4 839922192
  %v3100 = vunpack.c.0.s8 %v3099
  %v3101 = vlaneseq
  %v3102 = vshrl.u32 %v3101, 7
  %v3103 = vsub.s32 %v3100, %v3102
  %v3104 = vrot.slane %v3096, %v3103
  %3106 = vset.pattern.permute.xlu0 0
  %3107 = vperm.xlu0 %3106, %v518
  %v3108 = vpop.permute.xlu0 %3107
  %v3111 = vunpack.c.l.s4 839922192
  %v3112 = vunpack.c.0.s8 %v3111
  %v3113 = vlaneseq
  %v3114 = vshrl.u32 %v3113, 7
  %v3115 = vsub.s32 %v3112, %v3114
  %v3116 = vrot.slane %v3108, %v3115
  %3118 = vset.pattern.permute.xlu0 0
  %3119 = vperm.xlu0 %3118, %v519
  %v3120 = vpop.permute.xlu0 %3119
  %v3123 = vunpack.c.l.s4 839922192
  %v3124 = vunpack.c.0.s8 %v3123
  %v3125 = vlaneseq
  %v3126 = vshrl.u32 %v3125, 7
  %v3127 = vsub.s32 %v3124, %v3126
  %v3128 = vrot.slane %v3120, %v3127
  %3130 = vset.pattern.permute.xlu0 0
  %3131 = vperm.xlu0 %3130, %v520
  %v3132 = vpop.permute.xlu0 %3131
  %v3135 = vunpack.c.l.s4 839922192
  %v3136 = vunpack.c.0.s8 %v3135
  %v3137 = vlaneseq
  %v3138 = vshrl.u32 %v3137, 7
  %v3139 = vsub.s32 %v3136, %v3138
  %v3140 = vrot.slane %v3132, %v3139
  %3142 = vset.pattern.permute.xlu0 0
  %3143 = vperm.xlu0 %3142, %v521
  %v3144 = vpop.permute.xlu0 %3143
  %v3147 = vunpack.c.l.s4 839922192
  %v3148 = vunpack.c.0.s8 %v3147
  %v3149 = vlaneseq
  %v3150 = vshrl.u32 %v3149, 7
  %v3151 = vsub.s32 %v3148, %v3150
  %v3152 = vrot.slane %v3144, %v3151
  %3154 = vset.pattern.permute.xlu0 0
  %3155 = vperm.xlu0 %3154, %v522
  %v3156 = vpop.permute.xlu0 %3155
  %v3159 = vunpack.c.l.s4 839922192
  %v3160 = vunpack.c.0.s8 %v3159
  %v3161 = vlaneseq
  %v3162 = vshrl.u32 %v3161, 7
  %v3163 = vsub.s32 %v3160, %v3162
  %v3164 = vrot.slane %v3156, %v3163
  %3166 = vset.pattern.permute.xlu0 0
  %3167 = vperm.xlu0 %3166, %v523
  %v3168 = vpop.permute.xlu0 %3167
  %v3171 = vunpack.c.l.s4 839922192
  %v3172 = vunpack.c.0.s8 %v3171
  %v3173 = vlaneseq
  %v3174 = vshrl.u32 %v3173, 7
  %v3175 = vsub.s32 %v3172, %v3174
  %v3176 = vrot.slane %v3168, %v3175
  %3178 = vset.pattern.permute.xlu0 0
  %3179 = vperm.xlu0 %3178, %v524
  %v3180 = vpop.permute.xlu0 %3179
  %v3183 = vunpack.c.l.s4 839922192
  %v3184 = vunpack.c.0.s8 %v3183
  %v3185 = vlaneseq
  %v3186 = vshrl.u32 %v3185, 7
  %v3187 = vsub.s32 %v3184, %v3186
  %v3188 = vrot.slane %v3180, %v3187
  %3190 = vset.pattern.permute.xlu0 0
  %3191 = vperm.xlu0 %3190, %v525
  %v3192 = vpop.permute.xlu0 %3191
  %v3195 = vunpack.c.l.s4 839922192
  %v3196 = vunpack.c.0.s8 %v3195
  %v3197 = vlaneseq
  %v3198 = vshrl.u32 %v3197, 7
  %v3199 = vsub.s32 %v3196, %v3198
  %v3200 = vrot.slane %v3192, %v3199
  %3202 = vset.pattern.permute.xlu0 0
  %3203 = vperm.xlu0 %3202, %v526
  %v3204 = vpop.permute.xlu0 %3203
  %v3207 = vunpack.c.l.s4 839922192
  %v3208 = vunpack.c.0.s8 %v3207
  %v3209 = vlaneseq
  %v3210 = vshrl.u32 %v3209, 7
  %v3211 = vsub.s32 %v3208, %v3210
  %v3212 = vrot.slane %v3204, %v3211
  %3214 = vset.pattern.permute.xlu0 0
  %3215 = vperm.xlu0 %3214, %v527
  %v3216 = vpop.permute.xlu0 %3215
  %v3219 = vunpack.c.l.s4 839922192
  %v3220 = vunpack.c.0.s8 %v3219
  %v3221 = vlaneseq
  %v3222 = vshrl.u32 %v3221, 7
  %v3223 = vsub.s32 %v3220, %v3222
  %v3224 = vrot.slane %v3216, %v3223
  %3226 = vset.pattern.permute.xlu0 0
  %3227 = vperm.xlu0 %3226, %v528
  %v3228 = vpop.permute.xlu0 %3227
  %v3231 = vunpack.c.l.s4 839922192
  %v3232 = vunpack.c.0.s8 %v3231
  %v3233 = vlaneseq
  %v3234 = vshrl.u32 %v3233, 7
  %v3235 = vsub.s32 %v3232, %v3234
  %v3236 = vrot.slane %v3228, %v3235
  %3238 = vset.pattern.permute.xlu0 0
  %3239 = vperm.xlu0 %3238, %v529
  %v3240 = vpop.permute.xlu0 %3239
  %v3243 = vunpack.c.l.s4 839922192
  %v3244 = vunpack.c.0.s8 %v3243
  %v3245 = vlaneseq
  %v3246 = vshrl.u32 %v3245, 7
  %v3247 = vsub.s32 %v3244, %v3246
  %v3248 = vrot.slane %v3240, %v3247
  %3250 = vset.pattern.permute.xlu0 0
  %3251 = vperm.xlu0 %3250, %v530
  %v3252 = vpop.permute.xlu0 %3251
  %v3255 = vunpack.c.l.s4 839922192
  %v3256 = vunpack.c.0.s8 %v3255
  %v3257 = vlaneseq
  %v3258 = vshrl.u32 %v3257, 7
  %v3259 = vsub.s32 %v3256, %v3258
  %v3260 = vrot.slane %v3252, %v3259
  %3262 = vset.pattern.permute.xlu0 0
  %3263 = vperm.xlu0 %3262, %v531
  %v3264 = vpop.permute.xlu0 %3263
  %v3267 = vunpack.c.l.s4 839922192
  %v3268 = vunpack.c.0.s8 %v3267
  %v3269 = vlaneseq
  %v3270 = vshrl.u32 %v3269, 7
  %v3271 = vsub.s32 %v3268, %v3270
  %v3272 = vrot.slane %v3264, %v3271
  %3274 = vset.pattern.permute.xlu0 0
  %3275 = vperm.xlu0 %3274, %v532
  %v3276 = vpop.permute.xlu0 %3275
  %v3279 = vunpack.c.l.s4 839922192
  %v3280 = vunpack.c.0.s8 %v3279
  %v3281 = vlaneseq
  %v3282 = vshrl.u32 %v3281, 7
  %v3283 = vsub.s32 %v3280, %v3282
  %v3284 = vrot.slane %v3276, %v3283
  %3286 = vset.pattern.permute.xlu0 0
  %3287 = vperm.xlu0 %3286, %v533
  %v3288 = vpop.permute.xlu0 %3287
  %v3291 = vunpack.c.l.s4 839922192
  %v3292 = vunpack.c.0.s8 %v3291
  %v3293 = vlaneseq
  %v3294 = vshrl.u32 %v3293, 7
  %v3295 = vsub.s32 %v3292, %v3294
  %v3296 = vrot.slane %v3288, %v3295
  %3298 = vset.pattern.permute.xlu0 0
  %3299 = vperm.xlu0 %3298, %v534
  %v3300 = vpop.permute.xlu0 %3299
  %v3303 = vunpack.c.l.s4 839922192
  %v3304 = vunpack.c.0.s8 %v3303
  %v3305 = vlaneseq
  %v3306 = vshrl.u32 %v3305, 7
  %v3307 = vsub.s32 %v3304, %v3306
  %v3308 = vrot.slane %v3300, %v3307
  %3310 = vset.pattern.permute.xlu0 0
  %3311 = vperm.xlu0 %3310, %v535
  %v3312 = vpop.permute.xlu0 %3311
  %v3315 = vunpack.c.l.s4 839922192
  %v3316 = vunpack.c.0.s8 %v3315
  %v3317 = vlaneseq
  %v3318 = vshrl.u32 %v3317, 7
  %v3319 = vsub.s32 %v3316, %v3318
  %v3320 = vrot.slane %v3312, %v3319
  %3322 = vset.pattern.permute.xlu0 0
  %3323 = vperm.xlu0 %3322, %v536
  %v3324 = vpop.permute.xlu0 %3323
  %v3327 = vunpack.c.l.s4 839922192
  %v3328 = vunpack.c.0.s8 %v3327
  %v3329 = vlaneseq
  %v3330 = vshrl.u32 %v3329, 7
  %v3331 = vsub.s32 %v3328, %v3330
  %v3332 = vrot.slane %v3324, %v3331
  %3334 = vset.pattern.permute.xlu0 0
  %3335 = vperm.xlu0 %3334, %v537
  %v3336 = vpop.permute.xlu0 %3335
  %v3339 = vunpack.c.l.s4 839922192
  %v3340 = vunpack.c.0.s8 %v3339
  %v3341 = vlaneseq
  %v3342 = vshrl.u32 %v3341, 7
  %v3343 = vsub.s32 %v3340, %v3342
  %v3344 = vrot.slane %v3336, %v3343
  %3346 = vset.pattern.permute.xlu0 0
  %3347 = vperm.xlu0 %3346, %v538
  %v3348 = vpop.permute.xlu0 %3347
  %v3351 = vunpack.c.l.s4 839922192
  %v3352 = vunpack.c.0.s8 %v3351
  %v3353 = vlaneseq
  %v3354 = vshrl.u32 %v3353, 7
  %v3355 = vsub.s32 %v3352, %v3354
  %v3356 = vrot.slane %v3348, %v3355
  %3358 = vset.pattern.permute.xlu0 0
  %3359 = vperm.xlu0 %3358, %v539
  %v3360 = vpop.permute.xlu0 %3359
  %v3363 = vunpack.c.l.s4 839922192
  %v3364 = vunpack.c.0.s8 %v3363
  %v3365 = vlaneseq
  %v3366 = vshrl.u32 %v3365, 7
  %v3367 = vsub.s32 %v3364, %v3366
  %v3368 = vrot.slane %v3360, %v3367
  %3370 = vset.pattern.permute.xlu0 0
  %3371 = vperm.xlu0 %3370, %v540
  %v3372 = vpop.permute.xlu0 %3371
  %v3375 = vunpack.c.l.s4 839922192
  %v3376 = vunpack.c.0.s8 %v3375
  %v3377 = vlaneseq
  %v3378 = vshrl.u32 %v3377, 7
  %v3379 = vsub.s32 %v3376, %v3378
  %v3380 = vrot.slane %v3372, %v3379
  %3382 = vset.pattern.permute.xlu0 0
  %3383 = vperm.xlu0 %3382, %v541
  %v3384 = vpop.permute.xlu0 %3383
  %v3387 = vunpack.c.l.s4 839922192
  %v3388 = vunpack.c.0.s8 %v3387
  %v3389 = vlaneseq
  %v3390 = vshrl.u32 %v3389, 7
  %v3391 = vsub.s32 %v3388, %v3390
  %v3392 = vrot.slane %v3384, %v3391
  %3394 = vset.pattern.permute.xlu0 0
  %3395 = vperm.xlu0 %3394, %v542
  %v3396 = vpop.permute.xlu0 %3395
  %v3399 = vunpack.c.l.s4 839922192
  %v3400 = vunpack.c.0.s8 %v3399
  %v3401 = vlaneseq
  %v3402 = vshrl.u32 %v3401, 7
  %v3403 = vsub.s32 %v3400, %v3402
  %v3404 = vrot.slane %v3396, %v3403
  %3406 = vset.pattern.permute.xlu0 0
  %3407 = vperm.xlu0 %3406, %v543
  %v3408 = vpop.permute.xlu0 %3407
  %v3411 = vunpack.c.l.s4 839922192
  %v3412 = vunpack.c.0.s8 %v3411
  %v3413 = vlaneseq
  %v3414 = vshrl.u32 %v3413, 7
  %v3415 = vsub.s32 %v3412, %v3414
  %v3416 = vrot.slane %v3408, %v3415
  %3418 = vset.pattern.permute.xlu0 0
  %3419 = vperm.xlu0 %3418, %v544
  %v3420 = vpop.permute.xlu0 %3419
  %v3423 = vunpack.c.l.s4 839922192
  %v3424 = vunpack.c.0.s8 %v3423
  %v3425 = vlaneseq
  %v3426 = vshrl.u32 %v3425, 7
  %v3427 = vsub.s32 %v3424, %v3426
  %v3428 = vrot.slane %v3420, %v3427
  %3430 = vset.pattern.permute.xlu0 0
  %3431 = vperm.xlu0 %3430, %v545
  %v3432 = vpop.permute.xlu0 %3431
  %v3435 = vunpack.c.l.s4 839922192
  %v3436 = vunpack.c.0.s8 %v3435
  %v3437 = vlaneseq
  %v3438 = vshrl.u32 %v3437, 7
  %v3439 = vsub.s32 %v3436, %v3438
  %v3440 = vrot.slane %v3432, %v3439
  %3442 = vset.pattern.permute.xlu0 0
  %3443 = vperm.xlu0 %3442, %v546
  %v3444 = vpop.permute.xlu0 %3443
  %v3447 = vunpack.c.l.s4 839922192
  %v3448 = vunpack.c.0.s8 %v3447
  %v3449 = vlaneseq
  %v3450 = vshrl.u32 %v3449, 7
  %v3451 = vsub.s32 %v3448, %v3450
  %v3452 = vrot.slane %v3444, %v3451
  %3454 = vset.pattern.permute.xlu0 0
  %3455 = vperm.xlu0 %3454, %v547
  %v3456 = vpop.permute.xlu0 %3455
  %v3459 = vunpack.c.l.s4 839922192
  %v3460 = vunpack.c.0.s8 %v3459
  %v3461 = vlaneseq
  %v3462 = vshrl.u32 %v3461, 7
  %v3463 = vsub.s32 %v3460, %v3462
  %v3464 = vrot.slane %v3456, %v3463
  %3466 = vset.pattern.permute.xlu0 0
  %3467 = vperm.xlu0 %3466, %v548
  %v3468 = vpop.permute.xlu0 %3467
  %v3471 = vunpack.c.l.s4 839922192
  %v3472 = vunpack.c.0.s8 %v3471
  %v3473 = vlaneseq
  %v3474 = vshrl.u32 %v3473, 7
  %v3475 = vsub.s32 %v3472, %v3474
  %v3476 = vrot.slane %v3468, %v3475
  %3478 = vset.pattern.permute.xlu0 0
  %3479 = vperm.xlu0 %3478, %v549
  %v3480 = vpop.permute.xlu0 %3479
  %v3483 = vunpack.c.l.s4 839922192
  %v3484 = vunpack.c.0.s8 %v3483
  %v3485 = vlaneseq
  %v3486 = vshrl.u32 %v3485, 7
  %v3487 = vsub.s32 %v3484, %v3486
  %v3488 = vrot.slane %v3480, %v3487
  %3490 = vset.pattern.permute.xlu0 0
  %3491 = vperm.xlu0 %3490, %v550
  %v3492 = vpop.permute.xlu0 %3491
  %v3495 = vunpack.c.l.s4 839922192
  %v3496 = vunpack.c.0.s8 %v3495
  %v3497 = vlaneseq
  %v3498 = vshrl.u32 %v3497, 7
  %v3499 = vsub.s32 %v3496, %v3498
  %v3500 = vrot.slane %v3492, %v3499
  %3502 = vset.pattern.permute.xlu0 0
  %3503 = vperm.xlu0 %3502, %v551
  %v3504 = vpop.permute.xlu0 %3503
  %v3507 = vunpack.c.l.s4 839922192
  %v3508 = vunpack.c.0.s8 %v3507
  %v3509 = vlaneseq
  %v3510 = vshrl.u32 %v3509, 7
  %v3511 = vsub.s32 %v3508, %v3510
  %v3512 = vrot.slane %v3504, %v3511
  %3514 = vset.pattern.permute.xlu0 0
  %3515 = vperm.xlu0 %3514, %v552
  %v3516 = vpop.permute.xlu0 %3515
  %v3519 = vunpack.c.l.s4 839922192
  %v3520 = vunpack.c.0.s8 %v3519
  %v3521 = vlaneseq
  %v3522 = vshrl.u32 %v3521, 7
  %v3523 = vsub.s32 %v3520, %v3522
  %v3524 = vrot.slane %v3516, %v3523
  %3526 = vset.pattern.permute.xlu0 0
  %3527 = vperm.xlu0 %3526, %v553
  %v3528 = vpop.permute.xlu0 %3527
  %v3531 = vunpack.c.l.s4 839922192
  %v3532 = vunpack.c.0.s8 %v3531
  %v3533 = vlaneseq
  %v3534 = vshrl.u32 %v3533, 7
  %v3535 = vsub.s32 %v3532, %v3534
  %v3536 = vrot.slane %v3528, %v3535
  %3538 = vset.pattern.permute.xlu0 0
  %3539 = vperm.xlu0 %3538, %v554
  %v3540 = vpop.permute.xlu0 %3539
  %v3543 = vunpack.c.l.s4 839922192
  %v3544 = vunpack.c.0.s8 %v3543
  %v3545 = vlaneseq
  %v3546 = vshrl.u32 %v3545, 7
  %v3547 = vsub.s32 %v3544, %v3546
  %v3548 = vrot.slane %v3540, %v3547
  %3550 = vset.pattern.permute.xlu0 0
  %3551 = vperm.xlu0 %3550, %v555
  %v3552 = vpop.permute.xlu0 %3551
  %v3555 = vunpack.c.l.s4 839922192
  %v3556 = vunpack.c.0.s8 %v3555
  %v3557 = vlaneseq
  %v3558 = vshrl.u32 %v3557, 7
  %v3559 = vsub.s32 %v3556, %v3558
  %v3560 = vrot.slane %v3552, %v3559
  %3562 = vset.pattern.permute.xlu0 0
  %3563 = vperm.xlu0 %3562, %v556
  %v3564 = vpop.permute.xlu0 %3563
  %v3567 = vunpack.c.l.s4 839922192
  %v3568 = vunpack.c.0.s8 %v3567
  %v3569 = vlaneseq
  %v3570 = vshrl.u32 %v3569, 7
  %v3571 = vsub.s32 %v3568, %v3570
  %v3572 = vrot.slane %v3564, %v3571
  %3574 = vset.pattern.permute.xlu0 0
  %3575 = vperm.xlu0 %3574, %v557
  %v3576 = vpop.permute.xlu0 %3575
  %v3579 = vunpack.c.l.s4 839922192
  %v3580 = vunpack.c.0.s8 %v3579
  %v3581 = vlaneseq
  %v3582 = vshrl.u32 %v3581, 7
  %v3583 = vsub.s32 %v3580, %v3582
  %v3584 = vrot.slane %v3576, %v3583
  %3586 = vset.pattern.permute.xlu0 0
  %3587 = vperm.xlu0 %3586, %v558
  %v3588 = vpop.permute.xlu0 %3587
  %v3591 = vunpack.c.l.s4 839922192
  %v3592 = vunpack.c.0.s8 %v3591
  %v3593 = vlaneseq
  %v3594 = vshrl.u32 %v3593, 7
  %v3595 = vsub.s32 %v3592, %v3594
  %v3596 = vrot.slane %v3588, %v3595
  %3598 = vset.pattern.permute.xlu0 0
  %3599 = vperm.xlu0 %3598, %v559
  %v3600 = vpop.permute.xlu0 %3599
  %v3603 = vunpack.c.l.s4 839922192
  %v3604 = vunpack.c.0.s8 %v3603
  %v3605 = vlaneseq
  %v3606 = vshrl.u32 %v3605, 7
  %v3607 = vsub.s32 %v3604, %v3606
  %v3608 = vrot.slane %v3600, %v3607
  %3610 = vset.pattern.permute.xlu0 0
  %3611 = vperm.xlu0 %3610, %v560
  %v3612 = vpop.permute.xlu0 %3611
  %v3615 = vunpack.c.l.s4 839922192
  %v3616 = vunpack.c.0.s8 %v3615
  %v3617 = vlaneseq
  %v3618 = vshrl.u32 %v3617, 7
  %v3619 = vsub.s32 %v3616, %v3618
  %v3620 = vrot.slane %v3612, %v3619
  %3622 = vset.pattern.permute.xlu0 0
  %3623 = vperm.xlu0 %3622, %v561
  %v3624 = vpop.permute.xlu0 %3623
  %v3627 = vunpack.c.l.s4 839922192
  %v3628 = vunpack.c.0.s8 %v3627
  %v3629 = vlaneseq
  %v3630 = vshrl.u32 %v3629, 7
  %v3631 = vsub.s32 %v3628, %v3630
  %v3632 = vrot.slane %v3624, %v3631
  %3634 = vset.pattern.permute.xlu0 0
  %3635 = vperm.xlu0 %3634, %v562
  %v3636 = vpop.permute.xlu0 %3635
  %v3639 = vunpack.c.l.s4 839922192
  %v3640 = vunpack.c.0.s8 %v3639
  %v3641 = vlaneseq
  %v3642 = vshrl.u32 %v3641, 7
  %v3643 = vsub.s32 %v3640, %v3642
  %v3644 = vrot.slane %v3636, %v3643
  %3646 = vset.pattern.permute.xlu0 0
  %3647 = vperm.xlu0 %3646, %v563
  %v3648 = vpop.permute.xlu0 %3647
  %v3651 = vunpack.c.l.s4 839922192
  %v3652 = vunpack.c.0.s8 %v3651
  %v3653 = vlaneseq
  %v3654 = vshrl.u32 %v3653, 7
  %v3655 = vsub.s32 %v3652, %v3654
  %v3656 = vrot.slane %v3648, %v3655
  %3658 = vset.pattern.permute.xlu0 0
  %3659 = vperm.xlu0 %3658, %v564
  %v3660 = vpop.permute.xlu0 %3659
  %v3663 = vunpack.c.l.s4 839922192
  %v3664 = vunpack.c.0.s8 %v3663
  %v3665 = vlaneseq
  %v3666 = vshrl.u32 %v3665, 7
  %v3667 = vsub.s32 %v3664, %v3666
  %v3668 = vrot.slane %v3660, %v3667
  %3670 = vset.pattern.permute.xlu0 0
  %3671 = vperm.xlu0 %3670, %v565
  %v3672 = vpop.permute.xlu0 %3671
  %v3675 = vunpack.c.l.s4 839922192
  %v3676 = vunpack.c.0.s8 %v3675
  %v3677 = vlaneseq
  %v3678 = vshrl.u32 %v3677, 7
  %v3679 = vsub.s32 %v3676, %v3678
  %v3680 = vrot.slane %v3672, %v3679
  %3682 = vset.pattern.permute.xlu0 0
  %3683 = vperm.xlu0 %3682, %v566
  %v3684 = vpop.permute.xlu0 %3683
  %v3687 = vunpack.c.l.s4 839922192
  %v3688 = vunpack.c.0.s8 %v3687
  %v3689 = vlaneseq
  %v3690 = vshrl.u32 %v3689, 7
  %v3691 = vsub.s32 %v3688, %v3690
  %v3692 = vrot.slane %v3684, %v3691
  %3694 = vset.pattern.permute.xlu0 0
  %3695 = vperm.xlu0 %3694, %v567
  %v3696 = vpop.permute.xlu0 %3695
  %v3699 = vunpack.c.l.s4 839922192
  %v3700 = vunpack.c.0.s8 %v3699
  %v3701 = vlaneseq
  %v3702 = vshrl.u32 %v3701, 7
  %v3703 = vsub.s32 %v3700, %v3702
  %v3704 = vrot.slane %v3696, %v3703
  %3706 = vset.pattern.permute.xlu0 0
  %3707 = vperm.xlu0 %3706, %v568
  %v3708 = vpop.permute.xlu0 %3707
  %v3711 = vunpack.c.l.s4 839922192
  %v3712 = vunpack.c.0.s8 %v3711
  %v3713 = vlaneseq
  %v3714 = vshrl.u32 %v3713, 7
  %v3715 = vsub.s32 %v3712, %v3714
  %v3716 = vrot.slane %v3708, %v3715
  %3718 = vset.pattern.permute.xlu0 0
  %3719 = vperm.xlu0 %3718, %v569
  %v3720 = vpop.permute.xlu0 %3719
  %v3723 = vunpack.c.l.s4 839922192
  %v3724 = vunpack.c.0.s8 %v3723
  %v3725 = vlaneseq
  %v3726 = vshrl.u32 %v3725, 7
  %v3727 = vsub.s32 %v3724, %v3726
  %v3728 = vrot.slane %v3720, %v3727
  %3730 = vset.pattern.permute.xlu0 0
  %3731 = vperm.xlu0 %3730, %v570
  %v3732 = vpop.permute.xlu0 %3731
  %v3735 = vunpack.c.l.s4 839922192
  %v3736 = vunpack.c.0.s8 %v3735
  %v3737 = vlaneseq
  %v3738 = vshrl.u32 %v3737, 7
  %v3739 = vsub.s32 %v3736, %v3738
  %v3740 = vrot.slane %v3732, %v3739
  %3742 = vset.pattern.permute.xlu0 0
  %3743 = vperm.xlu0 %3742, %v571
  %v3744 = vpop.permute.xlu0 %3743
  %v3747 = vunpack.c.l.s4 839922192
  %v3748 = vunpack.c.0.s8 %v3747
  %v3749 = vlaneseq
  %v3750 = vshrl.u32 %v3749, 7
  %v3751 = vsub.s32 %v3748, %v3750
  %v3752 = vrot.slane %v3744, %v3751
  %3754 = vset.pattern.permute.xlu0 0
  %3755 = vperm.xlu0 %3754, %v572
  %v3756 = vpop.permute.xlu0 %3755
  %v3759 = vunpack.c.l.s4 839922192
  %v3760 = vunpack.c.0.s8 %v3759
  %v3761 = vlaneseq
  %v3762 = vshrl.u32 %v3761, 7
  %v3763 = vsub.s32 %v3760, %v3762
  %v3764 = vrot.slane %v3756, %v3763
  %3766 = vset.pattern.permute.xlu0 0
  %3767 = vperm.xlu0 %3766, %v573
  %v3768 = vpop.permute.xlu0 %3767
  %v3771 = vunpack.c.l.s4 839922192
  %v3772 = vunpack.c.0.s8 %v3771
  %v3773 = vlaneseq
  %v3774 = vshrl.u32 %v3773, 7
  %v3775 = vsub.s32 %v3772, %v3774
  %v3776 = vrot.slane %v3768, %v3775
  %3778 = vset.pattern.permute.xlu0 0
  %3779 = vperm.xlu0 %3778, %v574
  %v3780 = vpop.permute.xlu0 %3779
  %v3783 = vunpack.c.l.s4 839922192
  %v3784 = vunpack.c.0.s8 %v3783
  %v3785 = vlaneseq
  %v3786 = vshrl.u32 %v3785, 7
  %v3787 = vsub.s32 %v3784, %v3786
  %v3788 = vrot.slane %v3780, %v3787
  %3790 = vset.pattern.permute.xlu0 0
  %3791 = vperm.xlu0 %3790, %v575
  %v3792 = vpop.permute.xlu0 %3791
  %v3795 = vunpack.c.l.s4 839922192
  %v3796 = vunpack.c.0.s8 %v3795
  %v3797 = vlaneseq
  %v3798 = vshrl.u32 %v3797, 7
  %v3799 = vsub.s32 %v3796, %v3798
  %v3800 = vrot.slane %v3792, %v3799
  %3802 = vset.pattern.permute.xlu0 0
  %3803 = vperm.xlu0 %3802, %v576
  %v3804 = vpop.permute.xlu0 %3803
  %v3807 = vunpack.c.l.s4 839922192
  %v3808 = vunpack.c.0.s8 %v3807
  %v3809 = vlaneseq
  %v3810 = vshrl.u32 %v3809, 7
  %v3811 = vsub.s32 %v3808, %v3810
  %v3812 = vrot.slane %v3804, %v3811
  %3814 = vset.pattern.permute.xlu0 0
  %3815 = vperm.xlu0 %3814, %v577
  %v3816 = vpop.permute.xlu0 %3815
  %v3819 = vunpack.c.l.s4 839922192
  %v3820 = vunpack.c.0.s8 %v3819
  %v3821 = vlaneseq
  %v3822 = vshrl.u32 %v3821, 7
  %v3823 = vsub.s32 %v3820, %v3822
  %v3824 = vrot.slane %v3816, %v3823
  %3826 = vset.pattern.permute.xlu0 0
  %3827 = vperm.xlu0 %3826, %v578
  %v3828 = vpop.permute.xlu0 %3827
  %v3831 = vunpack.c.l.s4 839922192
  %v3832 = vunpack.c.0.s8 %v3831
  %v3833 = vlaneseq
  %v3834 = vshrl.u32 %v3833, 7
  %v3835 = vsub.s32 %v3832, %v3834
  %v3836 = vrot.slane %v3828, %v3835
  %3838 = vset.pattern.permute.xlu0 0
  %3839 = vperm.xlu0 %3838, %v579
  %v3840 = vpop.permute.xlu0 %3839
  %v3843 = vunpack.c.l.s4 839922192
  %v3844 = vunpack.c.0.s8 %v3843
  %v3845 = vlaneseq
  %v3846 = vshrl.u32 %v3845, 7
  %v3847 = vsub.s32 %v3844, %v3846
  %v3848 = vrot.slane %v3840, %v3847
  %3850 = vset.pattern.permute.xlu0 0
  %3851 = vperm.xlu0 %3850, %v580
  %v3852 = vpop.permute.xlu0 %3851
  %v3855 = vunpack.c.l.s4 839922192
  %v3856 = vunpack.c.0.s8 %v3855
  %v3857 = vlaneseq
  %v3858 = vshrl.u32 %v3857, 7
  %v3859 = vsub.s32 %v3856, %v3858
  %v3860 = vrot.slane %v3852, %v3859
  %3862 = vset.pattern.permute.xlu0 0
  %3863 = vperm.xlu0 %3862, %v581
  %v3864 = vpop.permute.xlu0 %3863
  %v3867 = vunpack.c.l.s4 839922192
  %v3868 = vunpack.c.0.s8 %v3867
  %v3869 = vlaneseq
  %v3870 = vshrl.u32 %v3869, 7
  %v3871 = vsub.s32 %v3868, %v3870
  %v3872 = vrot.slane %v3864, %v3871
  %3874 = vset.pattern.permute.xlu0 0
  %3875 = vperm.xlu0 %3874, %v582
  %v3876 = vpop.permute.xlu0 %3875
  %v3879 = vunpack.c.l.s4 839922192
  %v3880 = vunpack.c.0.s8 %v3879
  %v3881 = vlaneseq
  %v3882 = vshrl.u32 %v3881, 7
  %v3883 = vsub.s32 %v3880, %v3882
  %v3884 = vrot.slane %v3876, %v3883
  %3886 = vset.pattern.permute.xlu0 0
  %3887 = vperm.xlu0 %3886, %v583
  %v3888 = vpop.permute.xlu0 %3887
  %v3891 = vunpack.c.l.s4 839922192
  %v3892 = vunpack.c.0.s8 %v3891
  %v3893 = vlaneseq
  %v3894 = vshrl.u32 %v3893, 7
  %v3895 = vsub.s32 %v3892, %v3894
  %v3896 = vrot.slane %v3888, %v3895
  %3898 = vset.pattern.permute.xlu0 0
  %3899 = vperm.xlu0 %3898, %v584
  %v3900 = vpop.permute.xlu0 %3899
  %v3903 = vunpack.c.l.s4 839922192
  %v3904 = vunpack.c.0.s8 %v3903
  %v3905 = vlaneseq
  %v3906 = vshrl.u32 %v3905, 7
  %v3907 = vsub.s32 %v3904, %v3906
  %v3908 = vrot.slane %v3900, %v3907
  %3910 = vset.pattern.permute.xlu0 0
  %3911 = vperm.xlu0 %3910, %v585
  %v3912 = vpop.permute.xlu0 %3911
  %v3915 = vunpack.c.l.s4 839922192
  %v3916 = vunpack.c.0.s8 %v3915
  %v3917 = vlaneseq
  %v3918 = vshrl.u32 %v3917, 7
  %v3919 = vsub.s32 %v3916, %v3918
  %v3920 = vrot.slane %v3912, %v3919
  %3922 = vset.pattern.permute.xlu0 0
  %3923 = vperm.xlu0 %3922, %v586
  %v3924 = vpop.permute.xlu0 %3923
  %v3927 = vunpack.c.l.s4 839922192
  %v3928 = vunpack.c.0.s8 %v3927
  %v3929 = vlaneseq
  %v3930 = vshrl.u32 %v3929, 7
  %v3931 = vsub.s32 %v3928, %v3930
  %v3932 = vrot.slane %v3924, %v3931
  %3934 = vset.pattern.permute.xlu0 0
  %3935 = vperm.xlu0 %3934, %v587
  %v3936 = vpop.permute.xlu0 %3935
  %v3939 = vunpack.c.l.s4 839922192
  %v3940 = vunpack.c.0.s8 %v3939
  %v3941 = vlaneseq
  %v3942 = vshrl.u32 %v3941, 7
  %v3943 = vsub.s32 %v3940, %v3942
  %v3944 = vrot.slane %v3936, %v3943
  %3946 = vset.pattern.permute.xlu0 0
  %3947 = vperm.xlu0 %3946, %v588
  %v3948 = vpop.permute.xlu0 %3947
  %v3951 = vunpack.c.l.s4 839922192
  %v3952 = vunpack.c.0.s8 %v3951
  %v3953 = vlaneseq
  %v3954 = vshrl.u32 %v3953, 7
  %v3955 = vsub.s32 %v3952, %v3954
  %v3956 = vrot.slane %v3948, %v3955
  %3958 = vset.pattern.permute.xlu0 0
  %3959 = vperm.xlu0 %3958, %v589
  %v3960 = vpop.permute.xlu0 %3959
  %v3963 = vunpack.c.l.s4 839922192
  %v3964 = vunpack.c.0.s8 %v3963
  %v3965 = vlaneseq
  %v3966 = vshrl.u32 %v3965, 7
  %v3967 = vsub.s32 %v3964, %v3966
  %v3968 = vrot.slane %v3960, %v3967
  %3970 = vset.pattern.permute.xlu0 0
  %3971 = vperm.xlu0 %3970, %v590
  %v3972 = vpop.permute.xlu0 %3971
  %v3975 = vunpack.c.l.s4 839922192
  %v3976 = vunpack.c.0.s8 %v3975
  %v3977 = vlaneseq
  %v3978 = vshrl.u32 %v3977, 7
  %v3979 = vsub.s32 %v3976, %v3978
  %v3980 = vrot.slane %v3972, %v3979
  %3982 = vset.pattern.permute.xlu0 0
  %3983 = vperm.xlu0 %3982, %v591
  %v3984 = vpop.permute.xlu0 %3983
  %v3987 = vunpack.c.l.s4 839922192
  %v3988 = vunpack.c.0.s8 %v3987
  %v3989 = vlaneseq
  %v3990 = vshrl.u32 %v3989, 7
  %v3991 = vsub.s32 %v3988, %v3990
  %v3992 = vrot.slane %v3984, %v3991
  %3994 = vset.pattern.permute.xlu0 0
  %3995 = vperm.xlu0 %3994, %v592
  %v3996 = vpop.permute.xlu0 %3995
  %v3999 = vunpack.c.l.s4 839922192
  %v4000 = vunpack.c.0.s8 %v3999
  %v4001 = vlaneseq
  %v4002 = vshrl.u32 %v4001, 7
  %v4003 = vsub.s32 %v4000, %v4002
  %v4004 = vrot.slane %v3996, %v4003
  %4006 = vset.pattern.permute.xlu0 0
  %4007 = vperm.xlu0 %4006, %v593
  %v4008 = vpop.permute.xlu0 %4007
  %v4011 = vunpack.c.l.s4 839922192
  %v4012 = vunpack.c.0.s8 %v4011
  %v4013 = vlaneseq
  %v4014 = vshrl.u32 %v4013, 7
  %v4015 = vsub.s32 %v4012, %v4014
  %v4016 = vrot.slane %v4008, %v4015
  %4018 = vset.pattern.permute.xlu0 0
  %4019 = vperm.xlu0 %4018, %v594
  %v4020 = vpop.permute.xlu0 %4019
  %v4023 = vunpack.c.l.s4 839922192
  %v4024 = vunpack.c.0.s8 %v4023
  %v4025 = vlaneseq
  %v4026 = vshrl.u32 %v4025, 7
  %v4027 = vsub.s32 %v4024, %v4026
  %v4028 = vrot.slane %v4020, %v4027
  %4030 = vset.pattern.permute.xlu0 0
  %4031 = vperm.xlu0 %4030, %v595
  %v4032 = vpop.permute.xlu0 %4031
  %v4035 = vunpack.c.l.s4 839922192
  %v4036 = vunpack.c.0.s8 %v4035
  %v4037 = vlaneseq
  %v4038 = vshrl.u32 %v4037, 7
  %v4039 = vsub.s32 %v4036, %v4038
  %v4040 = vrot.slane %v4032, %v4039
  %4042 = vset.pattern.permute.xlu0 0
  %4043 = vperm.xlu0 %4042, %v596
  %v4044 = vpop.permute.xlu0 %4043
  %v4047 = vunpack.c.l.s4 839922192
  %v4048 = vunpack.c.0.s8 %v4047
  %v4049 = vlaneseq
  %v4050 = vshrl.u32 %v4049, 7
  %v4051 = vsub.s32 %v4048, %v4050
  %v4052 = vrot.slane %v4044, %v4051
  %v4053 = vmul.bf16 %v21, %v608
  %v4054 = vmul.bf16 %v22, %v620
  %v4055 = vmul.bf16 %v23, %v632
  %v4056 = vmul.bf16 %v24, %v644
  %v4057 = vmul.bf16 %v25, %v656
  %v4058 = vmul.bf16 %v26, %v668
  %v4059 = vmul.bf16 %v27, %v680
  %v4060 = vmul.bf16 %v28, %v692
  %v4061 = vmul.bf16 %v29, %v704
  %v4062 = vmul.bf16 %v30, %v716
  %v4063 = vmul.bf16 %v31, %v728
  %v4064 = vmul.bf16 %v32, %v740
  %v4065 = vmul.bf16 %v33, %v752
  %v4066 = vmul.bf16 %v34, %v764
  %v4067 = vmul.bf16 %v35, %v776
  %v4068 = vmul.bf16 %v36, %v788
  %v4069 = vmul.bf16 %v37, %v800
  %v4070 = vmul.bf16 %v38, %v812
  %v4071 = vmul.bf16 %v39, %v824
  %v4072 = vmul.bf16 %v40, %v836
  %v4073 = vmul.bf16 %v41, %v848
  %v4074 = vmul.bf16 %v42, %v860
  %v4075 = vmul.bf16 %v43, %v872
  %v4076 = vmul.bf16 %v44, %v884
  %v4077 = vmul.bf16 %v45, %v896
  %v4078 = vmul.bf16 %v46, %v908
  %v4079 = vmul.bf16 %v47, %v920
  %v4080 = vmul.bf16 %v48, %v932
  %v4081 = vmul.bf16 %v49, %v944
  %v4082 = vmul.bf16 %v50, %v956
  %v4083 = vmul.bf16 %v51, %v968
  %v4084 = vmul.bf16 %v52, %v980
  %v4085 = vmul.bf16 %v53, %v992
  %v4086 = vmul.bf16 %v54, %v1004
  %v4087 = vmul.bf16 %v55, %v1016
  %v4088 = vmul.bf16 %v56, %v1028
  %v4089 = vmul.bf16 %v57, %v1040
  %v4090 = vmul.bf16 %v58, %v1052
  %v4091 = vmul.bf16 %v59, %v1064
  %v4092 = vmul.bf16 %v60, %v1076
  %v4093 = vmul.bf16 %v61, %v1088
  %v4094 = vmul.bf16 %v62, %v1100
  %v4095 = vmul.bf16 %v63, %v1112
  %v4096 = vmul.bf16 %v64, %v1124
  %v4097 = vmul.bf16 %v65, %v1136
  %v4098 = vmul.bf16 %v66, %v1148
  %v4099 = vmul.bf16 %v67, %v1160
  %v4100 = vmul.bf16 %v68, %v1172
  %v4101 = vmul.bf16 %v69, %v1184
  %v4102 = vmul.bf16 %v70, %v1196
  %v4103 = vmul.bf16 %v71, %v1208
  %v4104 = vmul.bf16 %v72, %v1220
  %v4105 = vmul.bf16 %v73, %v1232
  %v4106 = vmul.bf16 %v74, %v1244
  %v4107 = vmul.bf16 %v75, %v1256
  %v4108 = vmul.bf16 %v76, %v1268
  %v4109 = vmul.bf16 %v77, %v1280
  %v4110 = vmul.bf16 %v78, %v1292
  %v4111 = vmul.bf16 %v79, %v1304
  %v4112 = vmul.bf16 %v80, %v1316
  %v4113 = vmul.bf16 %v81, %v1328
  %v4114 = vmul.bf16 %v82, %v1340
  %v4115 = vmul.bf16 %v83, %v1352
  %v4116 = vmul.bf16 %v84, %v1364
  %v4117 = vmul.bf16 %v85, %v1376
  %v4118 = vmul.bf16 %v86, %v1388
  %v4119 = vmul.bf16 %v87, %v1400
  %v4120 = vmul.bf16 %v88, %v1412
  %v4121 = vmul.bf16 %v89, %v1424
  %v4122 = vmul.bf16 %v90, %v1436
  %v4123 = vmul.bf16 %v91, %v1448
  %v4124 = vmul.bf16 %v92, %v1460
  %v4125 = vmul.bf16 %v93, %v1472
  %v4126 = vmul.bf16 %v94, %v1484
  %v4127 = vmul.bf16 %v95, %v1496
  %v4128 = vmul.bf16 %v96, %v1508
  %v4129 = vmul.bf16 %v97, %v1520
  %v4130 = vmul.bf16 %v98, %v1532
  %v4131 = vmul.bf16 %v99, %v1544
  %v4132 = vmul.bf16 %v100, %v1556
  %v4133 = vmul.bf16 %v101, %v1568
  %v4134 = vmul.bf16 %v102, %v1580
  %v4135 = vmul.bf16 %v103, %v1592
  %v4136 = vmul.bf16 %v104, %v1604
  %v4137 = vmul.bf16 %v105, %v1616
  %v4138 = vmul.bf16 %v106, %v1628
  %v4139 = vmul.bf16 %v107, %v1640
  %v4140 = vmul.bf16 %v108, %v1652
  %v4141 = vmul.bf16 %v109, %v1664
  %v4142 = vmul.bf16 %v110, %v1676
  %v4143 = vmul.bf16 %v111, %v1688
  %v4144 = vmul.bf16 %v112, %v1700
  %v4145 = vmul.bf16 %v113, %v1712
  %v4146 = vmul.bf16 %v114, %v1724
  %v4147 = vmul.bf16 %v115, %v1736
  %v4148 = vmul.bf16 %v116, %v1748
  %v4149 = vmul.bf16 %v117, %v1760
  %v4150 = vmul.bf16 %v118, %v1772
  %v4151 = vmul.bf16 %v119, %v1784
  %v4152 = vmul.bf16 %v120, %v1796
  %v4153 = vmul.bf16 %v121, %v1808
  %v4154 = vmul.bf16 %v122, %v1820
  %v4155 = vmul.bf16 %v123, %v1832
  %v4156 = vmul.bf16 %v124, %v1844
  %v4157 = vmul.bf16 %v125, %v1856
  %v4158 = vmul.bf16 %v126, %v1868
  %v4159 = vmul.bf16 %v127, %v1880
  %v4160 = vmul.bf16 %v128, %v1892
  %v4161 = vmul.bf16 %v129, %v1904
  %v4162 = vmul.bf16 %v130, %v1916
  %v4163 = vmul.bf16 %v131, %v1928
  %v4164 = vmul.bf16 %v132, %v1940
  %v4165 = vmul.bf16 %v133, %v1952
  %v4166 = vmul.bf16 %v134, %v1964
  %v4167 = vmul.bf16 %v135, %v1976
  %v4168 = vmul.bf16 %v136, %v1988
  %v4169 = vmul.bf16 %v137, %v2000
  %v4170 = vmul.bf16 %v138, %v2012
  %v4171 = vmul.bf16 %v139, %v2024
  %v4172 = vmul.bf16 %v140, %v2036
  %v4173 = vmul.bf16 %v141, %v2048
  %v4174 = vmul.bf16 %v142, %v2060
  %v4175 = vmul.bf16 %v143, %v2072
  %v4176 = vmul.bf16 %v144, %v2084
  %v4177 = vmul.bf16 %v145, %v2096
  %v4178 = vmul.bf16 %v146, %v2108
  %v4179 = vmul.bf16 %v147, %v2120
  %v4180 = vmul.bf16 %v148, %v2132
  %v4181 = vmul.bf16 %v149, %v2144
  %v4182 = vmul.bf16 %v150, %v2156
  %v4183 = vmul.bf16 %v151, %v2168
  %v4184 = vmul.bf16 %v152, %v2180
  %v4185 = vmul.bf16 %v153, %v2192
  %v4186 = vmul.bf16 %v154, %v2204
  %v4187 = vmul.bf16 %v155, %v2216
  %v4188 = vmul.bf16 %v156, %v2228
  %v4189 = vmul.bf16 %v157, %v2240
  %v4190 = vmul.bf16 %v158, %v2252
  %v4191 = vmul.bf16 %v159, %v2264
  %v4192 = vmul.bf16 %v160, %v2276
  %v4193 = vmul.bf16 %v161, %v2288
  %v4194 = vmul.bf16 %v162, %v2300
  %v4195 = vmul.bf16 %v163, %v2312
  %v4196 = vmul.bf16 %v164, %v2324
  %v4197 = vmul.bf16 %v165, %v2336
  %v4198 = vmul.bf16 %v166, %v2348
  %v4199 = vmul.bf16 %v167, %v2360
  %v4200 = vmul.bf16 %v168, %v2372
  %v4201 = vmul.bf16 %v169, %v2384
  %v4202 = vmul.bf16 %v170, %v2396
  %v4203 = vmul.bf16 %v171, %v2408
  %v4204 = vmul.bf16 %v172, %v2420
  %v4205 = vmul.bf16 %v173, %v2432
  %v4206 = vmul.bf16 %v174, %v2444
  %v4207 = vmul.bf16 %v175, %v2456
  %v4208 = vmul.bf16 %v176, %v2468
  %v4209 = vmul.bf16 %v177, %v2480
  %v4210 = vmul.bf16 %v178, %v2492
  %v4211 = vmul.bf16 %v179, %v2504
  %v4212 = vmul.bf16 %v180, %v2516
  %v4213 = vmul.bf16 %v181, %v2528
  %v4214 = vmul.bf16 %v182, %v2540
  %v4215 = vmul.bf16 %v183, %v2552
  %v4216 = vmul.bf16 %v184, %v2564
  %v4217 = vmul.bf16 %v185, %v2576
  %v4218 = vmul.bf16 %v186, %v2588
  %v4219 = vmul.bf16 %v187, %v2600
  %v4220 = vmul.bf16 %v188, %v2612
  %v4221 = vmul.bf16 %v189, %v2624
  %v4222 = vmul.bf16 %v190, %v2636
  %v4223 = vmul.bf16 %v191, %v2648
  %v4224 = vmul.bf16 %v192, %v2660
  %v4225 = vmul.bf16 %v193, %v2672
  %v4226 = vmul.bf16 %v194, %v2684
  %v4227 = vmul.bf16 %v195, %v2696
  %v4228 = vmul.bf16 %v196, %v2708
  %v4229 = vmul.bf16 %v197, %v2720
  %v4230 = vmul.bf16 %v198, %v2732
  %v4231 = vmul.bf16 %v199, %v2744
  %v4232 = vmul.bf16 %v200, %v2756
  %v4233 = vmul.bf16 %v201, %v2768
  %v4234 = vmul.bf16 %v202, %v2780
  %v4235 = vmul.bf16 %v203, %v2792
  %v4236 = vmul.bf16 %v204, %v2804
  %v4237 = vmul.bf16 %v205, %v2816
  %v4238 = vmul.bf16 %v206, %v2828
  %v4239 = vmul.bf16 %v207, %v2840
  %v4240 = vmul.bf16 %v208, %v2852
  %v4241 = vmul.bf16 %v209, %v2864
  %v4242 = vmul.bf16 %v210, %v2876
  %v4243 = vmul.bf16 %v211, %v2888
  %v4244 = vmul.bf16 %v212, %v2900
  %v4245 = vmul.bf16 %v213, %v2912
  %v4246 = vmul.bf16 %v214, %v2924
  %v4247 = vmul.bf16 %v215, %v2936
  %v4248 = vmul.bf16 %v216, %v2948
  %v4249 = vmul.bf16 %v217, %v2960
  %v4250 = vmul.bf16 %v218, %v2972
  %v4251 = vmul.bf16 %v219, %v2984
  %v4252 = vmul.bf16 %v220, %v2996
  %v4253 = vmul.bf16 %v221, %v3008
  %v4254 = vmul.bf16 %v222, %v3020
  %v4255 = vmul.bf16 %v223, %v3032
  %v4256 = vmul.bf16 %v224, %v3044
  %v4257 = vmul.bf16 %v225, %v3056
  %v4258 = vmul.bf16 %v226, %v3068
  %v4259 = vmul.bf16 %v227, %v3080
  %v4260 = vmul.bf16 %v228, %v3092
  %v4261 = vmul.bf16 %v229, %v3104
  %v4262 = vmul.bf16 %v230, %v3116
  %v4263 = vmul.bf16 %v231, %v3128
  %v4264 = vmul.bf16 %v232, %v3140
  %v4265 = vmul.bf16 %v233, %v3152
  %v4266 = vmul.bf16 %v234, %v3164
  %v4267 = vmul.bf16 %v235, %v3176
  %v4268 = vmul.bf16 %v236, %v3188
  %v4269 = vmul.bf16 %v237, %v3200
  %v4270 = vmul.bf16 %v238, %v3212
  %v4271 = vmul.bf16 %v239, %v3224
  %v4272 = vmul.bf16 %v240, %v3236
  %v4273 = vmul.bf16 %v241, %v3248
  %v4274 = vmul.bf16 %v242, %v3260
  %v4275 = vmul.bf16 %v243, %v3272
  %v4276 = vmul.bf16 %v244, %v3284
  %v4277 = vmul.bf16 %v245, %v3296
  %v4278 = vmul.bf16 %v246, %v3308
  %v4279 = vmul.bf16 %v247, %v3320
  %v4280 = vmul.bf16 %v248, %v3332
  %v4281 = vmul.bf16 %v249, %v3344
  %v4282 = vmul.bf16 %v250, %v3356
  %v4283 = vmul.bf16 %v251, %v3368
  %v4284 = vmul.bf16 %v252, %v3380
  %v4285 = vmul.bf16 %v253, %v3392
  %v4286 = vmul.bf16 %v254, %v3404
  %v4287 = vmul.bf16 %v255, %v3416
  %v4288 = vmul.bf16 %v256, %v3428
  %v4289 = vmul.bf16 %v257, %v3440
  %v4290 = vmul.bf16 %v258, %v3452
  %v4291 = vmul.bf16 %v259, %v3464
  %v4292 = vmul.bf16 %v260, %v3476
  %v4293 = vmul.bf16 %v261, %v3488
  %v4294 = vmul.bf16 %v262, %v3500
  %v4295 = vmul.bf16 %v263, %v3512
  %v4296 = vmul.bf16 %v264, %v3524
  %v4297 = vmul.bf16 %v265, %v3536
  %v4298 = vmul.bf16 %v266, %v3548
  %v4299 = vmul.bf16 %v267, %v3560
  %v4300 = vmul.bf16 %v268, %v3572
  %v4301 = vmul.bf16 %v269, %v3584
  %v4302 = vmul.bf16 %v270, %v3596
  %v4303 = vmul.bf16 %v271, %v3608
  %v4304 = vmul.bf16 %v272, %v3620
  %v4305 = vmul.bf16 %v273, %v3632
  %v4306 = vmul.bf16 %v274, %v3644
  %v4307 = vmul.bf16 %v275, %v3656
  %v4308 = vmul.bf16 %v276, %v3668
  %v4309 = vmul.bf16 %v277, %v3680
  %v4310 = vmul.bf16 %v278, %v3692
  %v4311 = vmul.bf16 %v279, %v3704
  %v4312 = vmul.bf16 %v280, %v3716
  %v4313 = vmul.bf16 %v281, %v3728
  %v4314 = vmul.bf16 %v282, %v3740
  %v4315 = vmul.bf16 %v283, %v3752
  %v4316 = vmul.bf16 %v284, %v3764
  %v4317 = vmul.bf16 %v285, %v3776
  %v4318 = vmul.bf16 %v286, %v3788
  %v4319 = vmul.bf16 %v287, %v3800
  %v4320 = vmul.bf16 %v288, %v3812
  %v4321 = vmul.bf16 %v289, %v3824
  %v4322 = vmul.bf16 %v290, %v3836
  %v4323 = vmul.bf16 %v291, %v3848
  %v4324 = vmul.bf16 %v292, %v3860
  %v4325 = vmul.bf16 %v293, %v3872
  %v4326 = vmul.bf16 %v294, %v3884
  %v4327 = vmul.bf16 %v295, %v3896
  %v4328 = vmul.bf16 %v296, %v3908
  %v4329 = vmul.bf16 %v297, %v3920
  %v4330 = vmul.bf16 %v298, %v3932
  %v4331 = vmul.bf16 %v299, %v3944
  %v4332 = vmul.bf16 %v300, %v3956
  %v4333 = vmul.bf16 %v301, %v3968
  %v4334 = vmul.bf16 %v302, %v3980
  %v4335 = vmul.bf16 %v303, %v3992
  %v4336 = vmul.bf16 %v304, %v4004
  %v4337 = vmul.bf16 %v305, %v4016
  %v4338 = vmul.bf16 %v306, %v4028
  %v4339 = vmul.bf16 %v307, %v4040
  %v4340 = vmul.bf16 %v308, %v4052
  %v4341 = vld [vmem:[%s2] sm:$0xff]
  %v4342 = vld [vmem:[%s2 + $0x8] sm:$0xff]
  %v4343 = vld [vmem:[%s2 + $0x10] sm:$0xff]
  %v4344 = vld [vmem:[%s2 + $0x18] sm:$0xff]
  %v4345 = vld [vmem:[%s2 + $0x20] sm:$0xff]
  %v4346 = vld [vmem:[%s2 + $0x28] sm:$0xff]
  %v4347 = vld [vmem:[%s2 + $0x30] sm:$0xff]
  %v4348 = vld [vmem:[%s2 + $0x38] sm:$0xff]
  %v4349 = vld [vmem:[%s2 + $0x40] sm:$0xff]
  %v4350 = vld [vmem:[%s2 + $0x48] sm:$0xff]
  %v4351 = vld [vmem:[%s2 + $0x50] sm:$0xff]
  %v4352 = vld [vmem:[%s2 + $0x58] sm:$0xff]
  %v4353 = vld [vmem:[%s2 + $0x60] sm:$0xff]
  %v4354 = vld [vmem:[%s2 + $0x68] sm:$0xff]
  %v4355 = vld [vmem:[%s2 + $0x70] sm:$0xff]
  %v4356 = vld [vmem:[%s2 + $0x78] sm:$0xff]
  %v4357 = vld [vmem:[%s2 + $0x80] sm:$0xff]
  %v4358 = vld [vmem:[%s2 + $0x88] sm:$0xff]
  %v4359 = vld [vmem:[%s2 + $0x90] sm:$0xff]
  %v4360 = vld [vmem:[%s2 + $0x98] sm:$0xff]
  %v4361 = vld [vmem:[%s2 + $0xa0] sm:$0xff]
  %v4362 = vld [vmem:[%s2 + $0xa8] sm:$0xff]
  %v4363 = vld [vmem:[%s2 + $0xb0] sm:$0xff]
  %v4364 = vld [vmem:[%s2 + $0xb8] sm:$0xff]
  %v4365 = vld [vmem:[%s2 + $0xc0] sm:$0xff]
  %v4366 = vld [vmem:[%s2 + $0xc8] sm:$0xff]
  %v4367 = vld [vmem:[%s2 + $0xd0] sm:$0xff]
  %v4368 = vld [vmem:[%s2 + $0xd8] sm:$0xff]
  %v4369 = vld [vmem:[%s2 + $0xe0] sm:$0xff]
  %v4370 = vld [vmem:[%s2 + $0xe8] sm:$0xff]
  %v4371 = vld [vmem:[%s2 + $0xf0] sm:$0xff]
  %v4372 = vld [vmem:[%s2 + $0xf8] sm:$0xff]
  %v4373 = vld [vmem:[%s2 + $0x100] sm:$0xff]
  %v4374 = vld [vmem:[%s2 + $0x108] sm:$0xff]
  %v4375 = vld [vmem:[%s2 + $0x110] sm:$0xff]
  %v4376 = vld [vmem:[%s2 + $0x118] sm:$0xff]
  %v4377 = vld [vmem:[%s2 + $0x120] sm:$0xff]
  %v4378 = vld [vmem:[%s2 + $0x128] sm:$0xff]
  %v4379 = vld [vmem:[%s2 + $0x130] sm:$0xff]
  %v4380 = vld [vmem:[%s2 + $0x138] sm:$0xff]
  %v4381 = vld [vmem:[%s2 + $0x140] sm:$0xff]
  %v4382 = vld [vmem:[%s2 + $0x148] sm:$0xff]
  %v4383 = vld [vmem:[%s2 + $0x150] sm:$0xff]
  %v4384 = vld [vmem:[%s2 + $0x158] sm:$0xff]
  %v4385 = vld [vmem:[%s2 + $0x160] sm:$0xff]
  %v4386 = vld [vmem:[%s2 + $0x168] sm:$0xff]
  %v4387 = vld [vmem:[%s2 + $0x170] sm:$0xff]
  %v4388 = vld [vmem:[%s2 + $0x178] sm:$0xff]
  %v4389 = vld [vmem:[%s2 + $0x180] sm:$0xff]
  %v4390 = vld [vmem:[%s2 + $0x188] sm:$0xff]
  %v4391 = vld [vmem:[%s2 + $0x190] sm:$0xff]
  %v4392 = vld [vmem:[%s2 + $0x198] sm:$0xff]
  %v4393 = vld [vmem:[%s2 + $0x1a0] sm:$0xff]
  %v4394 = vld [vmem:[%s2 + $0x1a8] sm:$0xff]
  %v4395 = vld [vmem:[%s2 + $0x1b0] sm:$0xff]
  %v4396 = vld [vmem:[%s2 + $0x1b8] sm:$0xff]
  %v4397 = vld [vmem:[%s2 + $0x1c0] sm:$0xff]
  %v4398 = vld [vmem:[%s2 + $0x1c8] sm:$0xff]
  %v4399 = vld [vmem:[%s2 + $0x1d0] sm:$0xff]
  %v4400 = vld [vmem:[%s2 + $0x1d8] sm:$0xff]
  %v4401 = vld [vmem:[%s2 + $0x1e0] sm:$0xff]
  %v4402 = vld [vmem:[%s2 + $0x1e8] sm:$0xff]
  %v4403 = vld [vmem:[%s2 + $0x1f0] sm:$0xff]
  %v4404 = vld [vmem:[%s2 + $0x1f8] sm:$0xff]
  %v4405 = vld [vmem:[%s2 + $0x200] sm:$0xff]
  %v4406 = vld [vmem:[%s2 + $0x208] sm:$0xff]
  %v4407 = vld [vmem:[%s2 + $0x210] sm:$0xff]
  %v4408 = vld [vmem:[%s2 + $0x218] sm:$0xff]
  %v4409 = vld [vmem:[%s2 + $0x220] sm:$0xff]
  %v4410 = vld [vmem:[%s2 + $0x228] sm:$0xff]
  %v4411 = vld [vmem:[%s2 + $0x230] sm:$0xff]
  %v4412 = vld [vmem:[%s2 + $0x238] sm:$0xff]
  %v4413 = vld [vmem:[%s2 + $0x240] sm:$0xff]
  %v4414 = vld [vmem:[%s2 + $0x248] sm:$0xff]
  %v4415 = vld [vmem:[%s2 + $0x250] sm:$0xff]
  %v4416 = vld [vmem:[%s2 + $0x258] sm:$0xff]
  %v4417 = vld [vmem:[%s2 + $0x260] sm:$0xff]
  %v4418 = vld [vmem:[%s2 + $0x268] sm:$0xff]
  %v4419 = vld [vmem:[%s2 + $0x270] sm:$0xff]
  %v4420 = vld [vmem:[%s2 + $0x278] sm:$0xff]
  %v4421 = vld [vmem:[%s2 + $0x280] sm:$0xff]
  %v4422 = vld [vmem:[%s2 + $0x288] sm:$0xff]
  %v4423 = vld [vmem:[%s2 + $0x290] sm:$0xff]
  %v4424 = vld [vmem:[%s2 + $0x298] sm:$0xff]
  %v4425 = vld [vmem:[%s2 + $0x2a0] sm:$0xff]
  %v4426 = vld [vmem:[%s2 + $0x2a8] sm:$0xff]
  %v4427 = vld [vmem:[%s2 + $0x2b0] sm:$0xff]
  %v4428 = vld [vmem:[%s2 + $0x2b8] sm:$0xff]
  %v4429 = vld [vmem:[%s2 + $0x2c0] sm:$0xff]
  %v4430 = vld [vmem:[%s2 + $0x2c8] sm:$0xff]
  %v4431 = vld [vmem:[%s2 + $0x2d0] sm:$0xff]
  %v4432 = vld [vmem:[%s2 + $0x2d8] sm:$0xff]
  %v4433 = vld [vmem:[%s2 + $0x2e0] sm:$0xff]
  %v4434 = vld [vmem:[%s2 + $0x2e8] sm:$0xff]
  %v4435 = vld [vmem:[%s2 + $0x2f0] sm:$0xff]
  %v4436 = vld [vmem:[%s2 + $0x2f8] sm:$0xff]
  %v4437 = vld [vmem:[%s2 + $0x300] sm:$0xff]
  %v4438 = vld [vmem:[%s2 + $0x308] sm:$0xff]
  %v4439 = vld [vmem:[%s2 + $0x310] sm:$0xff]
  %v4440 = vld [vmem:[%s2 + $0x318] sm:$0xff]
  %v4441 = vld [vmem:[%s2 + $0x320] sm:$0xff]
  %v4442 = vld [vmem:[%s2 + $0x328] sm:$0xff]
  %v4443 = vld [vmem:[%s2 + $0x330] sm:$0xff]
  %v4444 = vld [vmem:[%s2 + $0x338] sm:$0xff]
  %v4445 = vld [vmem:[%s2 + $0x340] sm:$0xff]
  %v4446 = vld [vmem:[%s2 + $0x348] sm:$0xff]
  %v4447 = vld [vmem:[%s2 + $0x350] sm:$0xff]
  %v4448 = vld [vmem:[%s2 + $0x358] sm:$0xff]
  %v4449 = vld [vmem:[%s2 + $0x360] sm:$0xff]
  %v4450 = vld [vmem:[%s2 + $0x368] sm:$0xff]
  %v4451 = vld [vmem:[%s2 + $0x370] sm:$0xff]
  %v4452 = vld [vmem:[%s2 + $0x378] sm:$0xff]
  %v4453 = vld [vmem:[%s2 + $0x380] sm:$0xff]
  %v4454 = vld [vmem:[%s2 + $0x388] sm:$0xff]
  %v4455 = vld [vmem:[%s2 + $0x390] sm:$0xff]
  %v4456 = vld [vmem:[%s2 + $0x398] sm:$0xff]
  %v4457 = vld [vmem:[%s2 + $0x3a0] sm:$0xff]
  %v4458 = vld [vmem:[%s2 + $0x3a8] sm:$0xff]
  %v4459 = vld [vmem:[%s2 + $0x3b0] sm:$0xff]
  %v4460 = vld [vmem:[%s2 + $0x3b8] sm:$0xff]
  %v4461 = vld [vmem:[%s2 + $0x3c0] sm:$0xff]
  %v4462 = vld [vmem:[%s2 + $0x3c8] sm:$0xff]
  %v4463 = vld [vmem:[%s2 + $0x3d0] sm:$0xff]
  %v4464 = vld [vmem:[%s2 + $0x3d8] sm:$0xff]
  %v4465 = vld [vmem:[%s2 + $0x3e0] sm:$0xff]
  %v4466 = vld [vmem:[%s2 + $0x3e8] sm:$0xff]
  %v4467 = vld [vmem:[%s2 + $0x3f0] sm:$0xff]
  %v4468 = vld [vmem:[%s2 + $0x3f8] sm:$0xff]
  %v4469 = vld [vmem:[%s2 + $0x400] sm:$0xff]
  %v4470 = vld [vmem:[%s2 + $0x408] sm:$0xff]
  %v4471 = vld [vmem:[%s2 + $0x410] sm:$0xff]
  %v4472 = vld [vmem:[%s2 + $0x418] sm:$0xff]
  %v4473 = vld [vmem:[%s2 + $0x420] sm:$0xff]
  %v4474 = vld [vmem:[%s2 + $0x428] sm:$0xff]
  %v4475 = vld [vmem:[%s2 + $0x430] sm:$0xff]
  %v4476 = vld [vmem:[%s2 + $0x438] sm:$0xff]
  %v4477 = vld [vmem:[%s2 + $0x440] sm:$0xff]
  %v4478 = vld [vmem:[%s2 + $0x448] sm:$0xff]
  %v4479 = vld [vmem:[%s2 + $0x450] sm:$0xff]
  %v4480 = vld [vmem:[%s2 + $0x458] sm:$0xff]
  %v4481 = vld [vmem:[%s2 + $0x460] sm:$0xff]
  %v4482 = vld [vmem:[%s2 + $0x468] sm:$0xff]
  %v4483 = vld [vmem:[%s2 + $0x470] sm:$0xff]
  %v4484 = vld [vmem:[%s2 + $0x478] sm:$0xff]
  %v4485 = vld [vmem:[%s2 + $0x480] sm:$0xff]
  %v4486 = vld [vmem:[%s2 + $0x488] sm:$0xff]
  %v4487 = vld [vmem:[%s2 + $0x490] sm:$0xff]
  %v4488 = vld [vmem:[%s2 + $0x498] sm:$0xff]
  %v4489 = vld [vmem:[%s2 + $0x4a0] sm:$0xff]
  %v4490 = vld [vmem:[%s2 + $0x4a8] sm:$0xff]
  %v4491 = vld [vmem:[%s2 + $0x4b0] sm:$0xff]
  %v4492 = vld [vmem:[%s2 + $0x4b8] sm:$0xff]
  %v4493 = vld [vmem:[%s2 + $0x4c0] sm:$0xff]
  %v4494 = vld [vmem:[%s2 + $0x4c8] sm:$0xff]
  %v4495 = vld [vmem:[%s2 + $0x4d0] sm:$0xff]
  %v4496 = vld [vmem:[%s2 + $0x4d8] sm:$0xff]
  %v4497 = vld [vmem:[%s2 + $0x4e0] sm:$0xff]
  %v4498 = vld [vmem:[%s2 + $0x4e8] sm:$0xff]
  %v4499 = vld [vmem:[%s2 + $0x4f0] sm:$0xff]
  %v4500 = vld [vmem:[%s2 + $0x4f8] sm:$0xff]
  %v4501 = vld [vmem:[%s2 + $0x500] sm:$0xff]
  %v4502 = vld [vmem:[%s2 + $0x508] sm:$0xff]
  %v4503 = vld [vmem:[%s2 + $0x510] sm:$0xff]
  %v4504 = vld [vmem:[%s2 + $0x518] sm:$0xff]
  %v4505 = vld [vmem:[%s2 + $0x520] sm:$0xff]
  %v4506 = vld [vmem:[%s2 + $0x528] sm:$0xff]
  %v4507 = vld [vmem:[%s2 + $0x530] sm:$0xff]
  %v4508 = vld [vmem:[%s2 + $0x538] sm:$0xff]
  %v4509 = vld [vmem:[%s2 + $0x540] sm:$0xff]
  %v4510 = vld [vmem:[%s2 + $0x548] sm:$0xff]
  %v4511 = vld [vmem:[%s2 + $0x550] sm:$0xff]
  %v4512 = vld [vmem:[%s2 + $0x558] sm:$0xff]
  %v4513 = vld [vmem:[%s2 + $0x560] sm:$0xff]
  %v4514 = vld [vmem:[%s2 + $0x568] sm:$0xff]
  %v4515 = vld [vmem:[%s2 + $0x570] sm:$0xff]
  %v4516 = vld [vmem:[%s2 + $0x578] sm:$0xff]
  %v4517 = vld [vmem:[%s2 + $0x580] sm:$0xff]
  %v4518 = vld [vmem:[%s2 + $0x588] sm:$0xff]
  %v4519 = vld [vmem:[%s2 + $0x590] sm:$0xff]
  %v4520 = vld [vmem:[%s2 + $0x598] sm:$0xff]
  %v4521 = vld [vmem:[%s2 + $0x5a0] sm:$0xff]
  %v4522 = vld [vmem:[%s2 + $0x5a8] sm:$0xff]
  %v4523 = vld [vmem:[%s2 + $0x5b0] sm:$0xff]
  %v4524 = vld [vmem:[%s2 + $0x5b8] sm:$0xff]
  %v4525 = vld [vmem:[%s2 + $0x5c0] sm:$0xff]
  %v4526 = vld [vmem:[%s2 + $0x5c8] sm:$0xff]
  %v4527 = vld [vmem:[%s2 + $0x5d0] sm:$0xff]
  %v4528 = vld [vmem:[%s2 + $0x5d8] sm:$0xff]
  %v4529 = vld [vmem:[%s2 + $0x5e0] sm:$0xff]
  %v4530 = vld [vmem:[%s2 + $0x5e8] sm:$0xff]
  %v4531 = vld [vmem:[%s2 + $0x5f0] sm:$0xff]
  %v4532 = vld [vmem:[%s2 + $0x5f8] sm:$0xff]
  %v4533 = vld [vmem:[%s2 + $0x600] sm:$0xff]
  %v4534 = vld [vmem:[%s2 + $0x608] sm:$0xff]
  %v4535 = vld [vmem:[%s2 + $0x610] sm:$0xff]
  %v4536 = vld [vmem:[%s2 + $0x618] sm:$0xff]
  %v4537 = vld [vmem:[%s2 + $0x620] sm:$0xff]
  %v4538 = vld [vmem:[%s2 + $0x628] sm:$0xff]
  %v4539 = vld [vmem:[%s2 + $0x630] sm:$0xff]
  %v4540 = vld [vmem:[%s2 + $0x638] sm:$0xff]
  %v4541 = vld [vmem:[%s2 + $0x640] sm:$0xff]
  %v4542 = vld [vmem:[%s2 + $0x648] sm:$0xff]
  %v4543 = vld [vmem:[%s2 + $0x650] sm:$0xff]
  %v4544 = vld [vmem:[%s2 + $0x658] sm:$0xff]
  %v4545 = vld [vmem:[%s2 + $0x660] sm:$0xff]
  %v4546 = vld [vmem:[%s2 + $0x668] sm:$0xff]
  %v4547 = vld [vmem:[%s2 + $0x670] sm:$0xff]
  %v4548 = vld [vmem:[%s2 + $0x678] sm:$0xff]
  %v4549 = vld [vmem:[%s2 + $0x680] sm:$0xff]
  %v4550 = vld [vmem:[%s2 + $0x688] sm:$0xff]
  %v4551 = vld [vmem:[%s2 + $0x690] sm:$0xff]
  %v4552 = vld [vmem:[%s2 + $0x698] sm:$0xff]
  %v4553 = vld [vmem:[%s2 + $0x6a0] sm:$0xff]
  %v4554 = vld [vmem:[%s2 + $0x6a8] sm:$0xff]
  %v4555 = vld [vmem:[%s2 + $0x6b0] sm:$0xff]
  %v4556 = vld [vmem:[%s2 + $0x6b8] sm:$0xff]
  %v4557 = vld [vmem:[%s2 + $0x6c0] sm:$0xff]
  %v4558 = vld [vmem:[%s2 + $0x6c8] sm:$0xff]
  %v4559 = vld [vmem:[%s2 + $0x6d0] sm:$0xff]
  %v4560 = vld [vmem:[%s2 + $0x6d8] sm:$0xff]
  %v4561 = vld [vmem:[%s2 + $0x6e0] sm:$0xff]
  %v4562 = vld [vmem:[%s2 + $0x6e8] sm:$0xff]
  %v4563 = vld [vmem:[%s2 + $0x6f0] sm:$0xff]
  %v4564 = vld [vmem:[%s2 + $0x6f8] sm:$0xff]
  %v4565 = vld [vmem:[%s2 + $0x700] sm:$0xff]
  %v4566 = vld [vmem:[%s2 + $0x708] sm:$0xff]
  %v4567 = vld [vmem:[%s2 + $0x710] sm:$0xff]
  %v4568 = vld [vmem:[%s2 + $0x718] sm:$0xff]
  %v4569 = vld [vmem:[%s2 + $0x720] sm:$0xff]
  %v4570 = vld [vmem:[%s2 + $0x728] sm:$0xff]
  %v4571 = vld [vmem:[%s2 + $0x730] sm:$0xff]
  %v4572 = vld [vmem:[%s2 + $0x738] sm:$0xff]
  %v4573 = vld [vmem:[%s2 + $0x740] sm:$0xff]
  %v4574 = vld [vmem:[%s2 + $0x748] sm:$0xff]
  %v4575 = vld [vmem:[%s2 + $0x750] sm:$0xff]
  %v4576 = vld [vmem:[%s2 + $0x758] sm:$0xff]
  %v4577 = vld [vmem:[%s2 + $0x760] sm:$0xff]
  %v4578 = vld [vmem:[%s2 + $0x768] sm:$0xff]
  %v4579 = vld [vmem:[%s2 + $0x770] sm:$0xff]
  %v4580 = vld [vmem:[%s2 + $0x778] sm:$0xff]
  %v4581 = vld [vmem:[%s2 + $0x780] sm:$0xff]
  %v4582 = vld [vmem:[%s2 + $0x788] sm:$0xff]
  %v4583 = vld [vmem:[%s2 + $0x790] sm:$0xff]
  %v4584 = vld [vmem:[%s2 + $0x798] sm:$0xff]
  %v4585 = vld [vmem:[%s2 + $0x7a0] sm:$0xff]
  %v4586 = vld [vmem:[%s2 + $0x7a8] sm:$0xff]
  %v4587 = vld [vmem:[%s2 + $0x7b0] sm:$0xff]
  %v4588 = vld [vmem:[%s2 + $0x7b8] sm:$0xff]
  %v4589 = vld [vmem:[%s2 + $0x7c0] sm:$0xff]
  %v4590 = vld [vmem:[%s2 + $0x7c8] sm:$0xff]
  %v4591 = vld [vmem:[%s2 + $0x7d0] sm:$0xff]
  %v4592 = vld [vmem:[%s2 + $0x7d8] sm:$0xff]
  %v4593 = vld [vmem:[%s2 + $0x7e0] sm:$0xff]
  %v4594 = vld [vmem:[%s2 + $0x7e8] sm:$0xff]
  %v4595 = vld [vmem:[%s2 + $0x7f0] sm:$0xff]
  %v4596 = vld [vmem:[%s2 + $0x7f8] sm:$0xff]
  %v4597 = vld [vmem:[%s2 + $0x800] sm:$0xff]
  %v4598 = vld [vmem:[%s2 + $0x808] sm:$0xff]
  %v4599 = vld [vmem:[%s2 + $0x810] sm:$0xff]
  %v4600 = vld [vmem:[%s2 + $0x818] sm:$0xff]
  %v4601 = vld [vmem:[%s2 + $0x820] sm:$0xff]
  %v4602 = vld [vmem:[%s2 + $0x828] sm:$0xff]
  %v4603 = vld [vmem:[%s2 + $0x830] sm:$0xff]
  %v4604 = vld [vmem:[%s2 + $0x838] sm:$0xff]
  %v4605 = vld [vmem:[%s2 + $0x840] sm:$0xff]
  %v4606 = vld [vmem:[%s2 + $0x848] sm:$0xff]
  %v4607 = vld [vmem:[%s2 + $0x850] sm:$0xff]
  %v4608 = vld [vmem:[%s2 + $0x858] sm:$0xff]
  %v4609 = vld [vmem:[%s2 + $0x860] sm:$0xff]
  %v4610 = vld [vmem:[%s2 + $0x868] sm:$0xff]
  %v4611 = vld [vmem:[%s2 + $0x870] sm:$0xff]
  %v4612 = vld [vmem:[%s2 + $0x878] sm:$0xff]
  %v4613 = vld [vmem:[%s2 + $0x880] sm:$0xff]
  %v4614 = vld [vmem:[%s2 + $0x888] sm:$0xff]
  %v4615 = vld [vmem:[%s2 + $0x890] sm:$0xff]
  %v4616 = vld [vmem:[%s2 + $0x898] sm:$0xff]
  %v4617 = vld [vmem:[%s2 + $0x8a0] sm:$0xff]
  %v4618 = vld [vmem:[%s2 + $0x8a8] sm:$0xff]
  %v4619 = vld [vmem:[%s2 + $0x8b0] sm:$0xff]
  %v4620 = vld [vmem:[%s2 + $0x8b8] sm:$0xff]
  %v4621 = vld [vmem:[%s2 + $0x8c0] sm:$0xff]
  %v4622 = vld [vmem:[%s2 + $0x8c8] sm:$0xff]
  %v4623 = vld [vmem:[%s2 + $0x8d0] sm:$0xff]
  %v4624 = vld [vmem:[%s2 + $0x8d8] sm:$0xff]
  %v4625 = vld [vmem:[%s2 + $0x8e0] sm:$0xff]
  %v4626 = vld [vmem:[%s2 + $0x8e8] sm:$0xff]
  %v4627 = vld [vmem:[%s2 + $0x8f0] sm:$0xff]
  %v4628 = vld [vmem:[%s2 + $0x8f8] sm:$0xff]
  %v4629 = vld [vmem:[%s2 + $0x900] sm:$0xff]
  %v4630 = vld [vmem:[%s2 + $0x908] sm:$0xff]
  %v4631 = vld [vmem:[%s2 + $0x910] sm:$0xff]
  %v4632 = vld [vmem:[%s2 + $0x918] sm:$0xff]
  %v4633 = vld [vmem:[%s2 + $0x920] sm:$0xff]
  %v4634 = vld [vmem:[%s2 + $0x928] sm:$0xff]
  %v4635 = vld [vmem:[%s2 + $0x930] sm:$0xff]
  %v4636 = vld [vmem:[%s2 + $0x938] sm:$0xff]
  %v4637 = vld [vmem:[%s2 + $0x940] sm:$0xff]
  %v4638 = vld [vmem:[%s2 + $0x948] sm:$0xff]
  %v4639 = vld [vmem:[%s2 + $0x950] sm:$0xff]
  %v4640 = vld [vmem:[%s2 + $0x958] sm:$0xff]
  %v4641 = vld [vmem:[%s2 + $0x960] sm:$0xff]
  %v4642 = vld [vmem:[%s2 + $0x968] sm:$0xff]
  %v4643 = vld [vmem:[%s2 + $0x970] sm:$0xff]
  %v4644 = vld [vmem:[%s2 + $0x978] sm:$0xff]
  %v4645 = vld [vmem:[%s2 + $0x980] sm:$0xff]
  %v4646 = vld [vmem:[%s2 + $0x988] sm:$0xff]
  %v4647 = vld [vmem:[%s2 + $0x990] sm:$0xff]
  %v4648 = vld [vmem:[%s2 + $0x998] sm:$0xff]
  %v4649 = vld [vmem:[%s2 + $0x9a0] sm:$0xff]
  %v4650 = vld [vmem:[%s2 + $0x9a8] sm:$0xff]
  %v4651 = vld [vmem:[%s2 + $0x9b0] sm:$0xff]
  %v4652 = vld [vmem:[%s2 + $0x9b8] sm:$0xff]
  %v4653 = vld [vmem:[%s2 + $0x9c0] sm:$0xff]
  %v4654 = vld [vmem:[%s2 + $0x9c8] sm:$0xff]
  %v4655 = vld [vmem:[%s2 + $0x9d0] sm:$0xff]
  %v4656 = vld [vmem:[%s2 + $0x9d8] sm:$0xff]
  %v4657 = vld [vmem:[%s2 + $0x9e0] sm:$0xff]
  %v4658 = vld [vmem:[%s2 + $0x9e8] sm:$0xff]
  %v4659 = vld [vmem:[%s2 + $0x9f0] sm:$0xff]
  %v4660 = vld [vmem:[%s2 + $0x9f8] sm:$0xff]
  %v4661 = vld [vmem:[%s2 + $0xa00] sm:$0xff]
  %v4662 = vld [vmem:[%s2 + $0xa08] sm:$0xff]
  %v4663 = vld [vmem:[%s2 + $0xa10] sm:$0xff]
  %v4664 = vld [vmem:[%s2 + $0xa18] sm:$0xff]
  %v4665 = vld [vmem:[%s2 + $0xa20] sm:$0xff]
  %v4666 = vld [vmem:[%s2 + $0xa28] sm:$0xff]
  %v4667 = vld [vmem:[%s2 + $0xa30] sm:$0xff]
  %v4668 = vld [vmem:[%s2 + $0xa38] sm:$0xff]
  %v4669 = vld [vmem:[%s2 + $0xa40] sm:$0xff]
  %v4670 = vld [vmem:[%s2 + $0xa48] sm:$0xff]
  %v4671 = vld [vmem:[%s2 + $0xa50] sm:$0xff]
  %v4672 = vld [vmem:[%s2 + $0xa58] sm:$0xff]
  %v4673 = vld [vmem:[%s2 + $0xa60] sm:$0xff]
  %v4674 = vld [vmem:[%s2 + $0xa68] sm:$0xff]
  %v4675 = vld [vmem:[%s2 + $0xa70] sm:$0xff]
  %v4676 = vld [vmem:[%s2 + $0xa78] sm:$0xff]
  %v4677 = vld [vmem:[%s2 + $0xa80] sm:$0xff]
  %v4678 = vld [vmem:[%s2 + $0xa88] sm:$0xff]
  %v4679 = vld [vmem:[%s2 + $0xa90] sm:$0xff]
  %v4680 = vld [vmem:[%s2 + $0xa98] sm:$0xff]
  %v4681 = vld [vmem:[%s2 + $0xaa0] sm:$0xff]
  %v4682 = vld [vmem:[%s2 + $0xaa8] sm:$0xff]
  %v4683 = vld [vmem:[%s2 + $0xab0] sm:$0xff]
  %v4684 = vld [vmem:[%s2 + $0xab8] sm:$0xff]
  %v4685 = vld [vmem:[%s2 + $0xac0] sm:$0xff]
  %v4686 = vld [vmem:[%s2 + $0xac8] sm:$0xff]
  %v4687 = vld [vmem:[%s2 + $0xad0] sm:$0xff]
  %v4688 = vld [vmem:[%s2 + $0xad8] sm:$0xff]
  %v4689 = vld [vmem:[%s2 + $0xae0] sm:$0xff]
  %v4690 = vld [vmem:[%s2 + $0xae8] sm:$0xff]
  %v4691 = vld [vmem:[%s2 + $0xaf0] sm:$0xff]
  %v4692 = vld [vmem:[%s2 + $0xaf8] sm:$0xff]
  %v4693 = vld [vmem:[%s2 + $0xb00] sm:$0xff]
  %v4694 = vld [vmem:[%s2 + $0xb08] sm:$0xff]
  %v4695 = vld [vmem:[%s2 + $0xb10] sm:$0xff]
  %v4696 = vld [vmem:[%s2 + $0xb18] sm:$0xff]
  %v4697 = vld [vmem:[%s2 + $0xb20] sm:$0xff]
  %v4698 = vld [vmem:[%s2 + $0xb28] sm:$0xff]
  %v4699 = vld [vmem:[%s2 + $0xb30] sm:$0xff]
  %v4700 = vld [vmem:[%s2 + $0xb38] sm:$0xff]
  %v4701 = vld [vmem:[%s2 + $0xb40] sm:$0xff]
  %v4702 = vld [vmem:[%s2 + $0xb48] sm:$0xff]
  %v4703 = vld [vmem:[%s2 + $0xb50] sm:$0xff]
  %v4704 = vld [vmem:[%s2 + $0xb58] sm:$0xff]
  %v4705 = vld [vmem:[%s2 + $0xb60] sm:$0xff]
  %v4706 = vld [vmem:[%s2 + $0xb68] sm:$0xff]
  %v4707 = vld [vmem:[%s2 + $0xb70] sm:$0xff]
  %v4708 = vld [vmem:[%s2 + $0xb78] sm:$0xff]
  %v4709 = vld [vmem:[%s2 + $0xb80] sm:$0xff]
  %v4710 = vld [vmem:[%s2 + $0xb88] sm:$0xff]
  %v4711 = vld [vmem:[%s2 + $0xb90] sm:$0xff]
  %v4712 = vld [vmem:[%s2 + $0xb98] sm:$0xff]
  %v4713 = vld [vmem:[%s2 + $0xba0] sm:$0xff]
  %v4714 = vld [vmem:[%s2 + $0xba8] sm:$0xff]
  %v4715 = vld [vmem:[%s2 + $0xbb0] sm:$0xff]
  %v4716 = vld [vmem:[%s2 + $0xbb8] sm:$0xff]
  %v4717 = vld [vmem:[%s2 + $0xbc0] sm:$0xff]
  %v4718 = vld [vmem:[%s2 + $0xbc8] sm:$0xff]
  %v4719 = vld [vmem:[%s2 + $0xbd0] sm:$0xff]
  %v4720 = vld [vmem:[%s2 + $0xbd8] sm:$0xff]
  %v4721 = vld [vmem:[%s2 + $0xbe0] sm:$0xff]
  %v4722 = vld [vmem:[%s2 + $0xbe8] sm:$0xff]
  %v4723 = vld [vmem:[%s2 + $0xbf0] sm:$0xff]
  %v4724 = vld [vmem:[%s2 + $0xbf8] sm:$0xff]
  %v4725 = vld [vmem:[%s2 + $0xc00] sm:$0xff]
  %v4726 = vld [vmem:[%s2 + $0xc08] sm:$0xff]
  %v4727 = vld [vmem:[%s2 + $0xc10] sm:$0xff]
  %v4728 = vld [vmem:[%s2 + $0xc18] sm:$0xff]
  %v4729 = vld [vmem:[%s2 + $0xc20] sm:$0xff]
  %v4730 = vld [vmem:[%s2 + $0xc28] sm:$0xff]
  %v4731 = vld [vmem:[%s2 + $0xc30] sm:$0xff]
  %v4732 = vld [vmem:[%s2 + $0xc38] sm:$0xff]
  %v4733 = vld [vmem:[%s2 + $0xc40] sm:$0xff]
  %v4734 = vld [vmem:[%s2 + $0xc48] sm:$0xff]
  %v4735 = vld [vmem:[%s2 + $0xc50] sm:$0xff]
  %v4736 = vld [vmem:[%s2 + $0xc58] sm:$0xff]
  %v4737 = vld [vmem:[%s2 + $0xc60] sm:$0xff]
  %v4738 = vld [vmem:[%s2 + $0xc68] sm:$0xff]
  %v4739 = vld [vmem:[%s2 + $0xc70] sm:$0xff]
  %v4740 = vld [vmem:[%s2 + $0xc78] sm:$0xff]
  %v4741 = vld [vmem:[%s2 + $0xc80] sm:$0xff]
  %v4742 = vld [vmem:[%s2 + $0xc88] sm:$0xff]
  %v4743 = vld [vmem:[%s2 + $0xc90] sm:$0xff]
  %v4744 = vld [vmem:[%s2 + $0xc98] sm:$0xff]
  %v4745 = vld [vmem:[%s2 + $0xca0] sm:$0xff]
  %v4746 = vld [vmem:[%s2 + $0xca8] sm:$0xff]
  %v4747 = vld [vmem:[%s2 + $0xcb0] sm:$0xff]
  %v4748 = vld [vmem:[%s2 + $0xcb8] sm:$0xff]
  %v4749 = vld [vmem:[%s2 + $0xcc0] sm:$0xff]
  %v4750 = vld [vmem:[%s2 + $0xcc8] sm:$0xff]
  %v4751 = vld [vmem:[%s2 + $0xcd0] sm:$0xff]
  %v4752 = vld [vmem:[%s2 + $0xcd8] sm:$0xff]
  %v4753 = vld [vmem:[%s2 + $0xce0] sm:$0xff]
  %v4754 = vld [vmem:[%s2 + $0xce8] sm:$0xff]
  %v4755 = vld [vmem:[%s2 + $0xcf0] sm:$0xff]
  %v4756 = vld [vmem:[%s2 + $0xcf8] sm:$0xff]
  %v4757 = vld [vmem:[%s2 + $0xd00] sm:$0xff]
  %v4758 = vld [vmem:[%s2 + $0xd08] sm:$0xff]
  %v4759 = vld [vmem:[%s2 + $0xd10] sm:$0xff]
  %v4760 = vld [vmem:[%s2 + $0xd18] sm:$0xff]
  %v4761 = vld [vmem:[%s2 + $0xd20] sm:$0xff]
  %v4762 = vld [vmem:[%s2 + $0xd28] sm:$0xff]
  %v4763 = vld [vmem:[%s2 + $0xd30] sm:$0xff]
  %v4764 = vld [vmem:[%s2 + $0xd38] sm:$0xff]
  %v4765 = vld [vmem:[%s2 + $0xd40] sm:$0xff]
  %v4766 = vld [vmem:[%s2 + $0xd48] sm:$0xff]
  %v4767 = vld [vmem:[%s2 + $0xd50] sm:$0xff]
  %v4768 = vld [vmem:[%s2 + $0xd58] sm:$0xff]
  %v4769 = vld [vmem:[%s2 + $0xd60] sm:$0xff]
  %v4770 = vld [vmem:[%s2 + $0xd68] sm:$0xff]
  %v4771 = vld [vmem:[%s2 + $0xd70] sm:$0xff]
  %v4772 = vld [vmem:[%s2 + $0xd78] sm:$0xff]
  %v5205 = vunpack.c.l.b16 %v4341
  %v5206 = vunpack.c.h.b16 %v4341
  %v5207 = vunpack.c.l.b16 %v4342
  %v5208 = vunpack.c.h.b16 %v4342
  %v5209 = vunpack.c.l.b16 %v4343
  %v5210 = vunpack.c.h.b16 %v4343
  %v5211 = vunpack.c.l.b16 %v4344
  %v5212 = vunpack.c.h.b16 %v4344
  %v5213 = vunpack.c.l.b16 %v4345
  %v5214 = vunpack.c.h.b16 %v4345
  %v5215 = vunpack.c.l.b16 %v4346
  %v5216 = vunpack.c.h.b16 %v4346
  %v5217 = vunpack.c.l.b16 %v4347
  %v5218 = vunpack.c.h.b16 %v4347
  %v5219 = vunpack.c.l.b16 %v4348
  %v5220 = vunpack.c.h.b16 %v4348
  %v5221 = vunpack.c.l.b16 %v4349
  %v5222 = vunpack.c.h.b16 %v4349
  %v5223 = vunpack.c.l.b16 %v4350
  %v5224 = vunpack.c.h.b16 %v4350
  %v5225 = vunpack.c.l.b16 %v4351
  %v5226 = vunpack.c.h.b16 %v4351
  %v5227 = vunpack.c.l.b16 %v4352
  %v5228 = vunpack.c.h.b16 %v4352
  %v5229 = vunpack.c.l.b16 %v4353
  %v5230 = vunpack.c.h.b16 %v4353
  %v5231 = vunpack.c.l.b16 %v4354
  %v5232 = vunpack.c.h.b16 %v4354
  %v5233 = vunpack.c.l.b16 %v4355
  %v5234 = vunpack.c.h.b16 %v4355
  %v5235 = vunpack.c.l.b16 %v4356
  %v5236 = vunpack.c.h.b16 %v4356
  %v5237 = vunpack.c.l.b16 %v4357
  %v5238 = vunpack.c.h.b16 %v4357
  %v5239 = vunpack.c.l.b16 %v4358
  %v5240 = vunpack.c.h.b16 %v4358
  %v5241 = vunpack.c.l.b16 %v4359
  %v5242 = vunpack.c.h.b16 %v4359
  %v5243 = vunpack.c.l.b16 %v4360
  %v5244 = vunpack.c.h.b16 %v4360
  %v5245 = vunpack.c.l.b16 %v4361
  %v5246 = vunpack.c.h.b16 %v4361
  %v5247 = vunpack.c.l.b16 %v4362
  %v5248 = vunpack.c.h.b16 %v4362
  %v5249 = vunpack.c.l.b16 %v4363
  %v5250 = vunpack.c.h.b16 %v4363
  %v5251 = vunpack.c.l.b16 %v4364
  %v5252 = vunpack.c.h.b16 %v4364
  %v5253 = vunpack.c.l.b16 %v4365
  %v5254 = vunpack.c.h.b16 %v4365
  %v5255 = vunpack.c.l.b16 %v4366
  %v5256 = vunpack.c.h.b16 %v4366
  %v5257 = vunpack.c.l.b16 %v4367
  %v5258 = vunpack.c.h.b16 %v4367
  %v5259 = vunpack.c.l.b16 %v4368
  %v5260 = vunpack.c.h.b16 %v4368
  %v5261 = vunpack.c.l.b16 %v4369
  %v5262 = vunpack.c.h.b16 %v4369
  %v5263 = vunpack.c.l.b16 %v4370
  %v5264 = vunpack.c.h.b16 %v4370
  %v5265 = vunpack.c.l.b16 %v4371
  %v5266 = vunpack.c.h.b16 %v4371
  %v5267 = vunpack.c.l.b16 %v4372
  %v5268 = vunpack.c.h.b16 %v4372
  %v5269 = vunpack.c.l.b16 %v4373
  %v5270 = vunpack.c.h.b16 %v4373
  %v5271 = vunpack.c.l.b16 %v4374
  %v5272 = vunpack.c.h.b16 %v4374
  %v5273 = vunpack.c.l.b16 %v4375
  %v5274 = vunpack.c.h.b16 %v4375
  %v5275 = vunpack.c.l.b16 %v4376
  %v5276 = vunpack.c.h.b16 %v4376
  %v5277 = vunpack.c.l.b16 %v4377
  %v5278 = vunpack.c.h.b16 %v4377
  %v5279 = vunpack.c.l.b16 %v4378
  %v5280 = vunpack.c.h.b16 %v4378
  %v5281 = vunpack.c.l.b16 %v4379
  %v5282 = vunpack.c.h.b16 %v4379
  %v5283 = vunpack.c.l.b16 %v4380
  %v5284 = vunpack.c.h.b16 %v4380
  %v5285 = vunpack.c.l.b16 %v4381
  %v5286 = vunpack.c.h.b16 %v4381
  %v5287 = vunpack.c.l.b16 %v4382
  %v5288 = vunpack.c.h.b16 %v4382
  %v5289 = vunpack.c.l.b16 %v4383
  %v5290 = vunpack.c.h.b16 %v4383
  %v5291 = vunpack.c.l.b16 %v4384
  %v5292 = vunpack.c.h.b16 %v4384
  %v5293 = vunpack.c.l.b16 %v4385
  %v5294 = vunpack.c.h.b16 %v4385
  %v5295 = vunpack.c.l.b16 %v4386
  %v5296 = vunpack.c.h.b16 %v4386
  %v5297 = vunpack.c.l.b16 %v4387
  %v5298 = vunpack.c.h.b16 %v4387
  %v5299 = vunpack.c.l.b16 %v4388
  %v5300 = vunpack.c.h.b16 %v4388
  %v5301 = vunpack.c.l.b16 %v4389
  %v5302 = vunpack.c.h.b16 %v4389
  %v5303 = vunpack.c.l.b16 %v4390
  %v5304 = vunpack.c.h.b16 %v4390
  %v5305 = vunpack.c.l.b16 %v4391
  %v5306 = vunpack.c.h.b16 %v4391
  %v5307 = vunpack.c.l.b16 %v4392
  %v5308 = vunpack.c.h.b16 %v4392
  %v5309 = vunpack.c.l.b16 %v4393
  %v5310 = vunpack.c.h.b16 %v4393
  %v5311 = vunpack.c.l.b16 %v4394
  %v5312 = vunpack.c.h.b16 %v4394
  %v5313 = vunpack.c.l.b16 %v4395
  %v5314 = vunpack.c.h.b16 %v4395
  %v5315 = vunpack.c.l.b16 %v4396
  %v5316 = vunpack.c.h.b16 %v4396
  %v5317 = vunpack.c.l.b16 %v4397
  %v5318 = vunpack.c.h.b16 %v4397
  %v5319 = vunpack.c.l.b16 %v4398
  %v5320 = vunpack.c.h.b16 %v4398
  %v5321 = vunpack.c.l.b16 %v4399
  %v5322 = vunpack.c.h.b16 %v4399
  %v5323 = vunpack.c.l.b16 %v4400
  %v5324 = vunpack.c.h.b16 %v4400
  %v5325 = vunpack.c.l.b16 %v4401
  %v5326 = vunpack.c.h.b16 %v4401
  %v5327 = vunpack.c.l.b16 %v4402
  %v5328 = vunpack.c.h.b16 %v4402
  %v5329 = vunpack.c.l.b16 %v4403
  %v5330 = vunpack.c.h.b16 %v4403
  %v5331 = vunpack.c.l.b16 %v4404
  %v5332 = vunpack.c.h.b16 %v4404
  %v5333 = vunpack.c.l.b16 %v4405
  %v5334 = vunpack.c.h.b16 %v4405
  %v5335 = vunpack.c.l.b16 %v4406
  %v5336 = vunpack.c.h.b16 %v4406
  %v5337 = vunpack.c.l.b16 %v4407
  %v5338 = vunpack.c.h.b16 %v4407
  %v5339 = vunpack.c.l.b16 %v4408
  %v5340 = vunpack.c.h.b16 %v4408
  %v5341 = vunpack.c.l.b16 %v4409
  %v5342 = vunpack.c.h.b16 %v4409
  %v5343 = vunpack.c.l.b16 %v4410
  %v5344 = vunpack.c.h.b16 %v4410
  %v5345 = vunpack.c.l.b16 %v4411
  %v5346 = vunpack.c.h.b16 %v4411
  %v5347 = vunpack.c.l.b16 %v4412
  %v5348 = vunpack.c.h.b16 %v4412
  %v5349 = vunpack.c.l.b16 %v4413
  %v5350 = vunpack.c.h.b16 %v4413
  %v5351 = vunpack.c.l.b16 %v4414
  %v5352 = vunpack.c.h.b16 %v4414
  %v5353 = vunpack.c.l.b16 %v4415
  %v5354 = vunpack.c.h.b16 %v4415
  %v5355 = vunpack.c.l.b16 %v4416
  %v5356 = vunpack.c.h.b16 %v4416
  %v5357 = vunpack.c.l.b16 %v4417
  %v5358 = vunpack.c.h.b16 %v4417
  %v5359 = vunpack.c.l.b16 %v4418
  %v5360 = vunpack.c.h.b16 %v4418
  %v5361 = vunpack.c.l.b16 %v4419
  %v5362 = vunpack.c.h.b16 %v4419
  %v5363 = vunpack.c.l.b16 %v4420
  %v5364 = vunpack.c.h.b16 %v4420
  %v5365 = vunpack.c.l.b16 %v4421
  %v5366 = vunpack.c.h.b16 %v4421
  %v5367 = vunpack.c.l.b16 %v4422
  %v5368 = vunpack.c.h.b16 %v4422
  %v5369 = vunpack.c.l.b16 %v4423
  %v5370 = vunpack.c.h.b16 %v4423
  %v5371 = vunpack.c.l.b16 %v4424
  %v5372 = vunpack.c.h.b16 %v4424
  %v5373 = vunpack.c.l.b16 %v4425
  %v5374 = vunpack.c.h.b16 %v4425
  %v5375 = vunpack.c.l.b16 %v4426
  %v5376 = vunpack.c.h.b16 %v4426
  %v5377 = vunpack.c.l.b16 %v4427
  %v5378 = vunpack.c.h.b16 %v4427
  %v5379 = vunpack.c.l.b16 %v4428
  %v5380 = vunpack.c.h.b16 %v4428
  %v5381 = vunpack.c.l.b16 %v4429
  %v5382 = vunpack.c.h.b16 %v4429
  %v5383 = vunpack.c.l.b16 %v4430
  %v5384 = vunpack.c.h.b16 %v4430
  %v5385 = vunpack.c.l.b16 %v4431
  %v5386 = vunpack.c.h.b16 %v4431
  %v5387 = vunpack.c.l.b16 %v4432
  %v5388 = vunpack.c.h.b16 %v4432
  %v5389 = vunpack.c.l.b16 %v4433
  %v5390 = vunpack.c.h.b16 %v4433
  %v5391 = vunpack.c.l.b16 %v4434
  %v5392 = vunpack.c.h.b16 %v4434
  %v5393 = vunpack.c.l.b16 %v4435
  %v5394 = vunpack.c.h.b16 %v4435
  %v5395 = vunpack.c.l.b16 %v4436
  %v5396 = vunpack.c.h.b16 %v4436
  %v5397 = vunpack.c.l.b16 %v4437
  %v5398 = vunpack.c.h.b16 %v4437
  %v5399 = vunpack.c.l.b16 %v4438
  %v5400 = vunpack.c.h.b16 %v4438
  %v5401 = vunpack.c.l.b16 %v4439
  %v5402 = vunpack.c.h.b16 %v4439
  %v5403 = vunpack.c.l.b16 %v4440
  %v5404 = vunpack.c.h.b16 %v4440
  %v5405 = vunpack.c.l.b16 %v4441
  %v5406 = vunpack.c.h.b16 %v4441
  %v5407 = vunpack.c.l.b16 %v4442
  %v5408 = vunpack.c.h.b16 %v4442
  %v5409 = vunpack.c.l.b16 %v4443
  %v5410 = vunpack.c.h.b16 %v4443
  %v5411 = vunpack.c.l.b16 %v4444
  %v5412 = vunpack.c.h.b16 %v4444
  %v5413 = vunpack.c.l.b16 %v4445
  %v5414 = vunpack.c.h.b16 %v4445
  %v5415 = vunpack.c.l.b16 %v4446
  %v5416 = vunpack.c.h.b16 %v4446
  %v5417 = vunpack.c.l.b16 %v4447
  %v5418 = vunpack.c.h.b16 %v4447
  %v5419 = vunpack.c.l.b16 %v4448
  %v5420 = vunpack.c.h.b16 %v4448
  %v5421 = vunpack.c.l.b16 %v4449
  %v5422 = vunpack.c.h.b16 %v4449
  %v5423 = vunpack.c.l.b16 %v4450
  %v5424 = vunpack.c.h.b16 %v4450
  %v5425 = vunpack.c.l.b16 %v4451
  %v5426 = vunpack.c.h.b16 %v4451
  %v5427 = vunpack.c.l.b16 %v4452
  %v5428 = vunpack.c.h.b16 %v4452
  %v5429 = vunpack.c.l.b16 %v4453
  %v5430 = vunpack.c.h.b16 %v4453
  %v5431 = vunpack.c.l.b16 %v4454
  %v5432 = vunpack.c.h.b16 %v4454
  %v5433 = vunpack.c.l.b16 %v4455
  %v5434 = vunpack.c.h.b16 %v4455
  %v5435 = vunpack.c.l.b16 %v4456
  %v5436 = vunpack.c.h.b16 %v4456
  %v5437 = vunpack.c.l.b16 %v4457
  %v5438 = vunpack.c.h.b16 %v4457
  %v5439 = vunpack.c.l.b16 %v4458
  %v5440 = vunpack.c.h.b16 %v4458
  %v5441 = vunpack.c.l.b16 %v4459
  %v5442 = vunpack.c.h.b16 %v4459
  %v5443 = vunpack.c.l.b16 %v4460
  %v5444 = vunpack.c.h.b16 %v4460
  %v5445 = vunpack.c.l.b16 %v4461
  %v5446 = vunpack.c.h.b16 %v4461
  %v5447 = vunpack.c.l.b16 %v4462
  %v5448 = vunpack.c.h.b16 %v4462
  %v5449 = vunpack.c.l.b16 %v4463
  %v5450 = vunpack.c.h.b16 %v4463
  %v5451 = vunpack.c.l.b16 %v4464
  %v5452 = vunpack.c.h.b16 %v4464
  %v5453 = vunpack.c.l.b16 %v4465
  %v5454 = vunpack.c.h.b16 %v4465
  %v5455 = vunpack.c.l.b16 %v4466
  %v5456 = vunpack.c.h.b16 %v4466
  %v5457 = vunpack.c.l.b16 %v4467
  %v5458 = vunpack.c.h.b16 %v4467
  %v5459 = vunpack.c.l.b16 %v4468
  %v5460 = vunpack.c.h.b16 %v4468
  %v5461 = vunpack.c.l.b16 %v4469
  %v5462 = vunpack.c.h.b16 %v4469
  %v5463 = vunpack.c.l.b16 %v4470
  %v5464 = vunpack.c.h.b16 %v4470
  %v5465 = vunpack.c.l.b16 %v4471
  %v5466 = vunpack.c.h.b16 %v4471
  %v5467 = vunpack.c.l.b16 %v4472
  %v5468 = vunpack.c.h.b16 %v4472
  %v5469 = vunpack.c.l.b16 %v4473
  %v5470 = vunpack.c.h.b16 %v4473
  %v5471 = vunpack.c.l.b16 %v4474
  %v5472 = vunpack.c.h.b16 %v4474
  %v5473 = vunpack.c.l.b16 %v4475
  %v5474 = vunpack.c.h.b16 %v4475
  %v5475 = vunpack.c.l.b16 %v4476
  %v5476 = vunpack.c.h.b16 %v4476
  %v5477 = vunpack.c.l.b16 %v4477
  %v5478 = vunpack.c.h.b16 %v4477
  %v5479 = vunpack.c.l.b16 %v4478
  %v5480 = vunpack.c.h.b16 %v4478
  %v5481 = vunpack.c.l.b16 %v4479
  %v5482 = vunpack.c.h.b16 %v4479
  %v5483 = vunpack.c.l.b16 %v4480
  %v5484 = vunpack.c.h.b16 %v4480
  %v5485 = vunpack.c.l.b16 %v4481
  %v5486 = vunpack.c.h.b16 %v4481
  %v5487 = vunpack.c.l.b16 %v4482
  %v5488 = vunpack.c.h.b16 %v4482
  %v5489 = vunpack.c.l.b16 %v4483
  %v5490 = vunpack.c.h.b16 %v4483
  %v5491 = vunpack.c.l.b16 %v4484
  %v5492 = vunpack.c.h.b16 %v4484
  %v5493 = vunpack.c.l.b16 %v4485
  %v5494 = vunpack.c.h.b16 %v4485
  %v5495 = vunpack.c.l.b16 %v4486
  %v5496 = vunpack.c.h.b16 %v4486
  %v5497 = vunpack.c.l.b16 %v4487
  %v5498 = vunpack.c.h.b16 %v4487
  %v5499 = vunpack.c.l.b16 %v4488
  %v5500 = vunpack.c.h.b16 %v4488
  %v5501 = vunpack.c.l.b16 %v4489
  %v5502 = vunpack.c.h.b16 %v4489
  %v5503 = vunpack.c.l.b16 %v4490
  %v5504 = vunpack.c.h.b16 %v4490
  %v5505 = vunpack.c.l.b16 %v4491
  %v5506 = vunpack.c.h.b16 %v4491
  %v5507 = vunpack.c.l.b16 %v4492
  %v5508 = vunpack.c.h.b16 %v4492
  %v5509 = vunpack.c.l.b16 %v4493
  %v5510 = vunpack.c.h.b16 %v4493
  %v5511 = vunpack.c.l.b16 %v4494
  %v5512 = vunpack.c.h.b16 %v4494
  %v5513 = vunpack.c.l.b16 %v4495
  %v5514 = vunpack.c.h.b16 %v4495
  %v5515 = vunpack.c.l.b16 %v4496
  %v5516 = vunpack.c.h.b16 %v4496
  %v5517 = vunpack.c.l.b16 %v4497
  %v5518 = vunpack.c.h.b16 %v4497
  %v5519 = vunpack.c.l.b16 %v4498
  %v5520 = vunpack.c.h.b16 %v4498
  %v5521 = vunpack.c.l.b16 %v4499
  %v5522 = vunpack.c.h.b16 %v4499
  %v5523 = vunpack.c.l.b16 %v4500
  %v5524 = vunpack.c.h.b16 %v4500
  %v5525 = vunpack.c.l.b16 %v4501
  %v5526 = vunpack.c.h.b16 %v4501
  %v5527 = vunpack.c.l.b16 %v4502
  %v5528 = vunpack.c.h.b16 %v4502
  %v5529 = vunpack.c.l.b16 %v4503
  %v5530 = vunpack.c.h.b16 %v4503
  %v5531 = vunpack.c.l.b16 %v4504
  %v5532 = vunpack.c.h.b16 %v4504
  %v5533 = vunpack.c.l.b16 %v4505
  %v5534 = vunpack.c.h.b16 %v4505
  %v5535 = vunpack.c.l.b16 %v4506
  %v5536 = vunpack.c.h.b16 %v4506
  %v5537 = vunpack.c.l.b16 %v4507
  %v5538 = vunpack.c.h.b16 %v4507
  %v5539 = vunpack.c.l.b16 %v4508
  %v5540 = vunpack.c.h.b16 %v4508
  %v5541 = vunpack.c.l.b16 %v4509
  %v5542 = vunpack.c.h.b16 %v4509
  %v5543 = vunpack.c.l.b16 %v4510
  %v5544 = vunpack.c.h.b16 %v4510
  %v5545 = vunpack.c.l.b16 %v4511
  %v5546 = vunpack.c.h.b16 %v4511
  %v5547 = vunpack.c.l.b16 %v4512
  %v5548 = vunpack.c.h.b16 %v4512
  %v5549 = vunpack.c.l.b16 %v4513
  %v5550 = vunpack.c.h.b16 %v4513
  %v5551 = vunpack.c.l.b16 %v4514
  %v5552 = vunpack.c.h.b16 %v4514
  %v5553 = vunpack.c.l.b16 %v4515
  %v5554 = vunpack.c.h.b16 %v4515
  %v5555 = vunpack.c.l.b16 %v4516
  %v5556 = vunpack.c.h.b16 %v4516
  %v5557 = vunpack.c.l.b16 %v4517
  %v5558 = vunpack.c.h.b16 %v4517
  %v5559 = vunpack.c.l.b16 %v4518
  %v5560 = vunpack.c.h.b16 %v4518
  %v5561 = vunpack.c.l.b16 %v4519
  %v5562 = vunpack.c.h.b16 %v4519
  %v5563 = vunpack.c.l.b16 %v4520
  %v5564 = vunpack.c.h.b16 %v4520
  %v5565 = vunpack.c.l.b16 %v4521
  %v5566 = vunpack.c.h.b16 %v4521
  %v5567 = vunpack.c.l.b16 %v4522
  %v5568 = vunpack.c.h.b16 %v4522
  %v5569 = vunpack.c.l.b16 %v4523
  %v5570 = vunpack.c.h.b16 %v4523
  %v5571 = vunpack.c.l.b16 %v4524
  %v5572 = vunpack.c.h.b16 %v4524
  %v5573 = vunpack.c.l.b16 %v4525
  %v5574 = vunpack.c.h.b16 %v4525
  %v5575 = vunpack.c.l.b16 %v4526
  %v5576 = vunpack.c.h.b16 %v4526
  %v5577 = vunpack.c.l.b16 %v4527
  %v5578 = vunpack.c.h.b16 %v4527
  %v5579 = vunpack.c.l.b16 %v4528
  %v5580 = vunpack.c.h.b16 %v4528
  %v5581 = vunpack.c.l.b16 %v4529
  %v5582 = vunpack.c.h.b16 %v4529
  %v5583 = vunpack.c.l.b16 %v4530
  %v5584 = vunpack.c.h.b16 %v4530
  %v5585 = vunpack.c.l.b16 %v4531
  %v5586 = vunpack.c.h.b16 %v4531
  %v5587 = vunpack.c.l.b16 %v4532
  %v5588 = vunpack.c.h.b16 %v4532
  %v5589 = vunpack.c.l.b16 %v4533
  %v5590 = vunpack.c.h.b16 %v4533
  %v5591 = vunpack.c.l.b16 %v4534
  %v5592 = vunpack.c.h.b16 %v4534
  %v5593 = vunpack.c.l.b16 %v4535
  %v5594 = vunpack.c.h.b16 %v4535
  %v5595 = vunpack.c.l.b16 %v4536
  %v5596 = vunpack.c.h.b16 %v4536
  %v5597 = vunpack.c.l.b16 %v4537
  %v5598 = vunpack.c.h.b16 %v4537
  %v5599 = vunpack.c.l.b16 %v4538
  %v5600 = vunpack.c.h.b16 %v4538
  %v5601 = vunpack.c.l.b16 %v4539
  %v5602 = vunpack.c.h.b16 %v4539
  %v5603 = vunpack.c.l.b16 %v4540
  %v5604 = vunpack.c.h.b16 %v4540
  %v5605 = vunpack.c.l.b16 %v4541
  %v5606 = vunpack.c.h.b16 %v4541
  %v5607 = vunpack.c.l.b16 %v4542
  %v5608 = vunpack.c.h.b16 %v4542
  %v5609 = vunpack.c.l.b16 %v4543
  %v5610 = vunpack.c.h.b16 %v4543
  %v5611 = vunpack.c.l.b16 %v4544
  %v5612 = vunpack.c.h.b16 %v4544
  %v5613 = vunpack.c.l.b16 %v4545
  %v5614 = vunpack.c.h.b16 %v4545
  %v5615 = vunpack.c.l.b16 %v4546
  %v5616 = vunpack.c.h.b16 %v4546
  %v5617 = vunpack.c.l.b16 %v4547
  %v5618 = vunpack.c.h.b16 %v4547
  %v5619 = vunpack.c.l.b16 %v4548
  %v5620 = vunpack.c.h.b16 %v4548
  %v5621 = vunpack.c.l.b16 %v4549
  %v5622 = vunpack.c.h.b16 %v4549
  %v5623 = vunpack.c.l.b16 %v4550
  %v5624 = vunpack.c.h.b16 %v4550
  %v5625 = vunpack.c.l.b16 %v4551
  %v5626 = vunpack.c.h.b16 %v4551
  %v5627 = vunpack.c.l.b16 %v4552
  %v5628 = vunpack.c.h.b16 %v4552
  %v5629 = vunpack.c.l.b16 %v4553
  %v5630 = vunpack.c.h.b16 %v4553
  %v5631 = vunpack.c.l.b16 %v4554
  %v5632 = vunpack.c.h.b16 %v4554
  %v5633 = vunpack.c.l.b16 %v4555
  %v5634 = vunpack.c.h.b16 %v4555
  %v5635 = vunpack.c.l.b16 %v4556
  %v5636 = vunpack.c.h.b16 %v4556
  %v5637 = vunpack.c.l.b16 %v4557
  %v5638 = vunpack.c.h.b16 %v4557
  %v5639 = vunpack.c.l.b16 %v4558
  %v5640 = vunpack.c.h.b16 %v4558
  %v5641 = vunpack.c.l.b16 %v4559
  %v5642 = vunpack.c.h.b16 %v4559
  %v5643 = vunpack.c.l.b16 %v4560
  %v5644 = vunpack.c.h.b16 %v4560
  %v5645 = vunpack.c.l.b16 %v4561
  %v5646 = vunpack.c.h.b16 %v4561
  %v5647 = vunpack.c.l.b16 %v4562
  %v5648 = vunpack.c.h.b16 %v4562
  %v5649 = vunpack.c.l.b16 %v4563
  %v5650 = vunpack.c.h.b16 %v4563
  %v5651 = vunpack.c.l.b16 %v4564
  %v5652 = vunpack.c.h.b16 %v4564
  %v5653 = vunpack.c.l.b16 %v4565
  %v5654 = vunpack.c.h.b16 %v4565
  %v5655 = vunpack.c.l.b16 %v4566
  %v5656 = vunpack.c.h.b16 %v4566
  %v5657 = vunpack.c.l.b16 %v4567
  %v5658 = vunpack.c.h.b16 %v4567
  %v5659 = vunpack.c.l.b16 %v4568
  %v5660 = vunpack.c.h.b16 %v4568
  %v5661 = vunpack.c.l.b16 %v4569
  %v5662 = vunpack.c.h.b16 %v4569
  %v5663 = vunpack.c.l.b16 %v4570
  %v5664 = vunpack.c.h.b16 %v4570
  %v5665 = vunpack.c.l.b16 %v4571
  %v5666 = vunpack.c.h.b16 %v4571
  %v5667 = vunpack.c.l.b16 %v4572
  %v5668 = vunpack.c.h.b16 %v4572
  %v5669 = vunpack.c.l.b16 %v4573
  %v5670 = vunpack.c.h.b16 %v4573
  %v5671 = vunpack.c.l.b16 %v4574
  %v5672 = vunpack.c.h.b16 %v4574
  %v5673 = vunpack.c.l.b16 %v4575
  %v5674 = vunpack.c.h.b16 %v4575
  %v5675 = vunpack.c.l.b16 %v4576
  %v5676 = vunpack.c.h.b16 %v4576
  %v5677 = vunpack.c.l.b16 %v4577
  %v5678 = vunpack.c.h.b16 %v4577
  %v5679 = vunpack.c.l.b16 %v4578
  %v5680 = vunpack.c.h.b16 %v4578
  %v5681 = vunpack.c.l.b16 %v4579
  %v5682 = vunpack.c.h.b16 %v4579
  %v5683 = vunpack.c.l.b16 %v4580
  %v5684 = vunpack.c.h.b16 %v4580
  %v5685 = vunpack.c.l.b16 %v4581
  %v5686 = vunpack.c.h.b16 %v4581
  %v5687 = vunpack.c.l.b16 %v4582
  %v5688 = vunpack.c.h.b16 %v4582
  %v5689 = vunpack.c.l.b16 %v4583
  %v5690 = vunpack.c.h.b16 %v4583
  %v5691 = vunpack.c.l.b16 %v4584
  %v5692 = vunpack.c.h.b16 %v4584
  %v5693 = vunpack.c.l.b16 %v4585
  %v5694 = vunpack.c.h.b16 %v4585
  %v5695 = vunpack.c.l.b16 %v4586
  %v5696 = vunpack.c.h.b16 %v4586
  %v5697 = vunpack.c.l.b16 %v4587
  %v5698 = vunpack.c.h.b16 %v4587
  %v5699 = vunpack.c.l.b16 %v4588
  %v5700 = vunpack.c.h.b16 %v4588
  %v5701 = vunpack.c.l.b16 %v4589
  %v5702 = vunpack.c.h.b16 %v4589
  %v5703 = vunpack.c.l.b16 %v4590
  %v5704 = vunpack.c.h.b16 %v4590
  %v5705 = vunpack.c.l.b16 %v4591
  %v5706 = vunpack.c.h.b16 %v4591
  %v5707 = vunpack.c.l.b16 %v4592
  %v5708 = vunpack.c.h.b16 %v4592
  %v5709 = vunpack.c.l.b16 %v4593
  %v5710 = vunpack.c.h.b16 %v4593
  %v5711 = vunpack.c.l.b16 %v4594
  %v5712 = vunpack.c.h.b16 %v4594
  %v5713 = vunpack.c.l.b16 %v4595
  %v5714 = vunpack.c.h.b16 %v4595
  %v5715 = vunpack.c.l.b16 %v4596
  %v5716 = vunpack.c.h.b16 %v4596
  %v5717 = vunpack.c.l.b16 %v4597
  %v5718 = vunpack.c.h.b16 %v4597
  %v5719 = vunpack.c.l.b16 %v4598
  %v5720 = vunpack.c.h.b16 %v4598
  %v5721 = vunpack.c.l.b16 %v4599
  %v5722 = vunpack.c.h.b16 %v4599
  %v5723 = vunpack.c.l.b16 %v4600
  %v5724 = vunpack.c.h.b16 %v4600
  %v5725 = vunpack.c.l.b16 %v4601
  %v5726 = vunpack.c.h.b16 %v4601
  %v5727 = vunpack.c.l.b16 %v4602
  %v5728 = vunpack.c.h.b16 %v4602
  %v5729 = vunpack.c.l.b16 %v4603
  %v5730 = vunpack.c.h.b16 %v4603
  %v5731 = vunpack.c.l.b16 %v4604
  %v5732 = vunpack.c.h.b16 %v4604
  %v5733 = vunpack.c.l.b16 %v4605
  %v5734 = vunpack.c.h.b16 %v4605
  %v5735 = vunpack.c.l.b16 %v4606
  %v5736 = vunpack.c.h.b16 %v4606
  %v5737 = vunpack.c.l.b16 %v4607
  %v5738 = vunpack.c.h.b16 %v4607
  %v5739 = vunpack.c.l.b16 %v4608
  %v5740 = vunpack.c.h.b16 %v4608
  %v5741 = vunpack.c.l.b16 %v4609
  %v5742 = vunpack.c.h.b16 %v4609
  %v5743 = vunpack.c.l.b16 %v4610
  %v5744 = vunpack.c.h.b16 %v4610
  %v5745 = vunpack.c.l.b16 %v4611
  %v5746 = vunpack.c.h.b16 %v4611
  %v5747 = vunpack.c.l.b16 %v4612
  %v5748 = vunpack.c.h.b16 %v4612
  %v5749 = vunpack.c.l.b16 %v4613
  %v5750 = vunpack.c.h.b16 %v4613
  %v5751 = vunpack.c.l.b16 %v4614
  %v5752 = vunpack.c.h.b16 %v4614
  %v5753 = vunpack.c.l.b16 %v4615
  %v5754 = vunpack.c.h.b16 %v4615
  %v5755 = vunpack.c.l.b16 %v4616
  %v5756 = vunpack.c.h.b16 %v4616
  %v5757 = vunpack.c.l.b16 %v4617
  %v5758 = vunpack.c.h.b16 %v4617
  %v5759 = vunpack.c.l.b16 %v4618
  %v5760 = vunpack.c.h.b16 %v4618
  %v5761 = vunpack.c.l.b16 %v4619
  %v5762 = vunpack.c.h.b16 %v4619
  %v5763 = vunpack.c.l.b16 %v4620
  %v5764 = vunpack.c.h.b16 %v4620
  %v5765 = vunpack.c.l.b16 %v4621
  %v5766 = vunpack.c.h.b16 %v4621
  %v5767 = vunpack.c.l.b16 %v4622
  %v5768 = vunpack.c.h.b16 %v4622
  %v5769 = vunpack.c.l.b16 %v4623
  %v5770 = vunpack.c.h.b16 %v4623
  %v5771 = vunpack.c.l.b16 %v4624
  %v5772 = vunpack.c.h.b16 %v4624
  %v5773 = vunpack.c.l.b16 %v4625
  %v5774 = vunpack.c.h.b16 %v4625
  %v5775 = vunpack.c.l.b16 %v4626
  %v5776 = vunpack.c.h.b16 %v4626
  %v5777 = vunpack.c.l.b16 %v4627
  %v5778 = vunpack.c.h.b16 %v4627
  %v5779 = vunpack.c.l.b16 %v4628
  %v5780 = vunpack.c.h.b16 %v4628
  %v5781 = vunpack.c.l.b16 %v4629
  %v5782 = vunpack.c.h.b16 %v4629
  %v5783 = vunpack.c.l.b16 %v4630
  %v5784 = vunpack.c.h.b16 %v4630
  %v5785 = vunpack.c.l.b16 %v4631
  %v5786 = vunpack.c.h.b16 %v4631
  %v5787 = vunpack.c.l.b16 %v4632
  %v5788 = vunpack.c.h.b16 %v4632
  %v5789 = vunpack.c.l.b16 %v4633
  %v5790 = vunpack.c.h.b16 %v4633
  %v5791 = vunpack.c.l.b16 %v4634
  %v5792 = vunpack.c.h.b16 %v4634
  %v5793 = vunpack.c.l.b16 %v4635
  %v5794 = vunpack.c.h.b16 %v4635
  %v5795 = vunpack.c.l.b16 %v4636
  %v5796 = vunpack.c.h.b16 %v4636
  %v5797 = vunpack.c.l.b16 %v4637
  %v5798 = vunpack.c.h.b16 %v4637
  %v5799 = vunpack.c.l.b16 %v4638
  %v5800 = vunpack.c.h.b16 %v4638
  %v5801 = vunpack.c.l.b16 %v4639
  %v5802 = vunpack.c.h.b16 %v4639
  %v5803 = vunpack.c.l.b16 %v4640
  %v5804 = vunpack.c.h.b16 %v4640
  %v5805 = vunpack.c.l.b16 %v4641
  %v5806 = vunpack.c.h.b16 %v4641
  %v5807 = vunpack.c.l.b16 %v4642
  %v5808 = vunpack.c.h.b16 %v4642
  %v5809 = vunpack.c.l.b16 %v4643
  %v5810 = vunpack.c.h.b16 %v4643
  %v5811 = vunpack.c.l.b16 %v4644
  %v5812 = vunpack.c.h.b16 %v4644
  %v5813 = vunpack.c.l.b16 %v4645
  %v5814 = vunpack.c.h.b16 %v4645
  %v5815 = vunpack.c.l.b16 %v4646
  %v5816 = vunpack.c.h.b16 %v4646
  %v5817 = vunpack.c.l.b16 %v4647
  %v5818 = vunpack.c.h.b16 %v4647
  %v5819 = vunpack.c.l.b16 %v4648
  %v5820 = vunpack.c.h.b16 %v4648
  %v5821 = vunpack.c.l.b16 %v4649
  %v5822 = vunpack.c.h.b16 %v4649
  %v5823 = vunpack.c.l.b16 %v4650
  %v5824 = vunpack.c.h.b16 %v4650
  %v5825 = vunpack.c.l.b16 %v4651
  %v5826 = vunpack.c.h.b16 %v4651
  %v5827 = vunpack.c.l.b16 %v4652
  %v5828 = vunpack.c.h.b16 %v4652
  %v5829 = vunpack.c.l.b16 %v4653
  %v5830 = vunpack.c.h.b16 %v4653
  %v5831 = vunpack.c.l.b16 %v4654
  %v5832 = vunpack.c.h.b16 %v4654
  %v5833 = vunpack.c.l.b16 %v4655
  %v5834 = vunpack.c.h.b16 %v4655
  %v5835 = vunpack.c.l.b16 %v4656
  %v5836 = vunpack.c.h.b16 %v4656
  %v5837 = vunpack.c.l.b16 %v4657
  %v5838 = vunpack.c.h.b16 %v4657
  %v5839 = vunpack.c.l.b16 %v4658
  %v5840 = vunpack.c.h.b16 %v4658
  %v5841 = vunpack.c.l.b16 %v4659
  %v5842 = vunpack.c.h.b16 %v4659
  %v5843 = vunpack.c.l.b16 %v4660
  %v5844 = vunpack.c.h.b16 %v4660
  %v5845 = vunpack.c.l.b16 %v4661
  %v5846 = vunpack.c.h.b16 %v4661
  %v5847 = vunpack.c.l.b16 %v4662
  %v5848 = vunpack.c.h.b16 %v4662
  %v5849 = vunpack.c.l.b16 %v4663
  %v5850 = vunpack.c.h.b16 %v4663
  %v5851 = vunpack.c.l.b16 %v4664
  %v5852 = vunpack.c.h.b16 %v4664
  %v5853 = vunpack.c.l.b16 %v4665
  %v5854 = vunpack.c.h.b16 %v4665
  %v5855 = vunpack.c.l.b16 %v4666
  %v5856 = vunpack.c.h.b16 %v4666
  %v5857 = vunpack.c.l.b16 %v4667
  %v5858 = vunpack.c.h.b16 %v4667
  %v5859 = vunpack.c.l.b16 %v4668
  %v5860 = vunpack.c.h.b16 %v4668
  %v5861 = vunpack.c.l.b16 %v4669
  %v5862 = vunpack.c.h.b16 %v4669
  %v5863 = vunpack.c.l.b16 %v4670
  %v5864 = vunpack.c.h.b16 %v4670
  %v5865 = vunpack.c.l.b16 %v4671
  %v5866 = vunpack.c.h.b16 %v4671
  %v5867 = vunpack.c.l.b16 %v4672
  %v5868 = vunpack.c.h.b16 %v4672
  %v5869 = vunpack.c.l.b16 %v4673
  %v5870 = vunpack.c.h.b16 %v4673
  %v5871 = vunpack.c.l.b16 %v4674
  %v5872 = vunpack.c.h.b16 %v4674
  %v5873 = vunpack.c.l.b16 %v4675
  %v5874 = vunpack.c.h.b16 %v4675
  %v5875 = vunpack.c.l.b16 %v4676
  %v5876 = vunpack.c.h.b16 %v4676
  %v5877 = vunpack.c.l.b16 %v4677
  %v5878 = vunpack.c.h.b16 %v4677
  %v5879 = vunpack.c.l.b16 %v4678
  %v5880 = vunpack.c.h.b16 %v4678
  %v5881 = vunpack.c.l.b16 %v4679
  %v5882 = vunpack.c.h.b16 %v4679
  %v5883 = vunpack.c.l.b16 %v4680
  %v5884 = vunpack.c.h.b16 %v4680
  %v5885 = vunpack.c.l.b16 %v4681
  %v5886 = vunpack.c.h.b16 %v4681
  %v5887 = vunpack.c.l.b16 %v4682
  %v5888 = vunpack.c.h.b16 %v4682
  %v5889 = vunpack.c.l.b16 %v4683
  %v5890 = vunpack.c.h.b16 %v4683
  %v5891 = vunpack.c.l.b16 %v4684
  %v5892 = vunpack.c.h.b16 %v4684
  %v5893 = vunpack.c.l.b16 %v4685
  %v5894 = vunpack.c.h.b16 %v4685
  %v5895 = vunpack.c.l.b16 %v4686
  %v5896 = vunpack.c.h.b16 %v4686
  %v5897 = vunpack.c.l.b16 %v4687
  %v5898 = vunpack.c.h.b16 %v4687
  %v5899 = vunpack.c.l.b16 %v4688
  %v5900 = vunpack.c.h.b16 %v4688
  %v5901 = vunpack.c.l.b16 %v4689
  %v5902 = vunpack.c.h.b16 %v4689
  %v5903 = vunpack.c.l.b16 %v4690
  %v5904 = vunpack.c.h.b16 %v4690
  %v5905 = vunpack.c.l.b16 %v4691
  %v5906 = vunpack.c.h.b16 %v4691
  %v5907 = vunpack.c.l.b16 %v4692
  %v5908 = vunpack.c.h.b16 %v4692
  %v5909 = vunpack.c.l.b16 %v4693
  %v5910 = vunpack.c.h.b16 %v4693
  %v5911 = vunpack.c.l.b16 %v4694
  %v5912 = vunpack.c.h.b16 %v4694
  %v5913 = vunpack.c.l.b16 %v4695
  %v5914 = vunpack.c.h.b16 %v4695
  %v5915 = vunpack.c.l.b16 %v4696
  %v5916 = vunpack.c.h.b16 %v4696
  %v5917 = vunpack.c.l.b16 %v4697
  %v5918 = vunpack.c.h.b16 %v4697
  %v5919 = vunpack.c.l.b16 %v4698
  %v5920 = vunpack.c.h.b16 %v4698
  %v5921 = vunpack.c.l.b16 %v4699
  %v5922 = vunpack.c.h.b16 %v4699
  %v5923 = vunpack.c.l.b16 %v4700
  %v5924 = vunpack.c.h.b16 %v4700
  %v5925 = vunpack.c.l.b16 %v4701
  %v5926 = vunpack.c.h.b16 %v4701
  %v5927 = vunpack.c.l.b16 %v4702
  %v5928 = vunpack.c.h.b16 %v4702
  %v5929 = vunpack.c.l.b16 %v4703
  %v5930 = vunpack.c.h.b16 %v4703
  %v5931 = vunpack.c.l.b16 %v4704
  %v5932 = vunpack.c.h.b16 %v4704
  %v5933 = vunpack.c.l.b16 %v4705
  %v5934 = vunpack.c.h.b16 %v4705
  %v5935 = vunpack.c.l.b16 %v4706
  %v5936 = vunpack.c.h.b16 %v4706
  %v5937 = vunpack.c.l.b16 %v4707
  %v5938 = vunpack.c.h.b16 %v4707
  %v5939 = vunpack.c.l.b16 %v4708
  %v5940 = vunpack.c.h.b16 %v4708
  %v5941 = vunpack.c.l.b16 %v4709
  %v5942 = vunpack.c.h.b16 %v4709
  %v5943 = vunpack.c.l.b16 %v4710
  %v5944 = vunpack.c.h.b16 %v4710
  %v5945 = vunpack.c.l.b16 %v4711
  %v5946 = vunpack.c.h.b16 %v4711
  %v5947 = vunpack.c.l.b16 %v4712
  %v5948 = vunpack.c.h.b16 %v4712
  %v5949 = vunpack.c.l.b16 %v4713
  %v5950 = vunpack.c.h.b16 %v4713
  %v5951 = vunpack.c.l.b16 %v4714
  %v5952 = vunpack.c.h.b16 %v4714
  %v5953 = vunpack.c.l.b16 %v4715
  %v5954 = vunpack.c.h.b16 %v4715
  %v5955 = vunpack.c.l.b16 %v4716
  %v5956 = vunpack.c.h.b16 %v4716
  %v5957 = vunpack.c.l.b16 %v4717
  %v5958 = vunpack.c.h.b16 %v4717
  %v5959 = vunpack.c.l.b16 %v4718
  %v5960 = vunpack.c.h.b16 %v4718
  %v5961 = vunpack.c.l.b16 %v4719
  %v5962 = vunpack.c.h.b16 %v4719
  %v5963 = vunpack.c.l.b16 %v4720
  %v5964 = vunpack.c.h.b16 %v4720
  %v5965 = vunpack.c.l.b16 %v4721
  %v5966 = vunpack.c.h.b16 %v4721
  %v5967 = vunpack.c.l.b16 %v4722
  %v5968 = vunpack.c.h.b16 %v4722
  %v5969 = vunpack.c.l.b16 %v4723
  %v5970 = vunpack.c.h.b16 %v4723
  %v5971 = vunpack.c.l.b16 %v4724
  %v5972 = vunpack.c.h.b16 %v4724
  %v5973 = vunpack.c.l.b16 %v4725
  %v5974 = vunpack.c.h.b16 %v4725
  %v5975 = vunpack.c.l.b16 %v4726
  %v5976 = vunpack.c.h.b16 %v4726
  %v5977 = vunpack.c.l.b16 %v4727
  %v5978 = vunpack.c.h.b16 %v4727
  %v5979 = vunpack.c.l.b16 %v4728
  %v5980 = vunpack.c.h.b16 %v4728
  %v5981 = vunpack.c.l.b16 %v4729
  %v5982 = vunpack.c.h.b16 %v4729
  %v5983 = vunpack.c.l.b16 %v4730
  %v5984 = vunpack.c.h.b16 %v4730
  %v5985 = vunpack.c.l.b16 %v4731
  %v5986 = vunpack.c.h.b16 %v4731
  %v5987 = vunpack.c.l.b16 %v4732
  %v5988 = vunpack.c.h.b16 %v4732
  %v5989 = vunpack.c.l.b16 %v4733
  %v5990 = vunpack.c.h.b16 %v4733
  %v5991 = vunpack.c.l.b16 %v4734
  %v5992 = vunpack.c.h.b16 %v4734
  %v5993 = vunpack.c.l.b16 %v4735
  %v5994 = vunpack.c.h.b16 %v4735
  %v5995 = vunpack.c.l.b16 %v4736
  %v5996 = vunpack.c.h.b16 %v4736
  %v5997 = vunpack.c.l.b16 %v4737
  %v5998 = vunpack.c.h.b16 %v4737
  %v5999 = vunpack.c.l.b16 %v4738
  %v6000 = vunpack.c.h.b16 %v4738
  %v6001 = vunpack.c.l.b16 %v4739
  %v6002 = vunpack.c.h.b16 %v4739
  %v6003 = vunpack.c.l.b16 %v4740
  %v6004 = vunpack.c.h.b16 %v4740
  %v6005 = vunpack.c.l.b16 %v4741
  %v6006 = vunpack.c.h.b16 %v4741
  %v6007 = vunpack.c.l.b16 %v4742
  %v6008 = vunpack.c.h.b16 %v4742
  %v6009 = vunpack.c.l.b16 %v4743
  %v6010 = vunpack.c.h.b16 %v4743
  %v6011 = vunpack.c.l.b16 %v4744
  %v6012 = vunpack.c.h.b16 %v4744
  %v6013 = vunpack.c.l.b16 %v4745
  %v6014 = vunpack.c.h.b16 %v4745
  %v6015 = vunpack.c.l.b16 %v4746
  %v6016 = vunpack.c.h.b16 %v4746
  %v6017 = vunpack.c.l.b16 %v4747
  %v6018 = vunpack.c.h.b16 %v4747
  %v6019 = vunpack.c.l.b16 %v4748
  %v6020 = vunpack.c.h.b16 %v4748
  %v6021 = vunpack.c.l.b16 %v4749
  %v6022 = vunpack.c.h.b16 %v4749
  %v6023 = vunpack.c.l.b16 %v4750
  %v6024 = vunpack.c.h.b16 %v4750
  %v6025 = vunpack.c.l.b16 %v4751
  %v6026 = vunpack.c.h.b16 %v4751
  %v6027 = vunpack.c.l.b16 %v4752
  %v6028 = vunpack.c.h.b16 %v4752
  %v6029 = vunpack.c.l.b16 %v4753
  %v6030 = vunpack.c.h.b16 %v4753
  %v6031 = vunpack.c.l.b16 %v4754
  %v6032 = vunpack.c.h.b16 %v4754
  %v6033 = vunpack.c.l.b16 %v4755
  %v6034 = vunpack.c.h.b16 %v4755
  %v6035 = vunpack.c.l.b16 %v4756
  %v6036 = vunpack.c.h.b16 %v4756
  %v6037 = vunpack.c.l.b16 %v4757
  %v6038 = vunpack.c.h.b16 %v4757
  %v6039 = vunpack.c.l.b16 %v4758
  %v6040 = vunpack.c.h.b16 %v4758
  %v6041 = vunpack.c.l.b16 %v4759
  %v6042 = vunpack.c.h.b16 %v4759
  %v6043 = vunpack.c.l.b16 %v4760
  %v6044 = vunpack.c.h.b16 %v4760
  %v6045 = vunpack.c.l.b16 %v4761
  %v6046 = vunpack.c.h.b16 %v4761
  %v6047 = vunpack.c.l.b16 %v4762
  %v6048 = vunpack.c.h.b16 %v4762
  %v6049 = vunpack.c.l.b16 %v4763
  %v6050 = vunpack.c.h.b16 %v4763
  %v6051 = vunpack.c.l.b16 %v4764
  %v6052 = vunpack.c.h.b16 %v4764
  %v6053 = vunpack.c.l.b16 %v4765
  %v6054 = vunpack.c.h.b16 %v4765
  %v6055 = vunpack.c.l.b16 %v4766
  %v6056 = vunpack.c.h.b16 %v4766
  %v6057 = vunpack.c.l.b16 %v4767
  %v6058 = vunpack.c.h.b16 %v4767
  %v6059 = vunpack.c.l.b16 %v4768
  %v6060 = vunpack.c.h.b16 %v4768
  %v6061 = vunpack.c.l.b16 %v4769
  %v6062 = vunpack.c.h.b16 %v4769
  %v6063 = vunpack.c.l.b16 %v4770
  %v6064 = vunpack.c.h.b16 %v4770
  %v6065 = vunpack.c.l.b16 %v4771
  %v6066 = vunpack.c.h.b16 %v4771
  %v6067 = vunpack.c.l.b16 %v4772
  %v6068 = vunpack.c.h.b16 %v4772
  %v6069 = vpack.c.b16 %v5223, %v5205
  %v6070 = vpack.c.b16 %v5224, %v5206
  %v6071 = vpack.c.b16 %v5225, %v5207
  %v6072 = vpack.c.b16 %v5226, %v5208
  %v6073 = vpack.c.b16 %v5227, %v5209
  %v6074 = vpack.c.b16 %v5228, %v5210
  %v6075 = vpack.c.b16 %v5229, %v5211
  %v6076 = vpack.c.b16 %v5230, %v5212
  %v6077 = vpack.c.b16 %v5231, %v5213
  %v6078 = vpack.c.b16 %v5232, %v5214
  %v6079 = vpack.c.b16 %v5233, %v5215
  %v6080 = vpack.c.b16 %v5234, %v5216
  %v6081 = vpack.c.b16 %v5235, %v5217
  %v6082 = vpack.c.b16 %v5236, %v5218
  %v6083 = vpack.c.b16 %v5237, %v5219
  %v6084 = vpack.c.b16 %v5238, %v5220
  %v6085 = vpack.c.b16 %v5239, %v5221
  %v6086 = vpack.c.b16 %v5240, %v5222
  %v6087 = vpack.c.b16 %v5259, %v5241
  %v6088 = vpack.c.b16 %v5260, %v5242
  %v6089 = vpack.c.b16 %v5261, %v5243
  %v6090 = vpack.c.b16 %v5262, %v5244
  %v6091 = vpack.c.b16 %v5263, %v5245
  %v6092 = vpack.c.b16 %v5264, %v5246
  %v6093 = vpack.c.b16 %v5265, %v5247
  %v6094 = vpack.c.b16 %v5266, %v5248
  %v6095 = vpack.c.b16 %v5267, %v5249
  %v6096 = vpack.c.b16 %v5268, %v5250
  %v6097 = vpack.c.b16 %v5269, %v5251
  %v6098 = vpack.c.b16 %v5270, %v5252
  %v6099 = vpack.c.b16 %v5271, %v5253
  %v6100 = vpack.c.b16 %v5272, %v5254
  %v6101 = vpack.c.b16 %v5273, %v5255
  %v6102 = vpack.c.b16 %v5274, %v5256
  %v6103 = vpack.c.b16 %v5275, %v5257
  %v6104 = vpack.c.b16 %v5276, %v5258
  %v6105 = vpack.c.b16 %v5295, %v5277
  %v6106 = vpack.c.b16 %v5296, %v5278
  %v6107 = vpack.c.b16 %v5297, %v5279
  %v6108 = vpack.c.b16 %v5298, %v5280
  %v6109 = vpack.c.b16 %v5299, %v5281
  %v6110 = vpack.c.b16 %v5300, %v5282
  %v6111 = vpack.c.b16 %v5301, %v5283
  %v6112 = vpack.c.b16 %v5302, %v5284
  %v6113 = vpack.c.b16 %v5303, %v5285
  %v6114 = vpack.c.b16 %v5304, %v5286
  %v6115 = vpack.c.b16 %v5305, %v5287
  %v6116 = vpack.c.b16 %v5306, %v5288
  %v6117 = vpack.c.b16 %v5307, %v5289
  %v6118 = vpack.c.b16 %v5308, %v5290
  %v6119 = vpack.c.b16 %v5309, %v5291
  %v6120 = vpack.c.b16 %v5310, %v5292
  %v6121 = vpack.c.b16 %v5311, %v5293
  %v6122 = vpack.c.b16 %v5312, %v5294
  %v6123 = vpack.c.b16 %v5331, %v5313
  %v6124 = vpack.c.b16 %v5332, %v5314
  %v6125 = vpack.c.b16 %v5333, %v5315
  %v6126 = vpack.c.b16 %v5334, %v5316
  %v6127 = vpack.c.b16 %v5335, %v5317
  %v6128 = vpack.c.b16 %v5336, %v5318
  %v6129 = vpack.c.b16 %v5337, %v5319
  %v6130 = vpack.c.b16 %v5338, %v5320
  %v6131 = vpack.c.b16 %v5339, %v5321
  %v6132 = vpack.c.b16 %v5340, %v5322
  %v6133 = vpack.c.b16 %v5341, %v5323
  %v6134 = vpack.c.b16 %v5342, %v5324
  %v6135 = vpack.c.b16 %v5343, %v5325
  %v6136 = vpack.c.b16 %v5344, %v5326
  %v6137 = vpack.c.b16 %v5345, %v5327
  %v6138 = vpack.c.b16 %v5346, %v5328
  %v6139 = vpack.c.b16 %v5347, %v5329
  %v6140 = vpack.c.b16 %v5348, %v5330
  %v6141 = vpack.c.b16 %v5367, %v5349
  %v6142 = vpack.c.b16 %v5368, %v5350
  %v6143 = vpack.c.b16 %v5369, %v5351
  %v6144 = vpack.c.b16 %v5370, %v5352
  %v6145 = vpack.c.b16 %v5371, %v5353
  %v6146 = vpack.c.b16 %v5372, %v5354
  %v6147 = vpack.c.b16 %v5373, %v5355
  %v6148 = vpack.c.b16 %v5374, %v5356
  %v6149 = vpack.c.b16 %v5375, %v5357
  %v6150 = vpack.c.b16 %v5376, %v5358
  %v6151 = vpack.c.b16 %v5377, %v5359
  %v6152 = vpack.c.b16 %v5378, %v5360
  %v6153 = vpack.c.b16 %v5379, %v5361
  %v6154 = vpack.c.b16 %v5380, %v5362
  %v6155 = vpack.c.b16 %v5381, %v5363
  %v6156 = vpack.c.b16 %v5382, %v5364
  %v6157 = vpack.c.b16 %v5383, %v5365
  %v6158 = vpack.c.b16 %v5384, %v5366
  %v6159 = vpack.c.b16 %v5403, %v5385
  %v6160 = vpack.c.b16 %v5404, %v5386
  %v6161 = vpack.c.b16 %v5405, %v5387
  %v6162 = vpack.c.b16 %v5406, %v5388
  %v6163 = vpack.c.b16 %v5407, %v5389
  %v6164 = vpack.c.b16 %v5408, %v5390
  %v6165 = vpack.c.b16 %v5409, %v5391
  %v6166 = vpack.c.b16 %v5410, %v5392
  %v6167 = vpack.c.b16 %v5411, %v5393
  %v6168 = vpack.c.b16 %v5412, %v5394
  %v6169 = vpack.c.b16 %v5413, %v5395
  %v6170 = vpack.c.b16 %v5414, %v5396
  %v6171 = vpack.c.b16 %v5415, %v5397
  %v6172 = vpack.c.b16 %v5416, %v5398
  %v6173 = vpack.c.b16 %v5417, %v5399
  %v6174 = vpack.c.b16 %v5418, %v5400
  %v6175 = vpack.c.b16 %v5419, %v5401
  %v6176 = vpack.c.b16 %v5420, %v5402
  %v6177 = vpack.c.b16 %v5439, %v5421
  %v6178 = vpack.c.b16 %v5440, %v5422
  %v6179 = vpack.c.b16 %v5441, %v5423
  %v6180 = vpack.c.b16 %v5442, %v5424
  %v6181 = vpack.c.b16 %v5443, %v5425
  %v6182 = vpack.c.b16 %v5444, %v5426
  %v6183 = vpack.c.b16 %v5445, %v5427
  %v6184 = vpack.c.b16 %v5446, %v5428
  %v6185 = vpack.c.b16 %v5447, %v5429
  %v6186 = vpack.c.b16 %v5448, %v5430
  %v6187 = vpack.c.b16 %v5449, %v5431
  %v6188 = vpack.c.b16 %v5450, %v5432
  %v6189 = vpack.c.b16 %v5451, %v5433
  %v6190 = vpack.c.b16 %v5452, %v5434
  %v6191 = vpack.c.b16 %v5453, %v5435
  %v6192 = vpack.c.b16 %v5454, %v5436
  %v6193 = vpack.c.b16 %v5455, %v5437
  %v6194 = vpack.c.b16 %v5456, %v5438
  %v6195 = vpack.c.b16 %v5475, %v5457
  %v6196 = vpack.c.b16 %v5476, %v5458
  %v6197 = vpack.c.b16 %v5477, %v5459
  %v6198 = vpack.c.b16 %v5478, %v5460
  %v6199 = vpack.c.b16 %v5479, %v5461
  %v6200 = vpack.c.b16 %v5480, %v5462
  %v6201 = vpack.c.b16 %v5481, %v5463
  %v6202 = vpack.c.b16 %v5482, %v5464
  %v6203 = vpack.c.b16 %v5483, %v5465
  %v6204 = vpack.c.b16 %v5484, %v5466
  %v6205 = vpack.c.b16 %v5485, %v5467
  %v6206 = vpack.c.b16 %v5486, %v5468
  %v6207 = vpack.c.b16 %v5487, %v5469
  %v6208 = vpack.c.b16 %v5488, %v5470
  %v6209 = vpack.c.b16 %v5489, %v5471
  %v6210 = vpack.c.b16 %v5490, %v5472
  %v6211 = vpack.c.b16 %v5491, %v5473
  %v6212 = vpack.c.b16 %v5492, %v5474
  %v6213 = vpack.c.b16 %v5511, %v5493
  %v6214 = vpack.c.b16 %v5512, %v5494
  %v6215 = vpack.c.b16 %v5513, %v5495
  %v6216 = vpack.c.b16 %v5514, %v5496
  %v6217 = vpack.c.b16 %v5515, %v5497
  %v6218 = vpack.c.b16 %v5516, %v5498
  %v6219 = vpack.c.b16 %v5517, %v5499
  %v6220 = vpack.c.b16 %v5518, %v5500
  %v6221 = vpack.c.b16 %v5519, %v5501
  %v6222 = vpack.c.b16 %v5520, %v5502
  %v6223 = vpack.c.b16 %v5521, %v5503
  %v6224 = vpack.c.b16 %v5522, %v5504
  %v6225 = vpack.c.b16 %v5523, %v5505
  %v6226 = vpack.c.b16 %v5524, %v5506
  %v6227 = vpack.c.b16 %v5525, %v5507
  %v6228 = vpack.c.b16 %v5526, %v5508
  %v6229 = vpack.c.b16 %v5527, %v5509
  %v6230 = vpack.c.b16 %v5528, %v5510
  %v6231 = vpack.c.b16 %v5547, %v5529
  %v6232 = vpack.c.b16 %v5548, %v5530
  %v6233 = vpack.c.b16 %v5549, %v5531
  %v6234 = vpack.c.b16 %v5550, %v5532
  %v6235 = vpack.c.b16 %v5551, %v5533
  %v6236 = vpack.c.b16 %v5552, %v5534
  %v6237 = vpack.c.b16 %v5553, %v5535
  %v6238 = vpack.c.b16 %v5554, %v5536
  %v6239 = vpack.c.b16 %v5555, %v5537
  %v6240 = vpack.c.b16 %v5556, %v5538
  %v6241 = vpack.c.b16 %v5557, %v5539
  %v6242 = vpack.c.b16 %v5558, %v5540
  %v6243 = vpack.c.b16 %v5559, %v5541
  %v6244 = vpack.c.b16 %v5560, %v5542
  %v6245 = vpack.c.b16 %v5561, %v5543
  %v6246 = vpack.c.b16 %v5562, %v5544
  %v6247 = vpack.c.b16 %v5563, %v5545
  %v6248 = vpack.c.b16 %v5564, %v5546
  %v6249 = vpack.c.b16 %v5583, %v5565
  %v6250 = vpack.c.b16 %v5584, %v5566
  %v6251 = vpack.c.b16 %v5585, %v5567
  %v6252 = vpack.c.b16 %v5586, %v5568
  %v6253 = vpack.c.b16 %v5587, %v5569
  %v6254 = vpack.c.b16 %v5588, %v5570
  %v6255 = vpack.c.b16 %v5589, %v5571
  %v6256 = vpack.c.b16 %v5590, %v5572
  %v6257 = vpack.c.b16 %v5591, %v5573
  %v6258 = vpack.c.b16 %v5592, %v5574
  %v6259 = vpack.c.b16 %v5593, %v5575
  %v6260 = vpack.c.b16 %v5594, %v5576
  %v6261 = vpack.c.b16 %v5595, %v5577
  %v6262 = vpack.c.b16 %v5596, %v5578
  %v6263 = vpack.c.b16 %v5597, %v5579
  %v6264 = vpack.c.b16 %v5598, %v5580
  %v6265 = vpack.c.b16 %v5599, %v5581
  %v6266 = vpack.c.b16 %v5600, %v5582
  %v6267 = vpack.c.b16 %v5619, %v5601
  %v6268 = vpack.c.b16 %v5620, %v5602
  %v6269 = vpack.c.b16 %v5621, %v5603
  %v6270 = vpack.c.b16 %v5622, %v5604
  %v6271 = vpack.c.b16 %v5623, %v5605
  %v6272 = vpack.c.b16 %v5624, %v5606
  %v6273 = vpack.c.b16 %v5625, %v5607
  %v6274 = vpack.c.b16 %v5626, %v5608
  %v6275 = vpack.c.b16 %v5627, %v5609
  %v6276 = vpack.c.b16 %v5628, %v5610
  %v6277 = vpack.c.b16 %v5629, %v5611
  %v6278 = vpack.c.b16 %v5630, %v5612
  %v6279 = vpack.c.b16 %v5631, %v5613
  %v6280 = vpack.c.b16 %v5632, %v5614
  %v6281 = vpack.c.b16 %v5633, %v5615
  %v6282 = vpack.c.b16 %v5634, %v5616
  %v6283 = vpack.c.b16 %v5635, %v5617
  %v6284 = vpack.c.b16 %v5636, %v5618
  %v6285 = vpack.c.b16 %v5655, %v5637
  %v6286 = vpack.c.b16 %v5656, %v5638
  %v6287 = vpack.c.b16 %v5657, %v5639
  %v6288 = vpack.c.b16 %v5658, %v5640
  %v6289 = vpack.c.b16 %v5659, %v5641
  %v6290 = vpack.c.b16 %v5660, %v5642
  %v6291 = vpack.c.b16 %v5661, %v5643
  %v6292 = vpack.c.b16 %v5662, %v5644
  %v6293 = vpack.c.b16 %v5663, %v5645
  %v6294 = vpack.c.b16 %v5664, %v5646
  %v6295 = vpack.c.b16 %v5665, %v5647
  %v6296 = vpack.c.b16 %v5666, %v5648
  %v6297 = vpack.c.b16 %v5667, %v5649
  %v6298 = vpack.c.b16 %v5668, %v5650
  %v6299 = vpack.c.b16 %v5669, %v5651
  %v6300 = vpack.c.b16 %v5670, %v5652
  %v6301 = vpack.c.b16 %v5671, %v5653
  %v6302 = vpack.c.b16 %v5672, %v5654
  %v6303 = vpack.c.b16 %v5691, %v5673
  %v6304 = vpack.c.b16 %v5692, %v5674
  %v6305 = vpack.c.b16 %v5693, %v5675
  %v6306 = vpack.c.b16 %v5694, %v5676
  %v6307 = vpack.c.b16 %v5695, %v5677
  %v6308 = vpack.c.b16 %v5696, %v5678
  %v6309 = vpack.c.b16 %v5697, %v5679
  %v6310 = vpack.c.b16 %v5698, %v5680
  %v6311 = vpack.c.b16 %v5699, %v5681
  %v6312 = vpack.c.b16 %v5700, %v5682
  %v6313 = vpack.c.b16 %v5701, %v5683
  %v6314 = vpack.c.b16 %v5702, %v5684
  %v6315 = vpack.c.b16 %v5703, %v5685
  %v6316 = vpack.c.b16 %v5704, %v5686
  %v6317 = vpack.c.b16 %v5705, %v5687
  %v6318 = vpack.c.b16 %v5706, %v5688
  %v6319 = vpack.c.b16 %v5707, %v5689
  %v6320 = vpack.c.b16 %v5708, %v5690
  %v6321 = vpack.c.b16 %v5727, %v5709
  %v6322 = vpack.c.b16 %v5728, %v5710
  %v6323 = vpack.c.b16 %v5729, %v5711
  %v6324 = vpack.c.b16 %v5730, %v5712
  %v6325 = vpack.c.b16 %v5731, %v5713
  %v6326 = vpack.c.b16 %v5732, %v5714
  %v6327 = vpack.c.b16 %v5733, %v5715
  %v6328 = vpack.c.b16 %v5734, %v5716
  %v6329 = vpack.c.b16 %v5735, %v5717
  %v6330 = vpack.c.b16 %v5736, %v5718
  %v6331 = vpack.c.b16 %v5737, %v5719
  %v6332 = vpack.c.b16 %v5738, %v5720
  %v6333 = vpack.c.b16 %v5739, %v5721
  %v6334 = vpack.c.b16 %v5740, %v5722
  %v6335 = vpack.c.b16 %v5741, %v5723
  %v6336 = vpack.c.b16 %v5742, %v5724
  %v6337 = vpack.c.b16 %v5743, %v5725
  %v6338 = vpack.c.b16 %v5744, %v5726
  %v6339 = vpack.c.b16 %v5763, %v5745
  %v6340 = vpack.c.b16 %v5764, %v5746
  %v6341 = vpack.c.b16 %v5765, %v5747
  %v6342 = vpack.c.b16 %v5766, %v5748
  %v6343 = vpack.c.b16 %v5767, %v5749
  %v6344 = vpack.c.b16 %v5768, %v5750
  %v6345 = vpack.c.b16 %v5769, %v5751
  %v6346 = vpack.c.b16 %v5770, %v5752
  %v6347 = vpack.c.b16 %v5771, %v5753
  %v6348 = vpack.c.b16 %v5772, %v5754
  %v6349 = vpack.c.b16 %v5773, %v5755
  %v6350 = vpack.c.b16 %v5774, %v5756
  %v6351 = vpack.c.b16 %v5775, %v5757
  %v6352 = vpack.c.b16 %v5776, %v5758
  %v6353 = vpack.c.b16 %v5777, %v5759
  %v6354 = vpack.c.b16 %v5778, %v5760
  %v6355 = vpack.c.b16 %v5779, %v5761
  %v6356 = vpack.c.b16 %v5780, %v5762
  %v6357 = vpack.c.b16 %v5799, %v5781
  %v6358 = vpack.c.b16 %v5800, %v5782
  %v6359 = vpack.c.b16 %v5801, %v5783
  %v6360 = vpack.c.b16 %v5802, %v5784
  %v6361 = vpack.c.b16 %v5803, %v5785
  %v6362 = vpack.c.b16 %v5804, %v5786
  %v6363 = vpack.c.b16 %v5805, %v5787
  %v6364 = vpack.c.b16 %v5806, %v5788
  %v6365 = vpack.c.b16 %v5807, %v5789
  %v6366 = vpack.c.b16 %v5808, %v5790
  %v6367 = vpack.c.b16 %v5809, %v5791
  %v6368 = vpack.c.b16 %v5810, %v5792
  %v6369 = vpack.c.b16 %v5811, %v5793
  %v6370 = vpack.c.b16 %v5812, %v5794
  %v6371 = vpack.c.b16 %v5813, %v5795
  %v6372 = vpack.c.b16 %v5814, %v5796
  %v6373 = vpack.c.b16 %v5815, %v5797
  %v6374 = vpack.c.b16 %v5816, %v5798
  %v6375 = vpack.c.b16 %v5835, %v5817
  %v6376 = vpack.c.b16 %v5836, %v5818
  %v6377 = vpack.c.b16 %v5837, %v5819
  %v6378 = vpack.c.b16 %v5838, %v5820
  %v6379 = vpack.c.b16 %v5839, %v5821
  %v6380 = vpack.c.b16 %v5840, %v5822
  %v6381 = vpack.c.b16 %v5841, %v5823
  %v6382 = vpack.c.b16 %v5842, %v5824
  %v6383 = vpack.c.b16 %v5843, %v5825
  %v6384 = vpack.c.b16 %v5844, %v5826
  %v6385 = vpack.c.b16 %v5845, %v5827
  %v6386 = vpack.c.b16 %v5846, %v5828
  %v6387 = vpack.c.b16 %v5847, %v5829
  %v6388 = vpack.c.b16 %v5848, %v5830
  %v6389 = vpack.c.b16 %v5849, %v5831
  %v6390 = vpack.c.b16 %v5850, %v5832
  %v6391 = vpack.c.b16 %v5851, %v5833
  %v6392 = vpack.c.b16 %v5852, %v5834
  %v6393 = vpack.c.b16 %v5871, %v5853
  %v6394 = vpack.c.b16 %v5872, %v5854
  %v6395 = vpack.c.b16 %v5873, %v5855
  %v6396 = vpack.c.b16 %v5874, %v5856
  %v6397 = vpack.c.b16 %v5875, %v5857
  %v6398 = vpack.c.b16 %v5876, %v5858
  %v6399 = vpack.c.b16 %v5877, %v5859
  %v6400 = vpack.c.b16 %v5878, %v5860
  %v6401 = vpack.c.b16 %v5879, %v5861
  %v6402 = vpack.c.b16 %v5880, %v5862
  %v6403 = vpack.c.b16 %v5881, %v5863
  %v6404 = vpack.c.b16 %v5882, %v5864
  %v6405 = vpack.c.b16 %v5883, %v5865
  %v6406 = vpack.c.b16 %v5884, %v5866
  %v6407 = vpack.c.b16 %v5885, %v5867
  %v6408 = vpack.c.b16 %v5886, %v5868
  %v6409 = vpack.c.b16 %v5887, %v5869
  %v6410 = vpack.c.b16 %v5888, %v5870
  %v6411 = vpack.c.b16 %v5907, %v5889
  %v6412 = vpack.c.b16 %v5908, %v5890
  %v6413 = vpack.c.b16 %v5909, %v5891
  %v6414 = vpack.c.b16 %v5910, %v5892
  %v6415 = vpack.c.b16 %v5911, %v5893
  %v6416 = vpack.c.b16 %v5912, %v5894
  %v6417 = vpack.c.b16 %v5913, %v5895
  %v6418 = vpack.c.b16 %v5914, %v5896
  %v6419 = vpack.c.b16 %v5915, %v5897
  %v6420 = vpack.c.b16 %v5916, %v5898
  %v6421 = vpack.c.b16 %v5917, %v5899
  %v6422 = vpack.c.b16 %v5918, %v5900
  %v6423 = vpack.c.b16 %v5919, %v5901
  %v6424 = vpack.c.b16 %v5920, %v5902
  %v6425 = vpack.c.b16 %v5921, %v5903
  %v6426 = vpack.c.b16 %v5922, %v5904
  %v6427 = vpack.c.b16 %v5923, %v5905
  %v6428 = vpack.c.b16 %v5924, %v5906
  %v6429 = vpack.c.b16 %v5943, %v5925
  %v6430 = vpack.c.b16 %v5944, %v5926
  %v6431 = vpack.c.b16 %v5945, %v5927
  %v6432 = vpack.c.b16 %v5946, %v5928
  %v6433 = vpack.c.b16 %v5947, %v5929
  %v6434 = vpack.c.b16 %v5948, %v5930
  %v6435 = vpack.c.b16 %v5949, %v5931
  %v6436 = vpack.c.b16 %v5950, %v5932
  %v6437 = vpack.c.b16 %v5951, %v5933
  %v6438 = vpack.c.b16 %v5952, %v5934
  %v6439 = vpack.c.b16 %v5953, %v5935
  %v6440 = vpack.c.b16 %v5954, %v5936
  %v6441 = vpack.c.b16 %v5955, %v5937
  %v6442 = vpack.c.b16 %v5956, %v5938
  %v6443 = vpack.c.b16 %v5957, %v5939
  %v6444 = vpack.c.b16 %v5958, %v5940
  %v6445 = vpack.c.b16 %v5959, %v5941
  %v6446 = vpack.c.b16 %v5960, %v5942
  %v6447 = vpack.c.b16 %v5979, %v5961
  %v6448 = vpack.c.b16 %v5980, %v5962
  %v6449 = vpack.c.b16 %v5981, %v5963
  %v6450 = vpack.c.b16 %v5982, %v5964
  %v6451 = vpack.c.b16 %v5983, %v5965
  %v6452 = vpack.c.b16 %v5984, %v5966
  %v6453 = vpack.c.b16 %v5985, %v5967
  %v6454 = vpack.c.b16 %v5986, %v5968
  %v6455 = vpack.c.b16 %v5987, %v5969
  %v6456 = vpack.c.b16 %v5988, %v5970
  %v6457 = vpack.c.b16 %v5989, %v5971
  %v6458 = vpack.c.b16 %v5990, %v5972
  %v6459 = vpack.c.b16 %v5991, %v5973
  %v6460 = vpack.c.b16 %v5992, %v5974
  %v6461 = vpack.c.b16 %v5993, %v5975
  %v6462 = vpack.c.b16 %v5994, %v5976
  %v6463 = vpack.c.b16 %v5995, %v5977
  %v6464 = vpack.c.b16 %v5996, %v5978
  %v6465 = vpack.c.b16 %v6015, %v5997
  %v6466 = vpack.c.b16 %v6016, %v5998
  %v6467 = vpack.c.b16 %v6017, %v5999
  %v6468 = vpack.c.b16 %v6018, %v6000
  %v6469 = vpack.c.b16 %v6019, %v6001
  %v6470 = vpack.c.b16 %v6020, %v6002
  %v6471 = vpack.c.b16 %v6021, %v6003
  %v6472 = vpack.c.b16 %v6022, %v6004
  %v6473 = vpack.c.b16 %v6023, %v6005
  %v6474 = vpack.c.b16 %v6024, %v6006
  %v6475 = vpack.c.b16 %v6025, %v6007
  %v6476 = vpack.c.b16 %v6026, %v6008
  %v6477 = vpack.c.b16 %v6027, %v6009
  %v6478 = vpack.c.b16 %v6028, %v6010
  %v6479 = vpack.c.b16 %v6029, %v6011
  %v6480 = vpack.c.b16 %v6030, %v6012
  %v6481 = vpack.c.b16 %v6031, %v6013
  %v6482 = vpack.c.b16 %v6032, %v6014
  %v6483 = vpack.c.b16 %v6051, %v6033
  %v6484 = vpack.c.b16 %v6052, %v6034
  %v6485 = vpack.c.b16 %v6053, %v6035
  %v6486 = vpack.c.b16 %v6054, %v6036
  %v6487 = vpack.c.b16 %v6055, %v6037
  %v6488 = vpack.c.b16 %v6056, %v6038
  %v6489 = vpack.c.b16 %v6057, %v6039
  %v6490 = vpack.c.b16 %v6058, %v6040
  %v6491 = vpack.c.b16 %v6059, %v6041
  %v6492 = vpack.c.b16 %v6060, %v6042
  %v6493 = vpack.c.b16 %v6061, %v6043
  %v6494 = vpack.c.b16 %v6062, %v6044
  %v6495 = vpack.c.b16 %v6063, %v6045
  %v6496 = vpack.c.b16 %v6064, %v6046
  %v6497 = vpack.c.b16 %v6065, %v6047
  %v6498 = vpack.c.b16 %v6066, %v6048
  %v6499 = vpack.c.b16 %v6067, %v6049
  %v6500 = vpack.c.b16 %v6068, %v6050
  %v7221 = vunpack.c.l.b16 %v4053
  %v7222 = vunpack.c.l.b16 %v4054
  %v7223 = vunpack.c.l.b16 %v4055
  %v7224 = vunpack.c.l.b16 %v4056
  %v7225 = vunpack.c.l.b16 %v4057
  %v7226 = vunpack.c.l.b16 %v4058
  %v7227 = vunpack.c.l.b16 %v4059
  %v7228 = vunpack.c.l.b16 %v4060
  %v7229 = vunpack.c.l.b16 %v4061
  %v7230 = vunpack.c.l.b16 %v4062
  %v7231 = vunpack.c.l.b16 %v4063
  %v7232 = vunpack.c.l.b16 %v4064
  %v7233 = vunpack.c.l.b16 %v4065
  %v7234 = vunpack.c.l.b16 %v4066
  %v7235 = vunpack.c.l.b16 %v4067
  %v7236 = vunpack.c.l.b16 %v4068
  %v7237 = vunpack.c.l.b16 %v4069
  %v7238 = vunpack.c.l.b16 %v4070
  %v7239 = vunpack.c.l.b16 %v4071
  %v7240 = vunpack.c.l.b16 %v4072
  %v7241 = vunpack.c.l.b16 %v4073
  %v7242 = vunpack.c.l.b16 %v4074
  %v7243 = vunpack.c.l.b16 %v4075
  %v7244 = vunpack.c.l.b16 %v4076
  %v7245 = vunpack.c.l.b16 %v4077
  %v7246 = vunpack.c.l.b16 %v4078
  %v7247 = vunpack.c.l.b16 %v4079
  %v7248 = vunpack.c.l.b16 %v4080
  %v7249 = vunpack.c.l.b16 %v4081
  %v7250 = vunpack.c.l.b16 %v4082
  %v7251 = vunpack.c.l.b16 %v4083
  %v7252 = vunpack.c.l.b16 %v4084
  %v7253 = vunpack.c.l.b16 %v4085
  %v7254 = vunpack.c.l.b16 %v4086
  %v7255 = vunpack.c.l.b16 %v4087
  %v7256 = vunpack.c.l.b16 %v4088
  %v7257 = vunpack.c.l.b16 %v4089
  %v7258 = vunpack.c.l.b16 %v4090
  %v7259 = vunpack.c.l.b16 %v4091
  %v7260 = vunpack.c.l.b16 %v4092
  %v7261 = vunpack.c.l.b16 %v4093
  %v7262 = vunpack.c.l.b16 %v4094
  %v7263 = vunpack.c.l.b16 %v4095
  %v7264 = vunpack.c.l.b16 %v4096
  %v7265 = vunpack.c.l.b16 %v4097
  %v7266 = vunpack.c.l.b16 %v4098
  %v7267 = vunpack.c.l.b16 %v4099
  %v7268 = vunpack.c.l.b16 %v4100
  %v7269 = vunpack.c.l.b16 %v4101
  %v7270 = vunpack.c.l.b16 %v4102
  %v7271 = vunpack.c.l.b16 %v4103
  %v7272 = vunpack.c.l.b16 %v4104
  %v7273 = vunpack.c.l.b16 %v4105
  %v7274 = vunpack.c.l.b16 %v4106
  %v7275 = vunpack.c.l.b16 %v4107
  %v7276 = vunpack.c.l.b16 %v4108
  %v7277 = vunpack.c.l.b16 %v4109
  %v7278 = vunpack.c.l.b16 %v4110
  %v7279 = vunpack.c.l.b16 %v4111
  %v7280 = vunpack.c.l.b16 %v4112
  %v7281 = vunpack.c.l.b16 %v4113
  %v7282 = vunpack.c.l.b16 %v4114
  %v7283 = vunpack.c.l.b16 %v4115
  %v7284 = vunpack.c.l.b16 %v4116
  %v7285 = vunpack.c.l.b16 %v4117
  %v7286 = vunpack.c.l.b16 %v4118
  %v7287 = vunpack.c.l.b16 %v4119
  %v7288 = vunpack.c.l.b16 %v4120
  %v7289 = vunpack.c.l.b16 %v4121
  %v7290 = vunpack.c.l.b16 %v4122
  %v7291 = vunpack.c.l.b16 %v4123
  %v7292 = vunpack.c.l.b16 %v4124
  %v7293 = vunpack.c.l.b16 %v4125
  %v7294 = vunpack.c.l.b16 %v4126
  %v7295 = vunpack.c.l.b16 %v4127
  %v7296 = vunpack.c.l.b16 %v4128
  %v7297 = vunpack.c.l.b16 %v4129
  %v7298 = vunpack.c.l.b16 %v4130
  %v7299 = vunpack.c.l.b16 %v4131
  %v7300 = vunpack.c.l.b16 %v4132
  %v7301 = vunpack.c.l.b16 %v4133
  %v7302 = vunpack.c.l.b16 %v4134
  %v7303 = vunpack.c.l.b16 %v4135
  %v7304 = vunpack.c.l.b16 %v4136
  %v7305 = vunpack.c.l.b16 %v4137
  %v7306 = vunpack.c.l.b16 %v4138
  %v7307 = vunpack.c.l.b16 %v4139
  %v7308 = vunpack.c.l.b16 %v4140
  %v7309 = vunpack.c.l.b16 %v4141
  %v7310 = vunpack.c.l.b16 %v4142
  %v7311 = vunpack.c.l.b16 %v4143
  %v7312 = vunpack.c.l.b16 %v4144
  %v7313 = vunpack.c.l.b16 %v4145
  %v7314 = vunpack.c.l.b16 %v4146
  %v7315 = vunpack.c.l.b16 %v4147
  %v7316 = vunpack.c.l.b16 %v4148
  %v7317 = vunpack.c.l.b16 %v4149
  %v7318 = vunpack.c.l.b16 %v4150
  %v7319 = vunpack.c.l.b16 %v4151
  %v7320 = vunpack.c.l.b16 %v4152
  %v7321 = vunpack.c.l.b16 %v4153
  %v7322 = vunpack.c.l.b16 %v4154
  %v7323 = vunpack.c.l.b16 %v4155
  %v7324 = vunpack.c.l.b16 %v4156
  %v7325 = vunpack.c.l.b16 %v4157
  %v7326 = vunpack.c.l.b16 %v4158
  %v7327 = vunpack.c.l.b16 %v4159
  %v7328 = vunpack.c.l.b16 %v4160
  %v7329 = vunpack.c.l.b16 %v4161
  %v7330 = vunpack.c.l.b16 %v4162
  %v7331 = vunpack.c.l.b16 %v4163
  %v7332 = vunpack.c.l.b16 %v4164
  %v7333 = vunpack.c.l.b16 %v4165
  %v7334 = vunpack.c.l.b16 %v4166
  %v7335 = vunpack.c.l.b16 %v4167
  %v7336 = vunpack.c.l.b16 %v4168
  %v7337 = vunpack.c.l.b16 %v4169
  %v7338 = vunpack.c.l.b16 %v4170
  %v7339 = vunpack.c.l.b16 %v4171
  %v7340 = vunpack.c.l.b16 %v4172
  %v7341 = vunpack.c.l.b16 %v4173
  %v7342 = vunpack.c.l.b16 %v4174
  %v7343 = vunpack.c.l.b16 %v4175
  %v7344 = vunpack.c.l.b16 %v4176
  %v7345 = vunpack.c.l.b16 %v4177
  %v7346 = vunpack.c.l.b16 %v4178
  %v7347 = vunpack.c.l.b16 %v4179
  %v7348 = vunpack.c.l.b16 %v4180
  %v7349 = vunpack.c.l.b16 %v4181
  %v7350 = vunpack.c.l.b16 %v4182
  %v7351 = vunpack.c.l.b16 %v4183
  %v7352 = vunpack.c.l.b16 %v4184
  %v7353 = vunpack.c.l.b16 %v4185
  %v7354 = vunpack.c.l.b16 %v4186
  %v7355 = vunpack.c.l.b16 %v4187
  %v7356 = vunpack.c.l.b16 %v4188
  %v7357 = vunpack.c.l.b16 %v4189
  %v7358 = vunpack.c.l.b16 %v4190
  %v7359 = vunpack.c.l.b16 %v4191
  %v7360 = vunpack.c.l.b16 %v4192
  %v7361 = vunpack.c.l.b16 %v4193
  %v7362 = vunpack.c.l.b16 %v4194
  %v7363 = vunpack.c.l.b16 %v4195
  %v7364 = vunpack.c.l.b16 %v4196
  %v7365 = vunpack.c.l.b16 %v4197
  %v7366 = vunpack.c.l.b16 %v4198
  %v7367 = vunpack.c.l.b16 %v4199
  %v7368 = vunpack.c.l.b16 %v4200
  %v7369 = vunpack.c.l.b16 %v4201
  %v7370 = vunpack.c.l.b16 %v4202
  %v7371 = vunpack.c.l.b16 %v4203
  %v7372 = vunpack.c.l.b16 %v4204
  %v7373 = vunpack.c.l.b16 %v4205
  %v7374 = vunpack.c.l.b16 %v4206
  %v7375 = vunpack.c.l.b16 %v4207
  %v7376 = vunpack.c.l.b16 %v4208
  %v7377 = vunpack.c.l.b16 %v4209
  %v7378 = vunpack.c.l.b16 %v4210
  %v7379 = vunpack.c.l.b16 %v4211
  %v7380 = vunpack.c.l.b16 %v4212
  %v7381 = vunpack.c.l.b16 %v4213
  %v7382 = vunpack.c.l.b16 %v4214
  %v7383 = vunpack.c.l.b16 %v4215
  %v7384 = vunpack.c.l.b16 %v4216
  %v7385 = vunpack.c.l.b16 %v4217
  %v7386 = vunpack.c.l.b16 %v4218
  %v7387 = vunpack.c.l.b16 %v4219
  %v7388 = vunpack.c.l.b16 %v4220
  %v7389 = vunpack.c.l.b16 %v4221
  %v7390 = vunpack.c.l.b16 %v4222
  %v7391 = vunpack.c.l.b16 %v4223
  %v7392 = vunpack.c.l.b16 %v4224
  %v7393 = vunpack.c.l.b16 %v4225
  %v7394 = vunpack.c.l.b16 %v4226
  %v7395 = vunpack.c.l.b16 %v4227
  %v7396 = vunpack.c.l.b16 %v4228
  %v7397 = vunpack.c.l.b16 %v4229
  %v7398 = vunpack.c.l.b16 %v4230
  %v7399 = vunpack.c.l.b16 %v4231
  %v7400 = vunpack.c.l.b16 %v4232
  %v7401 = vunpack.c.l.b16 %v4233
  %v7402 = vunpack.c.l.b16 %v4234
  %v7403 = vunpack.c.l.b16 %v4235
  %v7404 = vunpack.c.l.b16 %v4236
  %v7405 = vunpack.c.l.b16 %v4237
  %v7406 = vunpack.c.l.b16 %v4238
  %v7407 = vunpack.c.l.b16 %v4239
  %v7408 = vunpack.c.l.b16 %v4240
  %v7409 = vunpack.c.l.b16 %v4241
  %v7410 = vunpack.c.l.b16 %v4242
  %v7411 = vunpack.c.l.b16 %v4243
  %v7412 = vunpack.c.l.b16 %v4244
  %v7413 = vunpack.c.l.b16 %v4245
  %v7414 = vunpack.c.l.b16 %v4246
  %v7415 = vunpack.c.l.b16 %v4247
  %v7416 = vunpack.c.l.b16 %v4248
  %v7417 = vunpack.c.l.b16 %v4249
  %v7418 = vunpack.c.l.b16 %v4250
  %v7419 = vunpack.c.l.b16 %v4251
  %v7420 = vunpack.c.l.b16 %v4252
  %v7421 = vunpack.c.l.b16 %v4253
  %v7422 = vunpack.c.l.b16 %v4254
  %v7423 = vunpack.c.l.b16 %v4255
  %v7424 = vunpack.c.l.b16 %v4256
  %v7425 = vunpack.c.l.b16 %v4257
  %v7426 = vunpack.c.l.b16 %v4258
  %v7427 = vunpack.c.l.b16 %v4259
  %v7428 = vunpack.c.l.b16 %v4260
  %v7429 = vunpack.c.l.b16 %v4261
  %v7430 = vunpack.c.l.b16 %v4262
  %v7431 = vunpack.c.l.b16 %v4263
  %v7432 = vunpack.c.l.b16 %v4264
  %v7433 = vunpack.c.l.b16 %v4265
  %v7434 = vunpack.c.l.b16 %v4266
  %v7435 = vunpack.c.l.b16 %v4267
  %v7436 = vunpack.c.l.b16 %v4268
  %v7437 = vunpack.c.l.b16 %v4269
  %v7438 = vunpack.c.l.b16 %v4270
  %v7439 = vunpack.c.l.b16 %v4271
  %v7440 = vunpack.c.l.b16 %v4272
  %v7441 = vunpack.c.l.b16 %v4273
  %v7442 = vunpack.c.l.b16 %v4274
  %v7443 = vunpack.c.l.b16 %v4275
  %v7444 = vunpack.c.l.b16 %v4276
  %v7445 = vunpack.c.l.b16 %v4277
  %v7446 = vunpack.c.l.b16 %v4278
  %v7447 = vunpack.c.l.b16 %v4279
  %v7448 = vunpack.c.l.b16 %v4280
  %v7449 = vunpack.c.l.b16 %v4281
  %v7450 = vunpack.c.l.b16 %v4282
  %v7451 = vunpack.c.l.b16 %v4283
  %v7452 = vunpack.c.l.b16 %v4284
  %v7453 = vunpack.c.l.b16 %v4285
  %v7454 = vunpack.c.l.b16 %v4286
  %v7455 = vunpack.c.l.b16 %v4287
  %v7456 = vunpack.c.l.b16 %v4288
  %v7457 = vunpack.c.l.b16 %v4289
  %v7458 = vunpack.c.l.b16 %v4290
  %v7459 = vunpack.c.l.b16 %v4291
  %v7460 = vunpack.c.l.b16 %v4292
  %v7461 = vunpack.c.l.b16 %v4293
  %v7462 = vunpack.c.l.b16 %v4294
  %v7463 = vunpack.c.l.b16 %v4295
  %v7464 = vunpack.c.l.b16 %v4296
  %v7465 = vunpack.c.l.b16 %v4297
  %v7466 = vunpack.c.l.b16 %v4298
  %v7467 = vunpack.c.l.b16 %v4299
  %v7468 = vunpack.c.l.b16 %v4300
  %v7469 = vunpack.c.l.b16 %v4301
  %v7470 = vunpack.c.l.b16 %v4302
  %v7471 = vunpack.c.l.b16 %v4303
  %v7472 = vunpack.c.l.b16 %v4304
  %v7473 = vunpack.c.l.b16 %v4305
  %v7474 = vunpack.c.l.b16 %v4306
  %v7475 = vunpack.c.l.b16 %v4307
  %v7476 = vunpack.c.l.b16 %v4308
  %v7477 = vunpack.c.l.b16 %v4309
  %v7478 = vunpack.c.l.b16 %v4310
  %v7479 = vunpack.c.l.b16 %v4311
  %v7480 = vunpack.c.l.b16 %v4312
  %v7481 = vunpack.c.l.b16 %v4313
  %v7482 = vunpack.c.l.b16 %v4314
  %v7483 = vunpack.c.l.b16 %v4315
  %v7484 = vunpack.c.l.b16 %v4316
  %v7485 = vunpack.c.l.b16 %v4317
  %v7486 = vunpack.c.l.b16 %v4318
  %v7487 = vunpack.c.l.b16 %v4319
  %v7488 = vunpack.c.l.b16 %v4320
  %v7489 = vunpack.c.l.b16 %v4321
  %v7490 = vunpack.c.l.b16 %v4322
  %v7491 = vunpack.c.l.b16 %v4323
  %v7492 = vunpack.c.l.b16 %v4324
  %v7493 = vunpack.c.l.b16 %v4325
  %v7494 = vunpack.c.l.b16 %v4326
  %v7495 = vunpack.c.l.b16 %v4327
  %v7496 = vunpack.c.l.b16 %v4328
  %v7497 = vunpack.c.l.b16 %v4329
  %v7498 = vunpack.c.l.b16 %v4330
  %v7499 = vunpack.c.l.b16 %v4331
  %v7500 = vunpack.c.l.b16 %v4332
  %v7501 = vunpack.c.l.b16 %v4333
  %v7502 = vunpack.c.l.b16 %v4334
  %v7503 = vunpack.c.l.b16 %v4335
  %v7504 = vunpack.c.l.b16 %v4336
  %v7505 = vunpack.c.l.b16 %v4337
  %v7506 = vunpack.c.l.b16 %v4338
  %v7507 = vunpack.c.l.b16 %v4339
  %v7508 = vunpack.c.l.b16 %v4340
  %v7509 = vpack.c.b16 %v7222, %v7221
  %v7510 = vpack.c.b16 %v7224, %v7223
  %v7511 = vpack.c.b16 %v7226, %v7225
  %v7512 = vpack.c.b16 %v7228, %v7227
  %v7513 = vpack.c.b16 %v7230, %v7229
  %v7514 = vpack.c.b16 %v7232, %v7231
  %v7515 = vpack.c.b16 %v7234, %v7233
  %v7516 = vpack.c.b16 %v7236, %v7235
  %v7517 = vpack.c.b16 %v7238, %v7237
  %v7518 = vpack.c.b16 %v7240, %v7239
  %v7519 = vpack.c.b16 %v7242, %v7241
  %v7520 = vpack.c.b16 %v7244, %v7243
  %v7521 = vpack.c.b16 %v7246, %v7245
  %v7522 = vpack.c.b16 %v7248, %v7247
  %v7523 = vpack.c.b16 %v7250, %v7249
  %v7524 = vpack.c.b16 %v7252, %v7251
  %v7525 = vpack.c.b16 %v7254, %v7253
  %v7526 = vpack.c.b16 %v7256, %v7255
  %v7527 = vpack.c.b16 %v7258, %v7257
  %v7528 = vpack.c.b16 %v7260, %v7259
  %v7529 = vpack.c.b16 %v7262, %v7261
  %v7530 = vpack.c.b16 %v7264, %v7263
  %v7531 = vpack.c.b16 %v7266, %v7265
  %v7532 = vpack.c.b16 %v7268, %v7267
  %v7533 = vpack.c.b16 %v7270, %v7269
  %v7534 = vpack.c.b16 %v7272, %v7271
  %v7535 = vpack.c.b16 %v7274, %v7273
  %v7536 = vpack.c.b16 %v7276, %v7275
  %v7537 = vpack.c.b16 %v7278, %v7277
  %v7538 = vpack.c.b16 %v7280, %v7279
  %v7539 = vpack.c.b16 %v7282, %v7281
  %v7540 = vpack.c.b16 %v7284, %v7283
  %v7541 = vpack.c.b16 %v7286, %v7285
  %v7542 = vpack.c.b16 %v7288, %v7287
  %v7543 = vpack.c.b16 %v7290, %v7289
  %v7544 = vpack.c.b16 %v7292, %v7291
  %v7545 = vpack.c.b16 %v7294, %v7293
  %v7546 = vpack.c.b16 %v7296, %v7295
  %v7547 = vpack.c.b16 %v7298, %v7297
  %v7548 = vpack.c.b16 %v7300, %v7299
  %v7549 = vpack.c.b16 %v7302, %v7301
  %v7550 = vpack.c.b16 %v7304, %v7303
  %v7551 = vpack.c.b16 %v7306, %v7305
  %v7552 = vpack.c.b16 %v7308, %v7307
  %v7553 = vpack.c.b16 %v7310, %v7309
  %v7554 = vpack.c.b16 %v7312, %v7311
  %v7555 = vpack.c.b16 %v7314, %v7313
  %v7556 = vpack.c.b16 %v7316, %v7315
  %v7557 = vpack.c.b16 %v7318, %v7317
  %v7558 = vpack.c.b16 %v7320, %v7319
  %v7559 = vpack.c.b16 %v7322, %v7321
  %v7560 = vpack.c.b16 %v7324, %v7323
  %v7561 = vpack.c.b16 %v7326, %v7325
  %v7562 = vpack.c.b16 %v7328, %v7327
  %v7563 = vpack.c.b16 %v7330, %v7329
  %v7564 = vpack.c.b16 %v7332, %v7331
  %v7565 = vpack.c.b16 %v7334, %v7333
  %v7566 = vpack.c.b16 %v7336, %v7335
  %v7567 = vpack.c.b16 %v7338, %v7337
  %v7568 = vpack.c.b16 %v7340, %v7339
  %v7569 = vpack.c.b16 %v7342, %v7341
  %v7570 = vpack.c.b16 %v7344, %v7343
  %v7571 = vpack.c.b16 %v7346, %v7345
  %v7572 = vpack.c.b16 %v7348, %v7347
  %v7573 = vpack.c.b16 %v7350, %v7349
  %v7574 = vpack.c.b16 %v7352, %v7351
  %v7575 = vpack.c.b16 %v7354, %v7353
  %v7576 = vpack.c.b16 %v7356, %v7355
  %v7577 = vpack.c.b16 %v7358, %v7357
  %v7578 = vpack.c.b16 %v7360, %v7359
  %v7579 = vpack.c.b16 %v7362, %v7361
  %v7580 = vpack.c.b16 %v7364, %v7363
  %v7581 = vpack.c.b16 %v7366, %v7365
  %v7582 = vpack.c.b16 %v7368, %v7367
  %v7583 = vpack.c.b16 %v7370, %v7369
  %v7584 = vpack.c.b16 %v7372, %v7371
  %v7585 = vpack.c.b16 %v7374, %v7373
  %v7586 = vpack.c.b16 %v7376, %v7375
  %v7587 = vpack.c.b16 %v7378, %v7377
  %v7588 = vpack.c.b16 %v7380, %v7379
  %v7589 = vpack.c.b16 %v7382, %v7381
  %v7590 = vpack.c.b16 %v7384, %v7383
  %v7591 = vpack.c.b16 %v7386, %v7385
  %v7592 = vpack.c.b16 %v7388, %v7387
  %v7593 = vpack.c.b16 %v7390, %v7389
  %v7594 = vpack.c.b16 %v7392, %v7391
  %v7595 = vpack.c.b16 %v7394, %v7393
  %v7596 = vpack.c.b16 %v7396, %v7395
  %v7597 = vpack.c.b16 %v7398, %v7397
  %v7598 = vpack.c.b16 %v7400, %v7399
  %v7599 = vpack.c.b16 %v7402, %v7401
  %v7600 = vpack.c.b16 %v7404, %v7403
  %v7601 = vpack.c.b16 %v7406, %v7405
  %v7602 = vpack.c.b16 %v7408, %v7407
  %v7603 = vpack.c.b16 %v7410, %v7409
  %v7604 = vpack.c.b16 %v7412, %v7411
  %v7605 = vpack.c.b16 %v7414, %v7413
  %v7606 = vpack.c.b16 %v7416, %v7415
  %v7607 = vpack.c.b16 %v7418, %v7417
  %v7608 = vpack.c.b16 %v7420, %v7419
  %v7609 = vpack.c.b16 %v7422, %v7421
  %v7610 = vpack.c.b16 %v7424, %v7423
  %v7611 = vpack.c.b16 %v7426, %v7425
  %v7612 = vpack.c.b16 %v7428, %v7427
  %v7613 = vpack.c.b16 %v7430, %v7429
  %v7614 = vpack.c.b16 %v7432, %v7431
  %v7615 = vpack.c.b16 %v7434, %v7433
  %v7616 = vpack.c.b16 %v7436, %v7435
  %v7617 = vpack.c.b16 %v7438, %v7437
  %v7618 = vpack.c.b16 %v7440, %v7439
  %v7619 = vpack.c.b16 %v7442, %v7441
  %v7620 = vpack.c.b16 %v7444, %v7443
  %v7621 = vpack.c.b16 %v7446, %v7445
  %v7622 = vpack.c.b16 %v7448, %v7447
  %v7623 = vpack.c.b16 %v7450, %v7449
  %v7624 = vpack.c.b16 %v7452, %v7451
  %v7625 = vpack.c.b16 %v7454, %v7453
  %v7626 = vpack.c.b16 %v7456, %v7455
  %v7627 = vpack.c.b16 %v7458, %v7457
  %v7628 = vpack.c.b16 %v7460, %v7459
  %v7629 = vpack.c.b16 %v7462, %v7461
  %v7630 = vpack.c.b16 %v7464, %v7463
  %v7631 = vpack.c.b16 %v7466, %v7465
  %v7632 = vpack.c.b16 %v7468, %v7467
  %v7633 = vpack.c.b16 %v7470, %v7469
  %v7634 = vpack.c.b16 %v7472, %v7471
  %v7635 = vpack.c.b16 %v7474, %v7473
  %v7636 = vpack.c.b16 %v7476, %v7475
  %v7637 = vpack.c.b16 %v7478, %v7477
  %v7638 = vpack.c.b16 %v7480, %v7479
  %v7639 = vpack.c.b16 %v7482, %v7481
  %v7640 = vpack.c.b16 %v7484, %v7483
  %v7641 = vpack.c.b16 %v7486, %v7485
  %v7642 = vpack.c.b16 %v7488, %v7487
  %v7643 = vpack.c.b16 %v7490, %v7489
  %v7644 = vpack.c.b16 %v7492, %v7491
  %v7645 = vpack.c.b16 %v7494, %v7493
  %v7646 = vpack.c.b16 %v7496, %v7495
  %v7647 = vpack.c.b16 %v7498, %v7497
  %v7648 = vpack.c.b16 %v7500, %v7499
  %v7649 = vpack.c.b16 %v7502, %v7501
  %v7650 = vpack.c.b16 %v7504, %v7503
  %v7651 = vpack.c.b16 %v7506, %v7505
  %v7652 = vpack.c.b16 %v7508, %v7507
  %7797 = vmatprep.subr.bf16.mxu0 0
  %7798 = vmatpush1.bf16.msra.mxu0 %v7509
  %7799 = vmatprep.subr.bf16.mxu0 0
  %7800 = vmatpush1.bf16.msra.mxu0 %v7510
  %7801 = vmatprep.subr.bf16.mxu0 0
  %7802 = vmatpush1.bf16.msra.mxu0 %v7511
  %7803 = vmatprep.subr.bf16.mxu0 0
  %7804 = vmatpush1.bf16.msra.mxu0 %v7512
  %7805 = vmatprep.subr.bf16.mxu0 0
  %7806 = vmatpush1.bf16.msra.mxu0 %v7513
  %7807 = vmatprep.subr.bf16.mxu0 0
  %7808 = vmatpush1.bf16.msra.mxu0 %v7514
  %7809 = vmatprep.subr.bf16.mxu0 0
  %7810 = vmatpush1.bf16.msra.mxu0 %v7515
  %7811 = vmatprep.subr.bf16.mxu0 0
  %7812 = vmatpush1.bf16.msra.mxu0 %v7516
  %7813 = vmatprep.subr.bf16.mxu0 0
  %7814 = vmatpush1.bf16.msra.mxu0 %v7517
  %7815 = vmatprep.subr.bf16.mxu0 0
  %7816 = vmatpush1.bf16.msra.mxu0 %v7518
  %7817 = vmatprep.subr.bf16.mxu0 0
  %7818 = vmatpush1.bf16.msra.mxu0 %v7519
  %7819 = vmatprep.subr.bf16.mxu0 0
  %7820 = vmatpush1.bf16.msra.mxu0 %v7520
  %7821 = vmatprep.subr.bf16.mxu0 0
  %7822 = vmatpush1.bf16.msra.mxu0 %v7521
  %7823 = vmatprep.subr.bf16.mxu0 0
  %7824 = vmatpush1.bf16.msra.mxu0 %v7522
  %7825 = vmatprep.subr.bf16.mxu0 0
  %7826 = vmatpush1.bf16.msra.mxu0 %v7523
  %7827 = vmatprep.subr.bf16.mxu0 0
  %7828 = vmatpush1.bf16.msra.mxu0 %v7524
  %7829 = vmatprep.mubr.bf16.mxu0 %v6070
  %7830 = vmatmul.mubr.bf16.gmra.mrb[0].mxu0 %v6069
  %v7831 = vpop.f32.mrb[0].mxu0
  %v7832 = vadd.f32 0.0, %v7831
  %v7833 = vpop.f32.mrb[0].mxu0
  %v7834 = vpop.f32.mrb[0].mxu0
  %v7835 = vadd.f32 0.0, %v7834
  %v7836 = vpop.f32.mrb[0].mxu0
  %7837 = vmatprep.mubr.bf16.mxu0 %v6088
  %7838 = vmatmul.mubr.bf16.gmra.mrb[0].mxu0 %v6087
  %v7839 = vpop.f32.mrb[0].mxu0
  %v7840 = vadd.f32 0.0, %v7839
  %v7841 = vpop.f32.mrb[0].mxu0
  %v7842 = vpop.f32.mrb[0].mxu0
  %v7843 = vadd.f32 0.0, %v7842
  %v7844 = vpop.f32.mrb[0].mxu0
  %7845 = vmatprep.mubr.bf16.mxu0 %v6106
  %7846 = vmatmul.mubr.bf16.gmra.mrb[0].mxu0 %v6105
  %v7847 = vpop.f32.mrb[0].mxu0
  %v7848 = vadd.f32 0.0, %v7847
  %v7849 = vpop.f32.mrb[0].mxu0
  %v7850 = vpop.f32.mrb[0].mxu0
  %v7851 = vadd.f32 0.0, %v7850
  %v7852 = vpop.f32.mrb[0].mxu0
  %7853 = vmatprep.mubr.bf16.mxu0 %v6124
  %7854 = vmatmul.mubr.bf16.gmra.mrb[0].mxu0 %v6123
  %v7855 = vpop.f32.mrb[0].mxu0
  %v7856 = vadd.f32 0.0, %v7855
  %v7857 = vpop.f32.mrb[0].mxu0
  %v7858 = vpop.f32.mrb[0].mxu0
  %v7859 = vadd.f32 0.0, %v7858
  %v7860 = vpop.f32.mrb[0].mxu0
  %7861 = vmatprep.mubr.bf16.mxu0 %v6142
  %7862 = vmatmul.mubr.bf16.gmra.mrb[0].mxu0 %v6141
  %v7863 = vpop.f32.mrb[0].mxu0
  %v7864 = vadd.f32 0.0, %v7863
  %v7865 = vpop.f32.mrb[0].mxu0
  %v7866 = vpop.f32.mrb[0].mxu0
  %v7867 = vadd.f32 0.0, %v7866
  %v7868 = vpop.f32.mrb[0].mxu0
  %7869 = vmatprep.mubr.bf16.mxu0 %v6160
  %7870 = vmatmul.mubr.bf16.gmra.mrb[0].mxu0 %v6159
  %v7871 = vpop.f32.mrb[0].mxu0
  %v7872 = vadd.f32 0.0, %v7871
  %v7873 = vpop.f32.mrb[0].mxu0
  %v7874 = vpop.f32.mrb[0].mxu0
  %v7875 = vadd.f32 0.0, %v7874
  %v7876 = vpop.f32.mrb[0].mxu0
  %7877 = vmatprep.mubr.bf16.mxu0 %v6178
  %7878 = vmatmul.mubr.bf16.gmra.mrb[0].mxu0 %v6177
  %v7879 = vpop.f32.mrb[0].mxu0
  %v7880 = vadd.f32 0.0, %v7879
  %v7881 = vpop.f32.mrb[0].mxu0
  %v7882 = vpop.f32.mrb[0].mxu0
  %v7883 = vadd.f32 0.0, %v7882
  %v7884 = vpop.f32.mrb[0].mxu0
  %7885 = vmatprep.mubr.bf16.mxu0 %v6196
  %7886 = vmatmul.mubr.bf16.gmra.mrb[0].mxu0 %v6195
  %v7887 = vpop.f32.mrb[0].mxu0
  %v7888 = vadd.f32 0.0, %v7887
  %v7889 = vpop.f32.mrb[0].mxu0
  %v7890 = vpop.f32.mrb[0].mxu0
  %v7891 = vadd.f32 0.0, %v7890
  %v7892 = vpop.f32.mrb[0].mxu0
  %7893 = vmatprep.mubr.bf16.mxu0 %v6214
  %7894 = vmatmul.mubr.bf16.gmra.mrb[0].mxu0 %v6213
  %v7895 = vpop.f32.mrb[0].mxu0
  %v7896 = vadd.f32 0.0, %v7895
  %v7897 = vpop.f32.mrb[0].mxu0
  %v7898 = vpop.f32.mrb[0].mxu0
  %v7899 = vadd.f32 0.0, %v7898
  %v7900 = vpop.f32.mrb[0].mxu0
  %7901 = vmatprep.mubr.bf16.mxu0 %v6232
  %7902 = vmatmul.mubr.bf16.gmra.mrb[0].mxu0 %v6231
  %v7903 = vpop.f32.mrb[0].mxu0
  %v7904 = vadd.f32 0.0, %v7903
  %v7905 = vpop.f32.mrb[0].mxu0
  %v7906 = vpop.f32.mrb[0].mxu0
  %v7907 = vadd.f32 0.0, %v7906
  %v7908 = vpop.f32.mrb[0].mxu0
  %7909 = vmatprep.mubr.bf16.mxu0 %v6250
  %7910 = vmatmul.mubr.bf16.gmra.mrb[0].mxu0 %v6249
  %v7911 = vpop.f32.mrb[0].mxu0
  %v7912 = vadd.f32 0.0, %v7911
  %v7913 = vpop.f32.mrb[0].mxu0
  %v7914 = vpop.f32.mrb[0].mxu0
  %v7915 = vadd.f32 0.0, %v7914
  %v7916 = vpop.f32.mrb[0].mxu0
  %7917 = vmatprep.mubr.bf16.mxu0 %v6268
  %7918 = vmatmul.mubr.bf16.gmra.mrb[0].mxu0 %v6267
  %v7919 = vpop.f32.mrb[0].mxu0
  %v7920 = vadd.f32 0.0, %v7919
  %v7921 = vpop.f32.mrb[0].mxu0
  %v7922 = vpop.f32.mrb[0].mxu0
  %v7923 = vadd.f32 0.0, %v7922
  %v7924 = vpop.f32.mrb[0].mxu0
  %7925 = vmatprep.mubr.bf16.mxu0 %v6286
  %7926 = vmatmul.mubr.bf16.gmra.mrb[0].mxu0 %v6285
  %v7927 = vpop.f32.mrb[0].mxu0
  %v7928 = vadd.f32 0.0, %v7927
  %v7929 = vpop.f32.mrb[0].mxu0
  %v7930 = vpop.f32.mrb[0].mxu0
  %v7931 = vadd.f32 0.0, %v7930
  %v7932 = vpop.f32.mrb[0].mxu0
  %7933 = vmatprep.mubr.bf16.mxu0 %v6304
  %7934 = vmatmul.mubr.bf16.gmra.mrb[0].mxu0 %v6303
  %v7935 = vpop.f32.mrb[0].mxu0
  %v7936 = vadd.f32 0.0, %v7935
  %v7937 = vpop.f32.mrb[0].mxu0
  %v7938 = vpop.f32.mrb[0].mxu0
  %v7939 = vadd.f32 0.0, %v7938
  %v7940 = vpop.f32.mrb[0].mxu0
  %7941 = vmatprep.mubr.bf16.mxu0 %v6322
  %7942 = vmatmul.mubr.bf16.gmra.mrb[0].mxu0 %v6321
  %v7943 = vpop.f32.mrb[0].mxu0
  %v7944 = vadd.f32 0.0, %v7943
  %v7945 = vpop.f32.mrb[0].mxu0
  %v7946 = vpop.f32.mrb[0].mxu0
  %v7947 = vadd.f32 0.0, %v7946
  %v7948 = vpop.f32.mrb[0].mxu0
  %7949 = vmatprep.mubr.bf16.mxu0 %v6340
  %7950 = vmatmul.mubr.bf16.gmra.mrb[0].mxu0 %v6339
  %v7951 = vpop.f32.mrb[0].mxu0
  %v7952 = vadd.f32 0.0, %v7951
  %v7953 = vpop.f32.mrb[0].mxu0
  %v7954 = vpop.f32.mrb[0].mxu0
  %v7955 = vadd.f32 0.0, %v7954
  %v7956 = vpop.f32.mrb[0].mxu0
  %7957 = vmatprep.mubr.bf16.mxu0 %v6358
  %7958 = vmatmul.mubr.bf16.gmra.mrb[0].mxu0 %v6357
  %v7959 = vpop.f32.mrb[0].mxu0
  %v7960 = vadd.f32 0.0, %v7959
  %v7961 = vpop.f32.mrb[0].mxu0
  %v7962 = vpop.f32.mrb[0].mxu0
  %v7963 = vadd.f32 0.0, %v7962
  %v7964 = vpop.f32.mrb[0].mxu0
  %7965 = vmatprep.mubr.bf16.mxu0 %v6376
  %7966 = vmatmul.mubr.bf16.gmra.mrb[0].mxu0 %v6375
  %v7967 = vpop.f32.mrb[0].mxu0
  %v7968 = vadd.f32 0.0, %v7967
  %v7969 = vpop.f32.mrb[0].mxu0
  %v7970 = vpop.f32.mrb[0].mxu0
  %v7971 = vadd.f32 0.0, %v7970
  %v7972 = vpop.f32.mrb[0].mxu0
  %7973 = vmatprep.mubr.bf16.mxu0 %v6394
  %7974 = vmatmul.mubr.bf16.gmra.mrb[0].mxu0 %v6393
  %v7975 = vpop.f32.mrb[0].mxu0
  %v7976 = vadd.f32 0.0, %v7975
  %v7977 = vpop.f32.mrb[0].mxu0
  %v7978 = vpop.f32.mrb[0].mxu0
  %v7979 = vadd.f32 0.0, %v7978
  %v7980 = vpop.f32.mrb[0].mxu0
  %7981 = vmatprep.mubr.bf16.mxu0 %v6412
  %7982 = vmatmul.mubr.bf16.gmra.mrb[0].mxu0 %v6411
  %v7983 = vpop.f32.mrb[0].mxu0
  %v7984 = vadd.f32 0.0, %v7983
  %v7985 = vpop.f32.mrb[0].mxu0
  %v7986 = vpop.f32.mrb[0].mxu0
  %v7987 = vadd.f32 0.0, %v7986
  %v7988 = vpop.f32.mrb[0].mxu0
  %7989 = vmatprep.mubr.bf16.mxu0 %v6430
  %7990 = vmatmul.mubr.bf16.gmra.mrb[0].mxu0 %v6429
  %v7991 = vpop.f32.mrb[0].mxu0
  %v7992 = vadd.f32 0.0, %v7991
  %v7993 = vpop.f32.mrb[0].mxu0
  %v7994 = vpop.f32.mrb[0].mxu0
  %v7995 = vadd.f32 0.0, %v7994
  %v7996 = vpop.f32.mrb[0].mxu0
  %7997 = vmatprep.mubr.bf16.mxu0 %v6448
  %7998 = vmatmul.mubr.bf16.gmra.mrb[0].mxu0 %v6447
  %v7999 = vpop.f32.mrb[0].mxu0
  %v8000 = vadd.f32 0.0, %v7999
  %v8001 = vpop.f32.mrb[0].mxu0
  %v8002 = vpop.f32.mrb[0].mxu0
  %v8003 = vadd.f32 0.0, %v8002
  %v8004 = vpop.f32.mrb[0].mxu0
  %8005 = vmatprep.mubr.bf16.mxu0 %v6466
  %8006 = vmatmul.mubr.bf16.gmra.mrb[0].mxu0 %v6465
  %v8007 = vpop.f32.mrb[0].mxu0
  %v8008 = vadd.f32 0.0, %v8007
  %v8009 = vpop.f32.mrb[0].mxu0
  %v8010 = vpop.f32.mrb[0].mxu0
  %v8011 = vadd.f32 0.0, %v8010
  %v8012 = vpop.f32.mrb[0].mxu0
  %8013 = vmatprep.mubr.bf16.mxu0 %v6484
  %8014 = vmatmul.mubr.bf16.gmra.mrb[0].mxu0 %v6483
  %v8015 = vpop.f32.mrb[0].mxu0
  %v8016 = vadd.f32 0.0, %v8015
  %v8017 = vpop.f32.mrb[0].mxu0
  %v8018 = vpop.f32.mrb[0].mxu0
  %v8019 = vadd.f32 0.0, %v8018
  %v8020 = vpop.f32.mrb[0].mxu0
  %8021 = vdwg.mxu0
  %8022 = vmatprep.subr.bf16.mxu0 0
  %8023 = vmatpush1.bf16.msra.mxu0 %v7525
  %8024 = vmatprep.subr.bf16.mxu0 0
  %8025 = vmatpush1.bf16.msra.mxu0 %v7526
  %8026 = vmatprep.subr.bf16.mxu0 0
  %8027 = vmatpush1.bf16.msra.mxu0 %v7527
  %8028 = vmatprep.subr.bf16.mxu0 0
  %8029 = vmatpush1.bf16.msra.mxu0 %v7528
  %8030 = vmatprep.subr.bf16.mxu0 0
  %8031 = vmatpush1.bf16.msra.mxu0 %v7529
  %8032 = vmatprep.subr.bf16.mxu0 0
  %8033 = vmatpush1.bf16.msra.mxu0 %v7530
  %8034 = vmatprep.subr.bf16.mxu0 0
  %8035 = vmatpush1.bf16.msra.mxu0 %v7531
  %8036 = vmatprep.subr.bf16.mxu0 0
  %8037 = vmatpush1.bf16.msra.mxu0 %v7532
  %8038 = vmatprep.subr.bf16.mxu0 0
  %8039 = vmatpush1.bf16.msra.mxu0 %v7533
  %8040 = vmatprep.subr.bf16.mxu0 0
  %8041 = vmatpush1.bf16.msra.mxu0 %v7534
  %8042 = vmatprep.subr.bf16.mxu0 0
  %8043 = vmatpush1.bf16.msra.mxu0 %v7535
  %8044 = vmatprep.subr.bf16.mxu0 0
  %8045 = vmatpush1.bf16.msra.mxu0 %v7536
  %8046 = vmatprep.subr.bf16.mxu0 0
  %8047 = vmatpush1.bf16.msra.mxu0 %v7537
  %8048 = vmatprep.subr.bf16.mxu0 0
  %8049 = vmatpush1.bf16.msra.mxu0 %v7538
  %8050 = vmatprep.subr.bf16.mxu0 0
  %8051 = vmatpush1.bf16.msra.mxu0 %v7539
  %8052 = vmatprep.subr.bf16.mxu0 0
  %8053 = vmatpush1.bf16.msra.mxu0 %v7540
  %8054 = vmatprep.mubr.bf16.mxu0 %v6072
  %8055 = vmatmul.mubr.bf16.gmra.mrb[0].mxu0 %v6071
  %v8056 = vpop.f32.mrb[0].mxu0
  %v8057 = vadd.f32 %v7832, %v8056
  %v8058 = vpop.f32.mrb[0].mxu0
  %v8059 = vpop.f32.mrb[0].mxu0
  %v8060 = vadd.f32 %v7835, %v8059
  %v8061 = vpop.f32.mrb[0].mxu0
  %8062 = vmatprep.mubr.bf16.mxu0 %v6090
  %8063 = vmatmul.mubr.bf16.gmra.mrb[0].mxu0 %v6089
  %v8064 = vpop.f32.mrb[0].mxu0
  %v8065 = vadd.f32 %v7840, %v8064
  %v8066 = vpop.f32.mrb[0].mxu0
  %v8067 = vpop.f32.mrb[0].mxu0
  %v8068 = vadd.f32 %v7843, %v8067
  %v8069 = vpop.f32.mrb[0].mxu0
  %8070 = vmatprep.mubr.bf16.mxu0 %v6108
  %8071 = vmatmul.mubr.bf16.gmra.mrb[0].mxu0 %v6107
  %v8072 = vpop.f32.mrb[0].mxu0
  %v8073 = vadd.f32 %v7848, %v8072
  %v8074 = vpop.f32.mrb[0].mxu0
  %v8075 = vpop.f32.mrb[0].mxu0
  %v8076 = vadd.f32 %v7851, %v8075
  %v8077 = vpop.f32.mrb[0].mxu0
  %8078 = vmatprep.mubr.bf16.mxu0 %v6126
  %8079 = vmatmul.mubr.bf16.gmra.mrb[0].mxu0 %v6125
  %v8080 = vpop.f32.mrb[0].mxu0
  %v8081 = vadd.f32 %v7856, %v8080
  %v8082 = vpop.f32.mrb[0].mxu0
  %v8083 = vpop.f32.mrb[0].mxu0
  %v8084 = vadd.f32 %v7859, %v8083
  %v8085 = vpop.f32.mrb[0].mxu0
  %8086 = vmatprep.mubr.bf16.mxu0 %v6144
  %8087 = vmatmul.mubr.bf16.gmra.mrb[0].mxu0 %v6143
  %v8088 = vpop.f32.mrb[0].mxu0
  %v8089 = vadd.f32 %v7864, %v8088
  %v8090 = vpop.f32.mrb[0].mxu0
  %v8091 = vpop.f32.mrb[0].mxu0
  %v8092 = vadd.f32 %v7867, %v8091
  %v8093 = vpop.f32.mrb[0].mxu0
  %8094 = vmatprep.mubr.bf16.mxu0 %v6162
  %8095 = vmatmul.mubr.bf16.gmra.mrb[0].mxu0 %v6161
  %v8096 = vpop.f32.mrb[0].mxu0
  %v8097 = vadd.f32 %v7872, %v8096
  %v8098 = vpop.f32.mrb[0].mxu0
  %v8099 = vpop.f32.mrb[0].mxu0
  %v8100 = vadd.f32 %v7875, %v8099
  %v8101 = vpop.f32.mrb[0].mxu0
  %8102 = vmatprep.mubr.bf16.mxu0 %v6180
  %8103 = vmatmul.mubr.bf16.gmra.mrb[0].mxu0 %v6179
  %v8104 = vpop.f32.mrb[0].mxu0
  %v8105 = vadd.f32 %v7880, %v8104
  %v8106 = vpop.f32.mrb[0].mxu0
  %v8107 = vpop.f32.mrb[0].mxu0
  %v8108 = vadd.f32 %v7883, %v8107
  %v8109 = vpop.f32.mrb[0].mxu0
  %8110 = vmatprep.mubr.bf16.mxu0 %v6198
  %8111 = vmatmul.mubr.bf16.gmra.mrb[0].mxu0 %v6197
  %v8112 = vpop.f32.mrb[0].mxu0
  %v8113 = vadd.f32 %v7888, %v8112
  %v8114 = vpop.f32.mrb[0].mxu0
  %v8115 = vpop.f32.mrb[0].mxu0
  %v8116 = vadd.f32 %v7891, %v8115
  %v8117 = vpop.f32.mrb[0].mxu0
  %8118 = vmatprep.mubr.bf16.mxu0 %v6216
  %8119 = vmatmul.mubr.bf16.gmra.mrb[0].mxu0 %v6215
  %v8120 = vpop.f32.mrb[0].mxu0
  %v8121 = vadd.f32 %v7896, %v8120
  %v8122 = vpop.f32.mrb[0].mxu0
  %v8123 = vpop.f32.mrb[0].mxu0
  %v8124 = vadd.f32 %v7899, %v8123
  %v8125 = vpop.f32.mrb[0].mxu0
  %8126 = vmatprep.mubr.bf16.mxu0 %v6234
  %8127 = vmatmul.mubr.bf16.gmra.mrb[0].mxu0 %v6233
  %v8128 = vpop.f32.mrb[0].mxu0
  %v8129 = vadd.f32 %v7904, %v8128
  %v8130 = vpop.f32.mrb[0].mxu0
  %v8131 = vpop.f32.mrb[0].mxu0
  %v8132 = vadd.f32 %v7907, %v8131
  %v8133 = vpop.f32.mrb[0].mxu0
  %8134 = vmatprep.mubr.bf16.mxu0 %v6252
  %8135 = vmatmul.mubr.bf16.gmra.mrb[0].mxu0 %v6251
  %v8136 = vpop.f32.mrb[0].mxu0
  %v8137 = vadd.f32 %v7912, %v8136
  %v8138 = vpop.f32.mrb[0].mxu0
  %v8139 = vpop.f32.mrb[0].mxu0
  %v8140 = vadd.f32 %v7915, %v8139
  %v8141 = vpop.f32.mrb[0].mxu0
  %8142 = vmatprep.mubr.bf16.mxu0 %v6270
  %8143 = vmatmul.mubr.bf16.gmra.mrb[0].mxu0 %v6269
  %v8144 = vpop.f32.mrb[0].mxu0
  %v8145 = vadd.f32 %v7920, %v8144
  %v8146 = vpop.f32.mrb[0].mxu0
  %v8147 = vpop.f32.mrb[0].mxu0
  %v8148 = vadd.f32 %v7923, %v8147
  %v8149 = vpop.f32.mrb[0].mxu0
  %8150 = vmatprep.mubr.bf16.mxu0 %v6288
  %8151 = vmatmul.mubr.bf16.gmra.mrb[0].mxu0 %v6287
  %v8152 = vpop.f32.mrb[0].mxu0
  %v8153 = vadd.f32 %v7928, %v8152
  %v8154 = vpop.f32.mrb[0].mxu0
  %v8155 = vpop.f32.mrb[0].mxu0
  %v8156 = vadd.f32 %v7931, %v8155
  %v8157 = vpop.f32.mrb[0].mxu0
  %8158 = vmatprep.mubr.bf16.mxu0 %v6306
  %8159 = vmatmul.mubr.bf16.gmra.mrb[0].mxu0 %v6305
  %v8160 = vpop.f32.mrb[0].mxu0
  %v8161 = vadd.f32 %v7936, %v8160
  %v8162 = vpop.f32.mrb[0].mxu0
  %v8163 = vpop.f32.mrb[0].mxu0
  %v8164 = vadd.f32 %v7939, %v8163
  %v8165 = vpop.f32.mrb[0].mxu0
  %8166 = vmatprep.mubr.bf16.mxu0 %v6324
  %8167 = vmatmul.mubr.bf16.gmra.mrb[0].mxu0 %v6323
  %v8168 = vpop.f32.mrb[0].mxu0
  %v8169 = vadd.f32 %v7944, %v8168
  %v8170 = vpop.f32.mrb[0].mxu0
  %v8171 = vpop.f32.mrb[0].mxu0
  %v8172 = vadd.f32 %v7947, %v8171
  %v8173 = vpop.f32.mrb[0].mxu0
  %8174 = vmatprep.mubr.bf16.mxu0 %v6342
  %8175 = vmatmul.mubr.bf16.gmra.mrb[0].mxu0 %v6341
  %v8176 = vpop.f32.mrb[0].mxu0
  %v8177 = vadd.f32 %v7952, %v8176
  %v8178 = vpop.f32.mrb[0].mxu0
  %v8179 = vpop.f32.mrb[0].mxu0
  %v8180 = vadd.f32 %v7955, %v8179
  %v8181 = vpop.f32.mrb[0].mxu0
  %8182 = vmatprep.mubr.bf16.mxu0 %v6360
  %8183 = vmatmul.mubr.bf16.gmra.mrb[0].mxu0 %v6359
  %v8184 = vpop.f32.mrb[0].mxu0
  %v8185 = vadd.f32 %v7960, %v8184
  %v8186 = vpop.f32.mrb[0].mxu0
  %v8187 = vpop.f32.mrb[0].mxu0
  %v8188 = vadd.f32 %v7963, %v8187
  %v8189 = vpop.f32.mrb[0].mxu0
  %8190 = vmatprep.mubr.bf16.mxu0 %v6378
  %8191 = vmatmul.mubr.bf16.gmra.mrb[0].mxu0 %v6377
  %v8192 = vpop.f32.mrb[0].mxu0
  %v8193 = vadd.f32 %v7968, %v8192
  %v8194 = vpop.f32.mrb[0].mxu0
  %v8195 = vpop.f32.mrb[0].mxu0
  %v8196 = vadd.f32 %v7971, %v8195
  %v8197 = vpop.f32.mrb[0].mxu0
  %8198 = vmatprep.mubr.bf16.mxu0 %v6396
  %8199 = vmatmul.mubr.bf16.gmra.mrb[0].mxu0 %v6395
  %v8200 = vpop.f32.mrb[0].mxu0
  %v8201 = vadd.f32 %v7976, %v8200
  %v8202 = vpop.f32.mrb[0].mxu0
  %v8203 = vpop.f32.mrb[0].mxu0
  %v8204 = vadd.f32 %v7979, %v8203
  %v8205 = vpop.f32.mrb[0].mxu0
  %8206 = vmatprep.mubr.bf16.mxu0 %v6414
  %8207 = vmatmul.mubr.bf16.gmra.mrb[0].mxu0 %v6413
  %v8208 = vpop.f32.mrb[0].mxu0
  %v8209 = vadd.f32 %v7984, %v8208
  %v8210 = vpop.f32.mrb[0].mxu0
  %v8211 = vpop.f32.mrb[0].mxu0
  %v8212 = vadd.f32 %v7987, %v8211
  %v8213 = vpop.f32.mrb[0].mxu0
  %8214 = vmatprep.mubr.bf16.mxu0 %v6432
  %8215 = vmatmul.mubr.bf16.gmra.mrb[0].mxu0 %v6431
  %v8216 = vpop.f32.mrb[0].mxu0
  %v8217 = vadd.f32 %v7992, %v8216
  %v8218 = vpop.f32.mrb[0].mxu0
  %v8219 = vpop.f32.mrb[0].mxu0
  %v8220 = vadd.f32 %v7995, %v8219
  %v8221 = vpop.f32.mrb[0].mxu0
  %8222 = vmatprep.mubr.bf16.mxu0 %v6450
  %8223 = vmatmul.mubr.bf16.gmra.mrb[0].mxu0 %v6449
  %v8224 = vpop.f32.mrb[0].mxu0
  %v8225 = vadd.f32 %v8000, %v8224
  %v8226 = vpop.f32.mrb[0].mxu0
  %v8227 = vpop.f32.mrb[0].mxu0
  %v8228 = vadd.f32 %v8003, %v8227
  %v8229 = vpop.f32.mrb[0].mxu0
  %8230 = vmatprep.mubr.bf16.mxu0 %v6468
  %8231 = vmatmul.mubr.bf16.gmra.mrb[0].mxu0 %v6467
  %v8232 = vpop.f32.mrb[0].mxu0
  %v8233 = vadd.f32 %v8008, %v8232
  %v8234 = vpop.f32.mrb[0].mxu0
  %v8235 = vpop.f32.mrb[0].mxu0
  %v8236 = vadd.f32 %v8011, %v8235
  %v8237 = vpop.f32.mrb[0].mxu0
  %8238 = vmatprep.mubr.bf16.mxu0 %v6486
  %8239 = vmatmul.mubr.bf16.gmra.mrb[0].mxu0 %v6485
  %v8240 = vpop.f32.mrb[0].mxu0
  %v8241 = vadd.f32 %v8016, %v8240
  %v8242 = vpop.f32.mrb[0].mxu0
  %v8243 = vpop.f32.mrb[0].mxu0
  %v8244 = vadd.f32 %v8019, %v8243
  %v8245 = vpop.f32.mrb[0].mxu0
  %8246 = vdwg.mxu0
  %8247 = vmatprep.subr.bf16.mxu0 0
  %8248 = vmatpush1.bf16.msra.mxu0 %v7541
  %8249 = vmatprep.subr.bf16.mxu0 0
  %8250 = vmatpush1.bf16.msra.mxu0 %v7542
  %8251 = vmatprep.subr.bf16.mxu0 0
  %8252 = vmatpush1.bf16.msra.mxu0 %v7543
  %8253 = vmatprep.subr.bf16.mxu0 0
  %8254 = vmatpush1.bf16.msra.mxu0 %v7544
  %8255 = vmatprep.subr.bf16.mxu0 0
  %8256 = vmatpush1.bf16.msra.mxu0 %v7545
  %8257 = vmatprep.subr.bf16.mxu0 0
  %8258 = vmatpush1.bf16.msra.mxu0 %v7546
  %8259 = vmatprep.subr.bf16.mxu0 0
  %8260 = vmatpush1.bf16.msra.mxu0 %v7547
  %8261 = vmatprep.subr.bf16.mxu0 0
  %8262 = vmatpush1.bf16.msra.mxu0 %v7548
  %8263 = vmatprep.subr.bf16.mxu0 0
  %8264 = vmatpush1.bf16.msra.mxu0 %v7549
  %8265 = vmatprep.subr.bf16.mxu0 0
  %8266 = vmatpush1.bf16.msra.mxu0 %v7550
  %8267 = vmatprep.subr.bf16.mxu0 0
  %8268 = vmatpush1.bf16.msra.mxu0 %v7551
  %8269 = vmatprep.subr.bf16.mxu0 0
  %8270 = vmatpush1.bf16.msra.mxu0 %v7552
  %8271 = vmatprep.subr.bf16.mxu0 0
  %8272 = vmatpush1.bf16.msra.mxu0 %v7553
  %8273 = vmatprep.subr.bf16.mxu0 0
  %8274 = vmatpush1.bf16.msra.mxu0 %v7554
  %8275 = vmatprep.subr.bf16.mxu0 0
  %8276 = vmatpush1.bf16.msra.mxu0 %v7555
  %8277 = vmatprep.subr.bf16.mxu0 0
  %8278 = vmatpush1.bf16.msra.mxu0 %v7556
  %8279 = vmatprep.mubr.bf16.mxu0 %v6074
  %8280 = vmatmul.mubr.bf16.gmra.mrb[0].mxu0 %v6073
  %v8281 = vpop.f32.mrb[0].mxu0
  %v8282 = vadd.f32 %v8057, %v8281
  %v8283 = vpop.f32.mrb[0].mxu0
  %v8284 = vpop.f32.mrb[0].mxu0
  %v8285 = vadd.f32 %v8060, %v8284
  %v8286 = vpop.f32.mrb[0].mxu0
  %8287 = vmatprep.mubr.bf16.mxu0 %v6092
  %8288 = vmatmul.mubr.bf16.gmra.mrb[0].mxu0 %v6091
  %v8289 = vpop.f32.mrb[0].mxu0
  %v8290 = vadd.f32 %v8065, %v8289
  %v8291 = vpop.f32.mrb[0].mxu0
  %v8292 = vpop.f32.mrb[0].mxu0
  %v8293 = vadd.f32 %v8068, %v8292
  %v8294 = vpop.f32.mrb[0].mxu0
  %8295 = vmatprep.mubr.bf16.mxu0 %v6110
  %8296 = vmatmul.mubr.bf16.gmra.mrb[0].mxu0 %v6109
  %v8297 = vpop.f32.mrb[0].mxu0
  %v8298 = vadd.f32 %v8073, %v8297
  %v8299 = vpop.f32.mrb[0].mxu0
  %v8300 = vpop.f32.mrb[0].mxu0
  %v8301 = vadd.f32 %v8076, %v8300
  %v8302 = vpop.f32.mrb[0].mxu0
  %8303 = vmatprep.mubr.bf16.mxu0 %v6128
  %8304 = vmatmul.mubr.bf16.gmra.mrb[0].mxu0 %v6127
  %v8305 = vpop.f32.mrb[0].mxu0
  %v8306 = vadd.f32 %v8081, %v8305
  %v8307 = vpop.f32.mrb[0].mxu0
  %v8308 = vpop.f32.mrb[0].mxu0
  %v8309 = vadd.f32 %v8084, %v8308
  %v8310 = vpop.f32.mrb[0].mxu0
  %8311 = vmatprep.mubr.bf16.mxu0 %v6146
  %8312 = vmatmul.mubr.bf16.gmra.mrb[0].mxu0 %v6145
  %v8313 = vpop.f32.mrb[0].mxu0
  %v8314 = vadd.f32 %v8089, %v8313
  %v8315 = vpop.f32.mrb[0].mxu0
  %v8316 = vpop.f32.mrb[0].mxu0
  %v8317 = vadd.f32 %v8092, %v8316
  %v8318 = vpop.f32.mrb[0].mxu0
  %8319 = vmatprep.mubr.bf16.mxu0 %v6164
  %8320 = vmatmul.mubr.bf16.gmra.mrb[0].mxu0 %v6163
  %v8321 = vpop.f32.mrb[0].mxu0
  %v8322 = vadd.f32 %v8097, %v8321
  %v8323 = vpop.f32.mrb[0].mxu0
  %v8324 = vpop.f32.mrb[0].mxu0
  %v8325 = vadd.f32 %v8100, %v8324
  %v8326 = vpop.f32.mrb[0].mxu0
  %8327 = vmatprep.mubr.bf16.mxu0 %v6182
  %8328 = vmatmul.mubr.bf16.gmra.mrb[0].mxu0 %v6181
  %v8329 = vpop.f32.mrb[0].mxu0
  %v8330 = vadd.f32 %v8105, %v8329
  %v8331 = vpop.f32.mrb[0].mxu0
  %v8332 = vpop.f32.mrb[0].mxu0
  %v8333 = vadd.f32 %v8108, %v8332
  %v8334 = vpop.f32.mrb[0].mxu0
  %8335 = vmatprep.mubr.bf16.mxu0 %v6200
  %8336 = vmatmul.mubr.bf16.gmra.mrb[0].mxu0 %v6199
  %v8337 = vpop.f32.mrb[0].mxu0
  %v8338 = vadd.f32 %v8113, %v8337
  %v8339 = vpop.f32.mrb[0].mxu0
  %v8340 = vpop.f32.mrb[0].mxu0
  %v8341 = vadd.f32 %v8116, %v8340
  %v8342 = vpop.f32.mrb[0].mxu0
  %8343 = vmatprep.mubr.bf16.mxu0 %v6218
  %8344 = vmatmul.mubr.bf16.gmra.mrb[0].mxu0 %v6217
  %v8345 = vpop.f32.mrb[0].mxu0
  %v8346 = vadd.f32 %v8121, %v8345
  %v8347 = vpop.f32.mrb[0].mxu0
  %v8348 = vpop.f32.mrb[0].mxu0
  %v8349 = vadd.f32 %v8124, %v8348
  %v8350 = vpop.f32.mrb[0].mxu0
  %8351 = vmatprep.mubr.bf16.mxu0 %v6236
  %8352 = vmatmul.mubr.bf16.gmra.mrb[0].mxu0 %v6235
  %v8353 = vpop.f32.mrb[0].mxu0
  %v8354 = vadd.f32 %v8129, %v8353
  %v8355 = vpop.f32.mrb[0].mxu0
  %v8356 = vpop.f32.mrb[0].mxu0
  %v8357 = vadd.f32 %v8132, %v8356
  %v8358 = vpop.f32.mrb[0].mxu0
  %8359 = vmatprep.mubr.bf16.mxu0 %v6254
  %8360 = vmatmul.mubr.bf16.gmra.mrb[0].mxu0 %v6253
  %v8361 = vpop.f32.mrb[0].mxu0
  %v8362 = vadd.f32 %v8137, %v8361
  %v8363 = vpop.f32.mrb[0].mxu0
  %v8364 = vpop.f32.mrb[0].mxu0
  %v8365 = vadd.f32 %v8140, %v8364
  %v8366 = vpop.f32.mrb[0].mxu0
  %8367 = vmatprep.mubr.bf16.mxu0 %v6272
  %8368 = vmatmul.mubr.bf16.gmra.mrb[0].mxu0 %v6271
  %v8369 = vpop.f32.mrb[0].mxu0
  %v8370 = vadd.f32 %v8145, %v8369
  %v8371 = vpop.f32.mrb[0].mxu0
  %v8372 = vpop.f32.mrb[0].mxu0
  %v8373 = vadd.f32 %v8148, %v8372
  %v8374 = vpop.f32.mrb[0].mxu0
  %8375 = vmatprep.mubr.bf16.mxu0 %v6290
  %8376 = vmatmul.mubr.bf16.gmra.mrb[0].mxu0 %v6289
  %v8377 = vpop.f32.mrb[0].mxu0
  %v8378 = vadd.f32 %v8153, %v8377
  %v8379 = vpop.f32.mrb[0].mxu0
  %v8380 = vpop.f32.mrb[0].mxu0
  %v8381 = vadd.f32 %v8156, %v8380
  %v8382 = vpop.f32.mrb[0].mxu0
  %8383 = vmatprep.mubr.bf16.mxu0 %v6308
  %8384 = vmatmul.mubr.bf16.gmra.mrb[0].mxu0 %v6307
  %v8385 = vpop.f32.mrb[0].mxu0
  %v8386 = vadd.f32 %v8161, %v8385
  %v8387 = vpop.f32.mrb[0].mxu0
  %v8388 = vpop.f32.mrb[0].mxu0
  %v8389 = vadd.f32 %v8164, %v8388
  %v8390 = vpop.f32.mrb[0].mxu0
  %8391 = vmatprep.mubr.bf16.mxu0 %v6326
  %8392 = vmatmul.mubr.bf16.gmra.mrb[0].mxu0 %v6325
  %v8393 = vpop.f32.mrb[0].mxu0
  %v8394 = vadd.f32 %v8169, %v8393
  %v8395 = vpop.f32.mrb[0].mxu0
  %v8396 = vpop.f32.mrb[0].mxu0
  %v8397 = vadd.f32 %v8172, %v8396
  %v8398 = vpop.f32.mrb[0].mxu0
  %8399 = vmatprep.mubr.bf16.mxu0 %v6344
  %8400 = vmatmul.mubr.bf16.gmra.mrb[0].mxu0 %v6343
  %v8401 = vpop.f32.mrb[0].mxu0
  %v8402 = vadd.f32 %v8177, %v8401
  %v8403 = vpop.f32.mrb[0].mxu0
  %v8404 = vpop.f32.mrb[0].mxu0
  %v8405 = vadd.f32 %v8180, %v8404
  %v8406 = vpop.f32.mrb[0].mxu0
  %8407 = vmatprep.mubr.bf16.mxu0 %v6362
  %8408 = vmatmul.mubr.bf16.gmra.mrb[0].mxu0 %v6361
  %v8409 = vpop.f32.mrb[0].mxu0
  %v8410 = vadd.f32 %v8185, %v8409
  %v8411 = vpop.f32.mrb[0].mxu0
  %v8412 = vpop.f32.mrb[0].mxu0
  %v8413 = vadd.f32 %v8188, %v8412
  %v8414 = vpop.f32.mrb[0].mxu0
  %8415 = vmatprep.mubr.bf16.mxu0 %v6380
  %8416 = vmatmul.mubr.bf16.gmra.mrb[0].mxu0 %v6379
  %v8417 = vpop.f32.mrb[0].mxu0
  %v8418 = vadd.f32 %v8193, %v8417
  %v8419 = vpop.f32.mrb[0].mxu0
  %v8420 = vpop.f32.mrb[0].mxu0
  %v8421 = vadd.f32 %v8196, %v8420
  %v8422 = vpop.f32.mrb[0].mxu0
  %8423 = vmatprep.mubr.bf16.mxu0 %v6398
  %8424 = vmatmul.mubr.bf16.gmra.mrb[0].mxu0 %v6397
  %v8425 = vpop.f32.mrb[0].mxu0
  %v8426 = vadd.f32 %v8201, %v8425
  %v8427 = vpop.f32.mrb[0].mxu0
  %v8428 = vpop.f32.mrb[0].mxu0
  %v8429 = vadd.f32 %v8204, %v8428
  %v8430 = vpop.f32.mrb[0].mxu0
  %8431 = vmatprep.mubr.bf16.mxu0 %v6416
  %8432 = vmatmul.mubr.bf16.gmra.mrb[0].mxu0 %v6415
  %v8433 = vpop.f32.mrb[0].mxu0
  %v8434 = vadd.f32 %v8209, %v8433
  %v8435 = vpop.f32.mrb[0].mxu0
  %v8436 = vpop.f32.mrb[0].mxu0
  %v8437 = vadd.f32 %v8212, %v8436
  %v8438 = vpop.f32.mrb[0].mxu0
  %8439 = vmatprep.mubr.bf16.mxu0 %v6434
  %8440 = vmatmul.mubr.bf16.gmra.mrb[0].mxu0 %v6433
  %v8441 = vpop.f32.mrb[0].mxu0
  %v8442 = vadd.f32 %v8217, %v8441
  %v8443 = vpop.f32.mrb[0].mxu0
  %v8444 = vpop.f32.mrb[0].mxu0
  %v8445 = vadd.f32 %v8220, %v8444
  %v8446 = vpop.f32.mrb[0].mxu0
  %8447 = vmatprep.mubr.bf16.mxu0 %v6452
  %8448 = vmatmul.mubr.bf16.gmra.mrb[0].mxu0 %v6451
  %v8449 = vpop.f32.mrb[0].mxu0
  %v8450 = vadd.f32 %v8225, %v8449
  %v8451 = vpop.f32.mrb[0].mxu0
  %v8452 = vpop.f32.mrb[0].mxu0
  %v8453 = vadd.f32 %v8228, %v8452
  %v8454 = vpop.f32.mrb[0].mxu0
  %8455 = vmatprep.mubr.bf16.mxu0 %v6470
  %8456 = vmatmul.mubr.bf16.gmra.mrb[0].mxu0 %v6469
  %v8457 = vpop.f32.mrb[0].mxu0
  %v8458 = vadd.f32 %v8233, %v8457
  %v8459 = vpop.f32.mrb[0].mxu0
  %v8460 = vpop.f32.mrb[0].mxu0
  %v8461 = vadd.f32 %v8236, %v8460
  %v8462 = vpop.f32.mrb[0].mxu0
  %8463 = vmatprep.mubr.bf16.mxu0 %v6488
  %8464 = vmatmul.mubr.bf16.gmra.mrb[0].mxu0 %v6487
  %v8465 = vpop.f32.mrb[0].mxu0
  %v8466 = vadd.f32 %v8241, %v8465
  %v8467 = vpop.f32.mrb[0].mxu0
  %v8468 = vpop.f32.mrb[0].mxu0
  %v8469 = vadd.f32 %v8244, %v8468
  %v8470 = vpop.f32.mrb[0].mxu0
  %8471 = vdwg.mxu0
  %8472 = vmatprep.subr.bf16.mxu0 0
  %8473 = vmatpush1.bf16.msra.mxu0 %v7557
  %8474 = vmatprep.subr.bf16.mxu0 0
  %8475 = vmatpush1.bf16.msra.mxu0 %v7558
  %8476 = vmatprep.subr.bf16.mxu0 0
  %8477 = vmatpush1.bf16.msra.mxu0 %v7559
  %8478 = vmatprep.subr.bf16.mxu0 0
  %8479 = vmatpush1.bf16.msra.mxu0 %v7560
  %8480 = vmatprep.subr.bf16.mxu0 0
  %8481 = vmatpush1.bf16.msra.mxu0 %v7561
  %8482 = vmatprep.subr.bf16.mxu0 0
  %8483 = vmatpush1.bf16.msra.mxu0 %v7562
  %8484 = vmatprep.subr.bf16.mxu0 0
  %8485 = vmatpush1.bf16.msra.mxu0 %v7563
  %8486 = vmatprep.subr.bf16.mxu0 0
  %8487 = vmatpush1.bf16.msra.mxu0 %v7564
  %8488 = vmatprep.subr.bf16.mxu0 0
  %8489 = vmatpush1.bf16.msra.mxu0 %v7565
  %8490 = vmatprep.subr.bf16.mxu0 0
  %8491 = vmatpush1.bf16.msra.mxu0 %v7566
  %8492 = vmatprep.subr.bf16.mxu0 0
  %8493 = vmatpush1.bf16.msra.mxu0 %v7567
  %8494 = vmatprep.subr.bf16.mxu0 0
  %8495 = vmatpush1.bf16.msra.mxu0 %v7568
  %8496 = vmatprep.subr.bf16.mxu0 0
  %8497 = vmatpush1.bf16.msra.mxu0 %v7569
  %8498 = vmatprep.subr.bf16.mxu0 0
  %8499 = vmatpush1.bf16.msra.mxu0 %v7570
  %8500 = vmatprep.subr.bf16.mxu0 0
  %8501 = vmatpush1.bf16.msra.mxu0 %v7571
  %8502 = vmatprep.subr.bf16.mxu0 0
  %8503 = vmatpush1.bf16.msra.mxu0 %v7572
  %8504 = vmatprep.mubr.bf16.mxu0 %v6076
  %8505 = vmatmul.mubr.bf16.gmra.mrb[0].mxu0 %v6075
  %v8506 = vpop.f32.mrb[0].mxu0
  %v8507 = vadd.f32 %v8282, %v8506
  %v8508 = vpop.f32.mrb[0].mxu0
  %v8509 = vpop.f32.mrb[0].mxu0
  %v8510 = vadd.f32 %v8285, %v8509
  %v8511 = vpop.f32.mrb[0].mxu0
  %8512 = vmatprep.mubr.bf16.mxu0 %v6094
  %8513 = vmatmul.mubr.bf16.gmra.mrb[0].mxu0 %v6093
  %v8514 = vpop.f32.mrb[0].mxu0
  %v8515 = vadd.f32 %v8290, %v8514
  %v8516 = vpop.f32.mrb[0].mxu0
  %v8517 = vpop.f32.mrb[0].mxu0
  %v8518 = vadd.f32 %v8293, %v8517
  %v8519 = vpop.f32.mrb[0].mxu0
  %8520 = vmatprep.mubr.bf16.mxu0 %v6112
  %8521 = vmatmul.mubr.bf16.gmra.mrb[0].mxu0 %v6111
  %v8522 = vpop.f32.mrb[0].mxu0
  %v8523 = vadd.f32 %v8298, %v8522
  %v8524 = vpop.f32.mrb[0].mxu0
  %v8525 = vpop.f32.mrb[0].mxu0
  %v8526 = vadd.f32 %v8301, %v8525
  %v8527 = vpop.f32.mrb[0].mxu0
  %8528 = vmatprep.mubr.bf16.mxu0 %v6130
  %8529 = vmatmul.mubr.bf16.gmra.mrb[0].mxu0 %v6129
  %v8530 = vpop.f32.mrb[0].mxu0
  %v8531 = vadd.f32 %v8306, %v8530
  %v8532 = vpop.f32.mrb[0].mxu0
  %v8533 = vpop.f32.mrb[0].mxu0
  %v8534 = vadd.f32 %v8309, %v8533
  %v8535 = vpop.f32.mrb[0].mxu0
  %8536 = vmatprep.mubr.bf16.mxu0 %v6148
  %8537 = vmatmul.mubr.bf16.gmra.mrb[0].mxu0 %v6147
  %v8538 = vpop.f32.mrb[0].mxu0
  %v8539 = vadd.f32 %v8314, %v8538
  %v8540 = vpop.f32.mrb[0].mxu0
  %v8541 = vpop.f32.mrb[0].mxu0
  %v8542 = vadd.f32 %v8317, %v8541
  %v8543 = vpop.f32.mrb[0].mxu0
  %8544 = vmatprep.mubr.bf16.mxu0 %v6166
  %8545 = vmatmul.mubr.bf16.gmra.mrb[0].mxu0 %v6165
  %v8546 = vpop.f32.mrb[0].mxu0
  %v8547 = vadd.f32 %v8322, %v8546
  %v8548 = vpop.f32.mrb[0].mxu0
  %v8549 = vpop.f32.mrb[0].mxu0
  %v8550 = vadd.f32 %v8325, %v8549
  %v8551 = vpop.f32.mrb[0].mxu0
  %8552 = vmatprep.mubr.bf16.mxu0 %v6184
  %8553 = vmatmul.mubr.bf16.gmra.mrb[0].mxu0 %v6183
  %v8554 = vpop.f32.mrb[0].mxu0
  %v8555 = vadd.f32 %v8330, %v8554
  %v8556 = vpop.f32.mrb[0].mxu0
  %v8557 = vpop.f32.mrb[0].mxu0
  %v8558 = vadd.f32 %v8333, %v8557
  %v8559 = vpop.f32.mrb[0].mxu0
  %8560 = vmatprep.mubr.bf16.mxu0 %v6202
  %8561 = vmatmul.mubr.bf16.gmra.mrb[0].mxu0 %v6201
  %v8562 = vpop.f32.mrb[0].mxu0
  %v8563 = vadd.f32 %v8338, %v8562
  %v8564 = vpop.f32.mrb[0].mxu0
  %v8565 = vpop.f32.mrb[0].mxu0
  %v8566 = vadd.f32 %v8341, %v8565
  %v8567 = vpop.f32.mrb[0].mxu0
  %8568 = vmatprep.mubr.bf16.mxu0 %v6220
  %8569 = vmatmul.mubr.bf16.gmra.mrb[0].mxu0 %v6219
  %v8570 = vpop.f32.mrb[0].mxu0
  %v8571 = vadd.f32 %v8346, %v8570
  %v8572 = vpop.f32.mrb[0].mxu0
  %v8573 = vpop.f32.mrb[0].mxu0
  %v8574 = vadd.f32 %v8349, %v8573
  %v8575 = vpop.f32.mrb[0].mxu0
  %8576 = vmatprep.mubr.bf16.mxu0 %v6238
  %8577 = vmatmul.mubr.bf16.gmra.mrb[0].mxu0 %v6237
  %v8578 = vpop.f32.mrb[0].mxu0
  %v8579 = vadd.f32 %v8354, %v8578
  %v8580 = vpop.f32.mrb[0].mxu0
  %v8581 = vpop.f32.mrb[0].mxu0
  %v8582 = vadd.f32 %v8357, %v8581
  %v8583 = vpop.f32.mrb[0].mxu0
  %8584 = vmatprep.mubr.bf16.mxu0 %v6256
  %8585 = vmatmul.mubr.bf16.gmra.mrb[0].mxu0 %v6255
  %v8586 = vpop.f32.mrb[0].mxu0
  %v8587 = vadd.f32 %v8362, %v8586
  %v8588 = vpop.f32.mrb[0].mxu0
  %v8589 = vpop.f32.mrb[0].mxu0
  %v8590 = vadd.f32 %v8365, %v8589
  %v8591 = vpop.f32.mrb[0].mxu0
  %8592 = vmatprep.mubr.bf16.mxu0 %v6274
  %8593 = vmatmul.mubr.bf16.gmra.mrb[0].mxu0 %v6273
  %v8594 = vpop.f32.mrb[0].mxu0
  %v8595 = vadd.f32 %v8370, %v8594
  %v8596 = vpop.f32.mrb[0].mxu0
  %v8597 = vpop.f32.mrb[0].mxu0
  %v8598 = vadd.f32 %v8373, %v8597
  %v8599 = vpop.f32.mrb[0].mxu0
  %8600 = vmatprep.mubr.bf16.mxu0 %v6292
  %8601 = vmatmul.mubr.bf16.gmra.mrb[0].mxu0 %v6291
  %v8602 = vpop.f32.mrb[0].mxu0
  %v8603 = vadd.f32 %v8378, %v8602
  %v8604 = vpop.f32.mrb[0].mxu0
  %v8605 = vpop.f32.mrb[0].mxu0
  %v8606 = vadd.f32 %v8381, %v8605
  %v8607 = vpop.f32.mrb[0].mxu0
  %8608 = vmatprep.mubr.bf16.mxu0 %v6310
  %8609 = vmatmul.mubr.bf16.gmra.mrb[0].mxu0 %v6309
  %v8610 = vpop.f32.mrb[0].mxu0
  %v8611 = vadd.f32 %v8386, %v8610
  %v8612 = vpop.f32.mrb[0].mxu0
  %v8613 = vpop.f32.mrb[0].mxu0
  %v8614 = vadd.f32 %v8389, %v8613
  %v8615 = vpop.f32.mrb[0].mxu0
  %8616 = vmatprep.mubr.bf16.mxu0 %v6328
  %8617 = vmatmul.mubr.bf16.gmra.mrb[0].mxu0 %v6327
  %v8618 = vpop.f32.mrb[0].mxu0
  %v8619 = vadd.f32 %v8394, %v8618
  %v8620 = vpop.f32.mrb[0].mxu0
  %v8621 = vpop.f32.mrb[0].mxu0
  %v8622 = vadd.f32 %v8397, %v8621
  %v8623 = vpop.f32.mrb[0].mxu0
  %8624 = vmatprep.mubr.bf16.mxu0 %v6346
  %8625 = vmatmul.mubr.bf16.gmra.mrb[0].mxu0 %v6345
  %v8626 = vpop.f32.mrb[0].mxu0
  %v8627 = vadd.f32 %v8402, %v8626
  %v8628 = vpop.f32.mrb[0].mxu0
  %v8629 = vpop.f32.mrb[0].mxu0
  %v8630 = vadd.f32 %v8405, %v8629
  %v8631 = vpop.f32.mrb[0].mxu0
  %8632 = vmatprep.mubr.bf16.mxu0 %v6364
  %8633 = vmatmul.mubr.bf16.gmra.mrb[0].mxu0 %v6363
  %v8634 = vpop.f32.mrb[0].mxu0
  %v8635 = vadd.f32 %v8410, %v8634
  %v8636 = vpop.f32.mrb[0].mxu0
  %v8637 = vpop.f32.mrb[0].mxu0
  %v8638 = vadd.f32 %v8413, %v8637
  %v8639 = vpop.f32.mrb[0].mxu0
  %8640 = vmatprep.mubr.bf16.mxu0 %v6382
  %8641 = vmatmul.mubr.bf16.gmra.mrb[0].mxu0 %v6381
  %v8642 = vpop.f32.mrb[0].mxu0
  %v8643 = vadd.f32 %v8418, %v8642
  %v8644 = vpop.f32.mrb[0].mxu0
  %v8645 = vpop.f32.mrb[0].mxu0
  %v8646 = vadd.f32 %v8421, %v8645
  %v8647 = vpop.f32.mrb[0].mxu0
  %8648 = vmatprep.mubr.bf16.mxu0 %v6400
  %8649 = vmatmul.mubr.bf16.gmra.mrb[0].mxu0 %v6399
  %v8650 = vpop.f32.mrb[0].mxu0
  %v8651 = vadd.f32 %v8426, %v8650
  %v8652 = vpop.f32.mrb[0].mxu0
  %v8653 = vpop.f32.mrb[0].mxu0
  %v8654 = vadd.f32 %v8429, %v8653
  %v8655 = vpop.f32.mrb[0].mxu0
  %8656 = vmatprep.mubr.bf16.mxu0 %v6418
  %8657 = vmatmul.mubr.bf16.gmra.mrb[0].mxu0 %v6417
  %v8658 = vpop.f32.mrb[0].mxu0
  %v8659 = vadd.f32 %v8434, %v8658
  %v8660 = vpop.f32.mrb[0].mxu0
  %v8661 = vpop.f32.mrb[0].mxu0
  %v8662 = vadd.f32 %v8437, %v8661
  %v8663 = vpop.f32.mrb[0].mxu0
  %8664 = vmatprep.mubr.bf16.mxu0 %v6436
  %8665 = vmatmul.mubr.bf16.gmra.mrb[0].mxu0 %v6435
  %v8666 = vpop.f32.mrb[0].mxu0
  %v8667 = vadd.f32 %v8442, %v8666
  %v8668 = vpop.f32.mrb[0].mxu0
  %v8669 = vpop.f32.mrb[0].mxu0
  %v8670 = vadd.f32 %v8445, %v8669
  %v8671 = vpop.f32.mrb[0].mxu0
  %8672 = vmatprep.mubr.bf16.mxu0 %v6454
  %8673 = vmatmul.mubr.bf16.gmra.mrb[0].mxu0 %v6453
  %v8674 = vpop.f32.mrb[0].mxu0
  %v8675 = vadd.f32 %v8450, %v8674
  %v8676 = vpop.f32.mrb[0].mxu0
  %v8677 = vpop.f32.mrb[0].mxu0
  %v8678 = vadd.f32 %v8453, %v8677
  %v8679 = vpop.f32.mrb[0].mxu0
  %8680 = vmatprep.mubr.bf16.mxu0 %v6472
  %8681 = vmatmul.mubr.bf16.gmra.mrb[0].mxu0 %v6471
  %v8682 = vpop.f32.mrb[0].mxu0
  %v8683 = vadd.f32 %v8458, %v8682
  %v8684 = vpop.f32.mrb[0].mxu0
  %v8685 = vpop.f32.mrb[0].mxu0
  %v8686 = vadd.f32 %v8461, %v8685
  %v8687 = vpop.f32.mrb[0].mxu0
  %8688 = vmatprep.mubr.bf16.mxu0 %v6490
  %8689 = vmatmul.mubr.bf16.gmra.mrb[0].mxu0 %v6489
  %v8690 = vpop.f32.mrb[0].mxu0
  %v8691 = vadd.f32 %v8466, %v8690
  %v8692 = vpop.f32.mrb[0].mxu0
  %v8693 = vpop.f32.mrb[0].mxu0
  %v8694 = vadd.f32 %v8469, %v8693
  %v8695 = vpop.f32.mrb[0].mxu0
  %8696 = vdwg.mxu0
  %8697 = vmatprep.subr.bf16.mxu0 0
  %8698 = vmatpush1.bf16.msra.mxu0 %v7573
  %8699 = vmatprep.subr.bf16.mxu0 0
  %8700 = vmatpush1.bf16.msra.mxu0 %v7574
  %8701 = vmatprep.subr.bf16.mxu0 0
  %8702 = vmatpush1.bf16.msra.mxu0 %v7575
  %8703 = vmatprep.subr.bf16.mxu0 0
  %8704 = vmatpush1.bf16.msra.mxu0 %v7576
  %8705 = vmatprep.subr.bf16.mxu0 0
  %8706 = vmatpush1.bf16.msra.mxu0 %v7577
  %8707 = vmatprep.subr.bf16.mxu0 0
  %8708 = vmatpush1.bf16.msra.mxu0 %v7578
  %8709 = vmatprep.subr.bf16.mxu0 0
  %8710 = vmatpush1.bf16.msra.mxu0 %v7579
  %8711 = vmatprep.subr.bf16.mxu0 0
  %8712 = vmatpush1.bf16.msra.mxu0 %v7580
  %8713 = vmatprep.subr.bf16.mxu0 0
  %8714 = vmatpush1.bf16.msra.mxu0 %v7581
  %8715 = vmatprep.subr.bf16.mxu0 0
  %8716 = vmatpush1.bf16.msra.mxu0 %v7582
  %8717 = vmatprep.subr.bf16.mxu0 0
  %8718 = vmatpush1.bf16.msra.mxu0 %v7583
  %8719 = vmatprep.subr.bf16.mxu0 0
  %8720 = vmatpush1.bf16.msra.mxu0 %v7584
  %8721 = vmatprep.subr.bf16.mxu0 0
  %8722 = vmatpush1.bf16.msra.mxu0 %v7585
  %8723 = vmatprep.subr.bf16.mxu0 0
  %8724 = vmatpush1.bf16.msra.mxu0 %v7586
  %8725 = vmatprep.subr.bf16.mxu0 0
  %8726 = vmatpush1.bf16.msra.mxu0 %v7587
  %8727 = vmatprep.subr.bf16.mxu0 0
  %8728 = vmatpush1.bf16.msra.mxu0 %v7588
  %8729 = vmatprep.mubr.bf16.mxu0 %v6078
  %8730 = vmatmul.mubr.bf16.gmra.mrb[0].mxu0 %v6077
  %v8731 = vpop.f32.mrb[0].mxu0
  %v8732 = vadd.f32 %v8507, %v8731
  %v8733 = vpop.f32.mrb[0].mxu0
  %v8734 = vpop.f32.mrb[0].mxu0
  %v8735 = vadd.f32 %v8510, %v8734
  %v8736 = vpop.f32.mrb[0].mxu0
  %8737 = vmatprep.mubr.bf16.mxu0 %v6096
  %8738 = vmatmul.mubr.bf16.gmra.mrb[0].mxu0 %v6095
  %v8739 = vpop.f32.mrb[0].mxu0
  %v8740 = vadd.f32 %v8515, %v8739
  %v8741 = vpop.f32.mrb[0].mxu0
  %v8742 = vpop.f32.mrb[0].mxu0
  %v8743 = vadd.f32 %v8518, %v8742
  %v8744 = vpop.f32.mrb[0].mxu0
  %8745 = vmatprep.mubr.bf16.mxu0 %v6114
  %8746 = vmatmul.mubr.bf16.gmra.mrb[0].mxu0 %v6113
  %v8747 = vpop.f32.mrb[0].mxu0
  %v8748 = vadd.f32 %v8523, %v8747
  %v8749 = vpop.f32.mrb[0].mxu0
  %v8750 = vpop.f32.mrb[0].mxu0
  %v8751 = vadd.f32 %v8526, %v8750
  %v8752 = vpop.f32.mrb[0].mxu0
  %8753 = vmatprep.mubr.bf16.mxu0 %v6132
  %8754 = vmatmul.mubr.bf16.gmra.mrb[0].mxu0 %v6131
  %v8755 = vpop.f32.mrb[0].mxu0
  %v8756 = vadd.f32 %v8531, %v8755
  %v8757 = vpop.f32.mrb[0].mxu0
  %v8758 = vpop.f32.mrb[0].mxu0
  %v8759 = vadd.f32 %v8534, %v8758
  %v8760 = vpop.f32.mrb[0].mxu0
  %8761 = vmatprep.mubr.bf16.mxu0 %v6150
  %8762 = vmatmul.mubr.bf16.gmra.mrb[0].mxu0 %v6149
  %v8763 = vpop.f32.mrb[0].mxu0
  %v8764 = vadd.f32 %v8539, %v8763
  %v8765 = vpop.f32.mrb[0].mxu0
  %v8766 = vpop.f32.mrb[0].mxu0
  %v8767 = vadd.f32 %v8542, %v8766
  %v8768 = vpop.f32.mrb[0].mxu0
  %8769 = vmatprep.mubr.bf16.mxu0 %v6168
  %8770 = vmatmul.mubr.bf16.gmra.mrb[0].mxu0 %v6167
  %v8771 = vpop.f32.mrb[0].mxu0
  %v8772 = vadd.f32 %v8547, %v8771
  %v8773 = vpop.f32.mrb[0].mxu0
  %v8774 = vpop.f32.mrb[0].mxu0
  %v8775 = vadd.f32 %v8550, %v8774
  %v8776 = vpop.f32.mrb[0].mxu0
  %8777 = vmatprep.mubr.bf16.mxu0 %v6186
  %8778 = vmatmul.mubr.bf16.gmra.mrb[0].mxu0 %v6185
  %v8779 = vpop.f32.mrb[0].mxu0
  %v8780 = vadd.f32 %v8555, %v8779
  %v8781 = vpop.f32.mrb[0].mxu0
  %v8782 = vpop.f32.mrb[0].mxu0
  %v8783 = vadd.f32 %v8558, %v8782
  %v8784 = vpop.f32.mrb[0].mxu0
  %8785 = vmatprep.mubr.bf16.mxu0 %v6204
  %8786 = vmatmul.mubr.bf16.gmra.mrb[0].mxu0 %v6203
  %v8787 = vpop.f32.mrb[0].mxu0
  %v8788 = vadd.f32 %v8563, %v8787
  %v8789 = vpop.f32.mrb[0].mxu0
  %v8790 = vpop.f32.mrb[0].mxu0
  %v8791 = vadd.f32 %v8566, %v8790
  %v8792 = vpop.f32.mrb[0].mxu0
  %8793 = vmatprep.mubr.bf16.mxu0 %v6222
  %8794 = vmatmul.mubr.bf16.gmra.mrb[0].mxu0 %v6221
  %v8795 = vpop.f32.mrb[0].mxu0
  %v8796 = vadd.f32 %v8571, %v8795
  %v8797 = vpop.f32.mrb[0].mxu0
  %v8798 = vpop.f32.mrb[0].mxu0
  %v8799 = vadd.f32 %v8574, %v8798
  %v8800 = vpop.f32.mrb[0].mxu0
  %8801 = vmatprep.mubr.bf16.mxu0 %v6240
  %8802 = vmatmul.mubr.bf16.gmra.mrb[0].mxu0 %v6239
  %v8803 = vpop.f32.mrb[0].mxu0
  %v8804 = vadd.f32 %v8579, %v8803
  %v8805 = vpop.f32.mrb[0].mxu0
  %v8806 = vpop.f32.mrb[0].mxu0
  %v8807 = vadd.f32 %v8582, %v8806
  %v8808 = vpop.f32.mrb[0].mxu0
  %8809 = vmatprep.mubr.bf16.mxu0 %v6258
  %8810 = vmatmul.mubr.bf16.gmra.mrb[0].mxu0 %v6257
  %v8811 = vpop.f32.mrb[0].mxu0
  %v8812 = vadd.f32 %v8587, %v8811
  %v8813 = vpop.f32.mrb[0].mxu0
  %v8814 = vpop.f32.mrb[0].mxu0
  %v8815 = vadd.f32 %v8590, %v8814
  %v8816 = vpop.f32.mrb[0].mxu0
  %8817 = vmatprep.mubr.bf16.mxu0 %v6276
  %8818 = vmatmul.mubr.bf16.gmra.mrb[0].mxu0 %v6275
  %v8819 = vpop.f32.mrb[0].mxu0
  %v8820 = vadd.f32 %v8595, %v8819
  %v8821 = vpop.f32.mrb[0].mxu0
  %v8822 = vpop.f32.mrb[0].mxu0
  %v8823 = vadd.f32 %v8598, %v8822
  %v8824 = vpop.f32.mrb[0].mxu0
  %8825 = vmatprep.mubr.bf16.mxu0 %v6294
  %8826 = vmatmul.mubr.bf16.gmra.mrb[0].mxu0 %v6293
  %v8827 = vpop.f32.mrb[0].mxu0
  %v8828 = vadd.f32 %v8603, %v8827
  %v8829 = vpop.f32.mrb[0].mxu0
  %v8830 = vpop.f32.mrb[0].mxu0
  %v8831 = vadd.f32 %v8606, %v8830
  %v8832 = vpop.f32.mrb[0].mxu0
  %8833 = vmatprep.mubr.bf16.mxu0 %v6312
  %8834 = vmatmul.mubr.bf16.gmra.mrb[0].mxu0 %v6311
  %v8835 = vpop.f32.mrb[0].mxu0
  %v8836 = vadd.f32 %v8611, %v8835
  %v8837 = vpop.f32.mrb[0].mxu0
  %v8838 = vpop.f32.mrb[0].mxu0
  %v8839 = vadd.f32 %v8614, %v8838
  %v8840 = vpop.f32.mrb[0].mxu0
  %8841 = vmatprep.mubr.bf16.mxu0 %v6330
  %8842 = vmatmul.mubr.bf16.gmra.mrb[0].mxu0 %v6329
  %v8843 = vpop.f32.mrb[0].mxu0
  %v8844 = vadd.f32 %v8619, %v8843
  %v8845 = vpop.f32.mrb[0].mxu0
  %v8846 = vpop.f32.mrb[0].mxu0
  %v8847 = vadd.f32 %v8622, %v8846
  %v8848 = vpop.f32.mrb[0].mxu0
  %8849 = vmatprep.mubr.bf16.mxu0 %v6348
  %8850 = vmatmul.mubr.bf16.gmra.mrb[0].mxu0 %v6347
  %v8851 = vpop.f32.mrb[0].mxu0
  %v8852 = vadd.f32 %v8627, %v8851
  %v8853 = vpop.f32.mrb[0].mxu0
  %v8854 = vpop.f32.mrb[0].mxu0
  %v8855 = vadd.f32 %v8630, %v8854
  %v8856 = vpop.f32.mrb[0].mxu0
  %8857 = vmatprep.mubr.bf16.mxu0 %v6366
  %8858 = vmatmul.mubr.bf16.gmra.mrb[0].mxu0 %v6365
  %v8859 = vpop.f32.mrb[0].mxu0
  %v8860 = vadd.f32 %v8635, %v8859
  %v8861 = vpop.f32.mrb[0].mxu0
  %v8862 = vpop.f32.mrb[0].mxu0
  %v8863 = vadd.f32 %v8638, %v8862
  %v8864 = vpop.f32.mrb[0].mxu0
  %8865 = vmatprep.mubr.bf16.mxu0 %v6384
  %8866 = vmatmul.mubr.bf16.gmra.mrb[0].mxu0 %v6383
  %v8867 = vpop.f32.mrb[0].mxu0
  %v8868 = vadd.f32 %v8643, %v8867
  %v8869 = vpop.f32.mrb[0].mxu0
  %v8870 = vpop.f32.mrb[0].mxu0
  %v8871 = vadd.f32 %v8646, %v8870
  %v8872 = vpop.f32.mrb[0].mxu0
  %8873 = vmatprep.mubr.bf16.mxu0 %v6402
  %8874 = vmatmul.mubr.bf16.gmra.mrb[0].mxu0 %v6401
  %v8875 = vpop.f32.mrb[0].mxu0
  %v8876 = vadd.f32 %v8651, %v8875
  %v8877 = vpop.f32.mrb[0].mxu0
  %v8878 = vpop.f32.mrb[0].mxu0
  %v8879 = vadd.f32 %v8654, %v8878
  %v8880 = vpop.f32.mrb[0].mxu0
  %8881 = vmatprep.mubr.bf16.mxu0 %v6420
  %8882 = vmatmul.mubr.bf16.gmra.mrb[0].mxu0 %v6419
  %v8883 = vpop.f32.mrb[0].mxu0
  %v8884 = vadd.f32 %v8659, %v8883
  %v8885 = vpop.f32.mrb[0].mxu0
  %v8886 = vpop.f32.mrb[0].mxu0
  %v8887 = vadd.f32 %v8662, %v8886
  %v8888 = vpop.f32.mrb[0].mxu0
  %8889 = vmatprep.mubr.bf16.mxu0 %v6438
  %8890 = vmatmul.mubr.bf16.gmra.mrb[0].mxu0 %v6437
  %v8891 = vpop.f32.mrb[0].mxu0
  %v8892 = vadd.f32 %v8667, %v8891
  %v8893 = vpop.f32.mrb[0].mxu0
  %v8894 = vpop.f32.mrb[0].mxu0
  %v8895 = vadd.f32 %v8670, %v8894
  %v8896 = vpop.f32.mrb[0].mxu0
  %8897 = vmatprep.mubr.bf16.mxu0 %v6456
  %8898 = vmatmul.mubr.bf16.gmra.mrb[0].mxu0 %v6455
  %v8899 = vpop.f32.mrb[0].mxu0
  %v8900 = vadd.f32 %v8675, %v8899
  %v8901 = vpop.f32.mrb[0].mxu0
  %v8902 = vpop.f32.mrb[0].mxu0
  %v8903 = vadd.f32 %v8678, %v8902
  %v8904 = vpop.f32.mrb[0].mxu0
  %8905 = vmatprep.mubr.bf16.mxu0 %v6474
  %8906 = vmatmul.mubr.bf16.gmra.mrb[0].mxu0 %v6473
  %v8907 = vpop.f32.mrb[0].mxu0
  %v8908 = vadd.f32 %v8683, %v8907
  %v8909 = vpop.f32.mrb[0].mxu0
  %v8910 = vpop.f32.mrb[0].mxu0
  %v8911 = vadd.f32 %v8686, %v8910
  %v8912 = vpop.f32.mrb[0].mxu0
  %8913 = vmatprep.mubr.bf16.mxu0 %v6492
  %8914 = vmatmul.mubr.bf16.gmra.mrb[0].mxu0 %v6491
  %v8915 = vpop.f32.mrb[0].mxu0
  %v8916 = vadd.f32 %v8691, %v8915
  %v8917 = vpop.f32.mrb[0].mxu0
  %v8918 = vpop.f32.mrb[0].mxu0
  %v8919 = vadd.f32 %v8694, %v8918
  %v8920 = vpop.f32.mrb[0].mxu0
  %8921 = vdwg.mxu0
  %8922 = vmatprep.subr.bf16.mxu0 0
  %8923 = vmatpush1.bf16.msra.mxu0 %v7589
  %8924 = vmatprep.subr.bf16.mxu0 0
  %8925 = vmatpush1.bf16.msra.mxu0 %v7590
  %8926 = vmatprep.subr.bf16.mxu0 0
  %8927 = vmatpush1.bf16.msra.mxu0 %v7591
  %8928 = vmatprep.subr.bf16.mxu0 0
  %8929 = vmatpush1.bf16.msra.mxu0 %v7592
  %8930 = vmatprep.subr.bf16.mxu0 0
  %8931 = vmatpush1.bf16.msra.mxu0 %v7593
  %8932 = vmatprep.subr.bf16.mxu0 0
  %8933 = vmatpush1.bf16.msra.mxu0 %v7594
  %8934 = vmatprep.subr.bf16.mxu0 0
  %8935 = vmatpush1.bf16.msra.mxu0 %v7595
  %8936 = vmatprep.subr.bf16.mxu0 0
  %8937 = vmatpush1.bf16.msra.mxu0 %v7596
  %8938 = vmatprep.subr.bf16.mxu0 0
  %8939 = vmatpush1.bf16.msra.mxu0 %v7597
  %8940 = vmatprep.subr.bf16.mxu0 0
  %8941 = vmatpush1.bf16.msra.mxu0 %v7598
  %8942 = vmatprep.subr.bf16.mxu0 0
  %8943 = vmatpush1.bf16.msra.mxu0 %v7599
  %8944 = vmatprep.subr.bf16.mxu0 0
  %8945 = vmatpush1.bf16.msra.mxu0 %v7600
  %8946 = vmatprep.subr.bf16.mxu0 0
  %8947 = vmatpush1.bf16.msra.mxu0 %v7601
  %8948 = vmatprep.subr.bf16.mxu0 0
  %8949 = vmatpush1.bf16.msra.mxu0 %v7602
  %8950 = vmatprep.subr.bf16.mxu0 0
  %8951 = vmatpush1.bf16.msra.mxu0 %v7603
  %8952 = vmatprep.subr.bf16.mxu0 0
  %8953 = vmatpush1.bf16.msra.mxu0 %v7604
  %8954 = vmatprep.mubr.bf16.mxu0 %v6080
  %8955 = vmatmul.mubr.bf16.gmra.mrb[0].mxu0 %v6079
  %v8956 = vpop.f32.mrb[0].mxu0
  %v8957 = vadd.f32 %v8732, %v8956
  %v8958 = vpop.f32.mrb[0].mxu0
  %v8959 = vpop.f32.mrb[0].mxu0
  %v8960 = vadd.f32 %v8735, %v8959
  %v8961 = vpop.f32.mrb[0].mxu0
  %8962 = vmatprep.mubr.bf16.mxu0 %v6098
  %8963 = vmatmul.mubr.bf16.gmra.mrb[0].mxu0 %v6097
  %v8964 = vpop.f32.mrb[0].mxu0
  %v8965 = vadd.f32 %v8740, %v8964
  %v8966 = vpop.f32.mrb[0].mxu0
  %v8967 = vpop.f32.mrb[0].mxu0
  %v8968 = vadd.f32 %v8743, %v8967
  %v8969 = vpop.f32.mrb[0].mxu0
  %8970 = vmatprep.mubr.bf16.mxu0 %v6116
  %8971 = vmatmul.mubr.bf16.gmra.mrb[0].mxu0 %v6115
  %v8972 = vpop.f32.mrb[0].mxu0
  %v8973 = vadd.f32 %v8748, %v8972
  %v8974 = vpop.f32.mrb[0].mxu0
  %v8975 = vpop.f32.mrb[0].mxu0
  %v8976 = vadd.f32 %v8751, %v8975
  %v8977 = vpop.f32.mrb[0].mxu0
  %8978 = vmatprep.mubr.bf16.mxu0 %v6134
  %8979 = vmatmul.mubr.bf16.gmra.mrb[0].mxu0 %v6133
  %v8980 = vpop.f32.mrb[0].mxu0
  %v8981 = vadd.f32 %v8756, %v8980
  %v8982 = vpop.f32.mrb[0].mxu0
  %v8983 = vpop.f32.mrb[0].mxu0
  %v8984 = vadd.f32 %v8759, %v8983
  %v8985 = vpop.f32.mrb[0].mxu0
  %8986 = vmatprep.mubr.bf16.mxu0 %v6152
  %8987 = vmatmul.mubr.bf16.gmra.mrb[0].mxu0 %v6151
  %v8988 = vpop.f32.mrb[0].mxu0
  %v8989 = vadd.f32 %v8764, %v8988
  %v8990 = vpop.f32.mrb[0].mxu0
  %v8991 = vpop.f32.mrb[0].mxu0
  %v8992 = vadd.f32 %v8767, %v8991
  %v8993 = vpop.f32.mrb[0].mxu0
  %8994 = vmatprep.mubr.bf16.mxu0 %v6170
  %8995 = vmatmul.mubr.bf16.gmra.mrb[0].mxu0 %v6169
  %v8996 = vpop.f32.mrb[0].mxu0
  %v8997 = vadd.f32 %v8772, %v8996
  %v8998 = vpop.f32.mrb[0].mxu0
  %v8999 = vpop.f32.mrb[0].mxu0
  %v9000 = vadd.f32 %v8775, %v8999
  %v9001 = vpop.f32.mrb[0].mxu0
  %9002 = vmatprep.mubr.bf16.mxu0 %v6188
  %9003 = vmatmul.mubr.bf16.gmra.mrb[0].mxu0 %v6187
  %v9004 = vpop.f32.mrb[0].mxu0
  %v9005 = vadd.f32 %v8780, %v9004
  %v9006 = vpop.f32.mrb[0].mxu0
  %v9007 = vpop.f32.mrb[0].mxu0
  %v9008 = vadd.f32 %v8783, %v9007
  %v9009 = vpop.f32.mrb[0].mxu0
  %9010 = vmatprep.mubr.bf16.mxu0 %v6206
  %9011 = vmatmul.mubr.bf16.gmra.mrb[0].mxu0 %v6205
  %v9012 = vpop.f32.mrb[0].mxu0
  %v9013 = vadd.f32 %v8788, %v9012
  %v9014 = vpop.f32.mrb[0].mxu0
  %v9015 = vpop.f32.mrb[0].mxu0
  %v9016 = vadd.f32 %v8791, %v9015
  %v9017 = vpop.f32.mrb[0].mxu0
  %9018 = vmatprep.mubr.bf16.mxu0 %v6224
  %9019 = vmatmul.mubr.bf16.gmra.mrb[0].mxu0 %v6223
  %v9020 = vpop.f32.mrb[0].mxu0
  %v9021 = vadd.f32 %v8796, %v9020
  %v9022 = vpop.f32.mrb[0].mxu0
  %v9023 = vpop.f32.mrb[0].mxu0
  %v9024 = vadd.f32 %v8799, %v9023
  %v9025 = vpop.f32.mrb[0].mxu0
  %9026 = vmatprep.mubr.bf16.mxu0 %v6242
  %9027 = vmatmul.mubr.bf16.gmra.mrb[0].mxu0 %v6241
  %v9028 = vpop.f32.mrb[0].mxu0
  %v9029 = vadd.f32 %v8804, %v9028
  %v9030 = vpop.f32.mrb[0].mxu0
  %v9031 = vpop.f32.mrb[0].mxu0
  %v9032 = vadd.f32 %v8807, %v9031
  %v9033 = vpop.f32.mrb[0].mxu0
  %9034 = vmatprep.mubr.bf16.mxu0 %v6260
  %9035 = vmatmul.mubr.bf16.gmra.mrb[0].mxu0 %v6259
  %v9036 = vpop.f32.mrb[0].mxu0
  %v9037 = vadd.f32 %v8812, %v9036
  %v9038 = vpop.f32.mrb[0].mxu0
  %v9039 = vpop.f32.mrb[0].mxu0
  %v9040 = vadd.f32 %v8815, %v9039
  %v9041 = vpop.f32.mrb[0].mxu0
  %9042 = vmatprep.mubr.bf16.mxu0 %v6278
  %9043 = vmatmul.mubr.bf16.gmra.mrb[0].mxu0 %v6277
  %v9044 = vpop.f32.mrb[0].mxu0
  %v9045 = vadd.f32 %v8820, %v9044
  %v9046 = vpop.f32.mrb[0].mxu0
  %v9047 = vpop.f32.mrb[0].mxu0
  %v9048 = vadd.f32 %v8823, %v9047
  %v9049 = vpop.f32.mrb[0].mxu0
  %9050 = vmatprep.mubr.bf16.mxu0 %v6296
  %9051 = vmatmul.mubr.bf16.gmra.mrb[0].mxu0 %v6295
  %v9052 = vpop.f32.mrb[0].mxu0
  %v9053 = vadd.f32 %v8828, %v9052
  %v9054 = vpop.f32.mrb[0].mxu0
  %v9055 = vpop.f32.mrb[0].mxu0
  %v9056 = vadd.f32 %v8831, %v9055
  %v9057 = vpop.f32.mrb[0].mxu0
  %9058 = vmatprep.mubr.bf16.mxu0 %v6314
  %9059 = vmatmul.mubr.bf16.gmra.mrb[0].mxu0 %v6313
  %v9060 = vpop.f32.mrb[0].mxu0
  %v9061 = vadd.f32 %v8836, %v9060
  %v9062 = vpop.f32.mrb[0].mxu0
  %v9063 = vpop.f32.mrb[0].mxu0
  %v9064 = vadd.f32 %v8839, %v9063
  %v9065 = vpop.f32.mrb[0].mxu0
  %9066 = vmatprep.mubr.bf16.mxu0 %v6332
  %9067 = vmatmul.mubr.bf16.gmra.mrb[0].mxu0 %v6331
  %v9068 = vpop.f32.mrb[0].mxu0
  %v9069 = vadd.f32 %v8844, %v9068
  %v9070 = vpop.f32.mrb[0].mxu0
  %v9071 = vpop.f32.mrb[0].mxu0
  %v9072 = vadd.f32 %v8847, %v9071
  %v9073 = vpop.f32.mrb[0].mxu0
  %9074 = vmatprep.mubr.bf16.mxu0 %v6350
  %9075 = vmatmul.mubr.bf16.gmra.mrb[0].mxu0 %v6349
  %v9076 = vpop.f32.mrb[0].mxu0
  %v9077 = vadd.f32 %v8852, %v9076
  %v9078 = vpop.f32.mrb[0].mxu0
  %v9079 = vpop.f32.mrb[0].mxu0
  %v9080 = vadd.f32 %v8855, %v9079
  %v9081 = vpop.f32.mrb[0].mxu0
  %9082 = vmatprep.mubr.bf16.mxu0 %v6368
  %9083 = vmatmul.mubr.bf16.gmra.mrb[0].mxu0 %v6367
  %v9084 = vpop.f32.mrb[0].mxu0
  %v9085 = vadd.f32 %v8860, %v9084
  %v9086 = vpop.f32.mrb[0].mxu0
  %v9087 = vpop.f32.mrb[0].mxu0
  %v9088 = vadd.f32 %v8863, %v9087
  %v9089 = vpop.f32.mrb[0].mxu0
  %9090 = vmatprep.mubr.bf16.mxu0 %v6386
  %9091 = vmatmul.mubr.bf16.gmra.mrb[0].mxu0 %v6385
  %v9092 = vpop.f32.mrb[0].mxu0
  %v9093 = vadd.f32 %v8868, %v9092
  %v9094 = vpop.f32.mrb[0].mxu0
  %v9095 = vpop.f32.mrb[0].mxu0
  %v9096 = vadd.f32 %v8871, %v9095
  %v9097 = vpop.f32.mrb[0].mxu0
  %9098 = vmatprep.mubr.bf16.mxu0 %v6404
  %9099 = vmatmul.mubr.bf16.gmra.mrb[0].mxu0 %v6403
  %v9100 = vpop.f32.mrb[0].mxu0
  %v9101 = vadd.f32 %v8876, %v9100
  %v9102 = vpop.f32.mrb[0].mxu0
  %v9103 = vpop.f32.mrb[0].mxu0
  %v9104 = vadd.f32 %v8879, %v9103
  %v9105 = vpop.f32.mrb[0].mxu0
  %9106 = vmatprep.mubr.bf16.mxu0 %v6422
  %9107 = vmatmul.mubr.bf16.gmra.mrb[0].mxu0 %v6421
  %v9108 = vpop.f32.mrb[0].mxu0
  %v9109 = vadd.f32 %v8884, %v9108
  %v9110 = vpop.f32.mrb[0].mxu0
  %v9111 = vpop.f32.mrb[0].mxu0
  %v9112 = vadd.f32 %v8887, %v9111
  %v9113 = vpop.f32.mrb[0].mxu0
  %9114 = vmatprep.mubr.bf16.mxu0 %v6440
  %9115 = vmatmul.mubr.bf16.gmra.mrb[0].mxu0 %v6439
  %v9116 = vpop.f32.mrb[0].mxu0
  %v9117 = vadd.f32 %v8892, %v9116
  %v9118 = vpop.f32.mrb[0].mxu0
  %v9119 = vpop.f32.mrb[0].mxu0
  %v9120 = vadd.f32 %v8895, %v9119
  %v9121 = vpop.f32.mrb[0].mxu0
  %9122 = vmatprep.mubr.bf16.mxu0 %v6458
  %9123 = vmatmul.mubr.bf16.gmra.mrb[0].mxu0 %v6457
  %v9124 = vpop.f32.mrb[0].mxu0
  %v9125 = vadd.f32 %v8900, %v9124
  %v9126 = vpop.f32.mrb[0].mxu0
  %v9127 = vpop.f32.mrb[0].mxu0
  %v9128 = vadd.f32 %v8903, %v9127
  %v9129 = vpop.f32.mrb[0].mxu0
  %9130 = vmatprep.mubr.bf16.mxu0 %v6476
  %9131 = vmatmul.mubr.bf16.gmra.mrb[0].mxu0 %v6475
  %v9132 = vpop.f32.mrb[0].mxu0
  %v9133 = vadd.f32 %v8908, %v9132
  %v9134 = vpop.f32.mrb[0].mxu0
  %v9135 = vpop.f32.mrb[0].mxu0
  %v9136 = vadd.f32 %v8911, %v9135
  %v9137 = vpop.f32.mrb[0].mxu0
  %9138 = vmatprep.mubr.bf16.mxu0 %v6494
  %9139 = vmatmul.mubr.bf16.gmra.mrb[0].mxu0 %v6493
  %v9140 = vpop.f32.mrb[0].mxu0
  %v9141 = vadd.f32 %v8916, %v9140
  %v9142 = vpop.f32.mrb[0].mxu0
  %v9143 = vpop.f32.mrb[0].mxu0
  %v9144 = vadd.f32 %v8919, %v9143
  %v9145 = vpop.f32.mrb[0].mxu0
  %9146 = vdwg.mxu0
  %9147 = vmatprep.subr.bf16.mxu0 0
  %9148 = vmatpush1.bf16.msra.mxu0 %v7605
  %9149 = vmatprep.subr.bf16.mxu0 0
  %9150 = vmatpush1.bf16.msra.mxu0 %v7606
  %9151 = vmatprep.subr.bf16.mxu0 0
  %9152 = vmatpush1.bf16.msra.mxu0 %v7607
  %9153 = vmatprep.subr.bf16.mxu0 0
  %9154 = vmatpush1.bf16.msra.mxu0 %v7608
  %9155 = vmatprep.subr.bf16.mxu0 0
  %9156 = vmatpush1.bf16.msra.mxu0 %v7609
  %9157 = vmatprep.subr.bf16.mxu0 0
  %9158 = vmatpush1.bf16.msra.mxu0 %v7610
  %9159 = vmatprep.subr.bf16.mxu0 0
  %9160 = vmatpush1.bf16.msra.mxu0 %v7611
  %9161 = vmatprep.subr.bf16.mxu0 0
  %9162 = vmatpush1.bf16.msra.mxu0 %v7612
  %9163 = vmatprep.subr.bf16.mxu0 0
  %9164 = vmatpush1.bf16.msra.mxu0 %v7613
  %9165 = vmatprep.subr.bf16.mxu0 0
  %9166 = vmatpush1.bf16.msra.mxu0 %v7614
  %9167 = vmatprep.subr.bf16.mxu0 0
  %9168 = vmatpush1.bf16.msra.mxu0 %v7615
  %9169 = vmatprep.subr.bf16.mxu0 0
  %9170 = vmatpush1.bf16.msra.mxu0 %v7616
  %9171 = vmatprep.subr.bf16.mxu0 0
  %9172 = vmatpush1.bf16.msra.mxu0 %v7617
  %9173 = vmatprep.subr.bf16.mxu0 0
  %9174 = vmatpush1.bf16.msra.mxu0 %v7618
  %9175 = vmatprep.subr.bf16.mxu0 0
  %9176 = vmatpush1.bf16.msra.mxu0 %v7619
  %9177 = vmatprep.subr.bf16.mxu0 0
  %9178 = vmatpush1.bf16.msra.mxu0 %v7620
  %9179 = vmatprep.mubr.bf16.mxu0 %v6082
  %9180 = vmatmul.mubr.bf16.gmra.mrb[0].mxu0 %v6081
  %v9181 = vpop.f32.mrb[0].mxu0
  %v9182 = vadd.f32 %v8957, %v9181
  %v9183 = vpop.f32.mrb[0].mxu0
  %v9184 = vpop.f32.mrb[0].mxu0
  %v9185 = vadd.f32 %v8960, %v9184
  %v9186 = vpop.f32.mrb[0].mxu0
  %9187 = vmatprep.mubr.bf16.mxu0 %v6100
  %9188 = vmatmul.mubr.bf16.gmra.mrb[0].mxu0 %v6099
  %v9189 = vpop.f32.mrb[0].mxu0
  %v9190 = vadd.f32 %v8965, %v9189
  %v9191 = vpop.f32.mrb[0].mxu0
  %v9192 = vpop.f32.mrb[0].mxu0
  %v9193 = vadd.f32 %v8968, %v9192
  %v9194 = vpop.f32.mrb[0].mxu0
  %9195 = vmatprep.mubr.bf16.mxu0 %v6118
  %9196 = vmatmul.mubr.bf16.gmra.mrb[0].mxu0 %v6117
  %v9197 = vpop.f32.mrb[0].mxu0
  %v9198 = vadd.f32 %v8973, %v9197
  %v9199 = vpop.f32.mrb[0].mxu0
  %v9200 = vpop.f32.mrb[0].mxu0
  %v9201 = vadd.f32 %v8976, %v9200
  %v9202 = vpop.f32.mrb[0].mxu0
  %9203 = vmatprep.mubr.bf16.mxu0 %v6136
  %9204 = vmatmul.mubr.bf16.gmra.mrb[0].mxu0 %v6135
  %v9205 = vpop.f32.mrb[0].mxu0
  %v9206 = vadd.f32 %v8981, %v9205
  %v9207 = vpop.f32.mrb[0].mxu0
  %v9208 = vpop.f32.mrb[0].mxu0
  %v9209 = vadd.f32 %v8984, %v9208
  %v9210 = vpop.f32.mrb[0].mxu0
  %9211 = vmatprep.mubr.bf16.mxu0 %v6154
  %9212 = vmatmul.mubr.bf16.gmra.mrb[0].mxu0 %v6153
  %v9213 = vpop.f32.mrb[0].mxu0
  %v9214 = vadd.f32 %v8989, %v9213
  %v9215 = vpop.f32.mrb[0].mxu0
  %v9216 = vpop.f32.mrb[0].mxu0
  %v9217 = vadd.f32 %v8992, %v9216
  %v9218 = vpop.f32.mrb[0].mxu0
  %9219 = vmatprep.mubr.bf16.mxu0 %v6172
  %9220 = vmatmul.mubr.bf16.gmra.mrb[0].mxu0 %v6171
  %v9221 = vpop.f32.mrb[0].mxu0
  %v9222 = vadd.f32 %v8997, %v9221
  %v9223 = vpop.f32.mrb[0].mxu0
  %v9224 = vpop.f32.mrb[0].mxu0
  %v9225 = vadd.f32 %v9000, %v9224
  %v9226 = vpop.f32.mrb[0].mxu0
  %9227 = vmatprep.mubr.bf16.mxu0 %v6190
  %9228 = vmatmul.mubr.bf16.gmra.mrb[0].mxu0 %v6189
  %v9229 = vpop.f32.mrb[0].mxu0
  %v9230 = vadd.f32 %v9005, %v9229
  %v9231 = vpop.f32.mrb[0].mxu0
  %v9232 = vpop.f32.mrb[0].mxu0
  %v9233 = vadd.f32 %v9008, %v9232
  %v9234 = vpop.f32.mrb[0].mxu0
  %9235 = vmatprep.mubr.bf16.mxu0 %v6208
  %9236 = vmatmul.mubr.bf16.gmra.mrb[0].mxu0 %v6207
  %v9237 = vpop.f32.mrb[0].mxu0
  %v9238 = vadd.f32 %v9013, %v9237
  %v9239 = vpop.f32.mrb[0].mxu0
  %v9240 = vpop.f32.mrb[0].mxu0
  %v9241 = vadd.f32 %v9016, %v9240
  %v9242 = vpop.f32.mrb[0].mxu0
  %9243 = vmatprep.mubr.bf16.mxu0 %v6226
  %9244 = vmatmul.mubr.bf16.gmra.mrb[0].mxu0 %v6225
  %v9245 = vpop.f32.mrb[0].mxu0
  %v9246 = vadd.f32 %v9021, %v9245
  %v9247 = vpop.f32.mrb[0].mxu0
  %v9248 = vpop.f32.mrb[0].mxu0
  %v9249 = vadd.f32 %v9024, %v9248
  %v9250 = vpop.f32.mrb[0].mxu0
  %9251 = vmatprep.mubr.bf16.mxu0 %v6244
  %9252 = vmatmul.mubr.bf16.gmra.mrb[0].mxu0 %v6243
  %v9253 = vpop.f32.mrb[0].mxu0
  %v9254 = vadd.f32 %v9029, %v9253
  %v9255 = vpop.f32.mrb[0].mxu0
  %v9256 = vpop.f32.mrb[0].mxu0
  %v9257 = vadd.f32 %v9032, %v9256
  %v9258 = vpop.f32.mrb[0].mxu0
  %9259 = vmatprep.mubr.bf16.mxu0 %v6262
  %9260 = vmatmul.mubr.bf16.gmra.mrb[0].mxu0 %v6261
  %v9261 = vpop.f32.mrb[0].mxu0
  %v9262 = vadd.f32 %v9037, %v9261
  %v9263 = vpop.f32.mrb[0].mxu0
  %v9264 = vpop.f32.mrb[0].mxu0
  %v9265 = vadd.f32 %v9040, %v9264
  %v9266 = vpop.f32.mrb[0].mxu0
  %9267 = vmatprep.mubr.bf16.mxu0 %v6280
  %9268 = vmatmul.mubr.bf16.gmra.mrb[0].mxu0 %v6279
  %v9269 = vpop.f32.mrb[0].mxu0
  %v9270 = vadd.f32 %v9045, %v9269
  %v9271 = vpop.f32.mrb[0].mxu0
  %v9272 = vpop.f32.mrb[0].mxu0
  %v9273 = vadd.f32 %v9048, %v9272
  %v9274 = vpop.f32.mrb[0].mxu0
  %9275 = vmatprep.mubr.bf16.mxu0 %v6298
  %9276 = vmatmul.mubr.bf16.gmra.mrb[0].mxu0 %v6297
  %v9277 = vpop.f32.mrb[0].mxu0
  %v9278 = vadd.f32 %v9053, %v9277
  %v9279 = vpop.f32.mrb[0].mxu0
  %v9280 = vpop.f32.mrb[0].mxu0
  %v9281 = vadd.f32 %v9056, %v9280
  %v9282 = vpop.f32.mrb[0].mxu0
  %9283 = vmatprep.mubr.bf16.mxu0 %v6316
  %9284 = vmatmul.mubr.bf16.gmra.mrb[0].mxu0 %v6315
  %v9285 = vpop.f32.mrb[0].mxu0
  %v9286 = vadd.f32 %v9061, %v9285
  %v9287 = vpop.f32.mrb[0].mxu0
  %v9288 = vpop.f32.mrb[0].mxu0
  %v9289 = vadd.f32 %v9064, %v9288
  %v9290 = vpop.f32.mrb[0].mxu0
  %9291 = vmatprep.mubr.bf16.mxu0 %v6334
  %9292 = vmatmul.mubr.bf16.gmra.mrb[0].mxu0 %v6333
  %v9293 = vpop.f32.mrb[0].mxu0
  %v9294 = vadd.f32 %v9069, %v9293
  %v9295 = vpop.f32.mrb[0].mxu0
  %v9296 = vpop.f32.mrb[0].mxu0
  %v9297 = vadd.f32 %v9072, %v9296
  %v9298 = vpop.f32.mrb[0].mxu0
  %9299 = vmatprep.mubr.bf16.mxu0 %v6352
  %9300 = vmatmul.mubr.bf16.gmra.mrb[0].mxu0 %v6351
  %v9301 = vpop.f32.mrb[0].mxu0
  %v9302 = vadd.f32 %v9077, %v9301
  %v9303 = vpop.f32.mrb[0].mxu0
  %v9304 = vpop.f32.mrb[0].mxu0
  %v9305 = vadd.f32 %v9080, %v9304
  %v9306 = vpop.f32.mrb[0].mxu0
  %9307 = vmatprep.mubr.bf16.mxu0 %v6370
  %9308 = vmatmul.mubr.bf16.gmra.mrb[0].mxu0 %v6369
  %v9309 = vpop.f32.mrb[0].mxu0
  %v9310 = vadd.f32 %v9085, %v9309
  %v9311 = vpop.f32.mrb[0].mxu0
  %v9312 = vpop.f32.mrb[0].mxu0
  %v9313 = vadd.f32 %v9088, %v9312
  %v9314 = vpop.f32.mrb[0].mxu0
  %9315 = vmatprep.mubr.bf16.mxu0 %v6388
  %9316 = vmatmul.mubr.bf16.gmra.mrb[0].mxu0 %v6387
  %v9317 = vpop.f32.mrb[0].mxu0
  %v9318 = vadd.f32 %v9093, %v9317
  %v9319 = vpop.f32.mrb[0].mxu0
  %v9320 = vpop.f32.mrb[0].mxu0
  %v9321 = vadd.f32 %v9096, %v9320
  %v9322 = vpop.f32.mrb[0].mxu0
  %9323 = vmatprep.mubr.bf16.mxu0 %v6406
  %9324 = vmatmul.mubr.bf16.gmra.mrb[0].mxu0 %v6405
  %v9325 = vpop.f32.mrb[0].mxu0
  %v9326 = vadd.f32 %v9101, %v9325
  %v9327 = vpop.f32.mrb[0].mxu0
  %v9328 = vpop.f32.mrb[0].mxu0
  %v9329 = vadd.f32 %v9104, %v9328
  %v9330 = vpop.f32.mrb[0].mxu0
  %9331 = vmatprep.mubr.bf16.mxu0 %v6424
  %9332 = vmatmul.mubr.bf16.gmra.mrb[0].mxu0 %v6423
  %v9333 = vpop.f32.mrb[0].mxu0
  %v9334 = vadd.f32 %v9109, %v9333
  %v9335 = vpop.f32.mrb[0].mxu0
  %v9336 = vpop.f32.mrb[0].mxu0
  %v9337 = vadd.f32 %v9112, %v9336
  %v9338 = vpop.f32.mrb[0].mxu0
  %9339 = vmatprep.mubr.bf16.mxu0 %v6442
  %9340 = vmatmul.mubr.bf16.gmra.mrb[0].mxu0 %v6441
  %v9341 = vpop.f32.mrb[0].mxu0
  %v9342 = vadd.f32 %v9117, %v9341
  %v9343 = vpop.f32.mrb[0].mxu0
  %v9344 = vpop.f32.mrb[0].mxu0
  %v9345 = vadd.f32 %v9120, %v9344
  %v9346 = vpop.f32.mrb[0].mxu0
  %9347 = vmatprep.mubr.bf16.mxu0 %v6460
  %9348 = vmatmul.mubr.bf16.gmra.mrb[0].mxu0 %v6459
  %v9349 = vpop.f32.mrb[0].mxu0
  %v9350 = vadd.f32 %v9125, %v9349
  %v9351 = vpop.f32.mrb[0].mxu0
  %v9352 = vpop.f32.mrb[0].mxu0
  %v9353 = vadd.f32 %v9128, %v9352
  %v9354 = vpop.f32.mrb[0].mxu0
  %9355 = vmatprep.mubr.bf16.mxu0 %v6478
  %9356 = vmatmul.mubr.bf16.gmra.mrb[0].mxu0 %v6477
  %v9357 = vpop.f32.mrb[0].mxu0
  %v9358 = vadd.f32 %v9133, %v9357
  %v9359 = vpop.f32.mrb[0].mxu0
  %v9360 = vpop.f32.mrb[0].mxu0
  %v9361 = vadd.f32 %v9136, %v9360
  %v9362 = vpop.f32.mrb[0].mxu0
  %9363 = vmatprep.mubr.bf16.mxu0 %v6496
  %9364 = vmatmul.mubr.bf16.gmra.mrb[0].mxu0 %v6495
  %v9365 = vpop.f32.mrb[0].mxu0
  %v9366 = vadd.f32 %v9141, %v9365
  %v9367 = vpop.f32.mrb[0].mxu0
  %v9368 = vpop.f32.mrb[0].mxu0
  %v9369 = vadd.f32 %v9144, %v9368
  %v9370 = vpop.f32.mrb[0].mxu0
  %9371 = vdwg.mxu0
  %9372 = vmatprep.subr.bf16.mxu0 0
  %9373 = vmatpush1.bf16.msra.mxu0 %v7621
  %9374 = vmatprep.subr.bf16.mxu0 0
  %9375 = vmatpush1.bf16.msra.mxu0 %v7622
  %9376 = vmatprep.subr.bf16.mxu0 0
  %9377 = vmatpush1.bf16.msra.mxu0 %v7623
  %9378 = vmatprep.subr.bf16.mxu0 0
  %9379 = vmatpush1.bf16.msra.mxu0 %v7624
  %9380 = vmatprep.subr.bf16.mxu0 0
  %9381 = vmatpush1.bf16.msra.mxu0 %v7625
  %9382 = vmatprep.subr.bf16.mxu0 0
  %9383 = vmatpush1.bf16.msra.mxu0 %v7626
  %9384 = vmatprep.subr.bf16.mxu0 0
  %9385 = vmatpush1.bf16.msra.mxu0 %v7627
  %9386 = vmatprep.subr.bf16.mxu0 0
  %9387 = vmatpush1.bf16.msra.mxu0 %v7628
  %9388 = vmatprep.subr.bf16.mxu0 0
  %9389 = vmatpush1.bf16.msra.mxu0 %v7629
  %9390 = vmatprep.subr.bf16.mxu0 0
  %9391 = vmatpush1.bf16.msra.mxu0 %v7630
  %9392 = vmatprep.subr.bf16.mxu0 0
  %9393 = vmatpush1.bf16.msra.mxu0 %v7631
  %9394 = vmatprep.subr.bf16.mxu0 0
  %9395 = vmatpush1.bf16.msra.mxu0 %v7632
  %9396 = vmatprep.subr.bf16.mxu0 0
  %9397 = vmatpush1.bf16.msra.mxu0 %v7633
  %9398 = vmatprep.subr.bf16.mxu0 0
  %9399 = vmatpush1.bf16.msra.mxu0 %v7634
  %9400 = vmatprep.subr.bf16.mxu0 0
  %9401 = vmatpush1.bf16.msra.mxu0 %v7635
  %9402 = vmatprep.subr.bf16.mxu0 0
  %9403 = vmatpush1.bf16.msra.mxu0 %v7636
  %9404 = vmatprep.mubr.bf16.mxu0 %v6084
  %9405 = vmatmul.mubr.bf16.gmra.mrb[0].mxu0 %v6083
  %v9406 = vpop.f32.mrb[0].mxu0
  %v9407 = vadd.f32 %v9182, %v9406
  %v9408 = vpop.f32.mrb[0].mxu0
  %v9409 = vpop.f32.mrb[0].mxu0
  %v9410 = vadd.f32 %v9185, %v9409
  %v9411 = vpop.f32.mrb[0].mxu0
  %9412 = vmatprep.mubr.bf16.mxu0 %v6102
  %9413 = vmatmul.mubr.bf16.gmra.mrb[0].mxu0 %v6101
  %v9414 = vpop.f32.mrb[0].mxu0
  %v9415 = vadd.f32 %v9190, %v9414
  %v9416 = vpop.f32.mrb[0].mxu0
  %v9417 = vpop.f32.mrb[0].mxu0
  %v9418 = vadd.f32 %v9193, %v9417
  %v9419 = vpop.f32.mrb[0].mxu0
  %9420 = vmatprep.mubr.bf16.mxu0 %v6120
  %9421 = vmatmul.mubr.bf16.gmra.mrb[0].mxu0 %v6119
  %v9422 = vpop.f32.mrb[0].mxu0
  %v9423 = vadd.f32 %v9198, %v9422
  %v9424 = vpop.f32.mrb[0].mxu0
  %v9425 = vpop.f32.mrb[0].mxu0
  %v9426 = vadd.f32 %v9201, %v9425
  %v9427 = vpop.f32.mrb[0].mxu0
  %9428 = vmatprep.mubr.bf16.mxu0 %v6138
  %9429 = vmatmul.mubr.bf16.gmra.mrb[0].mxu0 %v6137
  %v9430 = vpop.f32.mrb[0].mxu0
  %v9431 = vadd.f32 %v9206, %v9430
  %v9432 = vpop.f32.mrb[0].mxu0
  %v9433 = vpop.f32.mrb[0].mxu0
  %v9434 = vadd.f32 %v9209, %v9433
  %v9435 = vpop.f32.mrb[0].mxu0
  %9436 = vmatprep.mubr.bf16.mxu0 %v6156
  %9437 = vmatmul.mubr.bf16.gmra.mrb[0].mxu0 %v6155
  %v9438 = vpop.f32.mrb[0].mxu0
  %v9439 = vadd.f32 %v9214, %v9438
  %v9440 = vpop.f32.mrb[0].mxu0
  %v9441 = vpop.f32.mrb[0].mxu0
  %v9442 = vadd.f32 %v9217, %v9441
  %v9443 = vpop.f32.mrb[0].mxu0
  %9444 = vmatprep.mubr.bf16.mxu0 %v6174
  %9445 = vmatmul.mubr.bf16.gmra.mrb[0].mxu0 %v6173
  %v9446 = vpop.f32.mrb[0].mxu0
  %v9447 = vadd.f32 %v9222, %v9446
  %v9448 = vpop.f32.mrb[0].mxu0
  %v9449 = vpop.f32.mrb[0].mxu0
  %v9450 = vadd.f32 %v9225, %v9449
  %v9451 = vpop.f32.mrb[0].mxu0
  %9452 = vmatprep.mubr.bf16.mxu0 %v6192
  %9453 = vmatmul.mubr.bf16.gmra.mrb[0].mxu0 %v6191
  %v9454 = vpop.f32.mrb[0].mxu0
  %v9455 = vadd.f32 %v9230, %v9454
  %v9456 = vpop.f32.mrb[0].mxu0
  %v9457 = vpop.f32.mrb[0].mxu0
  %v9458 = vadd.f32 %v9233, %v9457
  %v9459 = vpop.f32.mrb[0].mxu0
  %9460 = vmatprep.mubr.bf16.mxu0 %v6210
  %9461 = vmatmul.mubr.bf16.gmra.mrb[0].mxu0 %v6209
  %v9462 = vpop.f32.mrb[0].mxu0
  %v9463 = vadd.f32 %v9238, %v9462
  %v9464 = vpop.f32.mrb[0].mxu0
  %v9465 = vpop.f32.mrb[0].mxu0
  %v9466 = vadd.f32 %v9241, %v9465
  %v9467 = vpop.f32.mrb[0].mxu0
  %9468 = vmatprep.mubr.bf16.mxu0 %v6228
  %9469 = vmatmul.mubr.bf16.gmra.mrb[0].mxu0 %v6227
  %v9470 = vpop.f32.mrb[0].mxu0
  %v9471 = vadd.f32 %v9246, %v9470
  %v9472 = vpop.f32.mrb[0].mxu0
  %v9473 = vpop.f32.mrb[0].mxu0
  %v9474 = vadd.f32 %v9249, %v9473
  %v9475 = vpop.f32.mrb[0].mxu0
  %9476 = vmatprep.mubr.bf16.mxu0 %v6246
  %9477 = vmatmul.mubr.bf16.gmra.mrb[0].mxu0 %v6245
  %v9478 = vpop.f32.mrb[0].mxu0
  %v9479 = vadd.f32 %v9254, %v9478
  %v9480 = vpop.f32.mrb[0].mxu0
  %v9481 = vpop.f32.mrb[0].mxu0
  %v9482 = vadd.f32 %v9257, %v9481
  %v9483 = vpop.f32.mrb[0].mxu0
  %9484 = vmatprep.mubr.bf16.mxu0 %v6264
  %9485 = vmatmul.mubr.bf16.gmra.mrb[0].mxu0 %v6263
  %v9486 = vpop.f32.mrb[0].mxu0
  %v9487 = vadd.f32 %v9262, %v9486
  %v9488 = vpop.f32.mrb[0].mxu0
  %v9489 = vpop.f32.mrb[0].mxu0
  %v9490 = vadd.f32 %v9265, %v9489
  %v9491 = vpop.f32.mrb[0].mxu0
  %9492 = vmatprep.mubr.bf16.mxu0 %v6282
  %9493 = vmatmul.mubr.bf16.gmra.mrb[0].mxu0 %v6281
  %v9494 = vpop.f32.mrb[0].mxu0
  %v9495 = vadd.f32 %v9270, %v9494
  %v9496 = vpop.f32.mrb[0].mxu0
  %v9497 = vpop.f32.mrb[0].mxu0
  %v9498 = vadd.f32 %v9273, %v9497
  %v9499 = vpop.f32.mrb[0].mxu0
  %9500 = vmatprep.mubr.bf16.mxu0 %v6300
  %9501 = vmatmul.mubr.bf16.gmra.mrb[0].mxu0 %v6299
  %v9502 = vpop.f32.mrb[0].mxu0
  %v9503 = vadd.f32 %v9278, %v9502
  %v9504 = vpop.f32.mrb[0].mxu0
  %v9505 = vpop.f32.mrb[0].mxu0
  %v9506 = vadd.f32 %v9281, %v9505
  %v9507 = vpop.f32.mrb[0].mxu0
  %9508 = vmatprep.mubr.bf16.mxu0 %v6318
  %9509 = vmatmul.mubr.bf16.gmra.mrb[0].mxu0 %v6317
  %v9510 = vpop.f32.mrb[0].mxu0
  %v9511 = vadd.f32 %v9286, %v9510
  %v9512 = vpop.f32.mrb[0].mxu0
  %v9513 = vpop.f32.mrb[0].mxu0
  %v9514 = vadd.f32 %v9289, %v9513
  %v9515 = vpop.f32.mrb[0].mxu0
  %9516 = vmatprep.mubr.bf16.mxu0 %v6336
  %9517 = vmatmul.mubr.bf16.gmra.mrb[0].mxu0 %v6335
  %v9518 = vpop.f32.mrb[0].mxu0
  %v9519 = vadd.f32 %v9294, %v9518
  %v9520 = vpop.f32.mrb[0].mxu0
  %v9521 = vpop.f32.mrb[0].mxu0
  %v9522 = vadd.f32 %v9297, %v9521
  %v9523 = vpop.f32.mrb[0].mxu0
  %9524 = vmatprep.mubr.bf16.mxu0 %v6354
  %9525 = vmatmul.mubr.bf16.gmra.mrb[0].mxu0 %v6353
  %v9526 = vpop.f32.mrb[0].mxu0
  %v9527 = vadd.f32 %v9302, %v9526
  %v9528 = vpop.f32.mrb[0].mxu0
  %v9529 = vpop.f32.mrb[0].mxu0
  %v9530 = vadd.f32 %v9305, %v9529
  %v9531 = vpop.f32.mrb[0].mxu0
  %9532 = vmatprep.mubr.bf16.mxu0 %v6372
  %9533 = vmatmul.mubr.bf16.gmra.mrb[0].mxu0 %v6371
  %v9534 = vpop.f32.mrb[0].mxu0
  %v9535 = vadd.f32 %v9310, %v9534
  %v9536 = vpop.f32.mrb[0].mxu0
  %v9537 = vpop.f32.mrb[0].mxu0
  %v9538 = vadd.f32 %v9313, %v9537
  %v9539 = vpop.f32.mrb[0].mxu0
  %9540 = vmatprep.mubr.bf16.mxu0 %v6390
  %9541 = vmatmul.mubr.bf16.gmra.mrb[0].mxu0 %v6389
  %v9542 = vpop.f32.mrb[0].mxu0
  %v9543 = vadd.f32 %v9318, %v9542
  %v9544 = vpop.f32.mrb[0].mxu0
  %v9545 = vpop.f32.mrb[0].mxu0
  %v9546 = vadd.f32 %v9321, %v9545
  %v9547 = vpop.f32.mrb[0].mxu0
  %9548 = vmatprep.mubr.bf16.mxu0 %v6408
  %9549 = vmatmul.mubr.bf16.gmra.mrb[0].mxu0 %v6407
  %v9550 = vpop.f32.mrb[0].mxu0
  %v9551 = vadd.f32 %v9326, %v9550
  %v9552 = vpop.f32.mrb[0].mxu0
  %v9553 = vpop.f32.mrb[0].mxu0
  %v9554 = vadd.f32 %v9329, %v9553
  %v9555 = vpop.f32.mrb[0].mxu0
  %9556 = vmatprep.mubr.bf16.mxu0 %v6426
  %9557 = vmatmul.mubr.bf16.gmra.mrb[0].mxu0 %v6425
  %v9558 = vpop.f32.mrb[0].mxu0
  %v9559 = vadd.f32 %v9334, %v9558
  %v9560 = vpop.f32.mrb[0].mxu0
  %v9561 = vpop.f32.mrb[0].mxu0
  %v9562 = vadd.f32 %v9337, %v9561
  %v9563 = vpop.f32.mrb[0].mxu0
  %9564 = vmatprep.mubr.bf16.mxu0 %v6444
  %9565 = vmatmul.mubr.bf16.gmra.mrb[0].mxu0 %v6443
  %v9566 = vpop.f32.mrb[0].mxu0
  %v9567 = vadd.f32 %v9342, %v9566
  %v9568 = vpop.f32.mrb[0].mxu0
  %v9569 = vpop.f32.mrb[0].mxu0
  %v9570 = vadd.f32 %v9345, %v9569
  %v9571 = vpop.f32.mrb[0].mxu0
  %9572 = vmatprep.mubr.bf16.mxu0 %v6462
  %9573 = vmatmul.mubr.bf16.gmra.mrb[0].mxu0 %v6461
  %v9574 = vpop.f32.mrb[0].mxu0
  %v9575 = vadd.f32 %v9350, %v9574
  %v9576 = vpop.f32.mrb[0].mxu0
  %v9577 = vpop.f32.mrb[0].mxu0
  %v9578 = vadd.f32 %v9353, %v9577
  %v9579 = vpop.f32.mrb[0].mxu0
  %9580 = vmatprep.mubr.bf16.mxu0 %v6480
  %9581 = vmatmul.mubr.bf16.gmra.mrb[0].mxu0 %v6479
  %v9582 = vpop.f32.mrb[0].mxu0
  %v9583 = vadd.f32 %v9358, %v9582
  %v9584 = vpop.f32.mrb[0].mxu0
  %v9585 = vpop.f32.mrb[0].mxu0
  %v9586 = vadd.f32 %v9361, %v9585
  %v9587 = vpop.f32.mrb[0].mxu0
  %9588 = vmatprep.mubr.bf16.mxu0 %v6498
  %9589 = vmatmul.mubr.bf16.gmra.mrb[0].mxu0 %v6497
  %v9590 = vpop.f32.mrb[0].mxu0
  %v9591 = vadd.f32 %v9366, %v9590
  %v9592 = vpop.f32.mrb[0].mxu0
  %v9593 = vpop.f32.mrb[0].mxu0
  %v9594 = vadd.f32 %v9369, %v9593
  %v9595 = vpop.f32.mrb[0].mxu0
  %9596 = vdwg.mxu0
  %9597 = vmatprep.subr.bf16.mxu0 0
  %9598 = vmatpush1.bf16.msra.mxu0 %v7637
  %9599 = vmatprep.subr.bf16.mxu0 0
  %9600 = vmatpush1.bf16.msra.mxu0 %v7638
  %9601 = vmatprep.subr.bf16.mxu0 0
  %9602 = vmatpush1.bf16.msra.mxu0 %v7639
  %9603 = vmatprep.subr.bf16.mxu0 0
  %9604 = vmatpush1.bf16.msra.mxu0 %v7640
  %9605 = vmatprep.subr.bf16.mxu0 0
  %9606 = vmatpush1.bf16.msra.mxu0 %v7641
  %9607 = vmatprep.subr.bf16.mxu0 0
  %9608 = vmatpush1.bf16.msra.mxu0 %v7642
  %9609 = vmatprep.subr.bf16.mxu0 0
  %9610 = vmatpush1.bf16.msra.mxu0 %v7643
  %9611 = vmatprep.subr.bf16.mxu0 0
  %9612 = vmatpush1.bf16.msra.mxu0 %v7644
  %9613 = vmatprep.subr.bf16.mxu0 0
  %9614 = vmatpush1.bf16.msra.mxu0 %v7645
  %9615 = vmatprep.subr.bf16.mxu0 0
  %9616 = vmatpush1.bf16.msra.mxu0 %v7646
  %9617 = vmatprep.subr.bf16.mxu0 0
  %9618 = vmatpush1.bf16.msra.mxu0 %v7647
  %9619 = vmatprep.subr.bf16.mxu0 0
  %9620 = vmatpush1.bf16.msra.mxu0 %v7648
  %9621 = vmatprep.subr.bf16.mxu0 0
  %9622 = vmatpush1.bf16.msra.mxu0 %v7649
  %9623 = vmatprep.subr.bf16.mxu0 0
  %9624 = vmatpush1.bf16.msra.mxu0 %v7650
  %9625 = vmatprep.subr.bf16.mxu0 0
  %9626 = vmatpush1.bf16.msra.mxu0 %v7651
  %9627 = vmatprep.subr.bf16.mxu0 0
  %9628 = vmatpush1.bf16.msra.mxu0 %v7652
  %9629 = vmatprep.mubr.bf16.mxu0 %v6086
  %9630 = vmatmul.mubr.bf16.gmra.mrb[0].mxu0 %v6085
  %v9631 = vpop.f32.mrb[0].mxu0
  %v9632 = vadd.f32 %v9407, %v9631
  %v9633 = vpop.f32.mrb[0].mxu0
  %v9634 = vpop.f32.mrb[0].mxu0
  %v9635 = vadd.f32 %v9410, %v9634
  %v9636 = vpop.f32.mrb[0].mxu0
  %9637 = vmatprep.mubr.bf16.mxu0 %v6104
  %9638 = vmatmul.mubr.bf16.gmra.mrb[0].mxu0 %v6103
  %v9639 = vpop.f32.mrb[0].mxu0
  %v9640 = vadd.f32 %v9415, %v9639
  %v9641 = vpop.f32.mrb[0].mxu0
  %v9642 = vpop.f32.mrb[0].mxu0
  %v9643 = vadd.f32 %v9418, %v9642
  %v9644 = vpop.f32.mrb[0].mxu0
  %9645 = vmatprep.mubr.bf16.mxu0 %v6122
  %9646 = vmatmul.mubr.bf16.gmra.mrb[0].mxu0 %v6121
  %v9647 = vpop.f32.mrb[0].mxu0
  %v9648 = vadd.f32 %v9423, %v9647
  %v9649 = vpop.f32.mrb[0].mxu0
  %v9650 = vpop.f32.mrb[0].mxu0
  %v9651 = vadd.f32 %v9426, %v9650
  %v9652 = vpop.f32.mrb[0].mxu0
  %9653 = vmatprep.mubr.bf16.mxu0 %v6140
  %9654 = vmatmul.mubr.bf16.gmra.mrb[0].mxu0 %v6139
  %v9655 = vpop.f32.mrb[0].mxu0
  %v9656 = vadd.f32 %v9431, %v9655
  %v9657 = vpop.f32.mrb[0].mxu0
  %v9658 = vpop.f32.mrb[0].mxu0
  %v9659 = vadd.f32 %v9434, %v9658
  %v9660 = vpop.f32.mrb[0].mxu0
  %9661 = vmatprep.mubr.bf16.mxu0 %v6158
  %9662 = vmatmul.mubr.bf16.gmra.mrb[0].mxu0 %v6157
  %v9663 = vpop.f32.mrb[0].mxu0
  %v9664 = vadd.f32 %v9439, %v9663
  %v9665 = vpop.f32.mrb[0].mxu0
  %v9666 = vpop.f32.mrb[0].mxu0
  %v9667 = vadd.f32 %v9442, %v9666
  %v9668 = vpop.f32.mrb[0].mxu0
  %9669 = vmatprep.mubr.bf16.mxu0 %v6176
  %9670 = vmatmul.mubr.bf16.gmra.mrb[0].mxu0 %v6175
  %v9671 = vpop.f32.mrb[0].mxu0
  %v9672 = vadd.f32 %v9447, %v9671
  %v9673 = vpop.f32.mrb[0].mxu0
  %v9674 = vpop.f32.mrb[0].mxu0
  %v9675 = vadd.f32 %v9450, %v9674
  %v9676 = vpop.f32.mrb[0].mxu0
  %9677 = vmatprep.mubr.bf16.mxu0 %v6194
  %9678 = vmatmul.mubr.bf16.gmra.mrb[0].mxu0 %v6193
  %v9679 = vpop.f32.mrb[0].mxu0
  %v9680 = vadd.f32 %v9455, %v9679
  %v9681 = vpop.f32.mrb[0].mxu0
  %v9682 = vpop.f32.mrb[0].mxu0
  %v9683 = vadd.f32 %v9458, %v9682
  %v9684 = vpop.f32.mrb[0].mxu0
  %9685 = vmatprep.mubr.bf16.mxu0 %v6212
  %9686 = vmatmul.mubr.bf16.gmra.mrb[0].mxu0 %v6211
  %v9687 = vpop.f32.mrb[0].mxu0
  %v9688 = vadd.f32 %v9463, %v9687
  %v9689 = vpop.f32.mrb[0].mxu0
  %v9690 = vpop.f32.mrb[0].mxu0
  %v9691 = vadd.f32 %v9466, %v9690
  %v9692 = vpop.f32.mrb[0].mxu0
  %9693 = vmatprep.mubr.bf16.mxu0 %v6230
  %9694 = vmatmul.mubr.bf16.gmra.mrb[0].mxu0 %v6229
  %v9695 = vpop.f32.mrb[0].mxu0
  %v9696 = vadd.f32 %v9471, %v9695
  %v9697 = vpop.f32.mrb[0].mxu0
  %v9698 = vpop.f32.mrb[0].mxu0
  %v9699 = vadd.f32 %v9474, %v9698
  %v9700 = vpop.f32.mrb[0].mxu0
  %9701 = vmatprep.mubr.bf16.mxu0 %v6248
  %9702 = vmatmul.mubr.bf16.gmra.mrb[0].mxu0 %v6247
  %v9703 = vpop.f32.mrb[0].mxu0
  %v9704 = vadd.f32 %v9479, %v9703
  %v9705 = vpop.f32.mrb[0].mxu0
  %v9706 = vpop.f32.mrb[0].mxu0
  %v9707 = vadd.f32 %v9482, %v9706
  %v9708 = vpop.f32.mrb[0].mxu0
  %9709 = vmatprep.mubr.bf16.mxu0 %v6266
  %9710 = vmatmul.mubr.bf16.gmra.mrb[0].mxu0 %v6265
  %v9711 = vpop.f32.mrb[0].mxu0
  %v9712 = vadd.f32 %v9487, %v9711
  %v9713 = vpop.f32.mrb[0].mxu0
  %v9714 = vpop.f32.mrb[0].mxu0
  %v9715 = vadd.f32 %v9490, %v9714
  %v9716 = vpop.f32.mrb[0].mxu0
  %9717 = vmatprep.mubr.bf16.mxu0 %v6284
  %9718 = vmatmul.mubr.bf16.gmra.mrb[0].mxu0 %v6283
  %v9719 = vpop.f32.mrb[0].mxu0
  %v9720 = vadd.f32 %v9495, %v9719
  %v9721 = vpop.f32.mrb[0].mxu0
  %v9722 = vpop.f32.mrb[0].mxu0
  %v9723 = vadd.f32 %v9498, %v9722
  %v9724 = vpop.f32.mrb[0].mxu0
  %9725 = vmatprep.mubr.bf16.mxu0 %v6302
  %9726 = vmatmul.mubr.bf16.gmra.mrb[0].mxu0 %v6301
  %v9727 = vpop.f32.mrb[0].mxu0
  %v9728 = vadd.f32 %v9503, %v9727
  %v9729 = vpop.f32.mrb[0].mxu0
  %v9730 = vpop.f32.mrb[0].mxu0
  %v9731 = vadd.f32 %v9506, %v9730
  %v9732 = vpop.f32.mrb[0].mxu0
  %9733 = vmatprep.mubr.bf16.mxu0 %v6320
  %9734 = vmatmul.mubr.bf16.gmra.mrb[0].mxu0 %v6319
  %v9735 = vpop.f32.mrb[0].mxu0
  %v9736 = vadd.f32 %v9511, %v9735
  %v9737 = vpop.f32.mrb[0].mxu0
  %v9738 = vpop.f32.mrb[0].mxu0
  %v9739 = vadd.f32 %v9514, %v9738
  %v9740 = vpop.f32.mrb[0].mxu0
  %9741 = vmatprep.mubr.bf16.mxu0 %v6338
  %9742 = vmatmul.mubr.bf16.gmra.mrb[0].mxu0 %v6337
  %v9743 = vpop.f32.mrb[0].mxu0
  %v9744 = vadd.f32 %v9519, %v9743
  %v9745 = vpop.f32.mrb[0].mxu0
  %v9746 = vpop.f32.mrb[0].mxu0
  %v9747 = vadd.f32 %v9522, %v9746
  %v9748 = vpop.f32.mrb[0].mxu0
  %9749 = vmatprep.mubr.bf16.mxu0 %v6356
  %9750 = vmatmul.mubr.bf16.gmra.mrb[0].mxu0 %v6355
  %v9751 = vpop.f32.mrb[0].mxu0
  %v9752 = vadd.f32 %v9527, %v9751
  %v9753 = vpop.f32.mrb[0].mxu0
  %v9754 = vpop.f32.mrb[0].mxu0
  %v9755 = vadd.f32 %v9530, %v9754
  %v9756 = vpop.f32.mrb[0].mxu0
  %9757 = vmatprep.mubr.bf16.mxu0 %v6374
  %9758 = vmatmul.mubr.bf16.gmra.mrb[0].mxu0 %v6373
  %v9759 = vpop.f32.mrb[0].mxu0
  %v9760 = vadd.f32 %v9535, %v9759
  %v9761 = vpop.f32.mrb[0].mxu0
  %v9762 = vpop.f32.mrb[0].mxu0
  %v9763 = vadd.f32 %v9538, %v9762
  %v9764 = vpop.f32.mrb[0].mxu0
  %9765 = vmatprep.mubr.bf16.mxu0 %v6392
  %9766 = vmatmul.mubr.bf16.gmra.mrb[0].mxu0 %v6391
  %v9767 = vpop.f32.mrb[0].mxu0
  %v9768 = vadd.f32 %v9543, %v9767
  %v9769 = vpop.f32.mrb[0].mxu0
  %v9770 = vpop.f32.mrb[0].mxu0
  %v9771 = vadd.f32 %v9546, %v9770
  %v9772 = vpop.f32.mrb[0].mxu0
  %9773 = vmatprep.mubr.bf16.mxu0 %v6410
  %9774 = vmatmul.mubr.bf16.gmra.mrb[0].mxu0 %v6409
  %v9775 = vpop.f32.mrb[0].mxu0
  %v9776 = vadd.f32 %v9551, %v9775
  %v9777 = vpop.f32.mrb[0].mxu0
  %v9778 = vpop.f32.mrb[0].mxu0
  %v9779 = vadd.f32 %v9554, %v9778
  %v9780 = vpop.f32.mrb[0].mxu0
  %9781 = vmatprep.mubr.bf16.mxu0 %v6428
  %9782 = vmatmul.mubr.bf16.gmra.mrb[0].mxu0 %v6427
  %v9783 = vpop.f32.mrb[0].mxu0
  %v9784 = vadd.f32 %v9559, %v9783
  %v9785 = vpop.f32.mrb[0].mxu0
  %v9786 = vpop.f32.mrb[0].mxu0
  %v9787 = vadd.f32 %v9562, %v9786
  %v9788 = vpop.f32.mrb[0].mxu0
  %9789 = vmatprep.mubr.bf16.mxu0 %v6446
  %9790 = vmatmul.mubr.bf16.gmra.mrb[0].mxu0 %v6445
  %v9791 = vpop.f32.mrb[0].mxu0
  %v9792 = vadd.f32 %v9567, %v9791
  %v9793 = vpop.f32.mrb[0].mxu0
  %v9794 = vpop.f32.mrb[0].mxu0
  %v9795 = vadd.f32 %v9570, %v9794
  %v9796 = vpop.f32.mrb[0].mxu0
  %9797 = vmatprep.mubr.bf16.mxu0 %v6464
  %9798 = vmatmul.mubr.bf16.gmra.mrb[0].mxu0 %v6463
  %v9799 = vpop.f32.mrb[0].mxu0
  %v9800 = vadd.f32 %v9575, %v9799
  %v9801 = vpop.f32.mrb[0].mxu0
  %v9802 = vpop.f32.mrb[0].mxu0
  %v9803 = vadd.f32 %v9578, %v9802
  %v9804 = vpop.f32.mrb[0].mxu0
  %9805 = vmatprep.mubr.bf16.mxu0 %v6482
  %9806 = vmatmul.mubr.bf16.gmra.mrb[0].mxu0 %v6481
  %v9807 = vpop.f32.mrb[0].mxu0
  %v9808 = vadd.f32 %v9583, %v9807
  %v9809 = vpop.f32.mrb[0].mxu0
  %v9810 = vpop.f32.mrb[0].mxu0
  %v9811 = vadd.f32 %v9586, %v9810
  %v9812 = vpop.f32.mrb[0].mxu0
  %9813 = vmatprep.mubr.bf16.mxu0 %v6500
  %9814 = vmatmul.mubr.bf16.gmra.mrb[0].mxu0 %v6499
  %v9815 = vpop.f32.mrb[0].mxu0
  %v9816 = vadd.f32 %v9591, %v9815
  %v9817 = vpop.f32.mrb[0].mxu0
  %v9818 = vpop.f32.mrb[0].mxu0
  %v9819 = vadd.f32 %v9594, %v9818
  %v9820 = vpop.f32.mrb[0].mxu0
  %9821 = vdwg.mxu0
  %vm9822 = vcmask 400384
  %v9823 = vsel %vm9822, %v9632, 0.0
  %9824 = vadd.xlane.f32.xlu0 %v9823
  %v9825 = vpop.xlane.xlu0 %9824
  %v9826 = vsel %vm9822, %v9635, 0.0
  %9827 = vadd.xlane.f32.xlu0 %v9826
  %v9828 = vpop.xlane.xlu0 %9827
  %v9829 = vsel %vm9822, %v9640, 0.0
  %9830 = vadd.xlane.f32.xlu0 %v9829
  %v9831 = vpop.xlane.xlu0 %9830
  %v9832 = vsel %vm9822, %v9643, 0.0
  %9833 = vadd.xlane.f32.xlu0 %v9832
  %v9834 = vpop.xlane.xlu0 %9833
  %v9835 = vsel %vm9822, %v9648, 0.0
  %9836 = vadd.xlane.f32.xlu0 %v9835
  %v9837 = vpop.xlane.xlu0 %9836
  %v9838 = vsel %vm9822, %v9651, 0.0
  %9839 = vadd.xlane.f32.xlu0 %v9838
  %v9840 = vpop.xlane.xlu0 %9839
  %v9841 = vsel %vm9822, %v9656, 0.0
  %9842 = vadd.xlane.f32.xlu0 %v9841
  %v9843 = vpop.xlane.xlu0 %9842
  %v9844 = vsel %vm9822, %v9659, 0.0
  %9845 = vadd.xlane.f32.xlu0 %v9844
  %v9846 = vpop.xlane.xlu0 %9845
  %v9847 = vsel %vm9822, %v9664, 0.0
  %9848 = vadd.xlane.f32.xlu0 %v9847
  %v9849 = vpop.xlane.xlu0 %9848
  %v9850 = vsel %vm9822, %v9667, 0.0
  %9851 = vadd.xlane.f32.xlu0 %v9850
  %v9852 = vpop.xlane.xlu0 %9851
  %v9853 = vsel %vm9822, %v9672, 0.0
  %9854 = vadd.xlane.f32.xlu0 %v9853
  %v9855 = vpop.xlane.xlu0 %9854
  %v9856 = vsel %vm9822, %v9675, 0.0
  %9857 = vadd.xlane.f32.xlu0 %v9856
  %v9858 = vpop.xlane.xlu0 %9857
  %v9859 = vsel %vm9822, %v9680, 0.0
  %9860 = vadd.xlane.f32.xlu0 %v9859
  %v9861 = vpop.xlane.xlu0 %9860
  %v9862 = vsel %vm9822, %v9683, 0.0
  %9863 = vadd.xlane.f32.xlu0 %v9862
  %v9864 = vpop.xlane.xlu0 %9863
  %v9865 = vsel %vm9822, %v9688, 0.0
  %9866 = vadd.xlane.f32.xlu0 %v9865
  %v9867 = vpop.xlane.xlu0 %9866
  %v9868 = vsel %vm9822, %v9691, 0.0
  %9869 = vadd.xlane.f32.xlu0 %v9868
  %v9870 = vpop.xlane.xlu0 %9869
  %v9871 = vsel %vm9822, %v9696, 0.0
  %9872 = vadd.xlane.f32.xlu0 %v9871
  %v9873 = vpop.xlane.xlu0 %9872
  %v9874 = vsel %vm9822, %v9699, 0.0
  %9875 = vadd.xlane.f32.xlu0 %v9874
  %v9876 = vpop.xlane.xlu0 %9875
  %v9877 = vsel %vm9822, %v9704, 0.0
  %9878 = vadd.xlane.f32.xlu0 %v9877
  %v9879 = vpop.xlane.xlu0 %9878
  %v9880 = vsel %vm9822, %v9707, 0.0
  %9881 = vadd.xlane.f32.xlu0 %v9880
  %v9882 = vpop.xlane.xlu0 %9881
  %v9883 = vsel %vm9822, %v9712, 0.0
  %9884 = vadd.xlane.f32.xlu0 %v9883
  %v9885 = vpop.xlane.xlu0 %9884
  %v9886 = vsel %vm9822, %v9715, 0.0
  %9887 = vadd.xlane.f32.xlu0 %v9886
  %v9888 = vpop.xlane.xlu0 %9887
  %v9889 = vsel %vm9822, %v9720, 0.0
  %9890 = vadd.xlane.f32.xlu0 %v9889
  %v9891 = vpop.xlane.xlu0 %9890
  %v9892 = vsel %vm9822, %v9723, 0.0
  %9893 = vadd.xlane.f32.xlu0 %v9892
  %v9894 = vpop.xlane.xlu0 %9893
  %v9895 = vsel %vm9822, %v9728, 0.0
  %9896 = vadd.xlane.f32.xlu0 %v9895
  %v9897 = vpop.xlane.xlu0 %9896
  %v9898 = vsel %vm9822, %v9731, 0.0
  %9899 = vadd.xlane.f32.xlu0 %v9898
  %v9900 = vpop.xlane.xlu0 %9899
  %v9901 = vsel %vm9822, %v9736, 0.0
  %9902 = vadd.xlane.f32.xlu0 %v9901
  %v9903 = vpop.xlane.xlu0 %9902
  %v9904 = vsel %vm9822, %v9739, 0.0
  %9905 = vadd.xlane.f32.xlu0 %v9904
  %v9906 = vpop.xlane.xlu0 %9905
  %v9907 = vsel %vm9822, %v9744, 0.0
  %9908 = vadd.xlane.f32.xlu0 %v9907
  %v9909 = vpop.xlane.xlu0 %9908
  %v9910 = vsel %vm9822, %v9747, 0.0
  %9911 = vadd.xlane.f32.xlu0 %v9910
  %v9912 = vpop.xlane.xlu0 %9911
  %v9913 = vsel %vm9822, %v9752, 0.0
  %9914 = vadd.xlane.f32.xlu0 %v9913
  %v9915 = vpop.xlane.xlu0 %9914
  %v9916 = vsel %vm9822, %v9755, 0.0
  %9917 = vadd.xlane.f32.xlu0 %v9916
  %v9918 = vpop.xlane.xlu0 %9917
  %v9919 = vsel %vm9822, %v9760, 0.0
  %9920 = vadd.xlane.f32.xlu0 %v9919
  %v9921 = vpop.xlane.xlu0 %9920
  %v9922 = vsel %vm9822, %v9763, 0.0
  %9923 = vadd.xlane.f32.xlu0 %v9922
  %v9924 = vpop.xlane.xlu0 %9923
  %v9925 = vsel %vm9822, %v9768, 0.0
  %9926 = vadd.xlane.f32.xlu0 %v9925
  %v9927 = vpop.xlane.xlu0 %9926
  %v9928 = vsel %vm9822, %v9771, 0.0
  %9929 = vadd.xlane.f32.xlu0 %v9928
  %v9930 = vpop.xlane.xlu0 %9929
  %v9931 = vsel %vm9822, %v9776, 0.0
  %9932 = vadd.xlane.f32.xlu0 %v9931
  %v9933 = vpop.xlane.xlu0 %9932
  %v9934 = vsel %vm9822, %v9779, 0.0
  %9935 = vadd.xlane.f32.xlu0 %v9934
  %v9936 = vpop.xlane.xlu0 %9935
  %v9937 = vsel %vm9822, %v9784, 0.0
  %9938 = vadd.xlane.f32.xlu0 %v9937
  %v9939 = vpop.xlane.xlu0 %9938
  %v9940 = vsel %vm9822, %v9787, 0.0
  %9941 = vadd.xlane.f32.xlu0 %v9940
  %v9942 = vpop.xlane.xlu0 %9941
  %v9943 = vsel %vm9822, %v9792, 0.0
  %9944 = vadd.xlane.f32.xlu0 %v9943
  %v9945 = vpop.xlane.xlu0 %9944
  %v9946 = vsel %vm9822, %v9795, 0.0
  %9947 = vadd.xlane.f32.xlu0 %v9946
  %v9948 = vpop.xlane.xlu0 %9947
  %v9949 = vsel %vm9822, %v9800, 0.0
  %9950 = vadd.xlane.f32.xlu0 %v9949
  %v9951 = vpop.xlane.xlu0 %9950
  %v9952 = vsel %vm9822, %v9803, 0.0
  %9953 = vadd.xlane.f32.xlu0 %v9952
  %v9954 = vpop.xlane.xlu0 %9953
  %v9955 = vsel %vm9822, %v9808, 0.0
  %9956 = vadd.xlane.f32.xlu0 %v9955
  %v9957 = vpop.xlane.xlu0 %9956
  %v9958 = vsel %vm9822, %v9811, 0.0
  %9959 = vadd.xlane.f32.xlu0 %v9958
  %v9960 = vpop.xlane.xlu0 %9959
  %v9961 = vsel %vm9822, %v9816, 0.0
  %9962 = vadd.xlane.f32.xlu0 %v9961
  %v9963 = vpop.xlane.xlu0 %9962
  %v9964 = vsel %vm9822, %v9819, 0.0
  %9965 = vadd.xlane.f32.xlu0 %v9964
  %v9966 = vpop.xlane.xlu0 %9965
  %v9967 = vmul.f32 %v9825, 0.020408163
  %v9968 = vmul.f32 %v9828, 0.020408163
  %v9969 = vmul.f32 %v9831, 0.020408163
  %v9970 = vmul.f32 %v9834, 0.020408163
  %v9971 = vmul.f32 %v9837, 0.020408163
  %v9972 = vmul.f32 %v9840, 0.020408163
  %v9973 = vmul.f32 %v9843, 0.020408163
  %v9974 = vmul.f32 %v9846, 0.020408163
  %v9975 = vmul.f32 %v9849, 0.020408163
  %v9976 = vmul.f32 %v9852, 0.020408163
  %v9977 = vmul.f32 %v9855, 0.020408163
  %v9978 = vmul.f32 %v9858, 0.020408163
  %v9979 = vmul.f32 %v9861, 0.020408163
  %v9980 = vmul.f32 %v9864, 0.020408163
  %v9981 = vmul.f32 %v9867, 0.020408163
  %v9982 = vmul.f32 %v9870, 0.020408163
  %v9983 = vmul.f32 %v9873, 0.020408163
  %v9984 = vmul.f32 %v9876, 0.020408163
  %v9985 = vmul.f32 %v9879, 0.020408163
  %v9986 = vmul.f32 %v9882, 0.020408163
  %v9987 = vmul.f32 %v9885, 0.020408163
  %v9988 = vmul.f32 %v9888, 0.020408163
  %v9989 = vmul.f32 %v9891, 0.020408163
  %v9990 = vmul.f32 %v9894, 0.020408163
  %v9991 = vmul.f32 %v9897, 0.020408163
  %v9992 = vmul.f32 %v9900, 0.020408163
  %v9993 = vmul.f32 %v9903, 0.020408163
  %v9994 = vmul.f32 %v9906, 0.020408163
  %v9995 = vmul.f32 %v9909, 0.020408163
  %v9996 = vmul.f32 %v9912, 0.020408163
  %v9997 = vmul.f32 %v9915, 0.020408163
  %v9998 = vmul.f32 %v9918, 0.020408163
  %v9999 = vmul.f32 %v9921, 0.020408163
  %v10000 = vmul.f32 %v9924, 0.020408163
  %v10001 = vmul.f32 %v9927, 0.020408163
  %v10002 = vmul.f32 %v9930, 0.020408163
  %v10003 = vmul.f32 %v9933, 0.020408163
  %v10004 = vmul.f32 %v9936, 0.020408163
  %v10005 = vmul.f32 %v9939, 0.020408163
  %v10006 = vmul.f32 %v9942, 0.020408163
  %v10007 = vmul.f32 %v9945, 0.020408163
  %v10008 = vmul.f32 %v9948, 0.020408163
  %v10009 = vmul.f32 %v9951, 0.020408163
  %v10010 = vmul.f32 %v9954, 0.020408163
  %v10011 = vmul.f32 %v9957, 0.020408163
  %v10012 = vmul.f32 %v9960, 0.020408163
  %v10013 = vmul.f32 %v9963, 0.020408163
  %v10014 = vmul.f32 %v9966, 0.020408163
  %v10015 = vsub.f32 %v9632, %v9967
  %v10016 = vsub.f32 %v9635, %v9968
  %v10017 = vsub.f32 %v9640, %v9969
  %v10018 = vsub.f32 %v9643, %v9970
  %v10019 = vsub.f32 %v9648, %v9971
  %v10020 = vsub.f32 %v9651, %v9972
  %v10021 = vsub.f32 %v9656, %v9973
  %v10022 = vsub.f32 %v9659, %v9974
  %v10023 = vsub.f32 %v9664, %v9975
  %v10024 = vsub.f32 %v9667, %v9976
  %v10025 = vsub.f32 %v9672, %v9977
  %v10026 = vsub.f32 %v9675, %v9978
  %v10027 = vsub.f32 %v9680, %v9979
  %v10028 = vsub.f32 %v9683, %v9980
  %v10029 = vsub.f32 %v9688, %v9981
  %v10030 = vsub.f32 %v9691, %v9982
  %v10031 = vsub.f32 %v9696, %v9983
  %v10032 = vsub.f32 %v9699, %v9984
  %v10033 = vsub.f32 %v9704, %v9985
  %v10034 = vsub.f32 %v9707, %v9986
  %v10035 = vsub.f32 %v9712, %v9987
  %v10036 = vsub.f32 %v9715, %v9988
  %v10037 = vsub.f32 %v9720, %v9989
  %v10038 = vsub.f32 %v9723, %v9990
  %v10039 = vsub.f32 %v9728, %v9991
  %v10040 = vsub.f32 %v9731, %v9992
  %v10041 = vsub.f32 %v9736, %v9993
  %v10042 = vsub.f32 %v9739, %v9994
  %v10043 = vsub.f32 %v9744, %v9995
  %v10044 = vsub.f32 %v9747, %v9996
  %v10045 = vsub.f32 %v9752, %v9997
  %v10046 = vsub.f32 %v9755, %v9998
  %v10047 = vsub.f32 %v9760, %v9999
  %v10048 = vsub.f32 %v9763, %v10000
  %v10049 = vsub.f32 %v9768, %v10001
  %v10050 = vsub.f32 %v9771, %v10002
  %v10051 = vsub.f32 %v9776, %v10003
  %v10052 = vsub.f32 %v9779, %v10004
  %v10053 = vsub.f32 %v9784, %v10005
  %v10054 = vsub.f32 %v9787, %v10006
  %v10055 = vsub.f32 %v9792, %v10007
  %v10056 = vsub.f32 %v9795, %v10008
  %v10057 = vsub.f32 %v9800, %v10009
  %v10058 = vsub.f32 %v9803, %v10010
  %v10059 = vsub.f32 %v9808, %v10011
  %v10060 = vsub.f32 %v9811, %v10012
  %v10061 = vsub.f32 %v9816, %v10013
  %v10062 = vsub.f32 %v9819, %v10014
  %v10063 = vmul.f32 %v10015, %v10015
  %v10064 = vmul.f32 %v10016, %v10016
  %v10065 = vmul.f32 %v10017, %v10017
  %v10066 = vmul.f32 %v10018, %v10018
  %v10067 = vmul.f32 %v10019, %v10019
  %v10068 = vmul.f32 %v10020, %v10020
  %v10069 = vmul.f32 %v10021, %v10021
  %v10070 = vmul.f32 %v10022, %v10022
  %v10071 = vmul.f32 %v10023, %v10023
  %v10072 = vmul.f32 %v10024, %v10024
  %v10073 = vmul.f32 %v10025, %v10025
  %v10074 = vmul.f32 %v10026, %v10026
  %v10075 = vmul.f32 %v10027, %v10027
  %v10076 = vmul.f32 %v10028, %v10028
  %v10077 = vmul.f32 %v10029, %v10029
  %v10078 = vmul.f32 %v10030, %v10030
  %v10079 = vmul.f32 %v10031, %v10031
  %v10080 = vmul.f32 %v10032, %v10032
  %v10081 = vmul.f32 %v10033, %v10033
  %v10082 = vmul.f32 %v10034, %v10034
  %v10083 = vmul.f32 %v10035, %v10035
  %v10084 = vmul.f32 %v10036, %v10036
  %v10085 = vmul.f32 %v10037, %v10037
  %v10086 = vmul.f32 %v10038, %v10038
  %v10087 = vmul.f32 %v10039, %v10039
  %v10088 = vmul.f32 %v10040, %v10040
  %v10089 = vmul.f32 %v10041, %v10041
  %v10090 = vmul.f32 %v10042, %v10042
  %v10091 = vmul.f32 %v10043, %v10043
  %v10092 = vmul.f32 %v10044, %v10044
  %v10093 = vmul.f32 %v10045, %v10045
  %v10094 = vmul.f32 %v10046, %v10046
  %v10095 = vmul.f32 %v10047, %v10047
  %v10096 = vmul.f32 %v10048, %v10048
  %v10097 = vmul.f32 %v10049, %v10049
  %v10098 = vmul.f32 %v10050, %v10050
  %v10099 = vmul.f32 %v10051, %v10051
  %v10100 = vmul.f32 %v10052, %v10052
  %v10101 = vmul.f32 %v10053, %v10053
  %v10102 = vmul.f32 %v10054, %v10054
  %v10103 = vmul.f32 %v10055, %v10055
  %v10104 = vmul.f32 %v10056, %v10056
  %v10105 = vmul.f32 %v10057, %v10057
  %v10106 = vmul.f32 %v10058, %v10058
  %v10107 = vmul.f32 %v10059, %v10059
  %v10108 = vmul.f32 %v10060, %v10060
  %v10109 = vmul.f32 %v10061, %v10061
  %v10110 = vmul.f32 %v10062, %v10062
  %v10111 = vsel %vm9822, %v10063, 0.0
  %10112 = vadd.xlane.f32.xlu0 %v10111
  %v10113 = vpop.xlane.xlu0 %10112
  %v10114 = vsel %vm9822, %v10064, 0.0
  %10115 = vadd.xlane.f32.xlu0 %v10114
  %v10116 = vpop.xlane.xlu0 %10115
  %v10117 = vsel %vm9822, %v10065, 0.0
  %10118 = vadd.xlane.f32.xlu0 %v10117
  %v10119 = vpop.xlane.xlu0 %10118
  %v10120 = vsel %vm9822, %v10066, 0.0
  %10121 = vadd.xlane.f32.xlu0 %v10120
  %v10122 = vpop.xlane.xlu0 %10121
  %v10123 = vsel %vm9822, %v10067, 0.0
  %10124 = vadd.xlane.f32.xlu0 %v10123
  %v10125 = vpop.xlane.xlu0 %10124
  %v10126 = vsel %vm9822, %v10068, 0.0
  %10127 = vadd.xlane.f32.xlu0 %v10126
  %v10128 = vpop.xlane.xlu0 %10127
  %v10129 = vsel %vm9822, %v10069, 0.0
  %10130 = vadd.xlane.f32.xlu0 %v10129
  %v10131 = vpop.xlane.xlu0 %10130
  %v10132 = vsel %vm9822, %v10070, 0.0
  %10133 = vadd.xlane.f32.xlu0 %v10132
  %v10134 = vpop.xlane.xlu0 %10133
  %v10135 = vsel %vm9822, %v10071, 0.0
  %10136 = vadd.xlane.f32.xlu0 %v10135
  %v10137 = vpop.xlane.xlu0 %10136
  %v10138 = vsel %vm9822, %v10072, 0.0
  %10139 = vadd.xlane.f32.xlu0 %v10138
  %v10140 = vpop.xlane.xlu0 %10139
  %v10141 = vsel %vm9822, %v10073, 0.0
  %10142 = vadd.xlane.f32.xlu0 %v10141
  %v10143 = vpop.xlane.xlu0 %10142
  %v10144 = vsel %vm9822, %v10074, 0.0
  %10145 = vadd.xlane.f32.xlu0 %v10144
  %v10146 = vpop.xlane.xlu0 %10145
  %v10147 = vsel %vm9822, %v10075, 0.0
  %10148 = vadd.xlane.f32.xlu0 %v10147
  %v10149 = vpop.xlane.xlu0 %10148
  %v10150 = vsel %vm9822, %v10076, 0.0
  %10151 = vadd.xlane.f32.xlu0 %v10150
  %v10152 = vpop.xlane.xlu0 %10151
  %v10153 = vsel %vm9822, %v10077, 0.0
  %10154 = vadd.xlane.f32.xlu0 %v10153
  %v10155 = vpop.xlane.xlu0 %10154
  %v10156 = vsel %vm9822, %v10078, 0.0
  %10157 = vadd.xlane.f32.xlu0 %v10156
  %v10158 = vpop.xlane.xlu0 %10157
  %v10159 = vsel %vm9822, %v10079, 0.0
  %10160 = vadd.xlane.f32.xlu0 %v10159
  %v10161 = vpop.xlane.xlu0 %10160
  %v10162 = vsel %vm9822, %v10080, 0.0
  %10163 = vadd.xlane.f32.xlu0 %v10162
  %v10164 = vpop.xlane.xlu0 %10163
  %v10165 = vsel %vm9822, %v10081, 0.0
  %10166 = vadd.xlane.f32.xlu0 %v10165
  %v10167 = vpop.xlane.xlu0 %10166
  %v10168 = vsel %vm9822, %v10082, 0.0
  %10169 = vadd.xlane.f32.xlu0 %v10168
  %v10170 = vpop.xlane.xlu0 %10169
  %v10171 = vsel %vm9822, %v10083, 0.0
  %10172 = vadd.xlane.f32.xlu0 %v10171
  %v10173 = vpop.xlane.xlu0 %10172
  %v10174 = vsel %vm9822, %v10084, 0.0
  %10175 = vadd.xlane.f32.xlu0 %v10174
  %v10176 = vpop.xlane.xlu0 %10175
  %v10177 = vsel %vm9822, %v10085, 0.0
  %10178 = vadd.xlane.f32.xlu0 %v10177
  %v10179 = vpop.xlane.xlu0 %10178
  %v10180 = vsel %vm9822, %v10086, 0.0
  %10181 = vadd.xlane.f32.xlu0 %v10180
  %v10182 = vpop.xlane.xlu0 %10181
  %v10183 = vsel %vm9822, %v10087, 0.0
  %10184 = vadd.xlane.f32.xlu0 %v10183
  %v10185 = vpop.xlane.xlu0 %10184
  %v10186 = vsel %vm9822, %v10088, 0.0
  %10187 = vadd.xlane.f32.xlu0 %v10186
  %v10188 = vpop.xlane.xlu0 %10187
  %v10189 = vsel %vm9822, %v10089, 0.0
  %10190 = vadd.xlane.f32.xlu0 %v10189
  %v10191 = vpop.xlane.xlu0 %10190
  %v10192 = vsel %vm9822, %v10090, 0.0
  %10193 = vadd.xlane.f32.xlu0 %v10192
  %v10194 = vpop.xlane.xlu0 %10193
  %v10195 = vsel %vm9822, %v10091, 0.0
  %10196 = vadd.xlane.f32.xlu0 %v10195
  %v10197 = vpop.xlane.xlu0 %10196
  %v10198 = vsel %vm9822, %v10092, 0.0
  %10199 = vadd.xlane.f32.xlu0 %v10198
  %v10200 = vpop.xlane.xlu0 %10199
  %v10201 = vsel %vm9822, %v10093, 0.0
  %10202 = vadd.xlane.f32.xlu0 %v10201
  %v10203 = vpop.xlane.xlu0 %10202
  %v10204 = vsel %vm9822, %v10094, 0.0
  %10205 = vadd.xlane.f32.xlu0 %v10204
  %v10206 = vpop.xlane.xlu0 %10205
  %v10207 = vsel %vm9822, %v10095, 0.0
  %10208 = vadd.xlane.f32.xlu0 %v10207
  %v10209 = vpop.xlane.xlu0 %10208
  %v10210 = vsel %vm9822, %v10096, 0.0
  %10211 = vadd.xlane.f32.xlu0 %v10210
  %v10212 = vpop.xlane.xlu0 %10211
  %v10213 = vsel %vm9822, %v10097, 0.0
  %10214 = vadd.xlane.f32.xlu0 %v10213
  %v10215 = vpop.xlane.xlu0 %10214
  %v10216 = vsel %vm9822, %v10098, 0.0
  %10217 = vadd.xlane.f32.xlu0 %v10216
  %v10218 = vpop.xlane.xlu0 %10217
  %v10219 = vsel %vm9822, %v10099, 0.0
  %10220 = vadd.xlane.f32.xlu0 %v10219
  %v10221 = vpop.xlane.xlu0 %10220
  %v10222 = vsel %vm9822, %v10100, 0.0
  %10223 = vadd.xlane.f32.xlu0 %v10222
  %v10224 = vpop.xlane.xlu0 %10223
  %v10225 = vsel %vm9822, %v10101, 0.0
  %10226 = vadd.xlane.f32.xlu0 %v10225
  %v10227 = vpop.xlane.xlu0 %10226
  %v10228 = vsel %vm9822, %v10102, 0.0
  %10229 = vadd.xlane.f32.xlu0 %v10228
  %v10230 = vpop.xlane.xlu0 %10229
  %v10231 = vsel %vm9822, %v10103, 0.0
  %10232 = vadd.xlane.f32.xlu0 %v10231
  %v10233 = vpop.xlane.xlu0 %10232
  %v10234 = vsel %vm9822, %v10104, 0.0
  %10235 = vadd.xlane.f32.xlu0 %v10234
  %v10236 = vpop.xlane.xlu0 %10235
  %v10237 = vsel %vm9822, %v10105, 0.0
  %10238 = vadd.xlane.f32.xlu0 %v10237
  %v10239 = vpop.xlane.xlu0 %10238
  %v10240 = vsel %vm9822, %v10106, 0.0
  %10241 = vadd.xlane.f32.xlu0 %v10240
  %v10242 = vpop.xlane.xlu0 %10241
  %v10243 = vsel %vm9822, %v10107, 0.0
  %10244 = vadd.xlane.f32.xlu0 %v10243
  %v10245 = vpop.xlane.xlu0 %10244
  %v10246 = vsel %vm9822, %v10108, 0.0
  %10247 = vadd.xlane.f32.xlu0 %v10246
  %v10248 = vpop.xlane.xlu0 %10247
  %v10249 = vsel %vm9822, %v10109, 0.0
  %10250 = vadd.xlane.f32.xlu0 %v10249
  %v10251 = vpop.xlane.xlu0 %10250
  %v10252 = vsel %vm9822, %v10110, 0.0
  %10253 = vadd.xlane.f32.xlu0 %v10252
  %v10254 = vpop.xlane.xlu0 %10253
  %v10255 = vmul.f32 %v10113, 0.020408163
  %v10256 = vmul.f32 %v10116, 0.020408163
  %v10257 = vmul.f32 %v10119, 0.020408163
  %v10258 = vmul.f32 %v10122, 0.020408163
  %v10259 = vmul.f32 %v10125, 0.020408163
  %v10260 = vmul.f32 %v10128, 0.020408163
  %v10261 = vmul.f32 %v10131, 0.020408163
  %v10262 = vmul.f32 %v10134, 0.020408163
  %v10263 = vmul.f32 %v10137, 0.020408163
  %v10264 = vmul.f32 %v10140, 0.020408163
  %v10265 = vmul.f32 %v10143, 0.020408163
  %v10266 = vmul.f32 %v10146, 0.020408163
  %v10267 = vmul.f32 %v10149, 0.020408163
  %v10268 = vmul.f32 %v10152, 0.020408163
  %v10269 = vmul.f32 %v10155, 0.020408163
  %v10270 = vmul.f32 %v10158, 0.020408163
  %v10271 = vmul.f32 %v10161, 0.020408163
  %v10272 = vmul.f32 %v10164, 0.020408163
  %v10273 = vmul.f32 %v10167, 0.020408163
  %v10274 = vmul.f32 %v10170, 0.020408163
  %v10275 = vmul.f32 %v10173, 0.020408163
  %v10276 = vmul.f32 %v10176, 0.020408163
  %v10277 = vmul.f32 %v10179, 0.020408163
  %v10278 = vmul.f32 %v10182, 0.020408163
  %v10279 = vmul.f32 %v10185, 0.020408163
  %v10280 = vmul.f32 %v10188, 0.020408163
  %v10281 = vmul.f32 %v10191, 0.020408163
  %v10282 = vmul.f32 %v10194, 0.020408163
  %v10283 = vmul.f32 %v10197, 0.020408163
  %v10284 = vmul.f32 %v10200, 0.020408163
  %v10285 = vmul.f32 %v10203, 0.020408163
  %v10286 = vmul.f32 %v10206, 0.020408163
  %v10287 = vmul.f32 %v10209, 0.020408163
  %v10288 = vmul.f32 %v10212, 0.020408163
  %v10289 = vmul.f32 %v10215, 0.020408163
  %v10290 = vmul.f32 %v10218, 0.020408163
  %v10291 = vmul.f32 %v10221, 0.020408163
  %v10292 = vmul.f32 %v10224, 0.020408163
  %v10293 = vmul.f32 %v10227, 0.020408163
  %v10294 = vmul.f32 %v10230, 0.020408163
  %v10295 = vmul.f32 %v10233, 0.020408163
  %v10296 = vmul.f32 %v10236, 0.020408163
  %v10297 = vmul.f32 %v10239, 0.020408163
  %v10298 = vmul.f32 %v10242, 0.020408163
  %v10299 = vmul.f32 %v10245, 0.020408163
  %v10300 = vmul.f32 %v10248, 0.020408163
  %v10301 = vmul.f32 %v10251, 0.020408163
  %v10302 = vmul.f32 %v10254, 0.020408163
  %v10303 = vadd.f32 %v10255, 1e-05
  %v10304 = vadd.f32 %v10256, 1e-05
  %v10305 = vadd.f32 %v10257, 1e-05
  %v10306 = vadd.f32 %v10258, 1e-05
  %v10307 = vadd.f32 %v10259, 1e-05
  %v10308 = vadd.f32 %v10260, 1e-05
  %v10309 = vadd.f32 %v10261, 1e-05
  %v10310 = vadd.f32 %v10262, 1e-05
  %v10311 = vadd.f32 %v10263, 1e-05
  %v10312 = vadd.f32 %v10264, 1e-05
  %v10313 = vadd.f32 %v10265, 1e-05
  %v10314 = vadd.f32 %v10266, 1e-05
  %v10315 = vadd.f32 %v10267, 1e-05
  %v10316 = vadd.f32 %v10268, 1e-05
  %v10317 = vadd.f32 %v10269, 1e-05
  %v10318 = vadd.f32 %v10270, 1e-05
  %v10319 = vadd.f32 %v10271, 1e-05
  %v10320 = vadd.f32 %v10272, 1e-05
  %v10321 = vadd.f32 %v10273, 1e-05
  %v10322 = vadd.f32 %v10274, 1e-05
  %v10323 = vadd.f32 %v10275, 1e-05
  %v10324 = vadd.f32 %v10276, 1e-05
  %v10325 = vadd.f32 %v10277, 1e-05
  %v10326 = vadd.f32 %v10278, 1e-05
  %v10327 = vadd.f32 %v10279, 1e-05
  %v10328 = vadd.f32 %v10280, 1e-05
  %v10329 = vadd.f32 %v10281, 1e-05
  %v10330 = vadd.f32 %v10282, 1e-05
  %v10331 = vadd.f32 %v10283, 1e-05
  %v10332 = vadd.f32 %v10284, 1e-05
  %v10333 = vadd.f32 %v10285, 1e-05
  %v10334 = vadd.f32 %v10286, 1e-05
  %v10335 = vadd.f32 %v10287, 1e-05
  %v10336 = vadd.f32 %v10288, 1e-05
  %v10337 = vadd.f32 %v10289, 1e-05
  %v10338 = vadd.f32 %v10290, 1e-05
  %v10339 = vadd.f32 %v10291, 1e-05
  %v10340 = vadd.f32 %v10292, 1e-05
  %v10341 = vadd.f32 %v10293, 1e-05
  %v10342 = vadd.f32 %v10294, 1e-05
  %v10343 = vadd.f32 %v10295, 1e-05
  %v10344 = vadd.f32 %v10296, 1e-05
  %v10345 = vadd.f32 %v10297, 1e-05
  %v10346 = vadd.f32 %v10298, 1e-05
  %v10347 = vadd.f32 %v10299, 1e-05
  %v10348 = vadd.f32 %v10300, 1e-05
  %v10349 = vadd.f32 %v10301, 1e-05
  %v10350 = vadd.f32 %v10302, 1e-05
  %v10351 = vrsqrt.pop %v10303
  %v10352 = vrsqrt.pop %v10304
  %v10353 = vrsqrt.pop %v10305
  %v10354 = vrsqrt.pop %v10306
  %v10355 = vrsqrt.pop %v10307
  %v10356 = vrsqrt.pop %v10308
  %v10357 = vrsqrt.pop %v10309
  %v10358 = vrsqrt.pop %v10310
  %v10359 = vrsqrt.pop %v10311
  %v10360 = vrsqrt.pop %v10312
  %v10361 = vrsqrt.pop %v10313
  %v10362 = vrsqrt.pop %v10314
  %v10363 = vrsqrt.pop %v10315
  %v10364 = vrsqrt.pop %v10316
  %v10365 = vrsqrt.pop %v10317
  %v10366 = vrsqrt.pop %v10318
  %v10367 = vrsqrt.pop %v10319
  %v10368 = vrsqrt.pop %v10320
  %v10369 = vrsqrt.pop %v10321
  %v10370 = vrsqrt.pop %v10322
  %v10371 = vrsqrt.pop %v10323
  %v10372 = vrsqrt.pop %v10324
  %v10373 = vrsqrt.pop %v10325
  %v10374 = vrsqrt.pop %v10326
  %v10375 = vrsqrt.pop %v10327
  %v10376 = vrsqrt.pop %v10328
  %v10377 = vrsqrt.pop %v10329
  %v10378 = vrsqrt.pop %v10330
  %v10379 = vrsqrt.pop %v10331
  %v10380 = vrsqrt.pop %v10332
  %v10381 = vrsqrt.pop %v10333
  %v10382 = vrsqrt.pop %v10334
  %v10383 = vrsqrt.pop %v10335
  %v10384 = vrsqrt.pop %v10336
  %v10385 = vrsqrt.pop %v10337
  %v10386 = vrsqrt.pop %v10338
  %v10387 = vrsqrt.pop %v10339
  %v10388 = vrsqrt.pop %v10340
  %v10389 = vrsqrt.pop %v10341
  %v10390 = vrsqrt.pop %v10342
  %v10391 = vrsqrt.pop %v10343
  %v10392 = vrsqrt.pop %v10344
  %v10393 = vrsqrt.pop %v10345
  %v10394 = vrsqrt.pop %v10346
  %v10395 = vrsqrt.pop %v10347
  %v10396 = vrsqrt.pop %v10348
  %v10397 = vrsqrt.pop %v10349
  %v10398 = vrsqrt.pop %v10350
  %v10399 = vld [vmem:[%s3] sm:$0xff]
  %v10400 = vld [vmem:[%s3 + $0x8] sm:$0xff]
  %v10401 = vld [vmem:[%s3 + $0x10] sm:$0xff]
  %v10402 = vld [vmem:[%s3 + $0x18] sm:$0xff]
  %v10403 = vld [vmem:[%s3 + $0x20] sm:$0xff]
  %v10404 = vld [vmem:[%s3 + $0x28] sm:$0xff]
  %v10405 = vld [vmem:[%s3 + $0x30] sm:$0xff]
  %v10406 = vld [vmem:[%s3 + $0x38] sm:$0xff]
  %v10407 = vld [vmem:[%s3 + $0x40] sm:$0xff]
  %v10408 = vld [vmem:[%s3 + $0x48] sm:$0xff]
  %v10409 = vld [vmem:[%s3 + $0x50] sm:$0xff]
  %v10410 = vld [vmem:[%s3 + $0x58] sm:$0xff]
  %v10411 = vld [vmem:[%s3 + $0x60] sm:$0xff]
  %v10412 = vld [vmem:[%s3 + $0x68] sm:$0xff]
  %v10413 = vld [vmem:[%s3 + $0x70] sm:$0xff]
  %v10414 = vld [vmem:[%s3 + $0x78] sm:$0xff]
  %v10415 = vld [vmem:[%s3 + $0x80] sm:$0xff]
  %v10416 = vld [vmem:[%s3 + $0x88] sm:$0xff]
  %v10417 = vld [vmem:[%s3 + $0x90] sm:$0xff]
  %v10418 = vld [vmem:[%s3 + $0x98] sm:$0xff]
  %v10419 = vld [vmem:[%s3 + $0xa0] sm:$0xff]
  %v10420 = vld [vmem:[%s3 + $0xa8] sm:$0xff]
  %v10421 = vld [vmem:[%s3 + $0xb0] sm:$0xff]
  %v10422 = vld [vmem:[%s3 + $0xb8] sm:$0xff]
  %v10423 = vld [vmem:[%s3 + $0xc0] sm:$0xff]
  %v10424 = vld [vmem:[%s3 + $0xc8] sm:$0xff]
  %v10425 = vld [vmem:[%s3 + $0xd0] sm:$0xff]
  %v10426 = vld [vmem:[%s3 + $0xd8] sm:$0xff]
  %v10427 = vld [vmem:[%s3 + $0xe0] sm:$0xff]
  %v10428 = vld [vmem:[%s3 + $0xe8] sm:$0xff]
  %v10429 = vld [vmem:[%s3 + $0xf0] sm:$0xff]
  %v10430 = vld [vmem:[%s3 + $0xf8] sm:$0xff]
  %v10431 = vld [vmem:[%s3 + $0x100] sm:$0xff]
  %v10432 = vld [vmem:[%s3 + $0x108] sm:$0xff]
  %v10433 = vld [vmem:[%s3 + $0x110] sm:$0xff]
  %v10434 = vld [vmem:[%s3 + $0x118] sm:$0xff]
  %v10435 = vld [vmem:[%s3 + $0x120] sm:$0xff]
  %v10436 = vld [vmem:[%s3 + $0x128] sm:$0xff]
  %v10437 = vld [vmem:[%s3 + $0x130] sm:$0xff]
  %v10438 = vld [vmem:[%s3 + $0x138] sm:$0xff]
  %v10439 = vld [vmem:[%s3 + $0x140] sm:$0xff]
  %v10440 = vld [vmem:[%s3 + $0x148] sm:$0xff]
  %v10441 = vld [vmem:[%s3 + $0x150] sm:$0xff]
  %v10442 = vld [vmem:[%s3 + $0x158] sm:$0xff]
  %v10443 = vld [vmem:[%s3 + $0x160] sm:$0xff]
  %v10444 = vld [vmem:[%s3 + $0x168] sm:$0xff]
  %v10445 = vld [vmem:[%s3 + $0x170] sm:$0xff]
  %v10446 = vld [vmem:[%s3 + $0x178] sm:$0xff]
  %v10447 = vmul.f32 %v10351, %v10399
  %v10448 = vmul.f32 %v10352, %v10400
  %v10449 = vmul.f32 %v10353, %v10401
  %v10450 = vmul.f32 %v10354, %v10402
  %v10451 = vmul.f32 %v10355, %v10403
  %v10452 = vmul.f32 %v10356, %v10404
  %v10453 = vmul.f32 %v10357, %v10405
  %v10454 = vmul.f32 %v10358, %v10406
  %v10455 = vmul.f32 %v10359, %v10407
  %v10456 = vmul.f32 %v10360, %v10408
  %v10457 = vmul.f32 %v10361, %v10409
  %v10458 = vmul.f32 %v10362, %v10410
  %v10459 = vmul.f32 %v10363, %v10411
  %v10460 = vmul.f32 %v10364, %v10412
  %v10461 = vmul.f32 %v10365, %v10413
  %v10462 = vmul.f32 %v10366, %v10414
  %v10463 = vmul.f32 %v10367, %v10415
  %v10464 = vmul.f32 %v10368, %v10416
  %v10465 = vmul.f32 %v10369, %v10417
  %v10466 = vmul.f32 %v10370, %v10418
  %v10467 = vmul.f32 %v10371, %v10419
  %v10468 = vmul.f32 %v10372, %v10420
  %v10469 = vmul.f32 %v10373, %v10421
  %v10470 = vmul.f32 %v10374, %v10422
  %v10471 = vmul.f32 %v10375, %v10423
  %v10472 = vmul.f32 %v10376, %v10424
  %v10473 = vmul.f32 %v10377, %v10425
  %v10474 = vmul.f32 %v10378, %v10426
  %v10475 = vmul.f32 %v10379, %v10427
  %v10476 = vmul.f32 %v10380, %v10428
  %v10477 = vmul.f32 %v10381, %v10429
  %v10478 = vmul.f32 %v10382, %v10430
  %v10479 = vmul.f32 %v10383, %v10431
  %v10480 = vmul.f32 %v10384, %v10432
  %v10481 = vmul.f32 %v10385, %v10433
  %v10482 = vmul.f32 %v10386, %v10434
  %v10483 = vmul.f32 %v10387, %v10435
  %v10484 = vmul.f32 %v10388, %v10436
  %v10485 = vmul.f32 %v10389, %v10437
  %v10486 = vmul.f32 %v10390, %v10438
  %v10487 = vmul.f32 %v10391, %v10439
  %v10488 = vmul.f32 %v10392, %v10440
  %v10489 = vmul.f32 %v10393, %v10441
  %v10490 = vmul.f32 %v10394, %v10442
  %v10491 = vmul.f32 %v10395, %v10443
  %v10492 = vmul.f32 %v10396, %v10444
  %v10493 = vmul.f32 %v10397, %v10445
  %v10494 = vmul.f32 %v10398, %v10446
  %10496 = vset.pattern.permute.xlu0 0
  %10497 = vperm.xlu0 %10496, %v10447
  %v10498 = vpop.permute.xlu0 %10497
  %10501 = vset.pattern.permute.xlu0 0
  %10502 = vperm.xlu0 %10501, %v10448
  %v10503 = vpop.permute.xlu0 %10502
  %10506 = vset.pattern.permute.xlu0 0
  %10507 = vperm.xlu0 %10506, %v10449
  %v10508 = vpop.permute.xlu0 %10507
  %10511 = vset.pattern.permute.xlu0 0
  %10512 = vperm.xlu0 %10511, %v10450
  %v10513 = vpop.permute.xlu0 %10512
  %10516 = vset.pattern.permute.xlu0 0
  %10517 = vperm.xlu0 %10516, %v10451
  %v10518 = vpop.permute.xlu0 %10517
  %10521 = vset.pattern.permute.xlu0 0
  %10522 = vperm.xlu0 %10521, %v10452
  %v10523 = vpop.permute.xlu0 %10522
  %10526 = vset.pattern.permute.xlu0 0
  %10527 = vperm.xlu0 %10526, %v10453
  %v10528 = vpop.permute.xlu0 %10527
  %10531 = vset.pattern.permute.xlu0 0
  %10532 = vperm.xlu0 %10531, %v10454
  %v10533 = vpop.permute.xlu0 %10532
  %10536 = vset.pattern.permute.xlu0 0
  %10537 = vperm.xlu0 %10536, %v10455
  %v10538 = vpop.permute.xlu0 %10537
  %10541 = vset.pattern.permute.xlu0 0
  %10542 = vperm.xlu0 %10541, %v10456
  %v10543 = vpop.permute.xlu0 %10542
  %10546 = vset.pattern.permute.xlu0 0
  %10547 = vperm.xlu0 %10546, %v10457
  %v10548 = vpop.permute.xlu0 %10547
  %10551 = vset.pattern.permute.xlu0 0
  %10552 = vperm.xlu0 %10551, %v10458
  %v10553 = vpop.permute.xlu0 %10552
  %10556 = vset.pattern.permute.xlu0 0
  %10557 = vperm.xlu0 %10556, %v10459
  %v10558 = vpop.permute.xlu0 %10557
  %10561 = vset.pattern.permute.xlu0 0
  %10562 = vperm.xlu0 %10561, %v10460
  %v10563 = vpop.permute.xlu0 %10562
  %10566 = vset.pattern.permute.xlu0 0
  %10567 = vperm.xlu0 %10566, %v10461
  %v10568 = vpop.permute.xlu0 %10567
  %10571 = vset.pattern.permute.xlu0 0
  %10572 = vperm.xlu0 %10571, %v10462
  %v10573 = vpop.permute.xlu0 %10572
  %10576 = vset.pattern.permute.xlu0 0
  %10577 = vperm.xlu0 %10576, %v10463
  %v10578 = vpop.permute.xlu0 %10577
  %10581 = vset.pattern.permute.xlu0 0
  %10582 = vperm.xlu0 %10581, %v10464
  %v10583 = vpop.permute.xlu0 %10582
  %10586 = vset.pattern.permute.xlu0 0
  %10587 = vperm.xlu0 %10586, %v10465
  %v10588 = vpop.permute.xlu0 %10587
  %10591 = vset.pattern.permute.xlu0 0
  %10592 = vperm.xlu0 %10591, %v10466
  %v10593 = vpop.permute.xlu0 %10592
  %10596 = vset.pattern.permute.xlu0 0
  %10597 = vperm.xlu0 %10596, %v10467
  %v10598 = vpop.permute.xlu0 %10597
  %10601 = vset.pattern.permute.xlu0 0
  %10602 = vperm.xlu0 %10601, %v10468
  %v10603 = vpop.permute.xlu0 %10602
  %10606 = vset.pattern.permute.xlu0 0
  %10607 = vperm.xlu0 %10606, %v10469
  %v10608 = vpop.permute.xlu0 %10607
  %10611 = vset.pattern.permute.xlu0 0
  %10612 = vperm.xlu0 %10611, %v10470
  %v10613 = vpop.permute.xlu0 %10612
  %10616 = vset.pattern.permute.xlu0 0
  %10617 = vperm.xlu0 %10616, %v10471
  %v10618 = vpop.permute.xlu0 %10617
  %10621 = vset.pattern.permute.xlu0 0
  %10622 = vperm.xlu0 %10621, %v10472
  %v10623 = vpop.permute.xlu0 %10622
  %10626 = vset.pattern.permute.xlu0 0
  %10627 = vperm.xlu0 %10626, %v10473
  %v10628 = vpop.permute.xlu0 %10627
  %10631 = vset.pattern.permute.xlu0 0
  %10632 = vperm.xlu0 %10631, %v10474
  %v10633 = vpop.permute.xlu0 %10632
  %10636 = vset.pattern.permute.xlu0 0
  %10637 = vperm.xlu0 %10636, %v10475
  %v10638 = vpop.permute.xlu0 %10637
  %10641 = vset.pattern.permute.xlu0 0
  %10642 = vperm.xlu0 %10641, %v10476
  %v10643 = vpop.permute.xlu0 %10642
  %10646 = vset.pattern.permute.xlu0 0
  %10647 = vperm.xlu0 %10646, %v10477
  %v10648 = vpop.permute.xlu0 %10647
  %10651 = vset.pattern.permute.xlu0 0
  %10652 = vperm.xlu0 %10651, %v10478
  %v10653 = vpop.permute.xlu0 %10652
  %10656 = vset.pattern.permute.xlu0 0
  %10657 = vperm.xlu0 %10656, %v10479
  %v10658 = vpop.permute.xlu0 %10657
  %10661 = vset.pattern.permute.xlu0 0
  %10662 = vperm.xlu0 %10661, %v10480
  %v10663 = vpop.permute.xlu0 %10662
  %10666 = vset.pattern.permute.xlu0 0
  %10667 = vperm.xlu0 %10666, %v10481
  %v10668 = vpop.permute.xlu0 %10667
  %10671 = vset.pattern.permute.xlu0 0
  %10672 = vperm.xlu0 %10671, %v10482
  %v10673 = vpop.permute.xlu0 %10672
  %10676 = vset.pattern.permute.xlu0 0
  %10677 = vperm.xlu0 %10676, %v10483
  %v10678 = vpop.permute.xlu0 %10677
  %10681 = vset.pattern.permute.xlu0 0
  %10682 = vperm.xlu0 %10681, %v10484
  %v10683 = vpop.permute.xlu0 %10682
  %10686 = vset.pattern.permute.xlu0 0
  %10687 = vperm.xlu0 %10686, %v10485
  %v10688 = vpop.permute.xlu0 %10687
  %10691 = vset.pattern.permute.xlu0 0
  %10692 = vperm.xlu0 %10691, %v10486
  %v10693 = vpop.permute.xlu0 %10692
  %10696 = vset.pattern.permute.xlu0 0
  %10697 = vperm.xlu0 %10696, %v10487
  %v10698 = vpop.permute.xlu0 %10697
  %10701 = vset.pattern.permute.xlu0 0
  %10702 = vperm.xlu0 %10701, %v10488
  %v10703 = vpop.permute.xlu0 %10702
  %10706 = vset.pattern.permute.xlu0 0
  %10707 = vperm.xlu0 %10706, %v10489
  %v10708 = vpop.permute.xlu0 %10707
  %10711 = vset.pattern.permute.xlu0 0
  %10712 = vperm.xlu0 %10711, %v10490
  %v10713 = vpop.permute.xlu0 %10712
  %10716 = vset.pattern.permute.xlu0 0
  %10717 = vperm.xlu0 %10716, %v10491
  %v10718 = vpop.permute.xlu0 %10717
  %10721 = vset.pattern.permute.xlu0 0
  %10722 = vperm.xlu0 %10721, %v10492
  %v10723 = vpop.permute.xlu0 %10722
  %10726 = vset.pattern.permute.xlu0 0
  %10727 = vperm.xlu0 %10726, %v10493
  %v10728 = vpop.permute.xlu0 %10727
  %10731 = vset.pattern.permute.xlu0 0
  %10732 = vperm.xlu0 %10731, %v10494
  %v10733 = vpop.permute.xlu0 %10732
  %v10735 = vmul.f32 %v10015, %v10498
  %v10736 = vmul.f32 %v10016, %v10503
  %v10737 = vmul.f32 %v10017, %v10508
  %v10738 = vmul.f32 %v10018, %v10513
  %v10739 = vmul.f32 %v10019, %v10518
  %v10740 = vmul.f32 %v10020, %v10523
  %v10741 = vmul.f32 %v10021, %v10528
  %v10742 = vmul.f32 %v10022, %v10533
  %v10743 = vmul.f32 %v10023, %v10538
  %v10744 = vmul.f32 %v10024, %v10543
  %v10745 = vmul.f32 %v10025, %v10548
  %v10746 = vmul.f32 %v10026, %v10553
  %v10747 = vmul.f32 %v10027, %v10558
  %v10748 = vmul.f32 %v10028, %v10563
  %v10749 = vmul.f32 %v10029, %v10568
  %v10750 = vmul.f32 %v10030, %v10573
  %v10751 = vmul.f32 %v10031, %v10578
  %v10752 = vmul.f32 %v10032, %v10583
  %v10753 = vmul.f32 %v10033, %v10588
  %v10754 = vmul.f32 %v10034, %v10593
  %v10755 = vmul.f32 %v10035, %v10598
  %v10756 = vmul.f32 %v10036, %v10603
  %v10757 = vmul.f32 %v10037, %v10608
  %v10758 = vmul.f32 %v10038, %v10613
  %v10759 = vmul.f32 %v10039, %v10618
  %v10760 = vmul.f32 %v10040, %v10623
  %v10761 = vmul.f32 %v10041, %v10628
  %v10762 = vmul.f32 %v10042, %v10633
  %v10763 = vmul.f32 %v10043, %v10638
  %v10764 = vmul.f32 %v10044, %v10643
  %v10765 = vmul.f32 %v10045, %v10648
  %v10766 = vmul.f32 %v10046, %v10653
  %v10767 = vmul.f32 %v10047, %v10658
  %v10768 = vmul.f32 %v10048, %v10663
  %v10769 = vmul.f32 %v10049, %v10668
  %v10770 = vmul.f32 %v10050, %v10673
  %v10771 = vmul.f32 %v10051, %v10678
  %v10772 = vmul.f32 %v10052, %v10683
  %v10773 = vmul.f32 %v10053, %v10688
  %v10774 = vmul.f32 %v10054, %v10693
  %v10775 = vmul.f32 %v10055, %v10698
  %v10776 = vmul.f32 %v10056, %v10703
  %v10777 = vmul.f32 %v10057, %v10708
  %v10778 = vmul.f32 %v10058, %v10713
  %v10779 = vmul.f32 %v10059, %v10718
  %v10780 = vmul.f32 %v10060, %v10723
  %v10781 = vmul.f32 %v10061, %v10728
  %v10782 = vmul.f32 %v10062, %v10733
  %v10783 = vld [vmem:[%s4] sm:$0xff]
  %v10784 = vld [vmem:[%s4 + $0x8] sm:$0xff]
  %v10785 = vld [vmem:[%s4 + $0x10] sm:$0xff]
  %v10786 = vld [vmem:[%s4 + $0x18] sm:$0xff]
  %v10787 = vld [vmem:[%s4 + $0x20] sm:$0xff]
  %v10788 = vld [vmem:[%s4 + $0x28] sm:$0xff]
  %v10789 = vld [vmem:[%s4 + $0x30] sm:$0xff]
  %v10790 = vld [vmem:[%s4 + $0x38] sm:$0xff]
  %v10791 = vld [vmem:[%s4 + $0x40] sm:$0xff]
  %v10792 = vld [vmem:[%s4 + $0x48] sm:$0xff]
  %v10793 = vld [vmem:[%s4 + $0x50] sm:$0xff]
  %v10794 = vld [vmem:[%s4 + $0x58] sm:$0xff]
  %v10795 = vld [vmem:[%s4 + $0x60] sm:$0xff]
  %v10796 = vld [vmem:[%s4 + $0x68] sm:$0xff]
  %v10797 = vld [vmem:[%s4 + $0x70] sm:$0xff]
  %v10798 = vld [vmem:[%s4 + $0x78] sm:$0xff]
  %v10799 = vld [vmem:[%s4 + $0x80] sm:$0xff]
  %v10800 = vld [vmem:[%s4 + $0x88] sm:$0xff]
  %v10801 = vld [vmem:[%s4 + $0x90] sm:$0xff]
  %v10802 = vld [vmem:[%s4 + $0x98] sm:$0xff]
  %v10803 = vld [vmem:[%s4 + $0xa0] sm:$0xff]
  %v10804 = vld [vmem:[%s4 + $0xa8] sm:$0xff]
  %v10805 = vld [vmem:[%s4 + $0xb0] sm:$0xff]
  %v10806 = vld [vmem:[%s4 + $0xb8] sm:$0xff]
  %v10807 = vld [vmem:[%s4 + $0xc0] sm:$0xff]
  %v10808 = vld [vmem:[%s4 + $0xc8] sm:$0xff]
  %v10809 = vld [vmem:[%s4 + $0xd0] sm:$0xff]
  %v10810 = vld [vmem:[%s4 + $0xd8] sm:$0xff]
  %v10811 = vld [vmem:[%s4 + $0xe0] sm:$0xff]
  %v10812 = vld [vmem:[%s4 + $0xe8] sm:$0xff]
  %v10813 = vld [vmem:[%s4 + $0xf0] sm:$0xff]
  %v10814 = vld [vmem:[%s4 + $0xf8] sm:$0xff]
  %v10815 = vld [vmem:[%s4 + $0x100] sm:$0xff]
  %v10816 = vld [vmem:[%s4 + $0x108] sm:$0xff]
  %v10817 = vld [vmem:[%s4 + $0x110] sm:$0xff]
  %v10818 = vld [vmem:[%s4 + $0x118] sm:$0xff]
  %v10819 = vld [vmem:[%s4 + $0x120] sm:$0xff]
  %v10820 = vld [vmem:[%s4 + $0x128] sm:$0xff]
  %v10821 = vld [vmem:[%s4 + $0x130] sm:$0xff]
  %v10822 = vld [vmem:[%s4 + $0x138] sm:$0xff]
  %v10823 = vld [vmem:[%s4 + $0x140] sm:$0xff]
  %v10824 = vld [vmem:[%s4 + $0x148] sm:$0xff]
  %v10825 = vld [vmem:[%s4 + $0x150] sm:$0xff]
  %v10826 = vld [vmem:[%s4 + $0x158] sm:$0xff]
  %v10827 = vld [vmem:[%s4 + $0x160] sm:$0xff]
  %v10828 = vld [vmem:[%s4 + $0x168] sm:$0xff]
  %v10829 = vld [vmem:[%s4 + $0x170] sm:$0xff]
  %v10830 = vld [vmem:[%s4 + $0x178] sm:$0xff]
  %10832 = vset.pattern.permute.xlu0 0
  %10833 = vperm.xlu0 %10832, %v10783
  %v10834 = vpop.permute.xlu0 %10833
  %10837 = vset.pattern.permute.xlu0 0
  %10838 = vperm.xlu0 %10837, %v10784
  %v10839 = vpop.permute.xlu0 %10838
  %10842 = vset.pattern.permute.xlu0 0
  %10843 = vperm.xlu0 %10842, %v10785
  %v10844 = vpop.permute.xlu0 %10843
  %10847 = vset.pattern.permute.xlu0 0
  %10848 = vperm.xlu0 %10847, %v10786
  %v10849 = vpop.permute.xlu0 %10848
  %10852 = vset.pattern.permute.xlu0 0
  %10853 = vperm.xlu0 %10852, %v10787
  %v10854 = vpop.permute.xlu0 %10853
  %10857 = vset.pattern.permute.xlu0 0
  %10858 = vperm.xlu0 %10857, %v10788
  %v10859 = vpop.permute.xlu0 %10858
  %10862 = vset.pattern.permute.xlu0 0
  %10863 = vperm.xlu0 %10862, %v10789
  %v10864 = vpop.permute.xlu0 %10863
  %10867 = vset.pattern.permute.xlu0 0
  %10868 = vperm.xlu0 %10867, %v10790
  %v10869 = vpop.permute.xlu0 %10868
  %10872 = vset.pattern.permute.xlu0 0
  %10873 = vperm.xlu0 %10872, %v10791
  %v10874 = vpop.permute.xlu0 %10873
  %10877 = vset.pattern.permute.xlu0 0
  %10878 = vperm.xlu0 %10877, %v10792
  %v10879 = vpop.permute.xlu0 %10878
  %10882 = vset.pattern.permute.xlu0 0
  %10883 = vperm.xlu0 %10882, %v10793
  %v10884 = vpop.permute.xlu0 %10883
  %10887 = vset.pattern.permute.xlu0 0
  %10888 = vperm.xlu0 %10887, %v10794
  %v10889 = vpop.permute.xlu0 %10888
  %10892 = vset.pattern.permute.xlu0 0
  %10893 = vperm.xlu0 %10892, %v10795
  %v10894 = vpop.permute.xlu0 %10893
  %10897 = vset.pattern.permute.xlu0 0
  %10898 = vperm.xlu0 %10897, %v10796
  %v10899 = vpop.permute.xlu0 %10898
  %10902 = vset.pattern.permute.xlu0 0
  %10903 = vperm.xlu0 %10902, %v10797
  %v10904 = vpop.permute.xlu0 %10903
  %10907 = vset.pattern.permute.xlu0 0
  %10908 = vperm.xlu0 %10907, %v10798
  %v10909 = vpop.permute.xlu0 %10908
  %10912 = vset.pattern.permute.xlu0 0
  %10913 = vperm.xlu0 %10912, %v10799
  %v10914 = vpop.permute.xlu0 %10913
  %10917 = vset.pattern.permute.xlu0 0
  %10918 = vperm.xlu0 %10917, %v10800
  %v10919 = vpop.permute.xlu0 %10918
  %10922 = vset.pattern.permute.xlu0 0
  %10923 = vperm.xlu0 %10922, %v10801
  %v10924 = vpop.permute.xlu0 %10923
  %10927 = vset.pattern.permute.xlu0 0
  %10928 = vperm.xlu0 %10927, %v10802
  %v10929 = vpop.permute.xlu0 %10928
  %10932 = vset.pattern.permute.xlu0 0
  %10933 = vperm.xlu0 %10932, %v10803
  %v10934 = vpop.permute.xlu0 %10933
  %10937 = vset.pattern.permute.xlu0 0
  %10938 = vperm.xlu0 %10937, %v10804
  %v10939 = vpop.permute.xlu0 %10938
  %10942 = vset.pattern.permute.xlu0 0
  %10943 = vperm.xlu0 %10942, %v10805
  %v10944 = vpop.permute.xlu0 %10943
  %10947 = vset.pattern.permute.xlu0 0
  %10948 = vperm.xlu0 %10947, %v10806
  %v10949 = vpop.permute.xlu0 %10948
  %10952 = vset.pattern.permute.xlu0 0
  %10953 = vperm.xlu0 %10952, %v10807
  %v10954 = vpop.permute.xlu0 %10953
  %10957 = vset.pattern.permute.xlu0 0
  %10958 = vperm.xlu0 %10957, %v10808
  %v10959 = vpop.permute.xlu0 %10958
  %10962 = vset.pattern.permute.xlu0 0
  %10963 = vperm.xlu0 %10962, %v10809
  %v10964 = vpop.permute.xlu0 %10963
  %10967 = vset.pattern.permute.xlu0 0
  %10968 = vperm.xlu0 %10967, %v10810
  %v10969 = vpop.permute.xlu0 %10968
  %10972 = vset.pattern.permute.xlu0 0
  %10973 = vperm.xlu0 %10972, %v10811
  %v10974 = vpop.permute.xlu0 %10973
  %10977 = vset.pattern.permute.xlu0 0
  %10978 = vperm.xlu0 %10977, %v10812
  %v10979 = vpop.permute.xlu0 %10978
  %10982 = vset.pattern.permute.xlu0 0
  %10983 = vperm.xlu0 %10982, %v10813
  %v10984 = vpop.permute.xlu0 %10983
  %10987 = vset.pattern.permute.xlu0 0
  %10988 = vperm.xlu0 %10987, %v10814
  %v10989 = vpop.permute.xlu0 %10988
  %10992 = vset.pattern.permute.xlu0 0
  %10993 = vperm.xlu0 %10992, %v10815
  %v10994 = vpop.permute.xlu0 %10993
  %10997 = vset.pattern.permute.xlu0 0
  %10998 = vperm.xlu0 %10997, %v10816
  %v10999 = vpop.permute.xlu0 %10998
  %11002 = vset.pattern.permute.xlu0 0
  %11003 = vperm.xlu0 %11002, %v10817
  %v11004 = vpop.permute.xlu0 %11003
  %11007 = vset.pattern.permute.xlu0 0
  %11008 = vperm.xlu0 %11007, %v10818
  %v11009 = vpop.permute.xlu0 %11008
  %11012 = vset.pattern.permute.xlu0 0
  %11013 = vperm.xlu0 %11012, %v10819
  %v11014 = vpop.permute.xlu0 %11013
  %11017 = vset.pattern.permute.xlu0 0
  %11018 = vperm.xlu0 %11017, %v10820
  %v11019 = vpop.permute.xlu0 %11018
  %11022 = vset.pattern.permute.xlu0 0
  %11023 = vperm.xlu0 %11022, %v10821
  %v11024 = vpop.permute.xlu0 %11023
  %11027 = vset.pattern.permute.xlu0 0
  %11028 = vperm.xlu0 %11027, %v10822
  %v11029 = vpop.permute.xlu0 %11028
  %11032 = vset.pattern.permute.xlu0 0
  %11033 = vperm.xlu0 %11032, %v10823
  %v11034 = vpop.permute.xlu0 %11033
  %11037 = vset.pattern.permute.xlu0 0
  %11038 = vperm.xlu0 %11037, %v10824
  %v11039 = vpop.permute.xlu0 %11038
  %11042 = vset.pattern.permute.xlu0 0
  %11043 = vperm.xlu0 %11042, %v10825
  %v11044 = vpop.permute.xlu0 %11043
  %11047 = vset.pattern.permute.xlu0 0
  %11048 = vperm.xlu0 %11047, %v10826
  %v11049 = vpop.permute.xlu0 %11048
  %11052 = vset.pattern.permute.xlu0 0
  %11053 = vperm.xlu0 %11052, %v10827
  %v11054 = vpop.permute.xlu0 %11053
  %11057 = vset.pattern.permute.xlu0 0
  %11058 = vperm.xlu0 %11057, %v10828
  %v11059 = vpop.permute.xlu0 %11058
  %11062 = vset.pattern.permute.xlu0 0
  %11063 = vperm.xlu0 %11062, %v10829
  %v11064 = vpop.permute.xlu0 %11063
  %11067 = vset.pattern.permute.xlu0 0
  %11068 = vperm.xlu0 %11067, %v10830
  %v11069 = vpop.permute.xlu0 %11068
  %v11071 = vadd.f32 %v10735, %v10834
  %v11072 = vadd.f32 %v10736, %v10839
  %v11073 = vadd.f32 %v10737, %v10844
  %v11074 = vadd.f32 %v10738, %v10849
  %v11075 = vadd.f32 %v10739, %v10854
  %v11076 = vadd.f32 %v10740, %v10859
  %v11077 = vadd.f32 %v10741, %v10864
  %v11078 = vadd.f32 %v10742, %v10869
  %v11079 = vadd.f32 %v10743, %v10874
  %v11080 = vadd.f32 %v10744, %v10879
  %v11081 = vadd.f32 %v10745, %v10884
  %v11082 = vadd.f32 %v10746, %v10889
  %v11083 = vadd.f32 %v10747, %v10894
  %v11084 = vadd.f32 %v10748, %v10899
  %v11085 = vadd.f32 %v10749, %v10904
  %v11086 = vadd.f32 %v10750, %v10909
  %v11087 = vadd.f32 %v10751, %v10914
  %v11088 = vadd.f32 %v10752, %v10919
  %v11089 = vadd.f32 %v10753, %v10924
  %v11090 = vadd.f32 %v10754, %v10929
  %v11091 = vadd.f32 %v10755, %v10934
  %v11092 = vadd.f32 %v10756, %v10939
  %v11093 = vadd.f32 %v10757, %v10944
  %v11094 = vadd.f32 %v10758, %v10949
  %v11095 = vadd.f32 %v10759, %v10954
  %v11096 = vadd.f32 %v10760, %v10959
  %v11097 = vadd.f32 %v10761, %v10964
  %v11098 = vadd.f32 %v10762, %v10969
  %v11099 = vadd.f32 %v10763, %v10974
  %v11100 = vadd.f32 %v10764, %v10979
  %v11101 = vadd.f32 %v10765, %v10984
  %v11102 = vadd.f32 %v10766, %v10989
  %v11103 = vadd.f32 %v10767, %v10994
  %v11104 = vadd.f32 %v10768, %v10999
  %v11105 = vadd.f32 %v10769, %v11004
  %v11106 = vadd.f32 %v10770, %v11009
  %v11107 = vadd.f32 %v10771, %v11014
  %v11108 = vadd.f32 %v10772, %v11019
  %v11109 = vadd.f32 %v10773, %v11024
  %v11110 = vadd.f32 %v10774, %v11029
  %v11111 = vadd.f32 %v10775, %v11034
  %v11112 = vadd.f32 %v10776, %v11039
  %v11113 = vadd.f32 %v10777, %v11044
  %v11114 = vadd.f32 %v10778, %v11049
  %v11115 = vadd.f32 %v10779, %v11054
  %v11116 = vadd.f32 %v10780, %v11059
  %v11117 = vadd.f32 %v10781, %v11064
  %v11118 = vadd.f32 %v10782, %v11069
  %11119 = vst.msk [vmem:[%s5] sm:$0xff] %vm9822, %v11071
  %11120 = vst.msk [vmem:[%s5 + $0x8] sm:$0xff] %vm9822, %v11072
  %11121 = vst.msk [vmem:[%s5 + $0x10] sm:$0xff] %vm9822, %v11073
  %11122 = vst.msk [vmem:[%s5 + $0x18] sm:$0xff] %vm9822, %v11074
  %11123 = vst.msk [vmem:[%s5 + $0x20] sm:$0xff] %vm9822, %v11075
  %11124 = vst.msk [vmem:[%s5 + $0x28] sm:$0xff] %vm9822, %v11076
  %11125 = vst.msk [vmem:[%s5 + $0x30] sm:$0xff] %vm9822, %v11077
  %11126 = vst.msk [vmem:[%s5 + $0x38] sm:$0xff] %vm9822, %v11078
  %11127 = vst.msk [vmem:[%s5 + $0x40] sm:$0xff] %vm9822, %v11079
  %11128 = vst.msk [vmem:[%s5 + $0x48] sm:$0xff] %vm9822, %v11080
  %11129 = vst.msk [vmem:[%s5 + $0x50] sm:$0xff] %vm9822, %v11081
  %11130 = vst.msk [vmem:[%s5 + $0x58] sm:$0xff] %vm9822, %v11082
  %11131 = vst.msk [vmem:[%s5 + $0x60] sm:$0xff] %vm9822, %v11083
  %11132 = vst.msk [vmem:[%s5 + $0x68] sm:$0xff] %vm9822, %v11084
  %11133 = vst.msk [vmem:[%s5 + $0x70] sm:$0xff] %vm9822, %v11085
  %11134 = vst.msk [vmem:[%s5 + $0x78] sm:$0xff] %vm9822, %v11086
  %11135 = vst.msk [vmem:[%s5 + $0x80] sm:$0xff] %vm9822, %v11087
  %11136 = vst.msk [vmem:[%s5 + $0x88] sm:$0xff] %vm9822, %v11088
  %11137 = vst.msk [vmem:[%s5 + $0x90] sm:$0xff] %vm9822, %v11089
  %11138 = vst.msk [vmem:[%s5 + $0x98] sm:$0xff] %vm9822, %v11090
  %11139 = vst.msk [vmem:[%s5 + $0xa0] sm:$0xff] %vm9822, %v11091
  %11140 = vst.msk [vmem:[%s5 + $0xa8] sm:$0xff] %vm9822, %v11092
  %11141 = vst.msk [vmem:[%s5 + $0xb0] sm:$0xff] %vm9822, %v11093
  %11142 = vst.msk [vmem:[%s5 + $0xb8] sm:$0xff] %vm9822, %v11094
  %11143 = vst.msk [vmem:[%s5 + $0xc0] sm:$0xff] %vm9822, %v11095
  %11144 = vst.msk [vmem:[%s5 + $0xc8] sm:$0xff] %vm9822, %v11096
  %11145 = vst.msk [vmem:[%s5 + $0xd0] sm:$0xff] %vm9822, %v11097
  %11146 = vst.msk [vmem:[%s5 + $0xd8] sm:$0xff] %vm9822, %v11098
  %11147 = vst.msk [vmem:[%s5 + $0xe0] sm:$0xff] %vm9822, %v11099
  %11148 = vst.msk [vmem:[%s5 + $0xe8] sm:$0xff] %vm9822, %v11100
  %11149 = vst.msk [vmem:[%s5 + $0xf0] sm:$0xff] %vm9822, %v11101
  %11150 = vst.msk [vmem:[%s5 + $0xf8] sm:$0xff] %vm9822, %v11102
  %11151 = vst.msk [vmem:[%s5 + $0x100] sm:$0xff] %vm9822, %v11103
  %11152 = vst.msk [vmem:[%s5 + $0x108] sm:$0xff] %vm9822, %v11104
  %11153 = vst.msk [vmem:[%s5 + $0x110] sm:$0xff] %vm9822, %v11105
  %11154 = vst.msk [vmem:[%s5 + $0x118] sm:$0xff] %vm9822, %v11106
  %11155 = vst.msk [vmem:[%s5 + $0x120] sm:$0xff] %vm9822, %v11107
  %11156 = vst.msk [vmem:[%s5 + $0x128] sm:$0xff] %vm9822, %v11108
  %11157 = vst.msk [vmem:[%s5 + $0x130] sm:$0xff] %vm9822, %v11109
  %11158 = vst.msk [vmem:[%s5 + $0x138] sm:$0xff] %vm9822, %v11110
  %11159 = vst.msk [vmem:[%s5 + $0x140] sm:$0xff] %vm9822, %v11111
  %11160 = vst.msk [vmem:[%s5 + $0x148] sm:$0xff] %vm9822, %v11112
  %11161 = vst.msk [vmem:[%s5 + $0x150] sm:$0xff] %vm9822, %v11113
  %11162 = vst.msk [vmem:[%s5 + $0x158] sm:$0xff] %vm9822, %v11114
  %11163 = vst.msk [vmem:[%s5 + $0x160] sm:$0xff] %vm9822, %v11115
  %11164 = vst.msk [vmem:[%s5 + $0x168] sm:$0xff] %vm9822, %v11116
  %11165 = vst.msk [vmem:[%s5 + $0x170] sm:$0xff] %vm9822, %v11117
  %11166 = vst.msk [vmem:[%s5 + $0x178] sm:$0xff] %vm9822, %v11118
  // Predicated region
  $region22: #{fused_mul_conv1x1_bn.1} parent=0 // pred_check
    _
  $region23: #{fused_mul_conv1x1_bn.1} parent=0 // pred_check_branch
    %11168 = sbr.rel (0) target = $region25
  $region24: #{fused_mul_conv1x1_bn.1} parent=0 // pred_region
    _
  $region25: #{fused_mul_conv1x1_bn.1} parent=0 // pred_fallthru
    _
  // Predicated region
  $region26: #{fused_mul_conv1x1_bn.1} parent=0 // pred_check
    _
  $region27: #{fused_mul_conv1x1_bn.1} parent=0 // pred_check_branch
    %11170 = sbr.rel (0) target = $region29
  $region28: #{fused_mul_conv1x1_bn.1} parent=0 // pred_region
    _
  $region29: #{fused_mul_conv1x1_bn.1} parent=0 // pred_fallthru
    _

</llo_original>
